<compile_context>
chip_gen: v7x
topology: tpu7x:2x2x1
jax: 0.10.0
libtpu: 0.0.40
codegen_flags: <defaults>
</compile_context>

<pallas_src>
import jax
import jax.numpy as jnp
from jax import lax
from jax.experimental import pallas as pl
from jax.experimental.pallas import tpu as pltpu

EPS = 1e-5
LANES = 128


def _residual_block_kernel(x_ref, w1_ref, w2_ref, g1_ref, b1_ref,
                           g2_ref, b2_ref, out_ref, pad_ref, col_ref):
    """Fused ResidualBlock forward (whole problem resident in VMEM).

    x_ref   : (B, H, W, Cp)      f32, NHWC, channels zero-padded to Cp
    w1_ref  : (9*Cp, Cp)         bf16, tap-major im2col weights of conv1
    w2_ref  : (9*Cp, Cp)         bf16, tap-major im2col weights of conv2
    g*/b*   : (1, Cp)            f32, BatchNorm gamma / beta (channel-padded)
    out_ref : (B*H*W, Cp)        f32, lane-dense output slab
    pad_ref : (B, H+2, W+2, Cp)  f32 scratch, spatially padded activations
    col_ref : (B*H*W, 9*Cp)      bf16 scratch, im2col patches (reused by both convs)
    """
    B, H, W, Cp = x_ref.shape
    BHW = B * H * W

    # Zero ONLY the 1-pixel halo, once.  The interior is always overwritten
    # before each conv and the halo stays zero for both convolutions.
    pad_ref[:, 0:1, :, :] = jnp.zeros((B, 1, W + 2, Cp), jnp.float32)
    pad_ref[:, H + 1:H + 2, :, :] = jnp.zeros((B, 1, W + 2, Cp), jnp.float32)
    pad_ref[:, 1:H + 1, 0:1, :] = jnp.zeros((B, H, 1, Cp), jnp.float32)
    pad_ref[:, 1:H + 1, W + 1:W + 2, :] = jnp.zeros((B, H, 1, Cp), jnp.float32)

    def build_cols():
        # im2col: col[:, t*Cp:(t+1)*Cp] = window for tap t = ky*3 + kx.
        # Lane offsets are multiples of Cp=128, so every store is lane-dense.
        for ky in range(3):
            for kx in range(3):
                t = ky * 3 + kx
                col_ref[:, t * Cp:(t + 1) * Cp] = (
                    pad_ref[:, ky:ky + H, kx:kx + W, :]
                    .reshape(BHW, Cp).astype(jnp.bfloat16))

    def batchnorm(acc, g_ref, b_ref):
        # Training-mode BN: biased batch statistics over N*H*W, f32 math.
        mean = jnp.mean(acc, axis=0, keepdims=True)
        var = jnp.mean(jnp.square(acc - mean), axis=0, keepdims=True)
        return (acc - mean) * lax.rsqrt(var + EPS) * g_ref[...] + b_ref[...]

    # ---- conv1: single im2col matmul, bf16 operands, f32 accumulation ----
    pad_ref[:, 1:H + 1, 1:W + 1, :] = x_ref[...]
    build_cols()
    acc1 = jnp.dot(col_ref[...], w1_ref[...],
                   preferred_element_type=jnp.float32)        # (BHW, Cp) f32

    # ---- bn1 + ReLU ----
    h1 = jnp.maximum(batchnorm(acc1, g1_ref, b1_ref), 0.0)

    # ---- conv2 (reuse the same pad / col scratch buffers) ----
    pad_ref[:, 1:H + 1, 1:W + 1, :] = h1.reshape(B, H, W, Cp)
    build_cols()
    acc2 = jnp.dot(col_ref[...], w2_ref[...],
                   preferred_element_type=jnp.float32)

    # ---- bn2 + residual add + ReLU (residual read lane-dense from x_ref) ----
    h2 = batchnorm(acc2, g2_ref, b2_ref)
    residual = x_ref[...].reshape(BHW, Cp)
    out_ref[...] = jnp.maximum(h2 + residual, 0.0)


@jax.jit
def residual_block_forward(x_nchw, w1_hwio, w2_hwio, g1, b1, g2, b2):
    """NCHW in, NCHW out (matches the PyTorch module interface)."""
    B, C, H, W = x_nchw.shape
    Cp = max(LANES, ((C + LANES - 1) // LANES) * LANES)

    # Thin layout shims (tiny at these sizes): NCHW -> NHWC, channel-pad to
    # the lane width so every in-kernel access is lane-dense.
    # TODO(synk): for production ResNet shapes keep activations NHWC/Cp
    # end-to-end across blocks and add a tiled grid (batch/H-row strips marked
    # "parallel" for megacore, per-generation VMEM-sized blocks, cross-tile
    # sum/sumsq BN accumulators); unnecessary at this toy size (<4 MiB VMEM).
    x_nhwc = jnp.transpose(x_nchw, (0, 2, 3, 1)).astype(jnp.float32)
    x_p = jnp.pad(x_nhwc, ((0, 0), (0, 0), (0, 0), (0, Cp - C)))

    def prep_w(w_hwio):
        # (3,3,Cin,Cout) -> channel-pad -> tap-major (9*Cp, Cp), bf16 for MXU.
        w = jnp.pad(w_hwio.astype(jnp.float32),
                    ((0, 0), (0, 0), (0, Cp - C), (0, Cp - C)))
        return w.reshape(9 * Cp, Cp).astype(jnp.bfloat16)

    w1p, w2p = prep_w(w1_hwio), prep_w(w2_hwio)
    g1p = jnp.pad(g1.astype(jnp.float32), (0, Cp - C),
                  constant_values=1.0).reshape(1, Cp)
    b1p = jnp.pad(b1.astype(jnp.float32), (0, Cp - C)).reshape(1, Cp)
    g2p = jnp.pad(g2.astype(jnp.float32), (0, Cp - C),
                  constant_values=1.0).reshape(1, Cp)
    b2p = jnp.pad(b2.astype(jnp.float32), (0, Cp - C)).reshape(1, Cp)

    vmem = pl.BlockSpec(memory_space=pltpu.MemorySpace.VMEM)
    out_flat = pl.pallas_call(
        _residual_block_kernel,
        out_shape=jax.ShapeDtypeStruct((B * H * W, Cp), jnp.float32),
        in_specs=[vmem] * 7,
        out_specs=vmem,
        scratch_shapes=[
            pltpu.VMEM((B, H + 2, W + 2, Cp), jnp.float32),   # padded activations
            pltpu.VMEM((B * H * W, 9 * Cp), jnp.bfloat16),    # im2col patches
        ],
    )(x_p, w1p, w2p, g1p, b1p, g2p, b2p)

    out = out_flat.reshape(B, H, W, Cp)[..., :C]
    return jnp.transpose(out, (0, 3, 1, 2))


def _reference_forward(x_nchw, w1_hwio, w2_hwio, g1, b1, g2, b2):
    """Pure-JAX reference (NHWC conv + training-mode BN), f32."""
    x = jnp.transpose(x_nchw, (0, 2, 3, 1)).astype(jnp.float32)
    dn = ("NHWC", "HWIO", "NHWC")

    def bn(h, g, b):
        mean = jnp.mean(h, axis=(0, 1, 2), keepdims=True)
        var = jnp.mean((h - mean) ** 2, axis=(0, 1, 2), keepdims=True)
        return (h - mean) * lax.rsqrt(var + EPS) * g + b

    h = lax.conv_general_dilated(x, w1_hwio, (1, 1), "SAME",
                                 dimension_numbers=dn,
                                 precision=lax.Precision.HIGHEST)
    h = jnp.maximum(bn(h, g1, b1), 0.0)
    h = lax.conv_general_dilated(h, w2_hwio, (1, 1), "SAME",
                                 dimension_numbers=dn,
                                 precision=lax.Precision.HIGHEST)
    h = bn(h, g2, b2)
    out = jnp.maximum(h + x, 0.0)
    return jnp.transpose(out, (0, 3, 1, 2))


if __name__ == "__main__":
    B, C, H, W = 2, 4, 16, 16  # in_channels == out_channels, stride=1, downsample=None

    key = jax.random.PRNGKey(0)
    kx, k1, k2 = jax.random.split(key, 3)

    x = jax.random.normal(kx, (B, C, H, W), dtype=jnp.float32)
    w1 = jax.random.normal(k1, (3, 3, C, C), dtype=jnp.float32) * 0.1
    w2 = jax.random.normal(k2, (3, 3, C, C), dtype=jnp.float32) * 0.1
    g1 = jnp.ones((C,), jnp.float32)
    b1 = jnp.zeros((C,), jnp.float32)
    g2 = jnp.ones((C,), jnp.float32)
    b2 = jnp.zeros((C,), jnp.float32)

    out = jax.block_until_ready(residual_block_forward(x, w1, w2, g1, b1, g2, b2))
    ref = _reference_forward(x, w1, w2, g1, b1, g2, b2)

    assert out.shape == (B, C, H, W)
    # Kernel feeds the MXU bf16 operands (f32 accumulation, f32 BN/residual),
    # so compare against the f32 reference at bf16-level tolerance.
    assert jnp.allclose(out, ref, atol=5e-2, rtol=5e-2), "mismatch vs JAX reference"

    print("KERNEL_OK")
</pallas_src>

<mosaic_0001>
module attributes {stable_mosaic.version = 11 : i64} {
  func.func @_residual_block_kernel(%arg0: memref<2x16x16x128xf32, #tpu.memory_space<vmem>>, %arg1: memref<1152x128xbf16, #tpu.memory_space<vmem>>, %arg2: memref<1152x128xbf16, #tpu.memory_space<vmem>>, %arg3: memref<1x128xf32, #tpu.memory_space<vmem>>, %arg4: memref<1x128xf32, #tpu.memory_space<vmem>>, %arg5: memref<1x128xf32, #tpu.memory_space<vmem>>, %arg6: memref<1x128xf32, #tpu.memory_space<vmem>>, %arg7: memref<512x128xf32, #tpu.memory_space<vmem>>, %arg8: memref<2x18x18x128xf32, #tpu.memory_space<vmem>>, %arg9: memref<512x1152xbf16, #tpu.memory_space<vmem>>) attributes {dimension_semantics = [], scalar_prefetch = 0 : i64, scratch_operands = 2 : i64, tpu.core_type = #tpu.core_type<tc>} {
    %cst = arith.constant 0.000000e+00 : f32
    %0 = vector.broadcast %cst : f32 to vector<2x1x18x128xf32>
    %c0 = arith.constant 0 : index
    %c0_0 = arith.constant 0 : index
    %c0_1 = arith.constant 0 : index
    %c0_2 = arith.constant 0 : index
    %1 = vector.load %arg8[%c0, %c0_0, %c0_1, %c0_2] : memref<2x18x18x128xf32, #tpu.memory_space<vmem>>, vector<2x1x18x128xf32>
    tpu.vector_store %arg8[%c0, %c0_0, %c0_1, %c0_2], %0 {strides = array<i32>} : memref<2x18x18x128xf32, #tpu.memory_space<vmem>>, vector<2x1x18x128xf32>,
    %cst_3 = arith.constant 0.000000e+00 : f32
    %2 = vector.broadcast %cst_3 : f32 to vector<2x1x18x128xf32>
    %c0_4 = arith.constant 0 : index
    %c17 = arith.constant 17 : index
    %c0_5 = arith.constant 0 : index
    %c0_6 = arith.constant 0 : index
    %3 = vector.load %arg8[%c0_4, %c17, %c0_5, %c0_6] : memref<2x18x18x128xf32, #tpu.memory_space<vmem>>, vector<2x1x18x128xf32>
    tpu.vector_store %arg8[%c0_4, %c17, %c0_5, %c0_6], %2 {strides = array<i32>} : memref<2x18x18x128xf32, #tpu.memory_space<vmem>>, vector<2x1x18x128xf32>,
    %cst_7 = arith.constant 0.000000e+00 : f32
    %4 = vector.broadcast %cst_7 : f32 to vector<2x16x1x128xf32>
    %c0_8 = arith.constant 0 : index
    %c1 = arith.constant 1 : index
    %c0_9 = arith.constant 0 : index
    %c0_10 = arith.constant 0 : index
    %5 = vector.load %arg8[%c0_8, %c1, %c0_9, %c0_10] : memref<2x18x18x128xf32, #tpu.memory_space<vmem>>, vector<2x16x1x128xf32>
    tpu.vector_store %arg8[%c0_8, %c1, %c0_9, %c0_10], %4 {strides = array<i32>} : memref<2x18x18x128xf32, #tpu.memory_space<vmem>>, vector<2x16x1x128xf32>,
    %cst_11 = arith.constant 0.000000e+00 : f32
    %6 = vector.broadcast %cst_11 : f32 to vector<2x16x1x128xf32>
    %c0_12 = arith.constant 0 : index
    %c1_13 = arith.constant 1 : index
    %c17_14 = arith.constant 17 : index
    %c0_15 = arith.constant 0 : index
    %7 = vector.load %arg8[%c0_12, %c1_13, %c17_14, %c0_15] : memref<2x18x18x128xf32, #tpu.memory_space<vmem>>, vector<2x16x1x128xf32>
    tpu.vector_store %arg8[%c0_12, %c1_13, %c17_14, %c0_15], %6 {strides = array<i32>} : memref<2x18x18x128xf32, #tpu.memory_space<vmem>>, vector<2x16x1x128xf32>,
    %c0_16 = arith.constant 0 : index
    %c0_17 = arith.constant 0 : index
    %c0_18 = arith.constant 0 : index
    %c0_19 = arith.constant 0 : index
    %8 = vector.load %arg0[%c0_16, %c0_17, %c0_18, %c0_19] : memref<2x16x16x128xf32, #tpu.memory_space<vmem>>, vector<2x16x16x128xf32>
    %c0_20 = arith.constant 0 : index
    %c1_21 = arith.constant 1 : index
    %c1_22 = arith.constant 1 : index
    %c0_23 = arith.constant 0 : index
    %9 = vector.load %arg8[%c0_20, %c1_21, %c1_22, %c0_23] : memref<2x18x18x128xf32, #tpu.memory_space<vmem>>, vector<2x16x16x128xf32>
    tpu.vector_store %arg8[%c0_20, %c1_21, %c1_22, %c0_23], %8 {strides = array<i32>} : memref<2x18x18x128xf32, #tpu.memory_space<vmem>>, vector<2x16x16x128xf32>,
    %c0_24 = arith.constant 0 : index
    %c0_25 = arith.constant 0 : index
    %c0_26 = arith.constant 0 : index
    %c0_27 = arith.constant 0 : index
    %10 = vector.load %arg8[%c0_24, %c0_25, %c0_26, %c0_27] : memref<2x18x18x128xf32, #tpu.memory_space<vmem>>, vector<2x16x16x128xf32>
    %11 = vector.shape_cast %10 : vector<2x16x16x128xf32> to vector<512x128xf32>
    %12 = arith.truncf %11 : vector<512x128xf32> to vector<512x128xbf16>
    %c0_28 = arith.constant 0 : index
    %c0_29 = arith.constant 0 : index
    %13 = vector.load %arg9[%c0_28, %c0_29] : memref<512x1152xbf16, #tpu.memory_space<vmem>>, vector<512x128xbf16>
    tpu.vector_store %arg9[%c0_28, %c0_29], %12 {strides = array<i32>} : memref<512x1152xbf16, #tpu.memory_space<vmem>>, vector<512x128xbf16>,
    %c0_30 = arith.constant 0 : index
    %c0_31 = arith.constant 0 : index
    %c1_32 = arith.constant 1 : index
    %c0_33 = arith.constant 0 : index
    %14 = vector.load %arg8[%c0_30, %c0_31, %c1_32, %c0_33] : memref<2x18x18x128xf32, #tpu.memory_space<vmem>>, vector<2x16x16x128xf32>
    %15 = vector.shape_cast %14 : vector<2x16x16x128xf32> to vector<512x128xf32>
    %16 = arith.truncf %15 : vector<512x128xf32> to vector<512x128xbf16>
    %c0_34 = arith.constant 0 : index
    %c128 = arith.constant 128 : index
    %17 = vector.load %arg9[%c0_34, %c128] : memref<512x1152xbf16, #tpu.memory_space<vmem>>, vector<512x128xbf16>
    tpu.vector_store %arg9[%c0_34, %c128], %16 {strides = array<i32>} : memref<512x1152xbf16, #tpu.memory_space<vmem>>, vector<512x128xbf16>,
    %c0_35 = arith.constant 0 : index
    %c0_36 = arith.constant 0 : index
    %c2 = arith.constant 2 : index
    %c0_37 = arith.constant 0 : index
    %18 = vector.load %arg8[%c0_35, %c0_36, %c2, %c0_37] : memref<2x18x18x128xf32, #tpu.memory_space<vmem>>, vector<2x16x16x128xf32>
    %19 = vector.shape_cast %18 : vector<2x16x16x128xf32> to vector<512x128xf32>
    %20 = arith.truncf %19 : vector<512x128xf32> to vector<512x128xbf16>
    %c0_38 = arith.constant 0 : index
    %c256 = arith.constant 256 : index
    %21 = vector.load %arg9[%c0_38, %c256] : memref<512x1152xbf16, #tpu.memory_space<vmem>>, vector<512x128xbf16>
    tpu.vector_store %arg9[%c0_38, %c256], %20 {strides = array<i32>} : memref<512x1152xbf16, #tpu.memory_space<vmem>>, vector<512x128xbf16>,
    %c0_39 = arith.constant 0 : index
    %c1_40 = arith.constant 1 : index
    %c0_41 = arith.constant 0 : index
    %c0_42 = arith.constant 0 : index
    %22 = vector.load %arg8[%c0_39, %c1_40, %c0_41, %c0_42] : memref<2x18x18x128xf32, #tpu.memory_space<vmem>>, vector<2x16x16x128xf32>
    %23 = vector.shape_cast %22 : vector<2x16x16x128xf32> to vector<512x128xf32>
    %24 = arith.truncf %23 : vector<512x128xf32> to vector<512x128xbf16>
    %c0_43 = arith.constant 0 : index
    %c384 = arith.constant 384 : index
    %25 = vector.load %arg9[%c0_43, %c384] : memref<512x1152xbf16, #tpu.memory_space<vmem>>, vector<512x128xbf16>
    tpu.vector_store %arg9[%c0_43, %c384], %24 {strides = array<i32>} : memref<512x1152xbf16, #tpu.memory_space<vmem>>, vector<512x128xbf16>,
    %c0_44 = arith.constant 0 : index
    %c1_45 = arith.constant 1 : index
    %c1_46 = arith.constant 1 : index
    %c0_47 = arith.constant 0 : index
    %26 = vector.load %arg8[%c0_44, %c1_45, %c1_46, %c0_47] : memref<2x18x18x128xf32, #tpu.memory_space<vmem>>, vector<2x16x16x128xf32>
    %27 = vector.shape_cast %26 : vector<2x16x16x128xf32> to vector<512x128xf32>
    %28 = arith.truncf %27 : vector<512x128xf32> to vector<512x128xbf16>
    %c0_48 = arith.constant 0 : index
    %c512 = arith.constant 512 : index
    %29 = vector.load %arg9[%c0_48, %c512] : memref<512x1152xbf16, #tpu.memory_space<vmem>>, vector<512x128xbf16>
    tpu.vector_store %arg9[%c0_48, %c512], %28 {strides = array<i32>} : memref<512x1152xbf16, #tpu.memory_space<vmem>>, vector<512x128xbf16>,
    %c0_49 = arith.constant 0 : index
    %c1_50 = arith.constant 1 : index
    %c2_51 = arith.constant 2 : index
    %c0_52 = arith.constant 0 : index
    %30 = vector.load %arg8[%c0_49, %c1_50, %c2_51, %c0_52] : memref<2x18x18x128xf32, #tpu.memory_space<vmem>>, vector<2x16x16x128xf32>
    %31 = vector.shape_cast %30 : vector<2x16x16x128xf32> to vector<512x128xf32>
    %32 = arith.truncf %31 : vector<512x128xf32> to vector<512x128xbf16>
    %c0_53 = arith.constant 0 : index
    %c640 = arith.constant 640 : index
    %33 = vector.load %arg9[%c0_53, %c640] : memref<512x1152xbf16, #tpu.memory_space<vmem>>, vector<512x128xbf16>
    tpu.vector_store %arg9[%c0_53, %c640], %32 {strides = array<i32>} : memref<512x1152xbf16, #tpu.memory_space<vmem>>, vector<512x128xbf16>,
    %c0_54 = arith.constant 0 : index
    %c2_55 = arith.constant 2 : index
    %c0_56 = arith.constant 0 : index
    %c0_57 = arith.constant 0 : index
    %34 = vector.load %arg8[%c0_54, %c2_55, %c0_56, %c0_57] : memref<2x18x18x128xf32, #tpu.memory_space<vmem>>, vector<2x16x16x128xf32>
    %35 = vector.shape_cast %34 : vector<2x16x16x128xf32> to vector<512x128xf32>
    %36 = arith.truncf %35 : vector<512x128xf32> to vector<512x128xbf16>
    %c0_58 = arith.constant 0 : index
    %c768 = arith.constant 768 : index
    %37 = vector.load %arg9[%c0_58, %c768] : memref<512x1152xbf16, #tpu.memory_space<vmem>>, vector<512x128xbf16>
    tpu.vector_store %arg9[%c0_58, %c768], %36 {strides = array<i32>} : memref<512x1152xbf16, #tpu.memory_space<vmem>>, vector<512x128xbf16>,
    %c0_59 = arith.constant 0 : index
    %c2_60 = arith.constant 2 : index
    %c1_61 = arith.constant 1 : index
    %c0_62 = arith.constant 0 : index
    %38 = vector.load %arg8[%c0_59, %c2_60, %c1_61, %c0_62] : memref<2x18x18x128xf32, #tpu.memory_space<vmem>>, vector<2x16x16x128xf32>
    %39 = vector.shape_cast %38 : vector<2x16x16x128xf32> to vector<512x128xf32>
    %40 = arith.truncf %39 : vector<512x128xf32> to vector<512x128xbf16>
    %c0_63 = arith.constant 0 : index
    %c896 = arith.constant 896 : index
    %41 = vector.load %arg9[%c0_63, %c896] : memref<512x1152xbf16, #tpu.memory_space<vmem>>, vector<512x128xbf16>
    tpu.vector_store %arg9[%c0_63, %c896], %40 {strides = array<i32>} : memref<512x1152xbf16, #tpu.memory_space<vmem>>, vector<512x128xbf16>,
    %c0_64 = arith.constant 0 : index
    %c2_65 = arith.constant 2 : index
    %c2_66 = arith.constant 2 : index
    %c0_67 = arith.constant 0 : index
    %42 = vector.load %arg8[%c0_64, %c2_65, %c2_66, %c0_67] : memref<2x18x18x128xf32, #tpu.memory_space<vmem>>, vector<2x16x16x128xf32>
    %43 = vector.shape_cast %42 : vector<2x16x16x128xf32> to vector<512x128xf32>
    %44 = arith.truncf %43 : vector<512x128xf32> to vector<512x128xbf16>
    %c0_68 = arith.constant 0 : index
    %c1024 = arith.constant 1024 : index
    %45 = vector.load %arg9[%c0_68, %c1024] : memref<512x1152xbf16, #tpu.memory_space<vmem>>, vector<512x128xbf16>
    tpu.vector_store %arg9[%c0_68, %c1024], %44 {strides = array<i32>} : memref<512x1152xbf16, #tpu.memory_space<vmem>>, vector<512x128xbf16>,
    %c0_69 = arith.constant 0 : index
    %c0_70 = arith.constant 0 : index
    %46 = vector.load %arg9[%c0_69, %c0_70] : memref<512x1152xbf16, #tpu.memory_space<vmem>>, vector<512x1152xbf16>
    %c0_71 = arith.constant 0 : index
    %c0_72 = arith.constant 0 : index
    %47 = vector.load %arg1[%c0_71, %c0_72] : memref<1152x128xbf16, #tpu.memory_space<vmem>>, vector<1152x128xbf16>
    %cst_73 = arith.constant dense<0.000000e+00> : vector<512x128xf32>
    %48 = tpu.matmul %46, %47, %cst_73 {dimension_numbers = #tpu.dot_dimension_numbers<[1], [0], [0], [1], [0, 0, 1, 1], [], []>} : vector<512x1152xbf16>, vector<1152x128xbf16>, vector<512x128xf32> -> vector<512x128xf32>
    %cst_74 = arith.constant dense<0.000000e+00> : vector<128xf32>
    %49 = vector.multi_reduction <add>, %48, %cst_74 [0] : vector<512x128xf32> to vector<128xf32>
    %50 = vector.shape_cast %49 : vector<128xf32> to vector<1x128xf32>
    %cst_75 = arith.constant 5.120000e+02 : f32
    %51 = vector.broadcast %cst_75 : f32 to vector<1x128xf32>
    %52 = arith.divf %50, %51 : vector<1x128xf32>
    %53 = vector.broadcast %52 : vector<1x128xf32> to vector<512x128xf32>
    %54 = arith.subf %48, %53 : vector<512x128xf32>
    %55 = arith.mulf %54, %54 : vector<512x128xf32>
    %cst_76 = arith.constant dense<0.000000e+00> : vector<128xf32>
    %56 = vector.multi_reduction <add>, %55, %cst_76 [0] : vector<512x128xf32> to vector<128xf32>
    %57 = vector.shape_cast %56 : vector<128xf32> to vector<1x128xf32>
    %cst_77 = arith.constant 5.120000e+02 : f32
    %58 = vector.broadcast %cst_77 : f32 to vector<1x128xf32>
    %59 = arith.divf %57, %58 : vector<1x128xf32>
    %60 = vector.broadcast %52 : vector<1x128xf32> to vector<512x128xf32>
    %61 = arith.subf %48, %60 : vector<512x128xf32>
    %cst_78 = arith.constant 9.99999974E-6 : f32
    %62 = vector.broadcast %cst_78 : f32 to vector<1x128xf32>
    %63 = arith.addf %59, %62 : vector<1x128xf32>
    %64 = math.rsqrt %63 : vector<1x128xf32>
    %65 = vector.broadcast %64 : vector<1x128xf32> to vector<512x128xf32>
    %66 = arith.mulf %61, %65 : vector<512x128xf32>
    %c0_79 = arith.constant 0 : index
    %c0_80 = arith.constant 0 : index
    %67 = vector.load %arg3[%c0_79, %c0_80] : memref<1x128xf32, #tpu.memory_space<vmem>>, vector<1x128xf32>
    %68 = vector.broadcast %67 : vector<1x128xf32> to vector<512x128xf32>
    %69 = arith.mulf %66, %68 : vector<512x128xf32>
    %c0_81 = arith.constant 0 : index
    %c0_82 = arith.constant 0 : index
    %70 = vector.load %arg4[%c0_81, %c0_82] : memref<1x128xf32, #tpu.memory_space<vmem>>, vector<1x128xf32>
    %71 = vector.broadcast %70 : vector<1x128xf32> to vector<512x128xf32>
    %72 = arith.addf %69, %71 : vector<512x128xf32>
    %cst_83 = arith.constant 0.000000e+00 : f32
    %73 = vector.broadcast %cst_83 : f32 to vector<512x128xf32>
    %74 = arith.maximumf %72, %73 : vector<512x128xf32>
    %75 = vector.shape_cast %74 : vector<512x128xf32> to vector<2x16x16x128xf32>
    %c0_84 = arith.constant 0 : index
    %c1_85 = arith.constant 1 : index
    %c1_86 = arith.constant 1 : index
    %c0_87 = arith.constant 0 : index
    %76 = vector.load %arg8[%c0_84, %c1_85, %c1_86, %c0_87] : memref<2x18x18x128xf32, #tpu.memory_space<vmem>>, vector<2x16x16x128xf32>
    tpu.vector_store %arg8[%c0_84, %c1_85, %c1_86, %c0_87], %75 {strides = array<i32>} : memref<2x18x18x128xf32, #tpu.memory_space<vmem>>, vector<2x16x16x128xf32>,
    %c0_88 = arith.constant 0 : index
    %c0_89 = arith.constant 0 : index
    %c0_90 = arith.constant 0 : index
    %c0_91 = arith.constant 0 : index
    %77 = vector.load %arg8[%c0_88, %c0_89, %c0_90, %c0_91] : memref<2x18x18x128xf32, #tpu.memory_space<vmem>>, vector<2x16x16x128xf32>
    %78 = vector.shape_cast %77 : vector<2x16x16x128xf32> to vector<512x128xf32>
    %79 = arith.truncf %78 : vector<512x128xf32> to vector<512x128xbf16>
    %c0_92 = arith.constant 0 : index
    %c0_93 = arith.constant 0 : index
    %80 = vector.load %arg9[%c0_92, %c0_93] : memref<512x1152xbf16, #tpu.memory_space<vmem>>, vector<512x128xbf16>
    tpu.vector_store %arg9[%c0_92, %c0_93], %79 {strides = array<i32>} : memref<512x1152xbf16, #tpu.memory_space<vmem>>, vector<512x128xbf16>,
    %c0_94 = arith.constant 0 : index
    %c0_95 = arith.constant 0 : index
    %c1_96 = arith.constant 1 : index
    %c0_97 = arith.constant 0 : index
    %81 = vector.load %arg8[%c0_94, %c0_95, %c1_96, %c0_97] : memref<2x18x18x128xf32, #tpu.memory_space<vmem>>, vector<2x16x16x128xf32>
    %82 = vector.shape_cast %81 : vector<2x16x16x128xf32> to vector<512x128xf32>
    %83 = arith.truncf %82 : vector<512x128xf32> to vector<512x128xbf16>
    %c0_98 = arith.constant 0 : index
    %c128_99 = arith.constant 128 : index
    %84 = vector.load %arg9[%c0_98, %c128_99] : memref<512x1152xbf16, #tpu.memory_space<vmem>>, vector<512x128xbf16>
    tpu.vector_store %arg9[%c0_98, %c128_99], %83 {strides = array<i32>} : memref<512x1152xbf16, #tpu.memory_space<vmem>>, vector<512x128xbf16>,
    %c0_100 = arith.constant 0 : index
    %c0_101 = arith.constant 0 : index
    %c2_102 = arith.constant 2 : index
    %c0_103 = arith.constant 0 : index
    %85 = vector.load %arg8[%c0_100, %c0_101, %c2_102, %c0_103] : memref<2x18x18x128xf32, #tpu.memory_space<vmem>>, vector<2x16x16x128xf32>
    %86 = vector.shape_cast %85 : vector<2x16x16x128xf32> to vector<512x128xf32>
    %87 = arith.truncf %86 : vector<512x128xf32> to vector<512x128xbf16>
    %c0_104 = arith.constant 0 : index
    %c256_105 = arith.constant 256 : index
    %88 = vector.load %arg9[%c0_104, %c256_105] : memref<512x1152xbf16, #tpu.memory_space<vmem>>, vector<512x128xbf16>
    tpu.vector_store %arg9[%c0_104, %c256_105], %87 {strides = array<i32>} : memref<512x1152xbf16, #tpu.memory_space<vmem>>, vector<512x128xbf16>,
    %c0_106 = arith.constant 0 : index
    %c1_107 = arith.constant 1 : index
    %c0_108 = arith.constant 0 : index
    %c0_109 = arith.constant 0 : index
    %89 = vector.load %arg8[%c0_106, %c1_107, %c0_108, %c0_109] : memref<2x18x18x128xf32, #tpu.memory_space<vmem>>, vector<2x16x16x128xf32>
    %90 = vector.shape_cast %89 : vector<2x16x16x128xf32> to vector<512x128xf32>
    %91 = arith.truncf %90 : vector<512x128xf32> to vector<512x128xbf16>
    %c0_110 = arith.constant 0 : index
    %c384_111 = arith.constant 384 : index
    %92 = vector.load %arg9[%c0_110, %c384_111] : memref<512x1152xbf16, #tpu.memory_space<vmem>>, vector<512x128xbf16>
    tpu.vector_store %arg9[%c0_110, %c384_111], %91 {strides = array<i32>} : memref<512x1152xbf16, #tpu.memory_space<vmem>>, vector<512x128xbf16>,
    %c0_112 = arith.constant 0 : index
    %c1_113 = arith.constant 1 : index
    %c1_114 = arith.constant 1 : index
    %c0_115 = arith.constant 0 : index
    %93 = vector.load %arg8[%c0_112, %c1_113, %c1_114, %c0_115] : memref<2x18x18x128xf32, #tpu.memory_space<vmem>>, vector<2x16x16x128xf32>
    %94 = vector.shape_cast %93 : vector<2x16x16x128xf32> to vector<512x128xf32>
    %95 = arith.truncf %94 : vector<512x128xf32> to vector<512x128xbf16>
    %c0_116 = arith.constant 0 : index
    %c512_117 = arith.constant 512 : index
    %96 = vector.load %arg9[%c0_116, %c512_117] : memref<512x1152xbf16, #tpu.memory_space<vmem>>, vector<512x128xbf16>
    tpu.vector_store %arg9[%c0_116, %c512_117], %95 {strides = array<i32>} : memref<512x1152xbf16, #tpu.memory_space<vmem>>, vector<512x128xbf16>,
    %c0_118 = arith.constant 0 : index
    %c1_119 = arith.constant 1 : index
    %c2_120 = arith.constant 2 : index
    %c0_121 = arith.constant 0 : index
    %97 = vector.load %arg8[%c0_118, %c1_119, %c2_120, %c0_121] : memref<2x18x18x128xf32, #tpu.memory_space<vmem>>, vector<2x16x16x128xf32>
    %98 = vector.shape_cast %97 : vector<2x16x16x128xf32> to vector<512x128xf32>
    %99 = arith.truncf %98 : vector<512x128xf32> to vector<512x128xbf16>
    %c0_122 = arith.constant 0 : index
    %c640_123 = arith.constant 640 : index
    %100 = vector.load %arg9[%c0_122, %c640_123] : memref<512x1152xbf16, #tpu.memory_space<vmem>>, vector<512x128xbf16>
    tpu.vector_store %arg9[%c0_122, %c640_123], %99 {strides = array<i32>} : memref<512x1152xbf16, #tpu.memory_space<vmem>>, vector<512x128xbf16>,
    %c0_124 = arith.constant 0 : index
    %c2_125 = arith.constant 2 : index
    %c0_126 = arith.constant 0 : index
    %c0_127 = arith.constant 0 : index
    %101 = vector.load %arg8[%c0_124, %c2_125, %c0_126, %c0_127] : memref<2x18x18x128xf32, #tpu.memory_space<vmem>>, vector<2x16x16x128xf32>
    %102 = vector.shape_cast %101 : vector<2x16x16x128xf32> to vector<512x128xf32>
    %103 = arith.truncf %102 : vector<512x128xf32> to vector<512x128xbf16>
    %c0_128 = arith.constant 0 : index
    %c768_129 = arith.constant 768 : index
    %104 = vector.load %arg9[%c0_128, %c768_129] : memref<512x1152xbf16, #tpu.memory_space<vmem>>, vector<512x128xbf16>
    tpu.vector_store %arg9[%c0_128, %c768_129], %103 {strides = array<i32>} : memref<512x1152xbf16, #tpu.memory_space<vmem>>, vector<512x128xbf16>,
    %c0_130 = arith.constant 0 : index
    %c2_131 = arith.constant 2 : index
    %c1_132 = arith.constant 1 : index
    %c0_133 = arith.constant 0 : index
    %105 = vector.load %arg8[%c0_130, %c2_131, %c1_132, %c0_133] : memref<2x18x18x128xf32, #tpu.memory_space<vmem>>, vector<2x16x16x128xf32>
    %106 = vector.shape_cast %105 : vector<2x16x16x128xf32> to vector<512x128xf32>
    %107 = arith.truncf %106 : vector<512x128xf32> to vector<512x128xbf16>
    %c0_134 = arith.constant 0 : index
    %c896_135 = arith.constant 896 : index
    %108 = vector.load %arg9[%c0_134, %c896_135] : memref<512x1152xbf16, #tpu.memory_space<vmem>>, vector<512x128xbf16>
    tpu.vector_store %arg9[%c0_134, %c896_135], %107 {strides = array<i32>} : memref<512x1152xbf16, #tpu.memory_space<vmem>>, vector<512x128xbf16>,
    %c0_136 = arith.constant 0 : index
    %c2_137 = arith.constant 2 : index
    %c2_138 = arith.constant 2 : index
    %c0_139 = arith.constant 0 : index
    %109 = vector.load %arg8[%c0_136, %c2_137, %c2_138, %c0_139] : memref<2x18x18x128xf32, #tpu.memory_space<vmem>>, vector<2x16x16x128xf32>
    %110 = vector.shape_cast %109 : vector<2x16x16x128xf32> to vector<512x128xf32>
    %111 = arith.truncf %110 : vector<512x128xf32> to vector<512x128xbf16>
    %c0_140 = arith.constant 0 : index
    %c1024_141 = arith.constant 1024 : index
    %112 = vector.load %arg9[%c0_140, %c1024_141] : memref<512x1152xbf16, #tpu.memory_space<vmem>>, vector<512x128xbf16>
    tpu.vector_store %arg9[%c0_140, %c1024_141], %111 {strides = array<i32>} : memref<512x1152xbf16, #tpu.memory_space<vmem>>, vector<512x128xbf16>,
    %c0_142 = arith.constant 0 : index
    %c0_143 = arith.constant 0 : index
    %113 = vector.load %arg9[%c0_142, %c0_143] : memref<512x1152xbf16, #tpu.memory_space<vmem>>, vector<512x1152xbf16>
    %c0_144 = arith.constant 0 : index
    %c0_145 = arith.constant 0 : index
    %114 = vector.load %arg2[%c0_144, %c0_145] : memref<1152x128xbf16, #tpu.memory_space<vmem>>, vector<1152x128xbf16>
    %cst_146 = arith.constant dense<0.000000e+00> : vector<512x128xf32>
    %115 = tpu.matmul %113, %114, %cst_146 {dimension_numbers = #tpu.dot_dimension_numbers<[1], [0], [0], [1], [0, 0, 1, 1], [], []>} : vector<512x1152xbf16>, vector<1152x128xbf16>, vector<512x128xf32> -> vector<512x128xf32>
    %cst_147 = arith.constant dense<0.000000e+00> : vector<128xf32>
    %116 = vector.multi_reduction <add>, %115, %cst_147 [0] : vector<512x128xf32> to vector<128xf32>
    %117 = vector.shape_cast %116 : vector<128xf32> to vector<1x128xf32>
    %cst_148 = arith.constant 5.120000e+02 : f32
    %118 = vector.broadcast %cst_148 : f32 to vector<1x128xf32>
    %119 = arith.divf %117, %118 : vector<1x128xf32>
    %120 = vector.broadcast %119 : vector<1x128xf32> to vector<512x128xf32>
    %121 = arith.subf %115, %120 : vector<512x128xf32>
    %122 = arith.mulf %121, %121 : vector<512x128xf32>
    %cst_149 = arith.constant dense<0.000000e+00> : vector<128xf32>
    %123 = vector.multi_reduction <add>, %122, %cst_149 [0] : vector<512x128xf32> to vector<128xf32>
    %124 = vector.shape_cast %123 : vector<128xf32> to vector<1x128xf32>
    %cst_150 = arith.constant 5.120000e+02 : f32
    %125 = vector.broadcast %cst_150 : f32 to vector<1x128xf32>
    %126 = arith.divf %124, %125 : vector<1x128xf32>
    %127 = vector.broadcast %119 : vector<1x128xf32> to vector<512x128xf32>
    %128 = arith.subf %115, %127 : vector<512x128xf32>
    %cst_151 = arith.constant 9.99999974E-6 : f32
    %129 = vector.broadcast %cst_151 : f32 to vector<1x128xf32>
    %130 = arith.addf %126, %129 : vector<1x128xf32>
    %131 = math.rsqrt %130 : vector<1x128xf32>
    %132 = vector.broadcast %131 : vector<1x128xf32> to vector<512x128xf32>
    %133 = arith.mulf %128, %132 : vector<512x128xf32>
    %c0_152 = arith.constant 0 : index
    %c0_153 = arith.constant 0 : index
    %134 = vector.load %arg5[%c0_152, %c0_153] : memref<1x128xf32, #tpu.memory_space<vmem>>, vector<1x128xf32>
    %135 = vector.broadcast %134 : vector<1x128xf32> to vector<512x128xf32>
    %136 = arith.mulf %133, %135 : vector<512x128xf32>
    %c0_154 = arith.constant 0 : index
    %c0_155 = arith.constant 0 : index
    %137 = vector.load %arg6[%c0_154, %c0_155] : memref<1x128xf32, #tpu.memory_space<vmem>>, vector<1x128xf32>
    %138 = vector.broadcast %137 : vector<1x128xf32> to vector<512x128xf32>
    %139 = arith.addf %136, %138 : vector<512x128xf32>
    %c0_156 = arith.constant 0 : index
    %c0_157 = arith.constant 0 : index
    %c0_158 = arith.constant 0 : index
    %c0_159 = arith.constant 0 : index
    %140 = vector.load %arg0[%c0_156, %c0_157, %c0_158, %c0_159] : memref<2x16x16x128xf32, #tpu.memory_space<vmem>>, vector<2x16x16x128xf32>
    %141 = vector.shape_cast %140 : vector<2x16x16x128xf32> to vector<512x128xf32>
    %142 = arith.addf %139, %141 : vector<512x128xf32>
    %cst_160 = arith.constant 0.000000e+00 : f32
    %143 = vector.broadcast %cst_160 : f32 to vector<512x128xf32>
    %144 = arith.maximumf %142, %143 : vector<512x128xf32>
    %c0_161 = arith.constant 0 : index
    %c0_162 = arith.constant 0 : index
    %145 = vector.load %arg7[%c0_161, %c0_162] : memref<512x128xf32, #tpu.memory_space<vmem>>, vector<512x128xf32>
    tpu.vector_store %arg7[%c0_161, %c0_162], %144 {strides = array<i32>} : memref<512x128xf32, #tpu.memory_space<vmem>>, vector<512x128xf32>,
    return
  }
}

</mosaic_0001>

<llo_original>
// kernel: residual_block_forward.1
$region0: #{residual_block_forward.1}
  #allocation0 [shape = 'u32[]', space=smem, size = 0x4, offset = 0x4, fixed_abs, tag = 'smem constant byte address 0x4 - core index']
  #allocation1 [shape = 'u32[144,128]{1,0:T(1,128)}', space=vmem, size = 0x12000, scoped, tag = 'internal scratch']
  #allocation2 [shape = 'f32[2,18,18,128]{3,2,1,0:T(8,128)}', space=vmem, size = 0x6c000, scoped, tag = 'scratch operand']
  #allocation3 [shape = 'bf16[512,1152]{1,0:T(16,128)(2,1)}', space=vmem, size = 0x120000, scoped, tag = 'scratch operand']
  %s0 = inlined_call_operand.vmem [shape: f32[2,16,16,128], index: 0, kind: input, shape index: {}]
  %s1 = inlined_call_operand.vmem [shape: bf16[1152,128], index: 1, kind: input, shape index: {}]
  %s2 = inlined_call_operand.vmem [shape: bf16[1152,128], index: 2, kind: input, shape index: {}]
  %s3 = inlined_call_operand.vmem [shape: f32[1,128], index: 3, kind: input, shape index: {}]
  %s4 = inlined_call_operand.vmem [shape: f32[1,128], index: 4, kind: input, shape index: {}]
  %s5 = inlined_call_operand.vmem [shape: f32[1,128], index: 5, kind: input, shape index: {}]
  %s6 = inlined_call_operand.vmem [shape: f32[1,128], index: 6, kind: input, shape index: {}]
  %s7 = inlined_call_operand.vmem [shape: f32[512,128], index: 7, kind: output, shape index: {}]
  %s8 = sld [smem:[#allocation0]]
  $region38: #{residual_block_forward.1} parent=0
    _
  %s10 = ssub.s32 1, %s8
  %s11 = scalar_select 0, %s10, %s8
  // Predicated region
  $region2: #{residual_block_forward.1} parent=0 // pred_check
    _
  $region3: #{residual_block_forward.1} parent=0 // pred_check_branch
    %13 = sbr.rel (0) target = $region5
  $region4: #{residual_block_forward.1} parent=0 // pred_region
    _
  $region5: #{residual_block_forward.1} parent=0 // pred_fallthru
    _
  // Predicated region
  $region6: #{residual_block_forward.1} parent=0 // pred_check
    _
  $region7: #{residual_block_forward.1} parent=0 // pred_check_branch
    %15 = sbr.rel (0) target = $region9
  $region8: #{residual_block_forward.1} parent=0 // pred_region
    _
  $region9: #{residual_block_forward.1} parent=0 // pred_fallthru
    _
  // Predicated region
  $region10: #{residual_block_forward.1} parent=0 // pred_check
    _
  $region11: #{residual_block_forward.1} parent=0 // pred_check_branch
    %17 = sbr.rel (0) target = $region13
  $region12: #{residual_block_forward.1} parent=0 // pred_region
    _
  $region13: #{residual_block_forward.1} parent=0 // pred_fallthru
    _
  // Predicated region
  $region14: #{residual_block_forward.1} parent=0 // pred_check
    _
  $region15: #{residual_block_forward.1} parent=0 // pred_check_branch
    %19 = sbr.rel (0) target = $region17
  $region16: #{residual_block_forward.1} parent=0 // pred_region
    _
  $region17: #{residual_block_forward.1} parent=0 // pred_fallthru
    _
  // Predicated region
  $region18: #{residual_block_forward.1} parent=0 // pred_check
    _
  $region19: #{residual_block_forward.1} parent=0 // pred_check_branch
    %21 = sbr.rel (0) target = $region21
  $region20: #{residual_block_forward.1} parent=0 // pred_region
    _
  $region21: #{residual_block_forward.1} parent=0 // pred_fallthru
    _
  // Predicated region
  $region22: #{residual_block_forward.1} parent=0 // pred_check
    _
  $region23: #{residual_block_forward.1} parent=0 // pred_check_branch
    %23 = sbr.rel (0) target = $region25
  $region24: #{residual_block_forward.1} parent=0 // pred_region
    _
  $region25: #{residual_block_forward.1} parent=0 // pred_fallthru
    _
  // Predicated region
  $region26: #{residual_block_forward.1} parent=0 // pred_check
    _
  $region27: #{residual_block_forward.1} parent=0 // pred_check_branch
    %25 = sbr.rel (0) target = $region29
  $region28: #{residual_block_forward.1} parent=0 // pred_region
    _
  $region29: #{residual_block_forward.1} parent=0 // pred_fallthru
    _
  %27 = vst [vmem:[#allocation2] sm:$0xff] 0.0
  %28 = vst [vmem:[#allocation2 + $0x8] sm:$0xff] 0.0
  %29 = vst [vmem:[#allocation2 + $0x10] sm:$0x3] 0.0
  %30 = vst [vmem:[#allocation2 + $0x1b0] sm:$0xff] 0.0
  %31 = vst [vmem:[#allocation2 + $0x1b8] sm:$0xff] 0.0
  %32 = vst [vmem:[#allocation2 + $0x1c0] sm:$0x3] 0.0
  %s33 = scalar_lea.vmem [#allocation2], 408
  %34 = vst [vmem:[%s33] sm:$0xff] 0.0
  %35 = vst [vmem:[%s33 + $0x8] sm:$0xff] 0.0
  %36 = vst [vmem:[%s33 + $0x10] sm:$0x3] 0.0
  %37 = vst [vmem:[%s33 + $0x1b0] sm:$0xff] 0.0
  %38 = vst [vmem:[%s33 + $0x1b8] sm:$0xff] 0.0
  %39 = vst [vmem:[%s33 + $0x1c0] sm:$0x3] 0.0
  %s40 = scalar_lea.vmem [#allocation2], 24
  %41 = vst [vmem:[%s40] sm:$0x1] 0.0
  %42 = vst [vmem:[%s40 + $0x18] sm:$0x1] 0.0
  %43 = vst [vmem:[%s40 + $0x30] sm:$0x1] 0.0
  %44 = vst [vmem:[%s40 + $0x48] sm:$0x1] 0.0
  %45 = vst [vmem:[%s40 + $0x60] sm:$0x1] 0.0
  %46 = vst [vmem:[%s40 + $0x78] sm:$0x1] 0.0
  %47 = vst [vmem:[%s40 + $0x90] sm:$0x1] 0.0
  %48 = vst [vmem:[%s40 + $0xa8] sm:$0x1] 0.0
  %49 = vst [vmem:[%s40 + $0xc0] sm:$0x1] 0.0
  %50 = vst [vmem:[%s40 + $0xd8] sm:$0x1] 0.0
  %51 = vst [vmem:[%s40 + $0xf0] sm:$0x1] 0.0
  %52 = vst [vmem:[%s40 + $0x108] sm:$0x1] 0.0
  %53 = vst [vmem:[%s40 + $0x120] sm:$0x1] 0.0
  %54 = vst [vmem:[%s40 + $0x138] sm:$0x1] 0.0
  %55 = vst [vmem:[%s40 + $0x150] sm:$0x1] 0.0
  %56 = vst [vmem:[%s40 + $0x168] sm:$0x1] 0.0
  %57 = vst [vmem:[%s40 + $0x1b0] sm:$0x1] 0.0
  %58 = vst [vmem:[%s40 + $0x1c8] sm:$0x1] 0.0
  %59 = vst [vmem:[%s40 + $0x1e0] sm:$0x1] 0.0
  %60 = vst [vmem:[%s40 + $0x1f8] sm:$0x1] 0.0
  %61 = vst [vmem:[%s40 + $0x210] sm:$0x1] 0.0
  %62 = vst [vmem:[%s40 + $0x228] sm:$0x1] 0.0
  %63 = vst [vmem:[%s40 + $0x240] sm:$0x1] 0.0
  %64 = vst [vmem:[%s40 + $0x258] sm:$0x1] 0.0
  %65 = vst [vmem:[%s40 + $0x270] sm:$0x1] 0.0
  %66 = vst [vmem:[%s40 + $0x288] sm:$0x1] 0.0
  %67 = vst [vmem:[%s40 + $0x2a0] sm:$0x1] 0.0
  %68 = vst [vmem:[%s40 + $0x2b8] sm:$0x1] 0.0
  %69 = vst [vmem:[%s40 + $0x2d0] sm:$0x1] 0.0
  %70 = vst [vmem:[%s40 + $0x2e8] sm:$0x1] 0.0
  %71 = vst [vmem:[%s40 + $0x300] sm:$0x1] 0.0
  %72 = vst [vmem:[%s40 + $0x318] sm:$0x1] 0.0
  %73 = vst [vmem:[%s40 + $0x11] sm:$0x1] 0.0
  %74 = vst [vmem:[%s40 + $0x29] sm:$0x1] 0.0
  %75 = vst [vmem:[%s40 + $0x41] sm:$0x1] 0.0
  %76 = vst [vmem:[%s40 + $0x59] sm:$0x1] 0.0
  %77 = vst [vmem:[%s40 + $0x71] sm:$0x1] 0.0
  %78 = vst [vmem:[%s40 + $0x89] sm:$0x1] 0.0
  %79 = vst [vmem:[%s40 + $0xa1] sm:$0x1] 0.0
  %80 = vst [vmem:[%s40 + $0xb9] sm:$0x1] 0.0
  %81 = vst [vmem:[%s40 + $0xd1] sm:$0x1] 0.0
  %82 = vst [vmem:[%s40 + $0xe9] sm:$0x1] 0.0
  %83 = vst [vmem:[%s40 + $0x101] sm:$0x1] 0.0
  %84 = vst [vmem:[%s40 + $0x119] sm:$0x1] 0.0
  %85 = vst [vmem:[%s40 + $0x131] sm:$0x1] 0.0
  %86 = vst [vmem:[%s40 + $0x149] sm:$0x1] 0.0
  %87 = vst [vmem:[%s40 + $0x161] sm:$0x1] 0.0
  %88 = vst [vmem:[%s40 + $0x179] sm:$0x1] 0.0
  %89 = vst [vmem:[%s40 + $0x1c1] sm:$0x1] 0.0
  %90 = vst [vmem:[%s40 + $0x1d9] sm:$0x1] 0.0
  %91 = vst [vmem:[%s40 + $0x1f1] sm:$0x1] 0.0
  %92 = vst [vmem:[%s40 + $0x209] sm:$0x1] 0.0
  %93 = vst [vmem:[%s40 + $0x221] sm:$0x1] 0.0
  %94 = vst [vmem:[%s40 + $0x239] sm:$0x1] 0.0
  %95 = vst [vmem:[%s40 + $0x251] sm:$0x1] 0.0
  %96 = vst [vmem:[%s40 + $0x269] sm:$0x1] 0.0
  %97 = vst [vmem:[%s40 + $0x281] sm:$0x1] 0.0
  %98 = vst [vmem:[%s40 + $0x299] sm:$0x1] 0.0
  %99 = vst [vmem:[%s40 + $0x2b1] sm:$0x1] 0.0
  %100 = vst [vmem:[%s40 + $0x2c9] sm:$0x1] 0.0
  %101 = vst [vmem:[%s40 + $0x2e1] sm:$0x1] 0.0
  %102 = vst [vmem:[%s40 + $0x2f9] sm:$0x1] 0.0
  %103 = vst [vmem:[%s40 + $0x311] sm:$0x1] 0.0
  %104 = vst [vmem:[%s40 + $0x329] sm:$0x1] 0.0
  %v105 = vld [vmem:[%s0] sm:$0xff]
  %v106 = vld [vmem:[%s0 + $0x8] sm:$0xff]
  %v107 = vld [vmem:[%s0 + $0x10] sm:$0xff]
  %v108 = vld [vmem:[%s0 + $0x18] sm:$0xff]
  %v109 = vld [vmem:[%s0 + $0x20] sm:$0xff]
  %v110 = vld [vmem:[%s0 + $0x28] sm:$0xff]
  %v111 = vld [vmem:[%s0 + $0x30] sm:$0xff]
  %v112 = vld [vmem:[%s0 + $0x38] sm:$0xff]
  %v113 = vld [vmem:[%s0 + $0x40] sm:$0xff]
  %v114 = vld [vmem:[%s0 + $0x48] sm:$0xff]
  %v115 = vld [vmem:[%s0 + $0x50] sm:$0xff]
  %v116 = vld [vmem:[%s0 + $0x58] sm:$0xff]
  %v117 = vld [vmem:[%s0 + $0x60] sm:$0xff]
  %v118 = vld [vmem:[%s0 + $0x68] sm:$0xff]
  %v119 = vld [vmem:[%s0 + $0x70] sm:$0xff]
  %v120 = vld [vmem:[%s0 + $0x78] sm:$0xff]
  %v121 = vld [vmem:[%s0 + $0x80] sm:$0xff]
  %v122 = vld [vmem:[%s0 + $0x88] sm:$0xff]
  %v123 = vld [vmem:[%s0 + $0x90] sm:$0xff]
  %v124 = vld [vmem:[%s0 + $0x98] sm:$0xff]
  %v125 = vld [vmem:[%s0 + $0xa0] sm:$0xff]
  %v126 = vld [vmem:[%s0 + $0xa8] sm:$0xff]
  %v127 = vld [vmem:[%s0 + $0xb0] sm:$0xff]
  %v128 = vld [vmem:[%s0 + $0xb8] sm:$0xff]
  %v129 = vld [vmem:[%s0 + $0xc0] sm:$0xff]
  %v130 = vld [vmem:[%s0 + $0xc8] sm:$0xff]
  %v131 = vld [vmem:[%s0 + $0xd0] sm:$0xff]
  %v132 = vld [vmem:[%s0 + $0xd8] sm:$0xff]
  %v133 = vld [vmem:[%s0 + $0xe0] sm:$0xff]
  %v134 = vld [vmem:[%s0 + $0xe8] sm:$0xff]
  %v135 = vld [vmem:[%s0 + $0xf0] sm:$0xff]
  %v136 = vld [vmem:[%s0 + $0xf8] sm:$0xff]
  %v137 = vld [vmem:[%s0 + $0x100] sm:$0xff]
  %v138 = vld [vmem:[%s0 + $0x108] sm:$0xff]
  %v139 = vld [vmem:[%s0 + $0x110] sm:$0xff]
  %v140 = vld [vmem:[%s0 + $0x118] sm:$0xff]
  %v141 = vld [vmem:[%s0 + $0x120] sm:$0xff]
  %v142 = vld [vmem:[%s0 + $0x128] sm:$0xff]
  %v143 = vld [vmem:[%s0 + $0x130] sm:$0xff]
  %v144 = vld [vmem:[%s0 + $0x138] sm:$0xff]
  %v145 = vld [vmem:[%s0 + $0x140] sm:$0xff]
  %v146 = vld [vmem:[%s0 + $0x148] sm:$0xff]
  %v147 = vld [vmem:[%s0 + $0x150] sm:$0xff]
  %v148 = vld [vmem:[%s0 + $0x158] sm:$0xff]
  %v149 = vld [vmem:[%s0 + $0x160] sm:$0xff]
  %v150 = vld [vmem:[%s0 + $0x168] sm:$0xff]
  %v151 = vld [vmem:[%s0 + $0x170] sm:$0xff]
  %v152 = vld [vmem:[%s0 + $0x178] sm:$0xff]
  %v153 = vld [vmem:[%s0 + $0x180] sm:$0xff]
  %v154 = vld [vmem:[%s0 + $0x188] sm:$0xff]
  %v155 = vld [vmem:[%s0 + $0x190] sm:$0xff]
  %v156 = vld [vmem:[%s0 + $0x198] sm:$0xff]
  %v157 = vld [vmem:[%s0 + $0x1a0] sm:$0xff]
  %v158 = vld [vmem:[%s0 + $0x1a8] sm:$0xff]
  %v159 = vld [vmem:[%s0 + $0x1b0] sm:$0xff]
  %v160 = vld [vmem:[%s0 + $0x1b8] sm:$0xff]
  %v161 = vld [vmem:[%s0 + $0x1c0] sm:$0xff]
  %v162 = vld [vmem:[%s0 + $0x1c8] sm:$0xff]
  %v163 = vld [vmem:[%s0 + $0x1d0] sm:$0xff]
  %v164 = vld [vmem:[%s0 + $0x1d8] sm:$0xff]
  %v165 = vld [vmem:[%s0 + $0x1e0] sm:$0xff]
  %v166 = vld [vmem:[%s0 + $0x1e8] sm:$0xff]
  %v167 = vld [vmem:[%s0 + $0x1f0] sm:$0xff]
  %v168 = vld [vmem:[%s0 + $0x1f8] sm:$0xff]
  %169 = vst [vmem:[%s40 + $0x1] sm:$0xff] %v105
  %170 = vst [vmem:[%s40 + $0x9] sm:$0xff] %v106
  %171 = vst [vmem:[%s40 + $0x19] sm:$0xff] %v107
  %172 = vst [vmem:[%s40 + $0x21] sm:$0xff] %v108
  %173 = vst [vmem:[%s40 + $0x31] sm:$0xff] %v109
  %174 = vst [vmem:[%s40 + $0x39] sm:$0xff] %v110
  %175 = vst [vmem:[%s40 + $0x49] sm:$0xff] %v111
  %176 = vst [vmem:[%s40 + $0x51] sm:$0xff] %v112
  %177 = vst [vmem:[%s40 + $0x61] sm:$0xff] %v113
  %178 = vst [vmem:[%s40 + $0x69] sm:$0xff] %v114
  %179 = vst [vmem:[%s40 + $0x79] sm:$0xff] %v115
  %180 = vst [vmem:[%s40 + $0x81] sm:$0xff] %v116
  %181 = vst [vmem:[%s40 + $0x91] sm:$0xff] %v117
  %182 = vst [vmem:[%s40 + $0x99] sm:$0xff] %v118
  %183 = vst [vmem:[%s40 + $0xa9] sm:$0xff] %v119
  %184 = vst [vmem:[%s40 + $0xb1] sm:$0xff] %v120
  %185 = vst [vmem:[%s40 + $0xc1] sm:$0xff] %v121
  %186 = vst [vmem:[%s40 + $0xc9] sm:$0xff] %v122
  %187 = vst [vmem:[%s40 + $0xd9] sm:$0xff] %v123
  %188 = vst [vmem:[%s40 + $0xe1] sm:$0xff] %v124
  %189 = vst [vmem:[%s40 + $0xf1] sm:$0xff] %v125
  %190 = vst [vmem:[%s40 + $0xf9] sm:$0xff] %v126
  %191 = vst [vmem:[%s40 + $0x109] sm:$0xff] %v127
  %192 = vst [vmem:[%s40 + $0x111] sm:$0xff] %v128
  %193 = vst [vmem:[%s40 + $0x121] sm:$0xff] %v129
  %194 = vst [vmem:[%s40 + $0x129] sm:$0xff] %v130
  %195 = vst [vmem:[%s40 + $0x139] sm:$0xff] %v131
  %196 = vst [vmem:[%s40 + $0x141] sm:$0xff] %v132
  %197 = vst [vmem:[%s40 + $0x151] sm:$0xff] %v133
  %198 = vst [vmem:[%s40 + $0x159] sm:$0xff] %v134
  %199 = vst [vmem:[%s40 + $0x169] sm:$0xff] %v135
  %200 = vst [vmem:[%s40 + $0x171] sm:$0xff] %v136
  %201 = vst [vmem:[%s40 + $0x1b1] sm:$0xff] %v137
  %202 = vst [vmem:[%s40 + $0x1b9] sm:$0xff] %v138
  %203 = vst [vmem:[%s40 + $0x1c9] sm:$0xff] %v139
  %204 = vst [vmem:[%s40 + $0x1d1] sm:$0xff] %v140
  %205 = vst [vmem:[%s40 + $0x1e1] sm:$0xff] %v141
  %206 = vst [vmem:[%s40 + $0x1e9] sm:$0xff] %v142
  %207 = vst [vmem:[%s40 + $0x1f9] sm:$0xff] %v143
  %208 = vst [vmem:[%s40 + $0x201] sm:$0xff] %v144
  %209 = vst [vmem:[%s40 + $0x211] sm:$0xff] %v145
  %210 = vst [vmem:[%s40 + $0x219] sm:$0xff] %v146
  %211 = vst [vmem:[%s40 + $0x229] sm:$0xff] %v147
  %212 = vst [vmem:[%s40 + $0x231] sm:$0xff] %v148
  %213 = vst [vmem:[%s40 + $0x241] sm:$0xff] %v149
  %214 = vst [vmem:[%s40 + $0x249] sm:$0xff] %v150
  %215 = vst [vmem:[%s40 + $0x259] sm:$0xff] %v151
  %216 = vst [vmem:[%s40 + $0x261] sm:$0xff] %v152
  %217 = vst [vmem:[%s40 + $0x271] sm:$0xff] %v153
  %218 = vst [vmem:[%s40 + $0x279] sm:$0xff] %v154
  %219 = vst [vmem:[%s40 + $0x289] sm:$0xff] %v155
  %220 = vst [vmem:[%s40 + $0x291] sm:$0xff] %v156
  %221 = vst [vmem:[%s40 + $0x2a1] sm:$0xff] %v157
  %222 = vst [vmem:[%s40 + $0x2a9] sm:$0xff] %v158
  %223 = vst [vmem:[%s40 + $0x2b9] sm:$0xff] %v159
  %224 = vst [vmem:[%s40 + $0x2c1] sm:$0xff] %v160
  %225 = vst [vmem:[%s40 + $0x2d1] sm:$0xff] %v161
  %226 = vst [vmem:[%s40 + $0x2d9] sm:$0xff] %v162
  %227 = vst [vmem:[%s40 + $0x2e9] sm:$0xff] %v163
  %228 = vst [vmem:[%s40 + $0x2f1] sm:$0xff] %v164
  %229 = vst [vmem:[%s40 + $0x301] sm:$0xff] %v165
  %230 = vst [vmem:[%s40 + $0x309] sm:$0xff] %v166
  %231 = vst [vmem:[%s40 + $0x319] sm:$0xff] %v167
  %232 = vst [vmem:[%s40 + $0x321] sm:$0xff] %v168
  %v233 = vld [vmem:[#allocation2] sm:$0xff]
  %v234 = vld [vmem:[#allocation2 + $0x8] sm:$0xff]
  %v235 = vld [vmem:[#allocation2 + $0x18] sm:$0xff]
  %v236 = vld [vmem:[#allocation2 + $0x20] sm:$0xff]
  %v237 = vld [vmem:[#allocation2 + $0x30] sm:$0xff]
  %v238 = vld [vmem:[#allocation2 + $0x38] sm:$0xff]
  %v239 = vld [vmem:[#allocation2 + $0x48] sm:$0xff]
  %v240 = vld [vmem:[#allocation2 + $0x50] sm:$0xff]
  %v241 = vld [vmem:[#allocation2 + $0x60] sm:$0xff]
  %v242 = vld [vmem:[#allocation2 + $0x68] sm:$0xff]
  %v243 = vld [vmem:[#allocation2 + $0x78] sm:$0xff]
  %v244 = vld [vmem:[#allocation2 + $0x80] sm:$0xff]
  %v245 = vld [vmem:[#allocation2 + $0x90] sm:$0xff]
  %v246 = vld [vmem:[#allocation2 + $0x98] sm:$0xff]
  %v247 = vld [vmem:[#allocation2 + $0xa8] sm:$0xff]
  %v248 = vld [vmem:[#allocation2 + $0xb0] sm:$0xff]
  %v249 = vld [vmem:[#allocation2 + $0xc0] sm:$0xff]
  %v250 = vld [vmem:[#allocation2 + $0xc8] sm:$0xff]
  %v251 = vld [vmem:[#allocation2 + $0xd8] sm:$0xff]
  %v252 = vld [vmem:[#allocation2 + $0xe0] sm:$0xff]
  %v253 = vld [vmem:[#allocation2 + $0xf0] sm:$0xff]
  %v254 = vld [vmem:[#allocation2 + $0xf8] sm:$0xff]
  %v255 = vld [vmem:[#allocation2 + $0x108] sm:$0xff]
  %v256 = vld [vmem:[#allocation2 + $0x110] sm:$0xff]
  %v257 = vld [vmem:[#allocation2 + $0x120] sm:$0xff]
  %v258 = vld [vmem:[#allocation2 + $0x128] sm:$0xff]
  %v259 = vld [vmem:[#allocation2 + $0x138] sm:$0xff]
  %v260 = vld [vmem:[#allocation2 + $0x140] sm:$0xff]
  %v261 = vld [vmem:[#allocation2 + $0x150] sm:$0xff]
  %v262 = vld [vmem:[#allocation2 + $0x158] sm:$0xff]
  %v263 = vld [vmem:[#allocation2 + $0x168] sm:$0xff]
  %v264 = vld [vmem:[#allocation2 + $0x170] sm:$0xff]
  %v265 = vld [vmem:[#allocation2 + $0x1b0] sm:$0xff]
  %v266 = vld [vmem:[#allocation2 + $0x1b8] sm:$0xff]
  %v267 = vld [vmem:[#allocation2 + $0x1c8] sm:$0xff]
  %v268 = vld [vmem:[#allocation2 + $0x1d0] sm:$0xff]
  %v269 = vld [vmem:[#allocation2 + $0x1e0] sm:$0xff]
  %v270 = vld [vmem:[#allocation2 + $0x1e8] sm:$0xff]
  %v271 = vld [vmem:[#allocation2 + $0x1f8] sm:$0xff]
  %v272 = vld [vmem:[#allocation2 + $0x200] sm:$0xff]
  %v273 = vld [vmem:[#allocation2 + $0x210] sm:$0xff]
  %v274 = vld [vmem:[#allocation2 + $0x218] sm:$0xff]
  %v275 = vld [vmem:[#allocation2 + $0x228] sm:$0xff]
  %v276 = vld [vmem:[#allocation2 + $0x230] sm:$0xff]
  %v277 = vld [vmem:[#allocation2 + $0x240] sm:$0xff]
  %v278 = vld [vmem:[#allocation2 + $0x248] sm:$0xff]
  %v279 = vld [vmem:[#allocation2 + $0x258] sm:$0xff]
  %v280 = vld [vmem:[#allocation2 + $0x260] sm:$0xff]
  %v281 = vld [vmem:[#allocation2 + $0x270] sm:$0xff]
  %v282 = vld [vmem:[#allocation2 + $0x278] sm:$0xff]
  %v283 = vld [vmem:[#allocation2 + $0x288] sm:$0xff]
  %v284 = vld [vmem:[#allocation2 + $0x290] sm:$0xff]
  %v285 = vld [vmem:[#allocation2 + $0x2a0] sm:$0xff]
  %v286 = vld [vmem:[#allocation2 + $0x2a8] sm:$0xff]
  %v287 = vld [vmem:[#allocation2 + $0x2b8] sm:$0xff]
  %v288 = vld [vmem:[#allocation2 + $0x2c0] sm:$0xff]
  %v289 = vld [vmem:[#allocation2 + $0x2d0] sm:$0xff]
  %v290 = vld [vmem:[#allocation2 + $0x2d8] sm:$0xff]
  %v291 = vld [vmem:[#allocation2 + $0x2e8] sm:$0xff]
  %v292 = vld [vmem:[#allocation2 + $0x2f0] sm:$0xff]
  %v293 = vld [vmem:[#allocation2 + $0x300] sm:$0xff]
  %v294 = vld [vmem:[#allocation2 + $0x308] sm:$0xff]
  %v295 = vld [vmem:[#allocation2 + $0x318] sm:$0xff]
  %v296 = vld [vmem:[#allocation2 + $0x320] sm:$0xff]
  %v297 = vpack.c.bf16 %v234, %v233
  %v298 = vpack.c.bf16 %v236, %v235
  %v299 = vpack.c.bf16 %v238, %v237
  %v300 = vpack.c.bf16 %v240, %v239
  %v301 = vpack.c.bf16 %v242, %v241
  %v302 = vpack.c.bf16 %v244, %v243
  %v303 = vpack.c.bf16 %v246, %v245
  %v304 = vpack.c.bf16 %v248, %v247
  %v305 = vpack.c.bf16 %v250, %v249
  %v306 = vpack.c.bf16 %v252, %v251
  %v307 = vpack.c.bf16 %v254, %v253
  %v308 = vpack.c.bf16 %v256, %v255
  %v309 = vpack.c.bf16 %v258, %v257
  %v310 = vpack.c.bf16 %v260, %v259
  %v311 = vpack.c.bf16 %v262, %v261
  %v312 = vpack.c.bf16 %v264, %v263
  %v313 = vpack.c.bf16 %v266, %v265
  %v314 = vpack.c.bf16 %v268, %v267
  %v315 = vpack.c.bf16 %v270, %v269
  %v316 = vpack.c.bf16 %v272, %v271
  %v317 = vpack.c.bf16 %v274, %v273
  %v318 = vpack.c.bf16 %v276, %v275
  %v319 = vpack.c.bf16 %v278, %v277
  %v320 = vpack.c.bf16 %v280, %v279
  %v321 = vpack.c.bf16 %v282, %v281
  %v322 = vpack.c.bf16 %v284, %v283
  %v323 = vpack.c.bf16 %v286, %v285
  %v324 = vpack.c.bf16 %v288, %v287
  %v325 = vpack.c.bf16 %v290, %v289
  %v326 = vpack.c.bf16 %v292, %v291
  %v327 = vpack.c.bf16 %v294, %v293
  %v328 = vpack.c.bf16 %v296, %v295
  %329 = vst [vmem:[#allocation3] sm:$0xff] %v297
  %330 = vst [vmem:[#allocation3 + $0x48] sm:$0xff] %v298
  %331 = vst [vmem:[#allocation3 + $0x90] sm:$0xff] %v299
  %332 = vst [vmem:[#allocation3 + $0xd8] sm:$0xff] %v300
  %333 = vst [vmem:[#allocation3 + $0x120] sm:$0xff] %v301
  %334 = vst [vmem:[#allocation3 + $0x168] sm:$0xff] %v302
  %335 = vst [vmem:[#allocation3 + $0x1b0] sm:$0xff] %v303
  %336 = vst [vmem:[#allocation3 + $0x1f8] sm:$0xff] %v304
  %337 = vst [vmem:[#allocation3 + $0x240] sm:$0xff] %v305
  %338 = vst [vmem:[#allocation3 + $0x288] sm:$0xff] %v306
  %339 = vst [vmem:[#allocation3 + $0x2d0] sm:$0xff] %v307
  %340 = vst [vmem:[#allocation3 + $0x318] sm:$0xff] %v308
  %341 = vst [vmem:[#allocation3 + $0x360] sm:$0xff] %v309
  %342 = vst [vmem:[#allocation3 + $0x3a8] sm:$0xff] %v310
  %343 = vst [vmem:[#allocation3 + $0x3f0] sm:$0xff] %v311
  %344 = vst [vmem:[#allocation3 + $0x438] sm:$0xff] %v312
  %345 = vst [vmem:[#allocation3 + $0x480] sm:$0xff] %v313
  %346 = vst [vmem:[#allocation3 + $0x4c8] sm:$0xff] %v314
  %347 = vst [vmem:[#allocation3 + $0x510] sm:$0xff] %v315
  %348 = vst [vmem:[#allocation3 + $0x558] sm:$0xff] %v316
  %349 = vst [vmem:[#allocation3 + $0x5a0] sm:$0xff] %v317
  %350 = vst [vmem:[#allocation3 + $0x5e8] sm:$0xff] %v318
  %351 = vst [vmem:[#allocation3 + $0x630] sm:$0xff] %v319
  %352 = vst [vmem:[#allocation3 + $0x678] sm:$0xff] %v320
  %353 = vst [vmem:[#allocation3 + $0x6c0] sm:$0xff] %v321
  %354 = vst [vmem:[#allocation3 + $0x708] sm:$0xff] %v322
  %355 = vst [vmem:[#allocation3 + $0x750] sm:$0xff] %v323
  %356 = vst [vmem:[#allocation3 + $0x798] sm:$0xff] %v324
  %357 = vst [vmem:[#allocation3 + $0x7e0] sm:$0xff] %v325
  %358 = vst [vmem:[#allocation3 + $0x828] sm:$0xff] %v326
  %359 = vst [vmem:[#allocation3 + $0x870] sm:$0xff] %v327
  %360 = vst [vmem:[#allocation3 + $0x8b8] sm:$0xff] %v328
  %v361 = vld [vmem:[#allocation2 + $0x1] sm:$0xff]
  %v362 = vld [vmem:[#allocation2 + $0x9] sm:$0xff]
  %v363 = vld [vmem:[#allocation2 + $0x19] sm:$0xff]
  %v364 = vld [vmem:[#allocation2 + $0x21] sm:$0xff]
  %v365 = vld [vmem:[#allocation2 + $0x31] sm:$0xff]
  %v366 = vld [vmem:[#allocation2 + $0x39] sm:$0xff]
  %v367 = vld [vmem:[#allocation2 + $0x49] sm:$0xff]
  %v368 = vld [vmem:[#allocation2 + $0x51] sm:$0xff]
  %v369 = vld [vmem:[#allocation2 + $0x61] sm:$0xff]
  %v370 = vld [vmem:[#allocation2 + $0x69] sm:$0xff]
  %v371 = vld [vmem:[#allocation2 + $0x79] sm:$0xff]
  %v372 = vld [vmem:[#allocation2 + $0x81] sm:$0xff]
  %v373 = vld [vmem:[#allocation2 + $0x91] sm:$0xff]
  %v374 = vld [vmem:[#allocation2 + $0x99] sm:$0xff]
  %v375 = vld [vmem:[#allocation2 + $0xa9] sm:$0xff]
  %v376 = vld [vmem:[#allocation2 + $0xb1] sm:$0xff]
  %v377 = vld [vmem:[#allocation2 + $0xc1] sm:$0xff]
  %v378 = vld [vmem:[#allocation2 + $0xc9] sm:$0xff]
  %v379 = vld [vmem:[#allocation2 + $0xd9] sm:$0xff]
  %v380 = vld [vmem:[#allocation2 + $0xe1] sm:$0xff]
  %v381 = vld [vmem:[#allocation2 + $0xf1] sm:$0xff]
  %v382 = vld [vmem:[#allocation2 + $0xf9] sm:$0xff]
  %v383 = vld [vmem:[#allocation2 + $0x109] sm:$0xff]
  %v384 = vld [vmem:[#allocation2 + $0x111] sm:$0xff]
  %v385 = vld [vmem:[#allocation2 + $0x121] sm:$0xff]
  %v386 = vld [vmem:[#allocation2 + $0x129] sm:$0xff]
  %v387 = vld [vmem:[#allocation2 + $0x139] sm:$0xff]
  %v388 = vld [vmem:[#allocation2 + $0x141] sm:$0xff]
  %v389 = vld [vmem:[#allocation2 + $0x151] sm:$0xff]
  %v390 = vld [vmem:[#allocation2 + $0x159] sm:$0xff]
  %v391 = vld [vmem:[#allocation2 + $0x169] sm:$0xff]
  %v392 = vld [vmem:[#allocation2 + $0x171] sm:$0xff]
  %v393 = vld [vmem:[#allocation2 + $0x1b1] sm:$0xff]
  %v394 = vld [vmem:[#allocation2 + $0x1b9] sm:$0xff]
  %v395 = vld [vmem:[#allocation2 + $0x1c9] sm:$0xff]
  %v396 = vld [vmem:[#allocation2 + $0x1d1] sm:$0xff]
  %v397 = vld [vmem:[#allocation2 + $0x1e1] sm:$0xff]
  %v398 = vld [vmem:[#allocation2 + $0x1e9] sm:$0xff]
  %v399 = vld [vmem:[#allocation2 + $0x1f9] sm:$0xff]
  %v400 = vld [vmem:[#allocation2 + $0x201] sm:$0xff]
  %v401 = vld [vmem:[#allocation2 + $0x211] sm:$0xff]
  %v402 = vld [vmem:[#allocation2 + $0x219] sm:$0xff]
  %v403 = vld [vmem:[#allocation2 + $0x229] sm:$0xff]
  %v404 = vld [vmem:[#allocation2 + $0x231] sm:$0xff]
  %v405 = vld [vmem:[#allocation2 + $0x241] sm:$0xff]
  %v406 = vld [vmem:[#allocation2 + $0x249] sm:$0xff]
  %v407 = vld [vmem:[#allocation2 + $0x259] sm:$0xff]
  %v408 = vld [vmem:[#allocation2 + $0x261] sm:$0xff]
  %v409 = vld [vmem:[#allocation2 + $0x271] sm:$0xff]
  %v410 = vld [vmem:[#allocation2 + $0x279] sm:$0xff]
  %v411 = vld [vmem:[#allocation2 + $0x289] sm:$0xff]
  %v412 = vld [vmem:[#allocation2 + $0x291] sm:$0xff]
  %v413 = vld [vmem:[#allocation2 + $0x2a1] sm:$0xff]
  %v414 = vld [vmem:[#allocation2 + $0x2a9] sm:$0xff]
  %v415 = vld [vmem:[#allocation2 + $0x2b9] sm:$0xff]
  %v416 = vld [vmem:[#allocation2 + $0x2c1] sm:$0xff]
  %v417 = vld [vmem:[#allocation2 + $0x2d1] sm:$0xff]
  %v418 = vld [vmem:[#allocation2 + $0x2d9] sm:$0xff]
  %v419 = vld [vmem:[#allocation2 + $0x2e9] sm:$0xff]
  %v420 = vld [vmem:[#allocation2 + $0x2f1] sm:$0xff]
  %v421 = vld [vmem:[#allocation2 + $0x301] sm:$0xff]
  %v422 = vld [vmem:[#allocation2 + $0x309] sm:$0xff]
  %v423 = vld [vmem:[#allocation2 + $0x319] sm:$0xff]
  %v424 = vld [vmem:[#allocation2 + $0x321] sm:$0xff]
  %v425 = vpack.c.bf16 %v362, %v361
  %v426 = vpack.c.bf16 %v364, %v363
  %v427 = vpack.c.bf16 %v366, %v365
  %v428 = vpack.c.bf16 %v368, %v367
  %v429 = vpack.c.bf16 %v370, %v369
  %v430 = vpack.c.bf16 %v372, %v371
  %v431 = vpack.c.bf16 %v374, %v373
  %v432 = vpack.c.bf16 %v376, %v375
  %v433 = vpack.c.bf16 %v378, %v377
  %v434 = vpack.c.bf16 %v380, %v379
  %v435 = vpack.c.bf16 %v382, %v381
  %v436 = vpack.c.bf16 %v384, %v383
  %v437 = vpack.c.bf16 %v386, %v385
  %v438 = vpack.c.bf16 %v388, %v387
  %v439 = vpack.c.bf16 %v390, %v389
  %v440 = vpack.c.bf16 %v392, %v391
  %v441 = vpack.c.bf16 %v394, %v393
  %v442 = vpack.c.bf16 %v396, %v395
  %v443 = vpack.c.bf16 %v398, %v397
  %v444 = vpack.c.bf16 %v400, %v399
  %v445 = vpack.c.bf16 %v402, %v401
  %v446 = vpack.c.bf16 %v404, %v403
  %v447 = vpack.c.bf16 %v406, %v405
  %v448 = vpack.c.bf16 %v408, %v407
  %v449 = vpack.c.bf16 %v410, %v409
  %v450 = vpack.c.bf16 %v412, %v411
  %v451 = vpack.c.bf16 %v414, %v413
  %v452 = vpack.c.bf16 %v416, %v415
  %v453 = vpack.c.bf16 %v418, %v417
  %v454 = vpack.c.bf16 %v420, %v419
  %v455 = vpack.c.bf16 %v422, %v421
  %v456 = vpack.c.bf16 %v424, %v423
  %457 = vst [vmem:[#allocation3 + $0x8] sm:$0xff] %v425
  %458 = vst [vmem:[#allocation3 + $0x50] sm:$0xff] %v426
  %459 = vst [vmem:[#allocation3 + $0x98] sm:$0xff] %v427
  %460 = vst [vmem:[#allocation3 + $0xe0] sm:$0xff] %v428
  %461 = vst [vmem:[#allocation3 + $0x128] sm:$0xff] %v429
  %462 = vst [vmem:[#allocation3 + $0x170] sm:$0xff] %v430
  %463 = vst [vmem:[#allocation3 + $0x1b8] sm:$0xff] %v431
  %464 = vst [vmem:[#allocation3 + $0x200] sm:$0xff] %v432
  %465 = vst [vmem:[#allocation3 + $0x248] sm:$0xff] %v433
  %466 = vst [vmem:[#allocation3 + $0x290] sm:$0xff] %v434
  %467 = vst [vmem:[#allocation3 + $0x2d8] sm:$0xff] %v435
  %468 = vst [vmem:[#allocation3 + $0x320] sm:$0xff] %v436
  %469 = vst [vmem:[#allocation3 + $0x368] sm:$0xff] %v437
  %470 = vst [vmem:[#allocation3 + $0x3b0] sm:$0xff] %v438
  %471 = vst [vmem:[#allocation3 + $0x3f8] sm:$0xff] %v439
  %472 = vst [vmem:[#allocation3 + $0x440] sm:$0xff] %v440
  %473 = vst [vmem:[#allocation3 + $0x488] sm:$0xff] %v441
  %474 = vst [vmem:[#allocation3 + $0x4d0] sm:$0xff] %v442
  %475 = vst [vmem:[#allocation3 + $0x518] sm:$0xff] %v443
  %476 = vst [vmem:[#allocation3 + $0x560] sm:$0xff] %v444
  %477 = vst [vmem:[#allocation3 + $0x5a8] sm:$0xff] %v445
  %478 = vst [vmem:[#allocation3 + $0x5f0] sm:$0xff] %v446
  %479 = vst [vmem:[#allocation3 + $0x638] sm:$0xff] %v447
  %480 = vst [vmem:[#allocation3 + $0x680] sm:$0xff] %v448
  %481 = vst [vmem:[#allocation3 + $0x6c8] sm:$0xff] %v449
  %482 = vst [vmem:[#allocation3 + $0x710] sm:$0xff] %v450
  %483 = vst [vmem:[#allocation3 + $0x758] sm:$0xff] %v451
  %484 = vst [vmem:[#allocation3 + $0x7a0] sm:$0xff] %v452
  %485 = vst [vmem:[#allocation3 + $0x7e8] sm:$0xff] %v453
  %486 = vst [vmem:[#allocation3 + $0x830] sm:$0xff] %v454
  %487 = vst [vmem:[#allocation3 + $0x878] sm:$0xff] %v455
  %488 = vst [vmem:[#allocation3 + $0x8c0] sm:$0xff] %v456
  %v489 = vld [vmem:[#allocation2 + $0x2] sm:$0xff]
  %v490 = vld [vmem:[#allocation2 + $0xa] sm:$0xff]
  %v491 = vld [vmem:[#allocation2 + $0x1a] sm:$0xff]
  %v492 = vld [vmem:[#allocation2 + $0x22] sm:$0xff]
  %v493 = vld [vmem:[#allocation2 + $0x32] sm:$0xff]
  %v494 = vld [vmem:[#allocation2 + $0x3a] sm:$0xff]
  %v495 = vld [vmem:[#allocation2 + $0x4a] sm:$0xff]
  %v496 = vld [vmem:[#allocation2 + $0x52] sm:$0xff]
  %v497 = vld [vmem:[#allocation2 + $0x62] sm:$0xff]
  %v498 = vld [vmem:[#allocation2 + $0x6a] sm:$0xff]
  %v499 = vld [vmem:[#allocation2 + $0x7a] sm:$0xff]
  %v500 = vld [vmem:[#allocation2 + $0x82] sm:$0xff]
  %v501 = vld [vmem:[#allocation2 + $0x92] sm:$0xff]
  %v502 = vld [vmem:[#allocation2 + $0x9a] sm:$0xff]
  %v503 = vld [vmem:[#allocation2 + $0xaa] sm:$0xff]
  %v504 = vld [vmem:[#allocation2 + $0xb2] sm:$0xff]
  %v505 = vld [vmem:[#allocation2 + $0xc2] sm:$0xff]
  %v506 = vld [vmem:[#allocation2 + $0xca] sm:$0xff]
  %v507 = vld [vmem:[#allocation2 + $0xda] sm:$0xff]
  %v508 = vld [vmem:[#allocation2 + $0xe2] sm:$0xff]
  %v509 = vld [vmem:[#allocation2 + $0xf2] sm:$0xff]
  %v510 = vld [vmem:[#allocation2 + $0xfa] sm:$0xff]
  %v511 = vld [vmem:[#allocation2 + $0x10a] sm:$0xff]
  %v512 = vld [vmem:[#allocation2 + $0x112] sm:$0xff]
  %v513 = vld [vmem:[#allocation2 + $0x122] sm:$0xff]
  %v514 = vld [vmem:[#allocation2 + $0x12a] sm:$0xff]
  %v515 = vld [vmem:[#allocation2 + $0x13a] sm:$0xff]
  %v516 = vld [vmem:[#allocation2 + $0x142] sm:$0xff]
  %v517 = vld [vmem:[#allocation2 + $0x152] sm:$0xff]
  %v518 = vld [vmem:[#allocation2 + $0x15a] sm:$0xff]
  %v519 = vld [vmem:[#allocation2 + $0x16a] sm:$0xff]
  %v520 = vld [vmem:[#allocation2 + $0x172] sm:$0xff]
  %v521 = vld [vmem:[#allocation2 + $0x1b2] sm:$0xff]
  %v522 = vld [vmem:[#allocation2 + $0x1ba] sm:$0xff]
  %v523 = vld [vmem:[#allocation2 + $0x1ca] sm:$0xff]
  %v524 = vld [vmem:[#allocation2 + $0x1d2] sm:$0xff]
  %v525 = vld [vmem:[#allocation2 + $0x1e2] sm:$0xff]
  %v526 = vld [vmem:[#allocation2 + $0x1ea] sm:$0xff]
  %v527 = vld [vmem:[#allocation2 + $0x1fa] sm:$0xff]
  %v528 = vld [vmem:[#allocation2 + $0x202] sm:$0xff]
  %v529 = vld [vmem:[#allocation2 + $0x212] sm:$0xff]
  %v530 = vld [vmem:[#allocation2 + $0x21a] sm:$0xff]
  %v531 = vld [vmem:[#allocation2 + $0x22a] sm:$0xff]
  %v532 = vld [vmem:[#allocation2 + $0x232] sm:$0xff]
  %v533 = vld [vmem:[#allocation2 + $0x242] sm:$0xff]
  %v534 = vld [vmem:[#allocation2 + $0x24a] sm:$0xff]
  %v535 = vld [vmem:[#allocation2 + $0x25a] sm:$0xff]
  %v536 = vld [vmem:[#allocation2 + $0x262] sm:$0xff]
  %v537 = vld [vmem:[#allocation2 + $0x272] sm:$0xff]
  %v538 = vld [vmem:[#allocation2 + $0x27a] sm:$0xff]
  %v539 = vld [vmem:[#allocation2 + $0x28a] sm:$0xff]
  %v540 = vld [vmem:[#allocation2 + $0x292] sm:$0xff]
  %v541 = vld [vmem:[#allocation2 + $0x2a2] sm:$0xff]
  %v542 = vld [vmem:[#allocation2 + $0x2aa] sm:$0xff]
  %v543 = vld [vmem:[#allocation2 + $0x2ba] sm:$0xff]
  %v544 = vld [vmem:[#allocation2 + $0x2c2] sm:$0xff]
  %v545 = vld [vmem:[#allocation2 + $0x2d2] sm:$0xff]
  %v546 = vld [vmem:[#allocation2 + $0x2da] sm:$0xff]
  %v547 = vld [vmem:[#allocation2 + $0x2ea] sm:$0xff]
  %v548 = vld [vmem:[#allocation2 + $0x2f2] sm:$0xff]
  %v549 = vld [vmem:[#allocation2 + $0x302] sm:$0xff]
  %v550 = vld [vmem:[#allocation2 + $0x30a] sm:$0xff]
  %v551 = vld [vmem:[#allocation2 + $0x31a] sm:$0xff]
  %v552 = vld [vmem:[#allocation2 + $0x322] sm:$0xff]
  %v553 = vpack.c.bf16 %v490, %v489
  %v554 = vpack.c.bf16 %v492, %v491
  %v555 = vpack.c.bf16 %v494, %v493
  %v556 = vpack.c.bf16 %v496, %v495
  %v557 = vpack.c.bf16 %v498, %v497
  %v558 = vpack.c.bf16 %v500, %v499
  %v559 = vpack.c.bf16 %v502, %v501
  %v560 = vpack.c.bf16 %v504, %v503
  %v561 = vpack.c.bf16 %v506, %v505
  %v562 = vpack.c.bf16 %v508, %v507
  %v563 = vpack.c.bf16 %v510, %v509
  %v564 = vpack.c.bf16 %v512, %v511
  %v565 = vpack.c.bf16 %v514, %v513
  %v566 = vpack.c.bf16 %v516, %v515
  %v567 = vpack.c.bf16 %v518, %v517
  %v568 = vpack.c.bf16 %v520, %v519
  %v569 = vpack.c.bf16 %v522, %v521
  %v570 = vpack.c.bf16 %v524, %v523
  %v571 = vpack.c.bf16 %v526, %v525
  %v572 = vpack.c.bf16 %v528, %v527
  %v573 = vpack.c.bf16 %v530, %v529
  %v574 = vpack.c.bf16 %v532, %v531
  %v575 = vpack.c.bf16 %v534, %v533
  %v576 = vpack.c.bf16 %v536, %v535
  %v577 = vpack.c.bf16 %v538, %v537
  %v578 = vpack.c.bf16 %v540, %v539
  %v579 = vpack.c.bf16 %v542, %v541
  %v580 = vpack.c.bf16 %v544, %v543
  %v581 = vpack.c.bf16 %v546, %v545
  %v582 = vpack.c.bf16 %v548, %v547
  %v583 = vpack.c.bf16 %v550, %v549
  %v584 = vpack.c.bf16 %v552, %v551
  %585 = vst [vmem:[#allocation3 + $0x10] sm:$0xff] %v553
  %586 = vst [vmem:[#allocation3 + $0x58] sm:$0xff] %v554
  %587 = vst [vmem:[#allocation3 + $0xa0] sm:$0xff] %v555
  %588 = vst [vmem:[#allocation3 + $0xe8] sm:$0xff] %v556
  %589 = vst [vmem:[#allocation3 + $0x130] sm:$0xff] %v557
  %590 = vst [vmem:[#allocation3 + $0x178] sm:$0xff] %v558
  %591 = vst [vmem:[#allocation3 + $0x1c0] sm:$0xff] %v559
  %592 = vst [vmem:[#allocation3 + $0x208] sm:$0xff] %v560
  %593 = vst [vmem:[#allocation3 + $0x250] sm:$0xff] %v561
  %594 = vst [vmem:[#allocation3 + $0x298] sm:$0xff] %v562
  %595 = vst [vmem:[#allocation3 + $0x2e0] sm:$0xff] %v563
  %596 = vst [vmem:[#allocation3 + $0x328] sm:$0xff] %v564
  %597 = vst [vmem:[#allocation3 + $0x370] sm:$0xff] %v565
  %598 = vst [vmem:[#allocation3 + $0x3b8] sm:$0xff] %v566
  %599 = vst [vmem:[#allocation3 + $0x400] sm:$0xff] %v567
  %600 = vst [vmem:[#allocation3 + $0x448] sm:$0xff] %v568
  %601 = vst [vmem:[#allocation3 + $0x490] sm:$0xff] %v569
  %602 = vst [vmem:[#allocation3 + $0x4d8] sm:$0xff] %v570
  %603 = vst [vmem:[#allocation3 + $0x520] sm:$0xff] %v571
  %604 = vst [vmem:[#allocation3 + $0x568] sm:$0xff] %v572
  %605 = vst [vmem:[#allocation3 + $0x5b0] sm:$0xff] %v573
  %606 = vst [vmem:[#allocation3 + $0x5f8] sm:$0xff] %v574
  %607 = vst [vmem:[#allocation3 + $0x640] sm:$0xff] %v575
  %608 = vst [vmem:[#allocation3 + $0x688] sm:$0xff] %v576
  %609 = vst [vmem:[#allocation3 + $0x6d0] sm:$0xff] %v577
  %610 = vst [vmem:[#allocation3 + $0x718] sm:$0xff] %v578
  %611 = vst [vmem:[#allocation3 + $0x760] sm:$0xff] %v579
  %612 = vst [vmem:[#allocation3 + $0x7a8] sm:$0xff] %v580
  %613 = vst [vmem:[#allocation3 + $0x7f0] sm:$0xff] %v581
  %614 = vst [vmem:[#allocation3 + $0x838] sm:$0xff] %v582
  %615 = vst [vmem:[#allocation3 + $0x880] sm:$0xff] %v583
  %616 = vst [vmem:[#allocation3 + $0x8c8] sm:$0xff] %v584
  %v617 = vld [vmem:[%s40] sm:$0xff]
  %v618 = vld [vmem:[%s40 + $0x8] sm:$0xff]
  %v619 = vld [vmem:[%s40 + $0x18] sm:$0xff]
  %v620 = vld [vmem:[%s40 + $0x20] sm:$0xff]
  %v621 = vld [vmem:[%s40 + $0x30] sm:$0xff]
  %v622 = vld [vmem:[%s40 + $0x38] sm:$0xff]
  %v623 = vld [vmem:[%s40 + $0x48] sm:$0xff]
  %v624 = vld [vmem:[%s40 + $0x50] sm:$0xff]
  %v625 = vld [vmem:[%s40 + $0x60] sm:$0xff]
  %v626 = vld [vmem:[%s40 + $0x68] sm:$0xff]
  %v627 = vld [vmem:[%s40 + $0x78] sm:$0xff]
  %v628 = vld [vmem:[%s40 + $0x80] sm:$0xff]
  %v629 = vld [vmem:[%s40 + $0x90] sm:$0xff]
  %v630 = vld [vmem:[%s40 + $0x98] sm:$0xff]
  %v631 = vld [vmem:[%s40 + $0xa8] sm:$0xff]
  %v632 = vld [vmem:[%s40 + $0xb0] sm:$0xff]
  %v633 = vld [vmem:[%s40 + $0xc0] sm:$0xff]
  %v634 = vld [vmem:[%s40 + $0xc8] sm:$0xff]
  %v635 = vld [vmem:[%s40 + $0xd8] sm:$0xff]
  %v636 = vld [vmem:[%s40 + $0xe0] sm:$0xff]
  %v637 = vld [vmem:[%s40 + $0xf0] sm:$0xff]
  %v638 = vld [vmem:[%s40 + $0xf8] sm:$0xff]
  %v639 = vld [vmem:[%s40 + $0x108] sm:$0xff]
  %v640 = vld [vmem:[%s40 + $0x110] sm:$0xff]
  %v641 = vld [vmem:[%s40 + $0x120] sm:$0xff]
  %v642 = vld [vmem:[%s40 + $0x128] sm:$0xff]
  %v643 = vld [vmem:[%s40 + $0x138] sm:$0xff]
  %v644 = vld [vmem:[%s40 + $0x140] sm:$0xff]
  %v645 = vld [vmem:[%s40 + $0x150] sm:$0xff]
  %v646 = vld [vmem:[%s40 + $0x158] sm:$0xff]
  %v647 = vld [vmem:[%s40 + $0x168] sm:$0xff]
  %v648 = vld [vmem:[%s40 + $0x170] sm:$0xff]
  %v649 = vld [vmem:[%s40 + $0x1b0] sm:$0xff]
  %v650 = vld [vmem:[%s40 + $0x1b8] sm:$0xff]
  %v651 = vld [vmem:[%s40 + $0x1c8] sm:$0xff]
  %v652 = vld [vmem:[%s40 + $0x1d0] sm:$0xff]
  %v653 = vld [vmem:[%s40 + $0x1e0] sm:$0xff]
  %v654 = vld [vmem:[%s40 + $0x1e8] sm:$0xff]
  %v655 = vld [vmem:[%s40 + $0x1f8] sm:$0xff]
  %v656 = vld [vmem:[%s40 + $0x200] sm:$0xff]
  %v657 = vld [vmem:[%s40 + $0x210] sm:$0xff]
  %v658 = vld [vmem:[%s40 + $0x218] sm:$0xff]
  %v659 = vld [vmem:[%s40 + $0x228] sm:$0xff]
  %v660 = vld [vmem:[%s40 + $0x230] sm:$0xff]
  %v661 = vld [vmem:[%s40 + $0x240] sm:$0xff]
  %v662 = vld [vmem:[%s40 + $0x248] sm:$0xff]
  %v663 = vld [vmem:[%s40 + $0x258] sm:$0xff]
  %v664 = vld [vmem:[%s40 + $0x260] sm:$0xff]
  %v665 = vld [vmem:[%s40 + $0x270] sm:$0xff]
  %v666 = vld [vmem:[%s40 + $0x278] sm:$0xff]
  %v667 = vld [vmem:[%s40 + $0x288] sm:$0xff]
  %v668 = vld [vmem:[%s40 + $0x290] sm:$0xff]
  %v669 = vld [vmem:[%s40 + $0x2a0] sm:$0xff]
  %v670 = vld [vmem:[%s40 + $0x2a8] sm:$0xff]
  %v671 = vld [vmem:[%s40 + $0x2b8] sm:$0xff]
  %v672 = vld [vmem:[%s40 + $0x2c0] sm:$0xff]
  %v673 = vld [vmem:[%s40 + $0x2d0] sm:$0xff]
  %v674 = vld [vmem:[%s40 + $0x2d8] sm:$0xff]
  %v675 = vld [vmem:[%s40 + $0x2e8] sm:$0xff]
  %v676 = vld [vmem:[%s40 + $0x2f0] sm:$0xff]
  %v677 = vld [vmem:[%s40 + $0x300] sm:$0xff]
  %v678 = vld [vmem:[%s40 + $0x308] sm:$0xff]
  %v679 = vld [vmem:[%s40 + $0x318] sm:$0xff]
  %v680 = vld [vmem:[%s40 + $0x320] sm:$0xff]
  %v681 = vpack.c.bf16 %v618, %v617
  %v682 = vpack.c.bf16 %v620, %v619
  %v683 = vpack.c.bf16 %v622, %v621
  %v684 = vpack.c.bf16 %v624, %v623
  %v685 = vpack.c.bf16 %v626, %v625
  %v686 = vpack.c.bf16 %v628, %v627
  %v687 = vpack.c.bf16 %v630, %v629
  %v688 = vpack.c.bf16 %v632, %v631
  %v689 = vpack.c.bf16 %v634, %v633
  %v690 = vpack.c.bf16 %v636, %v635
  %v691 = vpack.c.bf16 %v638, %v637
  %v692 = vpack.c.bf16 %v640, %v639
  %v693 = vpack.c.bf16 %v642, %v641
  %v694 = vpack.c.bf16 %v644, %v643
  %v695 = vpack.c.bf16 %v646, %v645
  %v696 = vpack.c.bf16 %v648, %v647
  %v697 = vpack.c.bf16 %v650, %v649
  %v698 = vpack.c.bf16 %v652, %v651
  %v699 = vpack.c.bf16 %v654, %v653
  %v700 = vpack.c.bf16 %v656, %v655
  %v701 = vpack.c.bf16 %v658, %v657
  %v702 = vpack.c.bf16 %v660, %v659
  %v703 = vpack.c.bf16 %v662, %v661
  %v704 = vpack.c.bf16 %v664, %v663
  %v705 = vpack.c.bf16 %v666, %v665
  %v706 = vpack.c.bf16 %v668, %v667
  %v707 = vpack.c.bf16 %v670, %v669
  %v708 = vpack.c.bf16 %v672, %v671
  %v709 = vpack.c.bf16 %v674, %v673
  %v710 = vpack.c.bf16 %v676, %v675
  %v711 = vpack.c.bf16 %v678, %v677
  %v712 = vpack.c.bf16 %v680, %v679
  %713 = vst [vmem:[#allocation3 + $0x18] sm:$0xff] %v681
  %714 = vst [vmem:[#allocation3 + $0x60] sm:$0xff] %v682
  %715 = vst [vmem:[#allocation3 + $0xa8] sm:$0xff] %v683
  %716 = vst [vmem:[#allocation3 + $0xf0] sm:$0xff] %v684
  %717 = vst [vmem:[#allocation3 + $0x138] sm:$0xff] %v685
  %718 = vst [vmem:[#allocation3 + $0x180] sm:$0xff] %v686
  %719 = vst [vmem:[#allocation3 + $0x1c8] sm:$0xff] %v687
  %720 = vst [vmem:[#allocation3 + $0x210] sm:$0xff] %v688
  %721 = vst [vmem:[#allocation3 + $0x258] sm:$0xff] %v689
  %722 = vst [vmem:[#allocation3 + $0x2a0] sm:$0xff] %v690
  %723 = vst [vmem:[#allocation3 + $0x2e8] sm:$0xff] %v691
  %724 = vst [vmem:[#allocation3 + $0x330] sm:$0xff] %v692
  %725 = vst [vmem:[#allocation3 + $0x378] sm:$0xff] %v693
  %726 = vst [vmem:[#allocation3 + $0x3c0] sm:$0xff] %v694
  %727 = vst [vmem:[#allocation3 + $0x408] sm:$0xff] %v695
  %728 = vst [vmem:[#allocation3 + $0x450] sm:$0xff] %v696
  %729 = vst [vmem:[#allocation3 + $0x498] sm:$0xff] %v697
  %730 = vst [vmem:[#allocation3 + $0x4e0] sm:$0xff] %v698
  %731 = vst [vmem:[#allocation3 + $0x528] sm:$0xff] %v699
  %732 = vst [vmem:[#allocation3 + $0x570] sm:$0xff] %v700
  %733 = vst [vmem:[#allocation3 + $0x5b8] sm:$0xff] %v701
  %734 = vst [vmem:[#allocation3 + $0x600] sm:$0xff] %v702
  %735 = vst [vmem:[#allocation3 + $0x648] sm:$0xff] %v703
  %736 = vst [vmem:[#allocation3 + $0x690] sm:$0xff] %v704
  %737 = vst [vmem:[#allocation3 + $0x6d8] sm:$0xff] %v705
  %738 = vst [vmem:[#allocation3 + $0x720] sm:$0xff] %v706
  %739 = vst [vmem:[#allocation3 + $0x768] sm:$0xff] %v707
  %740 = vst [vmem:[#allocation3 + $0x7b0] sm:$0xff] %v708
  %741 = vst [vmem:[#allocation3 + $0x7f8] sm:$0xff] %v709
  %742 = vst [vmem:[#allocation3 + $0x840] sm:$0xff] %v710
  %743 = vst [vmem:[#allocation3 + $0x888] sm:$0xff] %v711
  %744 = vst [vmem:[#allocation3 + $0x8d0] sm:$0xff] %v712
  %v745 = vld [vmem:[%s40 + $0x1] sm:$0xff]
  %v746 = vld [vmem:[%s40 + $0x9] sm:$0xff]
  %v747 = vld [vmem:[%s40 + $0x19] sm:$0xff]
  %v748 = vld [vmem:[%s40 + $0x21] sm:$0xff]
  %v749 = vld [vmem:[%s40 + $0x31] sm:$0xff]
  %v750 = vld [vmem:[%s40 + $0x39] sm:$0xff]
  %v751 = vld [vmem:[%s40 + $0x49] sm:$0xff]
  %v752 = vld [vmem:[%s40 + $0x51] sm:$0xff]
  %v753 = vld [vmem:[%s40 + $0x61] sm:$0xff]
  %v754 = vld [vmem:[%s40 + $0x69] sm:$0xff]
  %v755 = vld [vmem:[%s40 + $0x79] sm:$0xff]
  %v756 = vld [vmem:[%s40 + $0x81] sm:$0xff]
  %v757 = vld [vmem:[%s40 + $0x91] sm:$0xff]
  %v758 = vld [vmem:[%s40 + $0x99] sm:$0xff]
  %v759 = vld [vmem:[%s40 + $0xa9] sm:$0xff]
  %v760 = vld [vmem:[%s40 + $0xb1] sm:$0xff]
  %v761 = vld [vmem:[%s40 + $0xc1] sm:$0xff]
  %v762 = vld [vmem:[%s40 + $0xc9] sm:$0xff]
  %v763 = vld [vmem:[%s40 + $0xd9] sm:$0xff]
  %v764 = vld [vmem:[%s40 + $0xe1] sm:$0xff]
  %v765 = vld [vmem:[%s40 + $0xf1] sm:$0xff]
  %v766 = vld [vmem:[%s40 + $0xf9] sm:$0xff]
  %v767 = vld [vmem:[%s40 + $0x109] sm:$0xff]
  %v768 = vld [vmem:[%s40 + $0x111] sm:$0xff]
  %v769 = vld [vmem:[%s40 + $0x121] sm:$0xff]
  %v770 = vld [vmem:[%s40 + $0x129] sm:$0xff]
  %v771 = vld [vmem:[%s40 + $0x139] sm:$0xff]
  %v772 = vld [vmem:[%s40 + $0x141] sm:$0xff]
  %v773 = vld [vmem:[%s40 + $0x151] sm:$0xff]
  %v774 = vld [vmem:[%s40 + $0x159] sm:$0xff]
  %v775 = vld [vmem:[%s40 + $0x169] sm:$0xff]
  %v776 = vld [vmem:[%s40 + $0x171] sm:$0xff]
  %v777 = vld [vmem:[%s40 + $0x1b1] sm:$0xff]
  %v778 = vld [vmem:[%s40 + $0x1b9] sm:$0xff]
  %v779 = vld [vmem:[%s40 + $0x1c9] sm:$0xff]
  %v780 = vld [vmem:[%s40 + $0x1d1] sm:$0xff]
  %v781 = vld [vmem:[%s40 + $0x1e1] sm:$0xff]
  %v782 = vld [vmem:[%s40 + $0x1e9] sm:$0xff]
  %v783 = vld [vmem:[%s40 + $0x1f9] sm:$0xff]
  %v784 = vld [vmem:[%s40 + $0x201] sm:$0xff]
  %v785 = vld [vmem:[%s40 + $0x211] sm:$0xff]
  %v786 = vld [vmem:[%s40 + $0x219] sm:$0xff]
  %v787 = vld [vmem:[%s40 + $0x229] sm:$0xff]
  %v788 = vld [vmem:[%s40 + $0x231] sm:$0xff]
  %v789 = vld [vmem:[%s40 + $0x241] sm:$0xff]
  %v790 = vld [vmem:[%s40 + $0x249] sm:$0xff]
  %v791 = vld [vmem:[%s40 + $0x259] sm:$0xff]
  %v792 = vld [vmem:[%s40 + $0x261] sm:$0xff]
  %v793 = vld [vmem:[%s40 + $0x271] sm:$0xff]
  %v794 = vld [vmem:[%s40 + $0x279] sm:$0xff]
  %v795 = vld [vmem:[%s40 + $0x289] sm:$0xff]
  %v796 = vld [vmem:[%s40 + $0x291] sm:$0xff]
  %v797 = vld [vmem:[%s40 + $0x2a1] sm:$0xff]
  %v798 = vld [vmem:[%s40 + $0x2a9] sm:$0xff]
  %v799 = vld [vmem:[%s40 + $0x2b9] sm:$0xff]
  %v800 = vld [vmem:[%s40 + $0x2c1] sm:$0xff]
  %v801 = vld [vmem:[%s40 + $0x2d1] sm:$0xff]
  %v802 = vld [vmem:[%s40 + $0x2d9] sm:$0xff]
  %v803 = vld [vmem:[%s40 + $0x2e9] sm:$0xff]
  %v804 = vld [vmem:[%s40 + $0x2f1] sm:$0xff]
  %v805 = vld [vmem:[%s40 + $0x301] sm:$0xff]
  %v806 = vld [vmem:[%s40 + $0x309] sm:$0xff]
  %v807 = vld [vmem:[%s40 + $0x319] sm:$0xff]
  %v808 = vld [vmem:[%s40 + $0x321] sm:$0xff]
  %v809 = vpack.c.bf16 %v746, %v745
  %v810 = vpack.c.bf16 %v748, %v747
  %v811 = vpack.c.bf16 %v750, %v749
  %v812 = vpack.c.bf16 %v752, %v751
  %v813 = vpack.c.bf16 %v754, %v753
  %v814 = vpack.c.bf16 %v756, %v755
  %v815 = vpack.c.bf16 %v758, %v757
  %v816 = vpack.c.bf16 %v760, %v759
  %v817 = vpack.c.bf16 %v762, %v761
  %v818 = vpack.c.bf16 %v764, %v763
  %v819 = vpack.c.bf16 %v766, %v765
  %v820 = vpack.c.bf16 %v768, %v767
  %v821 = vpack.c.bf16 %v770, %v769
  %v822 = vpack.c.bf16 %v772, %v771
  %v823 = vpack.c.bf16 %v774, %v773
  %v824 = vpack.c.bf16 %v776, %v775
  %v825 = vpack.c.bf16 %v778, %v777
  %v826 = vpack.c.bf16 %v780, %v779
  %v827 = vpack.c.bf16 %v782, %v781
  %v828 = vpack.c.bf16 %v784, %v783
  %v829 = vpack.c.bf16 %v786, %v785
  %v830 = vpack.c.bf16 %v788, %v787
  %v831 = vpack.c.bf16 %v790, %v789
  %v832 = vpack.c.bf16 %v792, %v791
  %v833 = vpack.c.bf16 %v794, %v793
  %v834 = vpack.c.bf16 %v796, %v795
  %v835 = vpack.c.bf16 %v798, %v797
  %v836 = vpack.c.bf16 %v800, %v799
  %v837 = vpack.c.bf16 %v802, %v801
  %v838 = vpack.c.bf16 %v804, %v803
  %v839 = vpack.c.bf16 %v806, %v805
  %v840 = vpack.c.bf16 %v808, %v807
  %841 = vst [vmem:[#allocation3 + $0x20] sm:$0xff] %v809
  %842 = vst [vmem:[#allocation3 + $0x68] sm:$0xff] %v810
  %843 = vst [vmem:[#allocation3 + $0xb0] sm:$0xff] %v811
  %844 = vst [vmem:[#allocation3 + $0xf8] sm:$0xff] %v812
  %845 = vst [vmem:[#allocation3 + $0x140] sm:$0xff] %v813
  %846 = vst [vmem:[#allocation3 + $0x188] sm:$0xff] %v814
  %847 = vst [vmem:[#allocation3 + $0x1d0] sm:$0xff] %v815
  %848 = vst [vmem:[#allocation3 + $0x218] sm:$0xff] %v816
  %849 = vst [vmem:[#allocation3 + $0x260] sm:$0xff] %v817
  %850 = vst [vmem:[#allocation3 + $0x2a8] sm:$0xff] %v818
  %851 = vst [vmem:[#allocation3 + $0x2f0] sm:$0xff] %v819
  %852 = vst [vmem:[#allocation3 + $0x338] sm:$0xff] %v820
  %853 = vst [vmem:[#allocation3 + $0x380] sm:$0xff] %v821
  %854 = vst [vmem:[#allocation3 + $0x3c8] sm:$0xff] %v822
  %855 = vst [vmem:[#allocation3 + $0x410] sm:$0xff] %v823
  %856 = vst [vmem:[#allocation3 + $0x458] sm:$0xff] %v824
  %857 = vst [vmem:[#allocation3 + $0x4a0] sm:$0xff] %v825
  %858 = vst [vmem:[#allocation3 + $0x4e8] sm:$0xff] %v826
  %859 = vst [vmem:[#allocation3 + $0x530] sm:$0xff] %v827
  %860 = vst [vmem:[#allocation3 + $0x578] sm:$0xff] %v828
  %861 = vst [vmem:[#allocation3 + $0x5c0] sm:$0xff] %v829
  %862 = vst [vmem:[#allocation3 + $0x608] sm:$0xff] %v830
  %863 = vst [vmem:[#allocation3 + $0x650] sm:$0xff] %v831
  %864 = vst [vmem:[#allocation3 + $0x698] sm:$0xff] %v832
  %865 = vst [vmem:[#allocation3 + $0x6e0] sm:$0xff] %v833
  %866 = vst [vmem:[#allocation3 + $0x728] sm:$0xff] %v834
  %867 = vst [vmem:[#allocation3 + $0x770] sm:$0xff] %v835
  %868 = vst [vmem:[#allocation3 + $0x7b8] sm:$0xff] %v836
  %869 = vst [vmem:[#allocation3 + $0x800] sm:$0xff] %v837
  %870 = vst [vmem:[#allocation3 + $0x848] sm:$0xff] %v838
  %871 = vst [vmem:[#allocation3 + $0x890] sm:$0xff] %v839
  %872 = vst [vmem:[#allocation3 + $0x8d8] sm:$0xff] %v840
  %v873 = vld [vmem:[%s40 + $0x2] sm:$0xff]
  %v874 = vld [vmem:[%s40 + $0xa] sm:$0xff]
  %v875 = vld [vmem:[%s40 + $0x1a] sm:$0xff]
  %v876 = vld [vmem:[%s40 + $0x22] sm:$0xff]
  %v877 = vld [vmem:[%s40 + $0x32] sm:$0xff]
  %v878 = vld [vmem:[%s40 + $0x3a] sm:$0xff]
  %v879 = vld [vmem:[%s40 + $0x4a] sm:$0xff]
  %v880 = vld [vmem:[%s40 + $0x52] sm:$0xff]
  %v881 = vld [vmem:[%s40 + $0x62] sm:$0xff]
  %v882 = vld [vmem:[%s40 + $0x6a] sm:$0xff]
  %v883 = vld [vmem:[%s40 + $0x7a] sm:$0xff]
  %v884 = vld [vmem:[%s40 + $0x82] sm:$0xff]
  %v885 = vld [vmem:[%s40 + $0x92] sm:$0xff]
  %v886 = vld [vmem:[%s40 + $0x9a] sm:$0xff]
  %v887 = vld [vmem:[%s40 + $0xaa] sm:$0xff]
  %v888 = vld [vmem:[%s40 + $0xb2] sm:$0xff]
  %v889 = vld [vmem:[%s40 + $0xc2] sm:$0xff]
  %v890 = vld [vmem:[%s40 + $0xca] sm:$0xff]
  %v891 = vld [vmem:[%s40 + $0xda] sm:$0xff]
  %v892 = vld [vmem:[%s40 + $0xe2] sm:$0xff]
  %v893 = vld [vmem:[%s40 + $0xf2] sm:$0xff]
  %v894 = vld [vmem:[%s40 + $0xfa] sm:$0xff]
  %v895 = vld [vmem:[%s40 + $0x10a] sm:$0xff]
  %v896 = vld [vmem:[%s40 + $0x112] sm:$0xff]
  %v897 = vld [vmem:[%s40 + $0x122] sm:$0xff]
  %v898 = vld [vmem:[%s40 + $0x12a] sm:$0xff]
  %v899 = vld [vmem:[%s40 + $0x13a] sm:$0xff]
  %v900 = vld [vmem:[%s40 + $0x142] sm:$0xff]
  %v901 = vld [vmem:[%s40 + $0x152] sm:$0xff]
  %v902 = vld [vmem:[%s40 + $0x15a] sm:$0xff]
  %v903 = vld [vmem:[%s40 + $0x16a] sm:$0xff]
  %v904 = vld [vmem:[%s40 + $0x172] sm:$0xff]
  %v905 = vld [vmem:[%s40 + $0x1b2] sm:$0xff]
  %v906 = vld [vmem:[%s40 + $0x1ba] sm:$0xff]
  %v907 = vld [vmem:[%s40 + $0x1ca] sm:$0xff]
  %v908 = vld [vmem:[%s40 + $0x1d2] sm:$0xff]
  %v909 = vld [vmem:[%s40 + $0x1e2] sm:$0xff]
  %v910 = vld [vmem:[%s40 + $0x1ea] sm:$0xff]
  %v911 = vld [vmem:[%s40 + $0x1fa] sm:$0xff]
  %v912 = vld [vmem:[%s40 + $0x202] sm:$0xff]
  %v913 = vld [vmem:[%s40 + $0x212] sm:$0xff]
  %v914 = vld [vmem:[%s40 + $0x21a] sm:$0xff]
  %v915 = vld [vmem:[%s40 + $0x22a] sm:$0xff]
  %v916 = vld [vmem:[%s40 + $0x232] sm:$0xff]
  %v917 = vld [vmem:[%s40 + $0x242] sm:$0xff]
  %v918 = vld [vmem:[%s40 + $0x24a] sm:$0xff]
  %v919 = vld [vmem:[%s40 + $0x25a] sm:$0xff]
  %v920 = vld [vmem:[%s40 + $0x262] sm:$0xff]
  %v921 = vld [vmem:[%s40 + $0x272] sm:$0xff]
  %v922 = vld [vmem:[%s40 + $0x27a] sm:$0xff]
  %v923 = vld [vmem:[%s40 + $0x28a] sm:$0xff]
  %v924 = vld [vmem:[%s40 + $0x292] sm:$0xff]
  %v925 = vld [vmem:[%s40 + $0x2a2] sm:$0xff]
  %v926 = vld [vmem:[%s40 + $0x2aa] sm:$0xff]
  %v927 = vld [vmem:[%s40 + $0x2ba] sm:$0xff]
  %v928 = vld [vmem:[%s40 + $0x2c2] sm:$0xff]
  %v929 = vld [vmem:[%s40 + $0x2d2] sm:$0xff]
  %v930 = vld [vmem:[%s40 + $0x2da] sm:$0xff]
  %v931 = vld [vmem:[%s40 + $0x2ea] sm:$0xff]
  %v932 = vld [vmem:[%s40 + $0x2f2] sm:$0xff]
  %v933 = vld [vmem:[%s40 + $0x302] sm:$0xff]
  %v934 = vld [vmem:[%s40 + $0x30a] sm:$0xff]
  %v935 = vld [vmem:[%s40 + $0x31a] sm:$0xff]
  %v936 = vld [vmem:[%s40 + $0x322] sm:$0xff]
  %v937 = vpack.c.bf16 %v874, %v873
  %v938 = vpack.c.bf16 %v876, %v875
  %v939 = vpack.c.bf16 %v878, %v877
  %v940 = vpack.c.bf16 %v880, %v879
  %v941 = vpack.c.bf16 %v882, %v881
  %v942 = vpack.c.bf16 %v884, %v883
  %v943 = vpack.c.bf16 %v886, %v885
  %v944 = vpack.c.bf16 %v888, %v887
  %v945 = vpack.c.bf16 %v890, %v889
  %v946 = vpack.c.bf16 %v892, %v891
  %v947 = vpack.c.bf16 %v894, %v893
  %v948 = vpack.c.bf16 %v896, %v895
  %v949 = vpack.c.bf16 %v898, %v897
  %v950 = vpack.c.bf16 %v900, %v899
  %v951 = vpack.c.bf16 %v902, %v901
  %v952 = vpack.c.bf16 %v904, %v903
  %v953 = vpack.c.bf16 %v906, %v905
  %v954 = vpack.c.bf16 %v908, %v907
  %v955 = vpack.c.bf16 %v910, %v909
  %v956 = vpack.c.bf16 %v912, %v911
  %v957 = vpack.c.bf16 %v914, %v913
  %v958 = vpack.c.bf16 %v916, %v915
  %v959 = vpack.c.bf16 %v918, %v917
  %v960 = vpack.c.bf16 %v920, %v919
  %v961 = vpack.c.bf16 %v922, %v921
  %v962 = vpack.c.bf16 %v924, %v923
  %v963 = vpack.c.bf16 %v926, %v925
  %v964 = vpack.c.bf16 %v928, %v927
  %v965 = vpack.c.bf16 %v930, %v929
  %v966 = vpack.c.bf16 %v932, %v931
  %v967 = vpack.c.bf16 %v934, %v933
  %v968 = vpack.c.bf16 %v936, %v935
  %969 = vst [vmem:[#allocation3 + $0x28] sm:$0xff] %v937
  %970 = vst [vmem:[#allocation3 + $0x70] sm:$0xff] %v938
  %971 = vst [vmem:[#allocation3 + $0xb8] sm:$0xff] %v939
  %972 = vst [vmem:[#allocation3 + $0x100] sm:$0xff] %v940
  %973 = vst [vmem:[#allocation3 + $0x148] sm:$0xff] %v941
  %974 = vst [vmem:[#allocation3 + $0x190] sm:$0xff] %v942
  %975 = vst [vmem:[#allocation3 + $0x1d8] sm:$0xff] %v943
  %976 = vst [vmem:[#allocation3 + $0x220] sm:$0xff] %v944
  %977 = vst [vmem:[#allocation3 + $0x268] sm:$0xff] %v945
  %978 = vst [vmem:[#allocation3 + $0x2b0] sm:$0xff] %v946
  %979 = vst [vmem:[#allocation3 + $0x2f8] sm:$0xff] %v947
  %980 = vst [vmem:[#allocation3 + $0x340] sm:$0xff] %v948
  %981 = vst [vmem:[#allocation3 + $0x388] sm:$0xff] %v949
  %982 = vst [vmem:[#allocation3 + $0x3d0] sm:$0xff] %v950
  %983 = vst [vmem:[#allocation3 + $0x418] sm:$0xff] %v951
  %984 = vst [vmem:[#allocation3 + $0x460] sm:$0xff] %v952
  %985 = vst [vmem:[#allocation3 + $0x4a8] sm:$0xff] %v953
  %986 = vst [vmem:[#allocation3 + $0x4f0] sm:$0xff] %v954
  %987 = vst [vmem:[#allocation3 + $0x538] sm:$0xff] %v955
  %988 = vst [vmem:[#allocation3 + $0x580] sm:$0xff] %v956
  %989 = vst [vmem:[#allocation3 + $0x5c8] sm:$0xff] %v957
  %990 = vst [vmem:[#allocation3 + $0x610] sm:$0xff] %v958
  %991 = vst [vmem:[#allocation3 + $0x658] sm:$0xff] %v959
  %992 = vst [vmem:[#allocation3 + $0x6a0] sm:$0xff] %v960
  %993 = vst [vmem:[#allocation3 + $0x6e8] sm:$0xff] %v961
  %994 = vst [vmem:[#allocation3 + $0x730] sm:$0xff] %v962
  %995 = vst [vmem:[#allocation3 + $0x778] sm:$0xff] %v963
  %996 = vst [vmem:[#allocation3 + $0x7c0] sm:$0xff] %v964
  %997 = vst [vmem:[#allocation3 + $0x808] sm:$0xff] %v965
  %998 = vst [vmem:[#allocation3 + $0x850] sm:$0xff] %v966
  %999 = vst [vmem:[#allocation3 + $0x898] sm:$0xff] %v967
  %1000 = vst [vmem:[#allocation3 + $0x8e0] sm:$0xff] %v968
  %s1001 = scalar_lea.vmem [#allocation2], 48
  %v1002 = vld [vmem:[%s1001] sm:$0xff]
  %v1003 = vld [vmem:[%s1001 + $0x8] sm:$0xff]
  %v1004 = vld [vmem:[%s1001 + $0x18] sm:$0xff]
  %v1005 = vld [vmem:[%s1001 + $0x20] sm:$0xff]
  %v1006 = vld [vmem:[%s1001 + $0x30] sm:$0xff]
  %v1007 = vld [vmem:[%s1001 + $0x38] sm:$0xff]
  %v1008 = vld [vmem:[%s1001 + $0x48] sm:$0xff]
  %v1009 = vld [vmem:[%s1001 + $0x50] sm:$0xff]
  %v1010 = vld [vmem:[%s1001 + $0x60] sm:$0xff]
  %v1011 = vld [vmem:[%s1001 + $0x68] sm:$0xff]
  %v1012 = vld [vmem:[%s1001 + $0x78] sm:$0xff]
  %v1013 = vld [vmem:[%s1001 + $0x80] sm:$0xff]
  %v1014 = vld [vmem:[%s1001 + $0x90] sm:$0xff]
  %v1015 = vld [vmem:[%s1001 + $0x98] sm:$0xff]
  %v1016 = vld [vmem:[%s1001 + $0xa8] sm:$0xff]
  %v1017 = vld [vmem:[%s1001 + $0xb0] sm:$0xff]
  %v1018 = vld [vmem:[%s1001 + $0xc0] sm:$0xff]
  %v1019 = vld [vmem:[%s1001 + $0xc8] sm:$0xff]
  %v1020 = vld [vmem:[%s1001 + $0xd8] sm:$0xff]
  %v1021 = vld [vmem:[%s1001 + $0xe0] sm:$0xff]
  %v1022 = vld [vmem:[%s1001 + $0xf0] sm:$0xff]
  %v1023 = vld [vmem:[%s1001 + $0xf8] sm:$0xff]
  %v1024 = vld [vmem:[%s1001 + $0x108] sm:$0xff]
  %v1025 = vld [vmem:[%s1001 + $0x110] sm:$0xff]
  %v1026 = vld [vmem:[%s1001 + $0x120] sm:$0xff]
  %v1027 = vld [vmem:[%s1001 + $0x128] sm:$0xff]
  %v1028 = vld [vmem:[%s1001 + $0x138] sm:$0xff]
  %v1029 = vld [vmem:[%s1001 + $0x140] sm:$0xff]
  %v1030 = vld [vmem:[%s1001 + $0x150] sm:$0xff]
  %v1031 = vld [vmem:[%s1001 + $0x158] sm:$0xff]
  %v1032 = vld [vmem:[%s1001 + $0x168] sm:$0xff]
  %v1033 = vld [vmem:[%s1001 + $0x170] sm:$0xff]
  %v1034 = vld [vmem:[%s1001 + $0x1b0] sm:$0xff]
  %v1035 = vld [vmem:[%s1001 + $0x1b8] sm:$0xff]
  %v1036 = vld [vmem:[%s1001 + $0x1c8] sm:$0xff]
  %v1037 = vld [vmem:[%s1001 + $0x1d0] sm:$0xff]
  %v1038 = vld [vmem:[%s1001 + $0x1e0] sm:$0xff]
  %v1039 = vld [vmem:[%s1001 + $0x1e8] sm:$0xff]
  %v1040 = vld [vmem:[%s1001 + $0x1f8] sm:$0xff]
  %v1041 = vld [vmem:[%s1001 + $0x200] sm:$0xff]
  %v1042 = vld [vmem:[%s1001 + $0x210] sm:$0xff]
  %v1043 = vld [vmem:[%s1001 + $0x218] sm:$0xff]
  %v1044 = vld [vmem:[%s1001 + $0x228] sm:$0xff]
  %v1045 = vld [vmem:[%s1001 + $0x230] sm:$0xff]
  %v1046 = vld [vmem:[%s1001 + $0x240] sm:$0xff]
  %v1047 = vld [vmem:[%s1001 + $0x248] sm:$0xff]
  %v1048 = vld [vmem:[%s1001 + $0x258] sm:$0xff]
  %v1049 = vld [vmem:[%s1001 + $0x260] sm:$0xff]
  %v1050 = vld [vmem:[%s1001 + $0x270] sm:$0xff]
  %v1051 = vld [vmem:[%s1001 + $0x278] sm:$0xff]
  %v1052 = vld [vmem:[%s1001 + $0x288] sm:$0xff]
  %v1053 = vld [vmem:[%s1001 + $0x290] sm:$0xff]
  %v1054 = vld [vmem:[%s1001 + $0x2a0] sm:$0xff]
  %v1055 = vld [vmem:[%s1001 + $0x2a8] sm:$0xff]
  %v1056 = vld [vmem:[%s1001 + $0x2b8] sm:$0xff]
  %v1057 = vld [vmem:[%s1001 + $0x2c0] sm:$0xff]
  %v1058 = vld [vmem:[%s1001 + $0x2d0] sm:$0xff]
  %v1059 = vld [vmem:[%s1001 + $0x2d8] sm:$0xff]
  %v1060 = vld [vmem:[%s1001 + $0x2e8] sm:$0xff]
  %v1061 = vld [vmem:[%s1001 + $0x2f0] sm:$0xff]
  %v1062 = vld [vmem:[%s1001 + $0x300] sm:$0xff]
  %v1063 = vld [vmem:[%s1001 + $0x308] sm:$0xff]
  %v1064 = vld [vmem:[%s1001 + $0x318] sm:$0xff]
  %v1065 = vld [vmem:[%s1001 + $0x320] sm:$0xff]
  %v1066 = vpack.c.bf16 %v1003, %v1002
  %v1067 = vpack.c.bf16 %v1005, %v1004
  %v1068 = vpack.c.bf16 %v1007, %v1006
  %v1069 = vpack.c.bf16 %v1009, %v1008
  %v1070 = vpack.c.bf16 %v1011, %v1010
  %v1071 = vpack.c.bf16 %v1013, %v1012
  %v1072 = vpack.c.bf16 %v1015, %v1014
  %v1073 = vpack.c.bf16 %v1017, %v1016
  %v1074 = vpack.c.bf16 %v1019, %v1018
  %v1075 = vpack.c.bf16 %v1021, %v1020
  %v1076 = vpack.c.bf16 %v1023, %v1022
  %v1077 = vpack.c.bf16 %v1025, %v1024
  %v1078 = vpack.c.bf16 %v1027, %v1026
  %v1079 = vpack.c.bf16 %v1029, %v1028
  %v1080 = vpack.c.bf16 %v1031, %v1030
  %v1081 = vpack.c.bf16 %v1033, %v1032
  %v1082 = vpack.c.bf16 %v1035, %v1034
  %v1083 = vpack.c.bf16 %v1037, %v1036
  %v1084 = vpack.c.bf16 %v1039, %v1038
  %v1085 = vpack.c.bf16 %v1041, %v1040
  %v1086 = vpack.c.bf16 %v1043, %v1042
  %v1087 = vpack.c.bf16 %v1045, %v1044
  %v1088 = vpack.c.bf16 %v1047, %v1046
  %v1089 = vpack.c.bf16 %v1049, %v1048
  %v1090 = vpack.c.bf16 %v1051, %v1050
  %v1091 = vpack.c.bf16 %v1053, %v1052
  %v1092 = vpack.c.bf16 %v1055, %v1054
  %v1093 = vpack.c.bf16 %v1057, %v1056
  %v1094 = vpack.c.bf16 %v1059, %v1058
  %v1095 = vpack.c.bf16 %v1061, %v1060
  %v1096 = vpack.c.bf16 %v1063, %v1062
  %v1097 = vpack.c.bf16 %v1065, %v1064
  %1098 = vst [vmem:[#allocation3 + $0x30] sm:$0xff] %v1066
  %1099 = vst [vmem:[#allocation3 + $0x78] sm:$0xff] %v1067
  %1100 = vst [vmem:[#allocation3 + $0xc0] sm:$0xff] %v1068
  %1101 = vst [vmem:[#allocation3 + $0x108] sm:$0xff] %v1069
  %1102 = vst [vmem:[#allocation3 + $0x150] sm:$0xff] %v1070
  %1103 = vst [vmem:[#allocation3 + $0x198] sm:$0xff] %v1071
  %1104 = vst [vmem:[#allocation3 + $0x1e0] sm:$0xff] %v1072
  %1105 = vst [vmem:[#allocation3 + $0x228] sm:$0xff] %v1073
  %1106 = vst [vmem:[#allocation3 + $0x270] sm:$0xff] %v1074
  %1107 = vst [vmem:[#allocation3 + $0x2b8] sm:$0xff] %v1075
  %1108 = vst [vmem:[#allocation3 + $0x300] sm:$0xff] %v1076
  %1109 = vst [vmem:[#allocation3 + $0x348] sm:$0xff] %v1077
  %1110 = vst [vmem:[#allocation3 + $0x390] sm:$0xff] %v1078
  %1111 = vst [vmem:[#allocation3 + $0x3d8] sm:$0xff] %v1079
  %1112 = vst [vmem:[#allocation3 + $0x420] sm:$0xff] %v1080
  %1113 = vst [vmem:[#allocation3 + $0x468] sm:$0xff] %v1081
  %1114 = vst [vmem:[#allocation3 + $0x4b0] sm:$0xff] %v1082
  %1115 = vst [vmem:[#allocation3 + $0x4f8] sm:$0xff] %v1083
  %1116 = vst [vmem:[#allocation3 + $0x540] sm:$0xff] %v1084
  %1117 = vst [vmem:[#allocation3 + $0x588] sm:$0xff] %v1085
  %1118 = vst [vmem:[#allocation3 + $0x5d0] sm:$0xff] %v1086
  %1119 = vst [vmem:[#allocation3 + $0x618] sm:$0xff] %v1087
  %1120 = vst [vmem:[#allocation3 + $0x660] sm:$0xff] %v1088
  %1121 = vst [vmem:[#allocation3 + $0x6a8] sm:$0xff] %v1089
  %1122 = vst [vmem:[#allocation3 + $0x6f0] sm:$0xff] %v1090
  %1123 = vst [vmem:[#allocation3 + $0x738] sm:$0xff] %v1091
  %1124 = vst [vmem:[#allocation3 + $0x780] sm:$0xff] %v1092
  %1125 = vst [vmem:[#allocation3 + $0x7c8] sm:$0xff] %v1093
  %1126 = vst [vmem:[#allocation3 + $0x810] sm:$0xff] %v1094
  %1127 = vst [vmem:[#allocation3 + $0x858] sm:$0xff] %v1095
  %1128 = vst [vmem:[#allocation3 + $0x8a0] sm:$0xff] %v1096
  %1129 = vst [vmem:[#allocation3 + $0x8e8] sm:$0xff] %v1097
  %v1130 = vld [vmem:[%s1001 + $0x1] sm:$0xff]
  %v1131 = vld [vmem:[%s1001 + $0x9] sm:$0xff]
  %v1132 = vld [vmem:[%s1001 + $0x19] sm:$0xff]
  %v1133 = vld [vmem:[%s1001 + $0x21] sm:$0xff]
  %v1134 = vld [vmem:[%s1001 + $0x31] sm:$0xff]
  %v1135 = vld [vmem:[%s1001 + $0x39] sm:$0xff]
  %v1136 = vld [vmem:[%s1001 + $0x49] sm:$0xff]
  %v1137 = vld [vmem:[%s1001 + $0x51] sm:$0xff]
  %v1138 = vld [vmem:[%s1001 + $0x61] sm:$0xff]
  %v1139 = vld [vmem:[%s1001 + $0x69] sm:$0xff]
  %v1140 = vld [vmem:[%s1001 + $0x79] sm:$0xff]
  %v1141 = vld [vmem:[%s1001 + $0x81] sm:$0xff]
  %v1142 = vld [vmem:[%s1001 + $0x91] sm:$0xff]
  %v1143 = vld [vmem:[%s1001 + $0x99] sm:$0xff]
  %v1144 = vld [vmem:[%s1001 + $0xa9] sm:$0xff]
  %v1145 = vld [vmem:[%s1001 + $0xb1] sm:$0xff]
  %v1146 = vld [vmem:[%s1001 + $0xc1] sm:$0xff]
  %v1147 = vld [vmem:[%s1001 + $0xc9] sm:$0xff]
  %v1148 = vld [vmem:[%s1001 + $0xd9] sm:$0xff]
  %v1149 = vld [vmem:[%s1001 + $0xe1] sm:$0xff]
  %v1150 = vld [vmem:[%s1001 + $0xf1] sm:$0xff]
  %v1151 = vld [vmem:[%s1001 + $0xf9] sm:$0xff]
  %v1152 = vld [vmem:[%s1001 + $0x109] sm:$0xff]
  %v1153 = vld [vmem:[%s1001 + $0x111] sm:$0xff]
  %v1154 = vld [vmem:[%s1001 + $0x121] sm:$0xff]
  %v1155 = vld [vmem:[%s1001 + $0x129] sm:$0xff]
  %v1156 = vld [vmem:[%s1001 + $0x139] sm:$0xff]
  %v1157 = vld [vmem:[%s1001 + $0x141] sm:$0xff]
  %v1158 = vld [vmem:[%s1001 + $0x151] sm:$0xff]
  %v1159 = vld [vmem:[%s1001 + $0x159] sm:$0xff]
  %v1160 = vld [vmem:[%s1001 + $0x169] sm:$0xff]
  %v1161 = vld [vmem:[%s1001 + $0x171] sm:$0xff]
  %v1162 = vld [vmem:[%s1001 + $0x1b1] sm:$0xff]
  %v1163 = vld [vmem:[%s1001 + $0x1b9] sm:$0xff]
  %v1164 = vld [vmem:[%s1001 + $0x1c9] sm:$0xff]
  %v1165 = vld [vmem:[%s1001 + $0x1d1] sm:$0xff]
  %v1166 = vld [vmem:[%s1001 + $0x1e1] sm:$0xff]
  %v1167 = vld [vmem:[%s1001 + $0x1e9] sm:$0xff]
  %v1168 = vld [vmem:[%s1001 + $0x1f9] sm:$0xff]
  %v1169 = vld [vmem:[%s1001 + $0x201] sm:$0xff]
  %v1170 = vld [vmem:[%s1001 + $0x211] sm:$0xff]
  %v1171 = vld [vmem:[%s1001 + $0x219] sm:$0xff]
  %v1172 = vld [vmem:[%s1001 + $0x229] sm:$0xff]
  %v1173 = vld [vmem:[%s1001 + $0x231] sm:$0xff]
  %v1174 = vld [vmem:[%s1001 + $0x241] sm:$0xff]
  %v1175 = vld [vmem:[%s1001 + $0x249] sm:$0xff]
  %v1176 = vld [vmem:[%s1001 + $0x259] sm:$0xff]
  %v1177 = vld [vmem:[%s1001 + $0x261] sm:$0xff]
  %v1178 = vld [vmem:[%s1001 + $0x271] sm:$0xff]
  %v1179 = vld [vmem:[%s1001 + $0x279] sm:$0xff]
  %v1180 = vld [vmem:[%s1001 + $0x289] sm:$0xff]
  %v1181 = vld [vmem:[%s1001 + $0x291] sm:$0xff]
  %v1182 = vld [vmem:[%s1001 + $0x2a1] sm:$0xff]
  %v1183 = vld [vmem:[%s1001 + $0x2a9] sm:$0xff]
  %v1184 = vld [vmem:[%s1001 + $0x2b9] sm:$0xff]
  %v1185 = vld [vmem:[%s1001 + $0x2c1] sm:$0xff]
  %v1186 = vld [vmem:[%s1001 + $0x2d1] sm:$0xff]
  %v1187 = vld [vmem:[%s1001 + $0x2d9] sm:$0xff]
  %v1188 = vld [vmem:[%s1001 + $0x2e9] sm:$0xff]
  %v1189 = vld [vmem:[%s1001 + $0x2f1] sm:$0xff]
  %v1190 = vld [vmem:[%s1001 + $0x301] sm:$0xff]
  %v1191 = vld [vmem:[%s1001 + $0x309] sm:$0xff]
  %v1192 = vld [vmem:[%s1001 + $0x319] sm:$0xff]
  %v1193 = vld [vmem:[%s1001 + $0x321] sm:$0xff]
  %v1194 = vpack.c.bf16 %v1131, %v1130
  %v1195 = vpack.c.bf16 %v1133, %v1132
  %v1196 = vpack.c.bf16 %v1135, %v1134
  %v1197 = vpack.c.bf16 %v1137, %v1136
  %v1198 = vpack.c.bf16 %v1139, %v1138
  %v1199 = vpack.c.bf16 %v1141, %v1140
  %v1200 = vpack.c.bf16 %v1143, %v1142
  %v1201 = vpack.c.bf16 %v1145, %v1144
  %v1202 = vpack.c.bf16 %v1147, %v1146
  %v1203 = vpack.c.bf16 %v1149, %v1148
  %v1204 = vpack.c.bf16 %v1151, %v1150
  %v1205 = vpack.c.bf16 %v1153, %v1152
  %v1206 = vpack.c.bf16 %v1155, %v1154
  %v1207 = vpack.c.bf16 %v1157, %v1156
  %v1208 = vpack.c.bf16 %v1159, %v1158
  %v1209 = vpack.c.bf16 %v1161, %v1160
  %v1210 = vpack.c.bf16 %v1163, %v1162
  %v1211 = vpack.c.bf16 %v1165, %v1164
  %v1212 = vpack.c.bf16 %v1167, %v1166
  %v1213 = vpack.c.bf16 %v1169, %v1168
  %v1214 = vpack.c.bf16 %v1171, %v1170
  %v1215 = vpack.c.bf16 %v1173, %v1172
  %v1216 = vpack.c.bf16 %v1175, %v1174
  %v1217 = vpack.c.bf16 %v1177, %v1176
  %v1218 = vpack.c.bf16 %v1179, %v1178
  %v1219 = vpack.c.bf16 %v1181, %v1180
  %v1220 = vpack.c.bf16 %v1183, %v1182
  %v1221 = vpack.c.bf16 %v1185, %v1184
  %v1222 = vpack.c.bf16 %v1187, %v1186
  %v1223 = vpack.c.bf16 %v1189, %v1188
  %v1224 = vpack.c.bf16 %v1191, %v1190
  %v1225 = vpack.c.bf16 %v1193, %v1192
  %1226 = vst [vmem:[#allocation3 + $0x38] sm:$0xff] %v1194
  %1227 = vst [vmem:[#allocation3 + $0x80] sm:$0xff] %v1195
  %1228 = vst [vmem:[#allocation3 + $0xc8] sm:$0xff] %v1196
  %1229 = vst [vmem:[#allocation3 + $0x110] sm:$0xff] %v1197
  %1230 = vst [vmem:[#allocation3 + $0x158] sm:$0xff] %v1198
  %1231 = vst [vmem:[#allocation3 + $0x1a0] sm:$0xff] %v1199
  %1232 = vst [vmem:[#allocation3 + $0x1e8] sm:$0xff] %v1200
  %1233 = vst [vmem:[#allocation3 + $0x230] sm:$0xff] %v1201
  %1234 = vst [vmem:[#allocation3 + $0x278] sm:$0xff] %v1202
  %1235 = vst [vmem:[#allocation3 + $0x2c0] sm:$0xff] %v1203
  %1236 = vst [vmem:[#allocation3 + $0x308] sm:$0xff] %v1204
  %1237 = vst [vmem:[#allocation3 + $0x350] sm:$0xff] %v1205
  %1238 = vst [vmem:[#allocation3 + $0x398] sm:$0xff] %v1206
  %1239 = vst [vmem:[#allocation3 + $0x3e0] sm:$0xff] %v1207
  %1240 = vst [vmem:[#allocation3 + $0x428] sm:$0xff] %v1208
  %1241 = vst [vmem:[#allocation3 + $0x470] sm:$0xff] %v1209
  %1242 = vst [vmem:[#allocation3 + $0x4b8] sm:$0xff] %v1210
  %1243 = vst [vmem:[#allocation3 + $0x500] sm:$0xff] %v1211
  %1244 = vst [vmem:[#allocation3 + $0x548] sm:$0xff] %v1212
  %1245 = vst [vmem:[#allocation3 + $0x590] sm:$0xff] %v1213
  %1246 = vst [vmem:[#allocation3 + $0x5d8] sm:$0xff] %v1214
  %1247 = vst [vmem:[#allocation3 + $0x620] sm:$0xff] %v1215
  %1248 = vst [vmem:[#allocation3 + $0x668] sm:$0xff] %v1216
  %1249 = vst [vmem:[#allocation3 + $0x6b0] sm:$0xff] %v1217
  %1250 = vst [vmem:[#allocation3 + $0x6f8] sm:$0xff] %v1218
  %1251 = vst [vmem:[#allocation3 + $0x740] sm:$0xff] %v1219
  %1252 = vst [vmem:[#allocation3 + $0x788] sm:$0xff] %v1220
  %1253 = vst [vmem:[#allocation3 + $0x7d0] sm:$0xff] %v1221
  %1254 = vst [vmem:[#allocation3 + $0x818] sm:$0xff] %v1222
  %1255 = vst [vmem:[#allocation3 + $0x860] sm:$0xff] %v1223
  %1256 = vst [vmem:[#allocation3 + $0x8a8] sm:$0xff] %v1224
  %1257 = vst [vmem:[#allocation3 + $0x8f0] sm:$0xff] %v1225
  %v1258 = vld [vmem:[%s1001 + $0x2] sm:$0xff]
  %v1259 = vld [vmem:[%s1001 + $0xa] sm:$0xff]
  %v1260 = vld [vmem:[%s1001 + $0x1a] sm:$0xff]
  %v1261 = vld [vmem:[%s1001 + $0x22] sm:$0xff]
  %v1262 = vld [vmem:[%s1001 + $0x32] sm:$0xff]
  %v1263 = vld [vmem:[%s1001 + $0x3a] sm:$0xff]
  %v1264 = vld [vmem:[%s1001 + $0x4a] sm:$0xff]
  %v1265 = vld [vmem:[%s1001 + $0x52] sm:$0xff]
  %v1266 = vld [vmem:[%s1001 + $0x62] sm:$0xff]
  %v1267 = vld [vmem:[%s1001 + $0x6a] sm:$0xff]
  %v1268 = vld [vmem:[%s1001 + $0x7a] sm:$0xff]
  %v1269 = vld [vmem:[%s1001 + $0x82] sm:$0xff]
  %v1270 = vld [vmem:[%s1001 + $0x92] sm:$0xff]
  %v1271 = vld [vmem:[%s1001 + $0x9a] sm:$0xff]
  %v1272 = vld [vmem:[%s1001 + $0xaa] sm:$0xff]
  %v1273 = vld [vmem:[%s1001 + $0xb2] sm:$0xff]
  %v1274 = vld [vmem:[%s1001 + $0xc2] sm:$0xff]
  %v1275 = vld [vmem:[%s1001 + $0xca] sm:$0xff]
  %v1276 = vld [vmem:[%s1001 + $0xda] sm:$0xff]
  %v1277 = vld [vmem:[%s1001 + $0xe2] sm:$0xff]
  %v1278 = vld [vmem:[%s1001 + $0xf2] sm:$0xff]
  %v1279 = vld [vmem:[%s1001 + $0xfa] sm:$0xff]
  %v1280 = vld [vmem:[%s1001 + $0x10a] sm:$0xff]
  %v1281 = vld [vmem:[%s1001 + $0x112] sm:$0xff]
  %v1282 = vld [vmem:[%s1001 + $0x122] sm:$0xff]
  %v1283 = vld [vmem:[%s1001 + $0x12a] sm:$0xff]
  %v1284 = vld [vmem:[%s1001 + $0x13a] sm:$0xff]
  %v1285 = vld [vmem:[%s1001 + $0x142] sm:$0xff]
  %v1286 = vld [vmem:[%s1001 + $0x152] sm:$0xff]
  %v1287 = vld [vmem:[%s1001 + $0x15a] sm:$0xff]
  %v1288 = vld [vmem:[%s1001 + $0x16a] sm:$0xff]
  %v1289 = vld [vmem:[%s1001 + $0x172] sm:$0xff]
  %v1290 = vld [vmem:[%s1001 + $0x1b2] sm:$0xff]
  %v1291 = vld [vmem:[%s1001 + $0x1ba] sm:$0xff]
  %v1292 = vld [vmem:[%s1001 + $0x1ca] sm:$0xff]
  %v1293 = vld [vmem:[%s1001 + $0x1d2] sm:$0xff]
  %v1294 = vld [vmem:[%s1001 + $0x1e2] sm:$0xff]
  %v1295 = vld [vmem:[%s1001 + $0x1ea] sm:$0xff]
  %v1296 = vld [vmem:[%s1001 + $0x1fa] sm:$0xff]
  %v1297 = vld [vmem:[%s1001 + $0x202] sm:$0xff]
  %v1298 = vld [vmem:[%s1001 + $0x212] sm:$0xff]
  %v1299 = vld [vmem:[%s1001 + $0x21a] sm:$0xff]
  %v1300 = vld [vmem:[%s1001 + $0x22a] sm:$0xff]
  %v1301 = vld [vmem:[%s1001 + $0x232] sm:$0xff]
  %v1302 = vld [vmem:[%s1001 + $0x242] sm:$0xff]
  %v1303 = vld [vmem:[%s1001 + $0x24a] sm:$0xff]
  %v1304 = vld [vmem:[%s1001 + $0x25a] sm:$0xff]
  %v1305 = vld [vmem:[%s1001 + $0x262] sm:$0xff]
  %v1306 = vld [vmem:[%s1001 + $0x272] sm:$0xff]
  %v1307 = vld [vmem:[%s1001 + $0x27a] sm:$0xff]
  %v1308 = vld [vmem:[%s1001 + $0x28a] sm:$0xff]
  %v1309 = vld [vmem:[%s1001 + $0x292] sm:$0xff]
  %v1310 = vld [vmem:[%s1001 + $0x2a2] sm:$0xff]
  %v1311 = vld [vmem:[%s1001 + $0x2aa] sm:$0xff]
  %v1312 = vld [vmem:[%s1001 + $0x2ba] sm:$0xff]
  %v1313 = vld [vmem:[%s1001 + $0x2c2] sm:$0xff]
  %v1314 = vld [vmem:[%s1001 + $0x2d2] sm:$0xff]
  %v1315 = vld [vmem:[%s1001 + $0x2da] sm:$0xff]
  %v1316 = vld [vmem:[%s1001 + $0x2ea] sm:$0xff]
  %v1317 = vld [vmem:[%s1001 + $0x2f2] sm:$0xff]
  %v1318 = vld [vmem:[%s1001 + $0x302] sm:$0xff]
  %v1319 = vld [vmem:[%s1001 + $0x30a] sm:$0xff]
  %v1320 = vld [vmem:[%s1001 + $0x31a] sm:$0xff]
  %v1321 = vld [vmem:[%s1001 + $0x322] sm:$0xff]
  %v1322 = vpack.c.bf16 %v1259, %v1258
  %v1323 = vpack.c.bf16 %v1261, %v1260
  %v1324 = vpack.c.bf16 %v1263, %v1262
  %v1325 = vpack.c.bf16 %v1265, %v1264
  %v1326 = vpack.c.bf16 %v1267, %v1266
  %v1327 = vpack.c.bf16 %v1269, %v1268
  %v1328 = vpack.c.bf16 %v1271, %v1270
  %v1329 = vpack.c.bf16 %v1273, %v1272
  %v1330 = vpack.c.bf16 %v1275, %v1274
  %v1331 = vpack.c.bf16 %v1277, %v1276
  %v1332 = vpack.c.bf16 %v1279, %v1278
  %v1333 = vpack.c.bf16 %v1281, %v1280
  %v1334 = vpack.c.bf16 %v1283, %v1282
  %v1335 = vpack.c.bf16 %v1285, %v1284
  %v1336 = vpack.c.bf16 %v1287, %v1286
  %v1337 = vpack.c.bf16 %v1289, %v1288
  %v1338 = vpack.c.bf16 %v1291, %v1290
  %v1339 = vpack.c.bf16 %v1293, %v1292
  %v1340 = vpack.c.bf16 %v1295, %v1294
  %v1341 = vpack.c.bf16 %v1297, %v1296
  %v1342 = vpack.c.bf16 %v1299, %v1298
  %v1343 = vpack.c.bf16 %v1301, %v1300
  %v1344 = vpack.c.bf16 %v1303, %v1302
  %v1345 = vpack.c.bf16 %v1305, %v1304
  %v1346 = vpack.c.bf16 %v1307, %v1306
  %v1347 = vpack.c.bf16 %v1309, %v1308
  %v1348 = vpack.c.bf16 %v1311, %v1310
  %v1349 = vpack.c.bf16 %v1313, %v1312
  %v1350 = vpack.c.bf16 %v1315, %v1314
  %v1351 = vpack.c.bf16 %v1317, %v1316
  %v1352 = vpack.c.bf16 %v1319, %v1318
  %v1353 = vpack.c.bf16 %v1321, %v1320
  %1354 = vst [vmem:[#allocation3 + $0x40] sm:$0xff] %v1322
  %1355 = vst [vmem:[#allocation3 + $0x88] sm:$0xff] %v1323
  %1356 = vst [vmem:[#allocation3 + $0xd0] sm:$0xff] %v1324
  %1357 = vst [vmem:[#allocation3 + $0x118] sm:$0xff] %v1325
  %1358 = vst [vmem:[#allocation3 + $0x160] sm:$0xff] %v1326
  %1359 = vst [vmem:[#allocation3 + $0x1a8] sm:$0xff] %v1327
  %1360 = vst [vmem:[#allocation3 + $0x1f0] sm:$0xff] %v1328
  %1361 = vst [vmem:[#allocation3 + $0x238] sm:$0xff] %v1329
  %1362 = vst [vmem:[#allocation3 + $0x280] sm:$0xff] %v1330
  %1363 = vst [vmem:[#allocation3 + $0x2c8] sm:$0xff] %v1331
  %1364 = vst [vmem:[#allocation3 + $0x310] sm:$0xff] %v1332
  %1365 = vst [vmem:[#allocation3 + $0x358] sm:$0xff] %v1333
  %1366 = vst [vmem:[#allocation3 + $0x3a0] sm:$0xff] %v1334
  %1367 = vst [vmem:[#allocation3 + $0x3e8] sm:$0xff] %v1335
  %1368 = vst [vmem:[#allocation3 + $0x430] sm:$0xff] %v1336
  %1369 = vst [vmem:[#allocation3 + $0x478] sm:$0xff] %v1337
  %1370 = vst [vmem:[#allocation3 + $0x4c0] sm:$0xff] %v1338
  %1371 = vst [vmem:[#allocation3 + $0x508] sm:$0xff] %v1339
  %1372 = vst [vmem:[#allocation3 + $0x550] sm:$0xff] %v1340
  %1373 = vst [vmem:[#allocation3 + $0x598] sm:$0xff] %v1341
  %1374 = vst [vmem:[#allocation3 + $0x5e0] sm:$0xff] %v1342
  %1375 = vst [vmem:[#allocation3 + $0x628] sm:$0xff] %v1343
  %1376 = vst [vmem:[#allocation3 + $0x670] sm:$0xff] %v1344
  %1377 = vst [vmem:[#allocation3 + $0x6b8] sm:$0xff] %v1345
  %1378 = vst [vmem:[#allocation3 + $0x700] sm:$0xff] %v1346
  %1379 = vst [vmem:[#allocation3 + $0x748] sm:$0xff] %v1347
  %1380 = vst [vmem:[#allocation3 + $0x790] sm:$0xff] %v1348
  %1381 = vst [vmem:[#allocation3 + $0x7d8] sm:$0xff] %v1349
  %1382 = vst [vmem:[#allocation3 + $0x820] sm:$0xff] %v1350
  %1383 = vst [vmem:[#allocation3 + $0x868] sm:$0xff] %v1351
  %1384 = vst [vmem:[#allocation3 + $0x8b0] sm:$0xff] %v1352
  %1385 = vst [vmem:[#allocation3 + $0x8f8] sm:$0xff] %v1353
  %v1386 = vld [vmem:[#allocation3] sm:$0xff]
  %v1387 = vld [vmem:[#allocation3 + $0x8] sm:$0xff]
  %v1388 = vld [vmem:[#allocation3 + $0x10] sm:$0xff]
  %v1389 = vld [vmem:[#allocation3 + $0x18] sm:$0xff]
  %v1390 = vld [vmem:[#allocation3 + $0x20] sm:$0xff]
  %v1391 = vld [vmem:[#allocation3 + $0x28] sm:$0xff]
  %v1392 = vld [vmem:[#allocation3 + $0x30] sm:$0xff]
  %v1393 = vld [vmem:[#allocation3 + $0x38] sm:$0xff]
  %v1394 = vld [vmem:[#allocation3 + $0x40] sm:$0xff]
  %v1395 = vld [vmem:[#allocation3 + $0x48] sm:$0xff]
  %v1396 = vld [vmem:[#allocation3 + $0x50] sm:$0xff]
  %v1397 = vld [vmem:[#allocation3 + $0x58] sm:$0xff]
  %v1398 = vld [vmem:[#allocation3 + $0x60] sm:$0xff]
  %v1399 = vld [vmem:[#allocation3 + $0x68] sm:$0xff]
  %v1400 = vld [vmem:[#allocation3 + $0x70] sm:$0xff]
  %v1401 = vld [vmem:[#allocation3 + $0x78] sm:$0xff]
  %v1402 = vld [vmem:[#allocation3 + $0x80] sm:$0xff]
  %v1403 = vld [vmem:[#allocation3 + $0x88] sm:$0xff]
  %v1404 = vld [vmem:[#allocation3 + $0x90] sm:$0xff]
  %v1405 = vld [vmem:[#allocation3 + $0x98] sm:$0xff]
  %v1406 = vld [vmem:[#allocation3 + $0xa0] sm:$0xff]
  %v1407 = vld [vmem:[#allocation3 + $0xa8] sm:$0xff]
  %v1408 = vld [vmem:[#allocation3 + $0xb0] sm:$0xff]
  %v1409 = vld [vmem:[#allocation3 + $0xb8] sm:$0xff]
  %v1410 = vld [vmem:[#allocation3 + $0xc0] sm:$0xff]
  %v1411 = vld [vmem:[#allocation3 + $0xc8] sm:$0xff]
  %v1412 = vld [vmem:[#allocation3 + $0xd0] sm:$0xff]
  %v1413 = vld [vmem:[#allocation3 + $0xd8] sm:$0xff]
  %v1414 = vld [vmem:[#allocation3 + $0xe0] sm:$0xff]
  %v1415 = vld [vmem:[#allocation3 + $0xe8] sm:$0xff]
  %v1416 = vld [vmem:[#allocation3 + $0xf0] sm:$0xff]
  %v1417 = vld [vmem:[#allocation3 + $0xf8] sm:$0xff]
  %v1418 = vld [vmem:[#allocation3 + $0x100] sm:$0xff]
  %v1419 = vld [vmem:[#allocation3 + $0x108] sm:$0xff]
  %v1420 = vld [vmem:[#allocation3 + $0x110] sm:$0xff]
  %v1421 = vld [vmem:[#allocation3 + $0x118] sm:$0xff]
  %v1422 = vld [vmem:[#allocation3 + $0x120] sm:$0xff]
  %v1423 = vld [vmem:[#allocation3 + $0x128] sm:$0xff]
  %v1424 = vld [vmem:[#allocation3 + $0x130] sm:$0xff]
  %v1425 = vld [vmem:[#allocation3 + $0x138] sm:$0xff]
  %v1426 = vld [vmem:[#allocation3 + $0x140] sm:$0xff]
  %v1427 = vld [vmem:[#allocation3 + $0x148] sm:$0xff]
  %v1428 = vld [vmem:[#allocation3 + $0x150] sm:$0xff]
  %v1429 = vld [vmem:[#allocation3 + $0x158] sm:$0xff]
  %v1430 = vld [vmem:[#allocation3 + $0x160] sm:$0xff]
  %v1431 = vld [vmem:[#allocation3 + $0x168] sm:$0xff]
  %v1432 = vld [vmem:[#allocation3 + $0x170] sm:$0xff]
  %v1433 = vld [vmem:[#allocation3 + $0x178] sm:$0xff]
  %v1434 = vld [vmem:[#allocation3 + $0x180] sm:$0xff]
  %v1435 = vld [vmem:[#allocation3 + $0x188] sm:$0xff]
  %v1436 = vld [vmem:[#allocation3 + $0x190] sm:$0xff]
  %v1437 = vld [vmem:[#allocation3 + $0x198] sm:$0xff]
  %v1438 = vld [vmem:[#allocation3 + $0x1a0] sm:$0xff]
  %v1439 = vld [vmem:[#allocation3 + $0x1a8] sm:$0xff]
  %v1440 = vld [vmem:[#allocation3 + $0x1b0] sm:$0xff]
  %v1441 = vld [vmem:[#allocation3 + $0x1b8] sm:$0xff]
  %v1442 = vld [vmem:[#allocation3 + $0x1c0] sm:$0xff]
  %v1443 = vld [vmem:[#allocation3 + $0x1c8] sm:$0xff]
  %v1444 = vld [vmem:[#allocation3 + $0x1d0] sm:$0xff]
  %v1445 = vld [vmem:[#allocation3 + $0x1d8] sm:$0xff]
  %v1446 = vld [vmem:[#allocation3 + $0x1e0] sm:$0xff]
  %v1447 = vld [vmem:[#allocation3 + $0x1e8] sm:$0xff]
  %v1448 = vld [vmem:[#allocation3 + $0x1f0] sm:$0xff]
  %v1449 = vld [vmem:[#allocation3 + $0x1f8] sm:$0xff]
  %v1450 = vld [vmem:[#allocation3 + $0x200] sm:$0xff]
  %v1451 = vld [vmem:[#allocation3 + $0x208] sm:$0xff]
  %v1452 = vld [vmem:[#allocation3 + $0x210] sm:$0xff]
  %v1453 = vld [vmem:[#allocation3 + $0x218] sm:$0xff]
  %v1454 = vld [vmem:[#allocation3 + $0x220] sm:$0xff]
  %v1455 = vld [vmem:[#allocation3 + $0x228] sm:$0xff]
  %v1456 = vld [vmem:[#allocation3 + $0x230] sm:$0xff]
  %v1457 = vld [vmem:[#allocation3 + $0x238] sm:$0xff]
  %v1458 = vld [vmem:[#allocation3 + $0x240] sm:$0xff]
  %v1459 = vld [vmem:[#allocation3 + $0x248] sm:$0xff]
  %v1460 = vld [vmem:[#allocation3 + $0x250] sm:$0xff]
  %v1461 = vld [vmem:[#allocation3 + $0x258] sm:$0xff]
  %v1462 = vld [vmem:[#allocation3 + $0x260] sm:$0xff]
  %v1463 = vld [vmem:[#allocation3 + $0x268] sm:$0xff]
  %v1464 = vld [vmem:[#allocation3 + $0x270] sm:$0xff]
  %v1465 = vld [vmem:[#allocation3 + $0x278] sm:$0xff]
  %v1466 = vld [vmem:[#allocation3 + $0x280] sm:$0xff]
  %v1467 = vld [vmem:[#allocation3 + $0x288] sm:$0xff]
  %v1468 = vld [vmem:[#allocation3 + $0x290] sm:$0xff]
  %v1469 = vld [vmem:[#allocation3 + $0x298] sm:$0xff]
  %v1470 = vld [vmem:[#allocation3 + $0x2a0] sm:$0xff]
  %v1471 = vld [vmem:[#allocation3 + $0x2a8] sm:$0xff]
  %v1472 = vld [vmem:[#allocation3 + $0x2b0] sm:$0xff]
  %v1473 = vld [vmem:[#allocation3 + $0x2b8] sm:$0xff]
  %v1474 = vld [vmem:[#allocation3 + $0x2c0] sm:$0xff]
  %v1475 = vld [vmem:[#allocation3 + $0x2c8] sm:$0xff]
  %v1476 = vld [vmem:[#allocation3 + $0x2d0] sm:$0xff]
  %v1477 = vld [vmem:[#allocation3 + $0x2d8] sm:$0xff]
  %v1478 = vld [vmem:[#allocation3 + $0x2e0] sm:$0xff]
  %v1479 = vld [vmem:[#allocation3 + $0x2e8] sm:$0xff]
  %v1480 = vld [vmem:[#allocation3 + $0x2f0] sm:$0xff]
  %v1481 = vld [vmem:[#allocation3 + $0x2f8] sm:$0xff]
  %v1482 = vld [vmem:[#allocation3 + $0x300] sm:$0xff]
  %v1483 = vld [vmem:[#allocation3 + $0x308] sm:$0xff]
  %v1484 = vld [vmem:[#allocation3 + $0x310] sm:$0xff]
  %v1485 = vld [vmem:[#allocation3 + $0x318] sm:$0xff]
  %v1486 = vld [vmem:[#allocation3 + $0x320] sm:$0xff]
  %v1487 = vld [vmem:[#allocation3 + $0x328] sm:$0xff]
  %v1488 = vld [vmem:[#allocation3 + $0x330] sm:$0xff]
  %v1489 = vld [vmem:[#allocation3 + $0x338] sm:$0xff]
  %v1490 = vld [vmem:[#allocation3 + $0x340] sm:$0xff]
  %v1491 = vld [vmem:[#allocation3 + $0x348] sm:$0xff]
  %v1492 = vld [vmem:[#allocation3 + $0x350] sm:$0xff]
  %v1493 = vld [vmem:[#allocation3 + $0x358] sm:$0xff]
  %v1494 = vld [vmem:[#allocation3 + $0x360] sm:$0xff]
  %v1495 = vld [vmem:[#allocation3 + $0x368] sm:$0xff]
  %v1496 = vld [vmem:[#allocation3 + $0x370] sm:$0xff]
  %v1497 = vld [vmem:[#allocation3 + $0x378] sm:$0xff]
  %v1498 = vld [vmem:[#allocation3 + $0x380] sm:$0xff]
  %v1499 = vld [vmem:[#allocation3 + $0x388] sm:$0xff]
  %v1500 = vld [vmem:[#allocation3 + $0x390] sm:$0xff]
  %v1501 = vld [vmem:[#allocation3 + $0x398] sm:$0xff]
  %v1502 = vld [vmem:[#allocation3 + $0x3a0] sm:$0xff]
  %v1503 = vld [vmem:[#allocation3 + $0x3a8] sm:$0xff]
  %v1504 = vld [vmem:[#allocation3 + $0x3b0] sm:$0xff]
  %v1505 = vld [vmem:[#allocation3 + $0x3b8] sm:$0xff]
  %v1506 = vld [vmem:[#allocation3 + $0x3c0] sm:$0xff]
  %v1507 = vld [vmem:[#allocation3 + $0x3c8] sm:$0xff]
  %v1508 = vld [vmem:[#allocation3 + $0x3d0] sm:$0xff]
  %v1509 = vld [vmem:[#allocation3 + $0x3d8] sm:$0xff]
  %v1510 = vld [vmem:[#allocation3 + $0x3e0] sm:$0xff]
  %v1511 = vld [vmem:[#allocation3 + $0x3e8] sm:$0xff]
  %v1512 = vld [vmem:[#allocation3 + $0x3f0] sm:$0xff]
  %v1513 = vld [vmem:[#allocation3 + $0x3f8] sm:$0xff]
  %v1514 = vld [vmem:[#allocation3 + $0x400] sm:$0xff]
  %v1515 = vld [vmem:[#allocation3 + $0x408] sm:$0xff]
  %v1516 = vld [vmem:[#allocation3 + $0x410] sm:$0xff]
  %v1517 = vld [vmem:[#allocation3 + $0x418] sm:$0xff]
  %v1518 = vld [vmem:[#allocation3 + $0x420] sm:$0xff]
  %v1519 = vld [vmem:[#allocation3 + $0x428] sm:$0xff]
  %v1520 = vld [vmem:[#allocation3 + $0x430] sm:$0xff]
  %v1521 = vld [vmem:[#allocation3 + $0x438] sm:$0xff]
  %v1522 = vld [vmem:[#allocation3 + $0x440] sm:$0xff]
  %v1523 = vld [vmem:[#allocation3 + $0x448] sm:$0xff]
  %v1524 = vld [vmem:[#allocation3 + $0x450] sm:$0xff]
  %v1525 = vld [vmem:[#allocation3 + $0x458] sm:$0xff]
  %v1526 = vld [vmem:[#allocation3 + $0x460] sm:$0xff]
  %v1527 = vld [vmem:[#allocation3 + $0x468] sm:$0xff]
  %v1528 = vld [vmem:[#allocation3 + $0x470] sm:$0xff]
  %v1529 = vld [vmem:[#allocation3 + $0x478] sm:$0xff]
  %v1530 = vld [vmem:[#allocation3 + $0x480] sm:$0xff]
  %v1531 = vld [vmem:[#allocation3 + $0x488] sm:$0xff]
  %v1532 = vld [vmem:[#allocation3 + $0x490] sm:$0xff]
  %v1533 = vld [vmem:[#allocation3 + $0x498] sm:$0xff]
  %v1534 = vld [vmem:[#allocation3 + $0x4a0] sm:$0xff]
  %v1535 = vld [vmem:[#allocation3 + $0x4a8] sm:$0xff]
  %v1536 = vld [vmem:[#allocation3 + $0x4b0] sm:$0xff]
  %v1537 = vld [vmem:[#allocation3 + $0x4b8] sm:$0xff]
  %v1538 = vld [vmem:[#allocation3 + $0x4c0] sm:$0xff]
  %v1539 = vld [vmem:[#allocation3 + $0x4c8] sm:$0xff]
  %v1540 = vld [vmem:[#allocation3 + $0x4d0] sm:$0xff]
  %v1541 = vld [vmem:[#allocation3 + $0x4d8] sm:$0xff]
  %v1542 = vld [vmem:[#allocation3 + $0x4e0] sm:$0xff]
  %v1543 = vld [vmem:[#allocation3 + $0x4e8] sm:$0xff]
  %v1544 = vld [vmem:[#allocation3 + $0x4f0] sm:$0xff]
  %v1545 = vld [vmem:[#allocation3 + $0x4f8] sm:$0xff]
  %v1546 = vld [vmem:[#allocation3 + $0x500] sm:$0xff]
  %v1547 = vld [vmem:[#allocation3 + $0x508] sm:$0xff]
  %v1548 = vld [vmem:[#allocation3 + $0x510] sm:$0xff]
  %v1549 = vld [vmem:[#allocation3 + $0x518] sm:$0xff]
  %v1550 = vld [vmem:[#allocation3 + $0x520] sm:$0xff]
  %v1551 = vld [vmem:[#allocation3 + $0x528] sm:$0xff]
  %v1552 = vld [vmem:[#allocation3 + $0x530] sm:$0xff]
  %v1553 = vld [vmem:[#allocation3 + $0x538] sm:$0xff]
  %v1554 = vld [vmem:[#allocation3 + $0x540] sm:$0xff]
  %v1555 = vld [vmem:[#allocation3 + $0x548] sm:$0xff]
  %v1556 = vld [vmem:[#allocation3 + $0x550] sm:$0xff]
  %v1557 = vld [vmem:[#allocation3 + $0x558] sm:$0xff]
  %v1558 = vld [vmem:[#allocation3 + $0x560] sm:$0xff]
  %v1559 = vld [vmem:[#allocation3 + $0x568] sm:$0xff]
  %v1560 = vld [vmem:[#allocation3 + $0x570] sm:$0xff]
  %v1561 = vld [vmem:[#allocation3 + $0x578] sm:$0xff]
  %v1562 = vld [vmem:[#allocation3 + $0x580] sm:$0xff]
  %v1563 = vld [vmem:[#allocation3 + $0x588] sm:$0xff]
  %v1564 = vld [vmem:[#allocation3 + $0x590] sm:$0xff]
  %v1565 = vld [vmem:[#allocation3 + $0x598] sm:$0xff]
  %v1566 = vld [vmem:[#allocation3 + $0x5a0] sm:$0xff]
  %v1567 = vld [vmem:[#allocation3 + $0x5a8] sm:$0xff]
  %v1568 = vld [vmem:[#allocation3 + $0x5b0] sm:$0xff]
  %v1569 = vld [vmem:[#allocation3 + $0x5b8] sm:$0xff]
  %v1570 = vld [vmem:[#allocation3 + $0x5c0] sm:$0xff]
  %v1571 = vld [vmem:[#allocation3 + $0x5c8] sm:$0xff]
  %v1572 = vld [vmem:[#allocation3 + $0x5d0] sm:$0xff]
  %v1573 = vld [vmem:[#allocation3 + $0x5d8] sm:$0xff]
  %v1574 = vld [vmem:[#allocation3 + $0x5e0] sm:$0xff]
  %v1575 = vld [vmem:[#allocation3 + $0x5e8] sm:$0xff]
  %v1576 = vld [vmem:[#allocation3 + $0x5f0] sm:$0xff]
  %v1577 = vld [vmem:[#allocation3 + $0x5f8] sm:$0xff]
  %v1578 = vld [vmem:[#allocation3 + $0x600] sm:$0xff]
  %v1579 = vld [vmem:[#allocation3 + $0x608] sm:$0xff]
  %v1580 = vld [vmem:[#allocation3 + $0x610] sm:$0xff]
  %v1581 = vld [vmem:[#allocation3 + $0x618] sm:$0xff]
  %v1582 = vld [vmem:[#allocation3 + $0x620] sm:$0xff]
  %v1583 = vld [vmem:[#allocation3 + $0x628] sm:$0xff]
  %v1584 = vld [vmem:[#allocation3 + $0x630] sm:$0xff]
  %v1585 = vld [vmem:[#allocation3 + $0x638] sm:$0xff]
  %v1586 = vld [vmem:[#allocation3 + $0x640] sm:$0xff]
  %v1587 = vld [vmem:[#allocation3 + $0x648] sm:$0xff]
  %v1588 = vld [vmem:[#allocation3 + $0x650] sm:$0xff]
  %v1589 = vld [vmem:[#allocation3 + $0x658] sm:$0xff]
  %v1590 = vld [vmem:[#allocation3 + $0x660] sm:$0xff]
  %v1591 = vld [vmem:[#allocation3 + $0x668] sm:$0xff]
  %v1592 = vld [vmem:[#allocation3 + $0x670] sm:$0xff]
  %v1593 = vld [vmem:[#allocation3 + $0x678] sm:$0xff]
  %v1594 = vld [vmem:[#allocation3 + $0x680] sm:$0xff]
  %v1595 = vld [vmem:[#allocation3 + $0x688] sm:$0xff]
  %v1596 = vld [vmem:[#allocation3 + $0x690] sm:$0xff]
  %v1597 = vld [vmem:[#allocation3 + $0x698] sm:$0xff]
  %v1598 = vld [vmem:[#allocation3 + $0x6a0] sm:$0xff]
  %v1599 = vld [vmem:[#allocation3 + $0x6a8] sm:$0xff]
  %v1600 = vld [vmem:[#allocation3 + $0x6b0] sm:$0xff]
  %v1601 = vld [vmem:[#allocation3 + $0x6b8] sm:$0xff]
  %v1602 = vld [vmem:[#allocation3 + $0x6c0] sm:$0xff]
  %v1603 = vld [vmem:[#allocation3 + $0x6c8] sm:$0xff]
  %v1604 = vld [vmem:[#allocation3 + $0x6d0] sm:$0xff]
  %v1605 = vld [vmem:[#allocation3 + $0x6d8] sm:$0xff]
  %v1606 = vld [vmem:[#allocation3 + $0x6e0] sm:$0xff]
  %v1607 = vld [vmem:[#allocation3 + $0x6e8] sm:$0xff]
  %v1608 = vld [vmem:[#allocation3 + $0x6f0] sm:$0xff]
  %v1609 = vld [vmem:[#allocation3 + $0x6f8] sm:$0xff]
  %v1610 = vld [vmem:[#allocation3 + $0x700] sm:$0xff]
  %v1611 = vld [vmem:[#allocation3 + $0x708] sm:$0xff]
  %v1612 = vld [vmem:[#allocation3 + $0x710] sm:$0xff]
  %v1613 = vld [vmem:[#allocation3 + $0x718] sm:$0xff]
  %v1614 = vld [vmem:[#allocation3 + $0x720] sm:$0xff]
  %v1615 = vld [vmem:[#allocation3 + $0x728] sm:$0xff]
  %v1616 = vld [vmem:[#allocation3 + $0x730] sm:$0xff]
  %v1617 = vld [vmem:[#allocation3 + $0x738] sm:$0xff]
  %v1618 = vld [vmem:[#allocation3 + $0x740] sm:$0xff]
  %v1619 = vld [vmem:[#allocation3 + $0x748] sm:$0xff]
  %v1620 = vld [vmem:[#allocation3 + $0x750] sm:$0xff]
  %v1621 = vld [vmem:[#allocation3 + $0x758] sm:$0xff]
  %v1622 = vld [vmem:[#allocation3 + $0x760] sm:$0xff]
  %v1623 = vld [vmem:[#allocation3 + $0x768] sm:$0xff]
  %v1624 = vld [vmem:[#allocation3 + $0x770] sm:$0xff]
  %v1625 = vld [vmem:[#allocation3 + $0x778] sm:$0xff]
  %v1626 = vld [vmem:[#allocation3 + $0x780] sm:$0xff]
  %v1627 = vld [vmem:[#allocation3 + $0x788] sm:$0xff]
  %v1628 = vld [vmem:[#allocation3 + $0x790] sm:$0xff]
  %v1629 = vld [vmem:[#allocation3 + $0x798] sm:$0xff]
  %v1630 = vld [vmem:[#allocation3 + $0x7a0] sm:$0xff]
  %v1631 = vld [vmem:[#allocation3 + $0x7a8] sm:$0xff]
  %v1632 = vld [vmem:[#allocation3 + $0x7b0] sm:$0xff]
  %v1633 = vld [vmem:[#allocation3 + $0x7b8] sm:$0xff]
  %v1634 = vld [vmem:[#allocation3 + $0x7c0] sm:$0xff]
  %v1635 = vld [vmem:[#allocation3 + $0x7c8] sm:$0xff]
  %v1636 = vld [vmem:[#allocation3 + $0x7d0] sm:$0xff]
  %v1637 = vld [vmem:[#allocation3 + $0x7d8] sm:$0xff]
  %v1638 = vld [vmem:[#allocation3 + $0x7e0] sm:$0xff]
  %v1639 = vld [vmem:[#allocation3 + $0x7e8] sm:$0xff]
  %v1640 = vld [vmem:[#allocation3 + $0x7f0] sm:$0xff]
  %v1641 = vld [vmem:[#allocation3 + $0x7f8] sm:$0xff]
  %v1642 = vld [vmem:[#allocation3 + $0x800] sm:$0xff]
  %v1643 = vld [vmem:[#allocation3 + $0x808] sm:$0xff]
  %v1644 = vld [vmem:[#allocation3 + $0x810] sm:$0xff]
  %v1645 = vld [vmem:[#allocation3 + $0x818] sm:$0xff]
  %v1646 = vld [vmem:[#allocation3 + $0x820] sm:$0xff]
  %v1647 = vld [vmem:[#allocation3 + $0x828] sm:$0xff]
  %v1648 = vld [vmem:[#allocation3 + $0x830] sm:$0xff]
  %v1649 = vld [vmem:[#allocation3 + $0x838] sm:$0xff]
  %v1650 = vld [vmem:[#allocation3 + $0x840] sm:$0xff]
  %v1651 = vld [vmem:[#allocation3 + $0x848] sm:$0xff]
  %v1652 = vld [vmem:[#allocation3 + $0x850] sm:$0xff]
  %v1653 = vld [vmem:[#allocation3 + $0x858] sm:$0xff]
  %v1654 = vld [vmem:[#allocation3 + $0x860] sm:$0xff]
  %v1655 = vld [vmem:[#allocation3 + $0x868] sm:$0xff]
  %v1656 = vld [vmem:[#allocation3 + $0x870] sm:$0xff]
  %v1657 = vld [vmem:[#allocation3 + $0x878] sm:$0xff]
  %v1658 = vld [vmem:[#allocation3 + $0x880] sm:$0xff]
  %v1659 = vld [vmem:[#allocation3 + $0x888] sm:$0xff]
  %v1660 = vld [vmem:[#allocation3 + $0x890] sm:$0xff]
  %v1661 = vld [vmem:[#allocation3 + $0x898] sm:$0xff]
  %v1662 = vld [vmem:[#allocation3 + $0x8a0] sm:$0xff]
  %v1663 = vld [vmem:[#allocation3 + $0x8a8] sm:$0xff]
  %v1664 = vld [vmem:[#allocation3 + $0x8b0] sm:$0xff]
  %v1665 = vld [vmem:[#allocation3 + $0x8b8] sm:$0xff]
  %v1666 = vld [vmem:[#allocation3 + $0x8c0] sm:$0xff]
  %v1667 = vld [vmem:[#allocation3 + $0x8c8] sm:$0xff]
  %v1668 = vld [vmem:[#allocation3 + $0x8d0] sm:$0xff]
  %v1669 = vld [vmem:[#allocation3 + $0x8d8] sm:$0xff]
  %v1670 = vld [vmem:[#allocation3 + $0x8e0] sm:$0xff]
  %v1671 = vld [vmem:[#allocation3 + $0x8e8] sm:$0xff]
  %v1672 = vld [vmem:[#allocation3 + $0x8f0] sm:$0xff]
  %v1673 = vld [vmem:[#allocation3 + $0x8f8] sm:$0xff]
  %v1674 = vld [vmem:[%s1] sm:$0xf]
  %v1675 = vld [vmem:[%s1 + $0x4] sm:$0xf]
  %v1676 = vld [vmem:[%s1 + $0x8] sm:$0xf]
  %v1677 = vld [vmem:[%s1 + $0xc] sm:$0xf]
  %v1678 = vld [vmem:[%s1 + $0x10] sm:$0xf]
  %v1679 = vld [vmem:[%s1 + $0x14] sm:$0xf]
  %v1680 = vld [vmem:[%s1 + $0x18] sm:$0xf]
  %v1681 = vld [vmem:[%s1 + $0x1c] sm:$0xf]
  %v1682 = vld [vmem:[%s1 + $0x20] sm:$0xf]
  %v1683 = vld [vmem:[%s1 + $0x24] sm:$0xf]
  %v1684 = vld [vmem:[%s1 + $0x28] sm:$0xf]
  %v1685 = vld [vmem:[%s1 + $0x2c] sm:$0xf]
  %v1686 = vld [vmem:[%s1 + $0x30] sm:$0xf]
  %v1687 = vld [vmem:[%s1 + $0x34] sm:$0xf]
  %v1688 = vld [vmem:[%s1 + $0x38] sm:$0xf]
  %v1689 = vld [vmem:[%s1 + $0x3c] sm:$0xf]
  %v1690 = vld [vmem:[%s1 + $0x40] sm:$0xf]
  %v1691 = vld [vmem:[%s1 + $0x44] sm:$0xf]
  %v1692 = vld [vmem:[%s1 + $0x48] sm:$0xf]
  %v1693 = vld [vmem:[%s1 + $0x4c] sm:$0xf]
  %v1694 = vld [vmem:[%s1 + $0x50] sm:$0xf]
  %v1695 = vld [vmem:[%s1 + $0x54] sm:$0xf]
  %v1696 = vld [vmem:[%s1 + $0x58] sm:$0xf]
  %v1697 = vld [vmem:[%s1 + $0x5c] sm:$0xf]
  %v1698 = vld [vmem:[%s1 + $0x60] sm:$0xf]
  %v1699 = vld [vmem:[%s1 + $0x64] sm:$0xf]
  %v1700 = vld [vmem:[%s1 + $0x68] sm:$0xf]
  %v1701 = vld [vmem:[%s1 + $0x6c] sm:$0xf]
  %v1702 = vld [vmem:[%s1 + $0x70] sm:$0xf]
  %v1703 = vld [vmem:[%s1 + $0x74] sm:$0xf]
  %v1704 = vld [vmem:[%s1 + $0x78] sm:$0xf]
  %v1705 = vld [vmem:[%s1 + $0x7c] sm:$0xf]
  %v1706 = vld [vmem:[%s1 + $0x80] sm:$0xf]
  %v1707 = vld [vmem:[%s1 + $0x84] sm:$0xf]
  %v1708 = vld [vmem:[%s1 + $0x88] sm:$0xf]
  %v1709 = vld [vmem:[%s1 + $0x8c] sm:$0xf]
  %v1710 = vld [vmem:[%s1 + $0x90] sm:$0xf]
  %v1711 = vld [vmem:[%s1 + $0x94] sm:$0xf]
  %v1712 = vld [vmem:[%s1 + $0x98] sm:$0xf]
  %v1713 = vld [vmem:[%s1 + $0x9c] sm:$0xf]
  %v1714 = vld [vmem:[%s1 + $0xa0] sm:$0xf]
  %v1715 = vld [vmem:[%s1 + $0xa4] sm:$0xf]
  %v1716 = vld [vmem:[%s1 + $0xa8] sm:$0xf]
  %v1717 = vld [vmem:[%s1 + $0xac] sm:$0xf]
  %v1718 = vld [vmem:[%s1 + $0xb0] sm:$0xf]
  %v1719 = vld [vmem:[%s1 + $0xb4] sm:$0xf]
  %v1720 = vld [vmem:[%s1 + $0xb8] sm:$0xf]
  %v1721 = vld [vmem:[%s1 + $0xbc] sm:$0xf]
  %v1722 = vld [vmem:[%s1 + $0xc0] sm:$0xf]
  %v1723 = vld [vmem:[%s1 + $0xc4] sm:$0xf]
  %v1724 = vld [vmem:[%s1 + $0xc8] sm:$0xf]
  %v1725 = vld [vmem:[%s1 + $0xcc] sm:$0xf]
  %v1726 = vld [vmem:[%s1 + $0xd0] sm:$0xf]
  %v1727 = vld [vmem:[%s1 + $0xd4] sm:$0xf]
  %v1728 = vld [vmem:[%s1 + $0xd8] sm:$0xf]
  %v1729 = vld [vmem:[%s1 + $0xdc] sm:$0xf]
  %v1730 = vld [vmem:[%s1 + $0xe0] sm:$0xf]
  %v1731 = vld [vmem:[%s1 + $0xe4] sm:$0xf]
  %v1732 = vld [vmem:[%s1 + $0xe8] sm:$0xf]
  %v1733 = vld [vmem:[%s1 + $0xec] sm:$0xf]
  %v1734 = vld [vmem:[%s1 + $0xf0] sm:$0xf]
  %v1735 = vld [vmem:[%s1 + $0xf4] sm:$0xf]
  %v1736 = vld [vmem:[%s1 + $0xf8] sm:$0xf]
  %v1737 = vld [vmem:[%s1 + $0xfc] sm:$0xf]
  %v1738 = vld [vmem:[%s1 + $0x100] sm:$0xf]
  %v1739 = vld [vmem:[%s1 + $0x104] sm:$0xf]
  %v1740 = vld [vmem:[%s1 + $0x108] sm:$0xf]
  %v1741 = vld [vmem:[%s1 + $0x10c] sm:$0xf]
  %v1742 = vld [vmem:[%s1 + $0x110] sm:$0xf]
  %v1743 = vld [vmem:[%s1 + $0x114] sm:$0xf]
  %v1744 = vld [vmem:[%s1 + $0x118] sm:$0xf]
  %v1745 = vld [vmem:[%s1 + $0x11c] sm:$0xf]
  %v1746 = vld [vmem:[%s1 + $0x120] sm:$0xf]
  %v1747 = vld [vmem:[%s1 + $0x124] sm:$0xf]
  %v1748 = vld [vmem:[%s1 + $0x128] sm:$0xf]
  %v1749 = vld [vmem:[%s1 + $0x12c] sm:$0xf]
  %v1750 = vld [vmem:[%s1 + $0x130] sm:$0xf]
  %v1751 = vld [vmem:[%s1 + $0x134] sm:$0xf]
  %v1752 = vld [vmem:[%s1 + $0x138] sm:$0xf]
  %v1753 = vld [vmem:[%s1 + $0x13c] sm:$0xf]
  %v1754 = vld [vmem:[%s1 + $0x140] sm:$0xf]
  %v1755 = vld [vmem:[%s1 + $0x144] sm:$0xf]
  %v1756 = vld [vmem:[%s1 + $0x148] sm:$0xf]
  %v1757 = vld [vmem:[%s1 + $0x14c] sm:$0xf]
  %v1758 = vld [vmem:[%s1 + $0x150] sm:$0xf]
  %v1759 = vld [vmem:[%s1 + $0x154] sm:$0xf]
  %v1760 = vld [vmem:[%s1 + $0x158] sm:$0xf]
  %v1761 = vld [vmem:[%s1 + $0x15c] sm:$0xf]
  %v1762 = vld [vmem:[%s1 + $0x160] sm:$0xf]
  %v1763 = vld [vmem:[%s1 + $0x164] sm:$0xf]
  %v1764 = vld [vmem:[%s1 + $0x168] sm:$0xf]
  %v1765 = vld [vmem:[%s1 + $0x16c] sm:$0xf]
  %v1766 = vld [vmem:[%s1 + $0x170] sm:$0xf]
  %v1767 = vld [vmem:[%s1 + $0x174] sm:$0xf]
  %v1768 = vld [vmem:[%s1 + $0x178] sm:$0xf]
  %v1769 = vld [vmem:[%s1 + $0x17c] sm:$0xf]
  %v1770 = vld [vmem:[%s1 + $0x180] sm:$0xf]
  %v1771 = vld [vmem:[%s1 + $0x184] sm:$0xf]
  %v1772 = vld [vmem:[%s1 + $0x188] sm:$0xf]
  %v1773 = vld [vmem:[%s1 + $0x18c] sm:$0xf]
  %v1774 = vld [vmem:[%s1 + $0x190] sm:$0xf]
  %v1775 = vld [vmem:[%s1 + $0x194] sm:$0xf]
  %v1776 = vld [vmem:[%s1 + $0x198] sm:$0xf]
  %v1777 = vld [vmem:[%s1 + $0x19c] sm:$0xf]
  %v1778 = vld [vmem:[%s1 + $0x1a0] sm:$0xf]
  %v1779 = vld [vmem:[%s1 + $0x1a4] sm:$0xf]
  %v1780 = vld [vmem:[%s1 + $0x1a8] sm:$0xf]
  %v1781 = vld [vmem:[%s1 + $0x1ac] sm:$0xf]
  %v1782 = vld [vmem:[%s1 + $0x1b0] sm:$0xf]
  %v1783 = vld [vmem:[%s1 + $0x1b4] sm:$0xf]
  %v1784 = vld [vmem:[%s1 + $0x1b8] sm:$0xf]
  %v1785 = vld [vmem:[%s1 + $0x1bc] sm:$0xf]
  %v1786 = vld [vmem:[%s1 + $0x1c0] sm:$0xf]
  %v1787 = vld [vmem:[%s1 + $0x1c4] sm:$0xf]
  %v1788 = vld [vmem:[%s1 + $0x1c8] sm:$0xf]
  %v1789 = vld [vmem:[%s1 + $0x1cc] sm:$0xf]
  %v1790 = vld [vmem:[%s1 + $0x1d0] sm:$0xf]
  %v1791 = vld [vmem:[%s1 + $0x1d4] sm:$0xf]
  %v1792 = vld [vmem:[%s1 + $0x1d8] sm:$0xf]
  %v1793 = vld [vmem:[%s1 + $0x1dc] sm:$0xf]
  %v1794 = vld [vmem:[%s1 + $0x1e0] sm:$0xf]
  %v1795 = vld [vmem:[%s1 + $0x1e4] sm:$0xf]
  %v1796 = vld [vmem:[%s1 + $0x1e8] sm:$0xf]
  %v1797 = vld [vmem:[%s1 + $0x1ec] sm:$0xf]
  %v1798 = vld [vmem:[%s1 + $0x1f0] sm:$0xf]
  %v1799 = vld [vmem:[%s1 + $0x1f4] sm:$0xf]
  %v1800 = vld [vmem:[%s1 + $0x1f8] sm:$0xf]
  %v1801 = vld [vmem:[%s1 + $0x1fc] sm:$0xf]
  %v1802 = vld [vmem:[%s1 + $0x200] sm:$0xf]
  %v1803 = vld [vmem:[%s1 + $0x204] sm:$0xf]
  %v1804 = vld [vmem:[%s1 + $0x208] sm:$0xf]
  %v1805 = vld [vmem:[%s1 + $0x20c] sm:$0xf]
  %v1806 = vld [vmem:[%s1 + $0x210] sm:$0xf]
  %v1807 = vld [vmem:[%s1 + $0x214] sm:$0xf]
  %v1808 = vld [vmem:[%s1 + $0x218] sm:$0xf]
  %v1809 = vld [vmem:[%s1 + $0x21c] sm:$0xf]
  %v1810 = vld [vmem:[%s1 + $0x220] sm:$0xf]
  %v1811 = vld [vmem:[%s1 + $0x224] sm:$0xf]
  %v1812 = vld [vmem:[%s1 + $0x228] sm:$0xf]
  %v1813 = vld [vmem:[%s1 + $0x22c] sm:$0xf]
  %v1814 = vld [vmem:[%s1 + $0x230] sm:$0xf]
  %v1815 = vld [vmem:[%s1 + $0x234] sm:$0xf]
  %v1816 = vld [vmem:[%s1 + $0x238] sm:$0xf]
  %v1817 = vld [vmem:[%s1 + $0x23c] sm:$0xf]
  %v1962 = vunpack.c.l.b16 %v1674
  %v1963 = vunpack.c.l.b16 %v1675
  %v1964 = vunpack.c.l.b16 %v1676
  %v1965 = vunpack.c.l.b16 %v1677
  %v1966 = vunpack.c.l.b16 %v1678
  %v1967 = vunpack.c.l.b16 %v1679
  %v1968 = vunpack.c.l.b16 %v1680
  %v1969 = vunpack.c.l.b16 %v1681
  %v1970 = vunpack.c.l.b16 %v1682
  %v1971 = vunpack.c.l.b16 %v1683
  %v1972 = vunpack.c.l.b16 %v1684
  %v1973 = vunpack.c.l.b16 %v1685
  %v1974 = vunpack.c.l.b16 %v1686
  %v1975 = vunpack.c.l.b16 %v1687
  %v1976 = vunpack.c.l.b16 %v1688
  %v1977 = vunpack.c.l.b16 %v1689
  %v1978 = vunpack.c.l.b16 %v1690
  %v1979 = vunpack.c.l.b16 %v1691
  %v1980 = vunpack.c.l.b16 %v1692
  %v1981 = vunpack.c.l.b16 %v1693
  %v1982 = vunpack.c.l.b16 %v1694
  %v1983 = vunpack.c.l.b16 %v1695
  %v1984 = vunpack.c.l.b16 %v1696
  %v1985 = vunpack.c.l.b16 %v1697
  %v1986 = vunpack.c.l.b16 %v1698
  %v1987 = vunpack.c.l.b16 %v1699
  %v1988 = vunpack.c.l.b16 %v1700
  %v1989 = vunpack.c.l.b16 %v1701
  %v1990 = vunpack.c.l.b16 %v1702
  %v1991 = vunpack.c.l.b16 %v1703
  %v1992 = vunpack.c.l.b16 %v1704
  %v1993 = vunpack.c.l.b16 %v1705
  %v1994 = vunpack.c.l.b16 %v1706
  %v1995 = vunpack.c.l.b16 %v1707
  %v1996 = vunpack.c.l.b16 %v1708
  %v1997 = vunpack.c.l.b16 %v1709
  %v1998 = vunpack.c.l.b16 %v1710
  %v1999 = vunpack.c.l.b16 %v1711
  %v2000 = vunpack.c.l.b16 %v1712
  %v2001 = vunpack.c.l.b16 %v1713
  %v2002 = vunpack.c.l.b16 %v1714
  %v2003 = vunpack.c.l.b16 %v1715
  %v2004 = vunpack.c.l.b16 %v1716
  %v2005 = vunpack.c.l.b16 %v1717
  %v2006 = vunpack.c.l.b16 %v1718
  %v2007 = vunpack.c.l.b16 %v1719
  %v2008 = vunpack.c.l.b16 %v1720
  %v2009 = vunpack.c.l.b16 %v1721
  %v2010 = vunpack.c.l.b16 %v1722
  %v2011 = vunpack.c.l.b16 %v1723
  %v2012 = vunpack.c.l.b16 %v1724
  %v2013 = vunpack.c.l.b16 %v1725
  %v2014 = vunpack.c.l.b16 %v1726
  %v2015 = vunpack.c.l.b16 %v1727
  %v2016 = vunpack.c.l.b16 %v1728
  %v2017 = vunpack.c.l.b16 %v1729
  %v2018 = vunpack.c.l.b16 %v1730
  %v2019 = vunpack.c.l.b16 %v1731
  %v2020 = vunpack.c.l.b16 %v1732
  %v2021 = vunpack.c.l.b16 %v1733
  %v2022 = vunpack.c.l.b16 %v1734
  %v2023 = vunpack.c.l.b16 %v1735
  %v2024 = vunpack.c.l.b16 %v1736
  %v2025 = vunpack.c.l.b16 %v1737
  %v2026 = vunpack.c.l.b16 %v1738
  %v2027 = vunpack.c.l.b16 %v1739
  %v2028 = vunpack.c.l.b16 %v1740
  %v2029 = vunpack.c.l.b16 %v1741
  %v2030 = vunpack.c.l.b16 %v1742
  %v2031 = vunpack.c.l.b16 %v1743
  %v2032 = vunpack.c.l.b16 %v1744
  %v2033 = vunpack.c.l.b16 %v1745
  %v2034 = vunpack.c.l.b16 %v1746
  %v2035 = vunpack.c.l.b16 %v1747
  %v2036 = vunpack.c.l.b16 %v1748
  %v2037 = vunpack.c.l.b16 %v1749
  %v2038 = vunpack.c.l.b16 %v1750
  %v2039 = vunpack.c.l.b16 %v1751
  %v2040 = vunpack.c.l.b16 %v1752
  %v2041 = vunpack.c.l.b16 %v1753
  %v2042 = vunpack.c.l.b16 %v1754
  %v2043 = vunpack.c.l.b16 %v1755
  %v2044 = vunpack.c.l.b16 %v1756
  %v2045 = vunpack.c.l.b16 %v1757
  %v2046 = vunpack.c.l.b16 %v1758
  %v2047 = vunpack.c.l.b16 %v1759
  %v2048 = vunpack.c.l.b16 %v1760
  %v2049 = vunpack.c.l.b16 %v1761
  %v2050 = vunpack.c.l.b16 %v1762
  %v2051 = vunpack.c.l.b16 %v1763
  %v2052 = vunpack.c.l.b16 %v1764
  %v2053 = vunpack.c.l.b16 %v1765
  %v2054 = vunpack.c.l.b16 %v1766
  %v2055 = vunpack.c.l.b16 %v1767
  %v2056 = vunpack.c.l.b16 %v1768
  %v2057 = vunpack.c.l.b16 %v1769
  %v2058 = vunpack.c.l.b16 %v1770
  %v2059 = vunpack.c.l.b16 %v1771
  %v2060 = vunpack.c.l.b16 %v1772
  %v2061 = vunpack.c.l.b16 %v1773
  %v2062 = vunpack.c.l.b16 %v1774
  %v2063 = vunpack.c.l.b16 %v1775
  %v2064 = vunpack.c.l.b16 %v1776
  %v2065 = vunpack.c.l.b16 %v1777
  %v2066 = vunpack.c.l.b16 %v1778
  %v2067 = vunpack.c.l.b16 %v1779
  %v2068 = vunpack.c.l.b16 %v1780
  %v2069 = vunpack.c.l.b16 %v1781
  %v2070 = vunpack.c.l.b16 %v1782
  %v2071 = vunpack.c.l.b16 %v1783
  %v2072 = vunpack.c.l.b16 %v1784
  %v2073 = vunpack.c.l.b16 %v1785
  %v2074 = vunpack.c.l.b16 %v1786
  %v2075 = vunpack.c.l.b16 %v1787
  %v2076 = vunpack.c.l.b16 %v1788
  %v2077 = vunpack.c.l.b16 %v1789
  %v2078 = vunpack.c.l.b16 %v1790
  %v2079 = vunpack.c.l.b16 %v1791
  %v2080 = vunpack.c.l.b16 %v1792
  %v2081 = vunpack.c.l.b16 %v1793
  %v2082 = vunpack.c.l.b16 %v1794
  %v2083 = vunpack.c.l.b16 %v1795
  %v2084 = vunpack.c.l.b16 %v1796
  %v2085 = vunpack.c.l.b16 %v1797
  %v2086 = vunpack.c.l.b16 %v1798
  %v2087 = vunpack.c.l.b16 %v1799
  %v2088 = vunpack.c.l.b16 %v1800
  %v2089 = vunpack.c.l.b16 %v1801
  %v2090 = vunpack.c.l.b16 %v1802
  %v2091 = vunpack.c.l.b16 %v1803
  %v2092 = vunpack.c.l.b16 %v1804
  %v2093 = vunpack.c.l.b16 %v1805
  %v2094 = vunpack.c.l.b16 %v1806
  %v2095 = vunpack.c.l.b16 %v1807
  %v2096 = vunpack.c.l.b16 %v1808
  %v2097 = vunpack.c.l.b16 %v1809
  %v2098 = vunpack.c.l.b16 %v1810
  %v2099 = vunpack.c.l.b16 %v1811
  %v2100 = vunpack.c.l.b16 %v1812
  %v2101 = vunpack.c.l.b16 %v1813
  %v2102 = vunpack.c.l.b16 %v1814
  %v2103 = vunpack.c.l.b16 %v1815
  %v2104 = vunpack.c.l.b16 %v1816
  %v2105 = vunpack.c.l.b16 %v1817
  %v2106 = vpack.c.b16 %v1963, %v1962
  %v2107 = vpack.c.b16 %v1965, %v1964
  %v2108 = vpack.c.b16 %v1967, %v1966
  %v2109 = vpack.c.b16 %v1969, %v1968
  %v2110 = vpack.c.b16 %v1971, %v1970
  %v2111 = vpack.c.b16 %v1973, %v1972
  %v2112 = vpack.c.b16 %v1975, %v1974
  %v2113 = vpack.c.b16 %v1977, %v1976
  %v2114 = vpack.c.b16 %v1979, %v1978
  %v2115 = vpack.c.b16 %v1981, %v1980
  %v2116 = vpack.c.b16 %v1983, %v1982
  %v2117 = vpack.c.b16 %v1985, %v1984
  %v2118 = vpack.c.b16 %v1987, %v1986
  %v2119 = vpack.c.b16 %v1989, %v1988
  %v2120 = vpack.c.b16 %v1991, %v1990
  %v2121 = vpack.c.b16 %v1993, %v1992
  %v2122 = vpack.c.b16 %v1995, %v1994
  %v2123 = vpack.c.b16 %v1997, %v1996
  %v2124 = vpack.c.b16 %v1999, %v1998
  %v2125 = vpack.c.b16 %v2001, %v2000
  %v2126 = vpack.c.b16 %v2003, %v2002
  %v2127 = vpack.c.b16 %v2005, %v2004
  %v2128 = vpack.c.b16 %v2007, %v2006
  %v2129 = vpack.c.b16 %v2009, %v2008
  %v2130 = vpack.c.b16 %v2011, %v2010
  %v2131 = vpack.c.b16 %v2013, %v2012
  %v2132 = vpack.c.b16 %v2015, %v2014
  %v2133 = vpack.c.b16 %v2017, %v2016
  %v2134 = vpack.c.b16 %v2019, %v2018
  %v2135 = vpack.c.b16 %v2021, %v2020
  %v2136 = vpack.c.b16 %v2023, %v2022
  %v2137 = vpack.c.b16 %v2025, %v2024
  %v2138 = vpack.c.b16 %v2027, %v2026
  %v2139 = vpack.c.b16 %v2029, %v2028
  %v2140 = vpack.c.b16 %v2031, %v2030
  %v2141 = vpack.c.b16 %v2033, %v2032
  %v2142 = vpack.c.b16 %v2035, %v2034
  %v2143 = vpack.c.b16 %v2037, %v2036
  %v2144 = vpack.c.b16 %v2039, %v2038
  %v2145 = vpack.c.b16 %v2041, %v2040
  %v2146 = vpack.c.b16 %v2043, %v2042
  %v2147 = vpack.c.b16 %v2045, %v2044
  %v2148 = vpack.c.b16 %v2047, %v2046
  %v2149 = vpack.c.b16 %v2049, %v2048
  %v2150 = vpack.c.b16 %v2051, %v2050
  %v2151 = vpack.c.b16 %v2053, %v2052
  %v2152 = vpack.c.b16 %v2055, %v2054
  %v2153 = vpack.c.b16 %v2057, %v2056
  %v2154 = vpack.c.b16 %v2059, %v2058
  %v2155 = vpack.c.b16 %v2061, %v2060
  %v2156 = vpack.c.b16 %v2063, %v2062
  %v2157 = vpack.c.b16 %v2065, %v2064
  %v2158 = vpack.c.b16 %v2067, %v2066
  %v2159 = vpack.c.b16 %v2069, %v2068
  %v2160 = vpack.c.b16 %v2071, %v2070
  %v2161 = vpack.c.b16 %v2073, %v2072
  %v2162 = vpack.c.b16 %v2075, %v2074
  %v2163 = vpack.c.b16 %v2077, %v2076
  %v2164 = vpack.c.b16 %v2079, %v2078
  %v2165 = vpack.c.b16 %v2081, %v2080
  %v2166 = vpack.c.b16 %v2083, %v2082
  %v2167 = vpack.c.b16 %v2085, %v2084
  %v2168 = vpack.c.b16 %v2087, %v2086
  %v2169 = vpack.c.b16 %v2089, %v2088
  %v2170 = vpack.c.b16 %v2091, %v2090
  %v2171 = vpack.c.b16 %v2093, %v2092
  %v2172 = vpack.c.b16 %v2095, %v2094
  %v2173 = vpack.c.b16 %v2097, %v2096
  %v2174 = vpack.c.b16 %v2099, %v2098
  %v2175 = vpack.c.b16 %v2101, %v2100
  %v2176 = vpack.c.b16 %v2103, %v2102
  %v2177 = vpack.c.b16 %v2105, %v2104
  %2250 = vmatprep.subr.bf16.mxu0 0
  %2251 = vmatpush1.bf16.msra.mxu0 %v2106
  %2252 = vmatprep.subr.bf16.mxu0 0
  %2253 = vmatpush1.bf16.msra.mxu0 %v2107
  %2254 = vmatprep.subr.bf16.mxu0 0
  %2255 = vmatpush1.bf16.msra.mxu0 %v2108
  %2256 = vmatprep.subr.bf16.mxu0 0
  %2257 = vmatpush1.bf16.msra.mxu0 %v2109
  %2258 = vmatprep.subr.bf16.mxu0 0
  %2259 = vmatpush1.bf16.msra.mxu0 %v2110
  %2260 = vmatprep.subr.bf16.mxu0 0
  %2261 = vmatpush1.bf16.msra.mxu0 %v2111
  %2262 = vmatprep.subr.bf16.mxu0 0
  %2263 = vmatpush1.bf16.msra.mxu0 %v2112
  %2264 = vmatprep.subr.bf16.mxu0 0
  %2265 = vmatpush1.bf16.msra.mxu0 %v2113
  %2266 = vmatprep.subr.bf16.mxu0 0
  %2267 = vmatpush1.bf16.msra.mxu0 %v2114
  %2268 = vmatprep.subr.bf16.mxu0 0
  %2269 = vmatpush1.bf16.msra.mxu0 %v2115
  %2270 = vmatprep.subr.bf16.mxu0 0
  %2271 = vmatpush1.bf16.msra.mxu0 %v2116
  %2272 = vmatprep.subr.bf16.mxu0 0
  %2273 = vmatpush1.bf16.msra.mxu0 %v2117
  %2274 = vmatprep.subr.bf16.mxu0 0
  %2275 = vmatpush1.bf16.msra.mxu0 %v2118
  %2276 = vmatprep.subr.bf16.mxu0 0
  %2277 = vmatpush1.bf16.msra.mxu0 %v2119
  %2278 = vmatprep.subr.bf16.mxu0 0
  %2279 = vmatpush1.bf16.msra.mxu0 %v2120
  %2280 = vmatprep.subr.bf16.mxu0 0
  %2281 = vmatpush1.bf16.msra.mxu0 %v2121
  %2282 = vmatprep.mubr.bf16.mxu0 %v1387
  %2283 = vmatmul.mubr.bf16.gmra.mrb[0].mxu0 %v1386
  %v2284 = vpop.f32.mrb[0].mxu0
  %v2285 = vadd.f32 0.0, %v2284
  %v2286 = vpop.f32.mrb[0].mxu0
  %v2287 = vpop.f32.mrb[0].mxu0
  %v2288 = vadd.f32 0.0, %v2287
  %v2289 = vpop.f32.mrb[0].mxu0
  %2290 = vmatprep.mubr.bf16.mxu0 %v1396
  %2291 = vmatmul.mubr.bf16.gmra.mrb[0].mxu0 %v1395
  %v2292 = vpop.f32.mrb[0].mxu0
  %v2293 = vadd.f32 0.0, %v2292
  %v2294 = vpop.f32.mrb[0].mxu0
  %v2295 = vpop.f32.mrb[0].mxu0
  %v2296 = vadd.f32 0.0, %v2295
  %v2297 = vpop.f32.mrb[0].mxu0
  %2298 = vmatprep.mubr.bf16.mxu0 %v1405
  %2299 = vmatmul.mubr.bf16.gmra.mrb[0].mxu0 %v1404
  %v2300 = vpop.f32.mrb[0].mxu0
  %v2301 = vadd.f32 0.0, %v2300
  %v2302 = vpop.f32.mrb[0].mxu0
  %v2303 = vpop.f32.mrb[0].mxu0
  %v2304 = vadd.f32 0.0, %v2303
  %v2305 = vpop.f32.mrb[0].mxu0
  %2306 = vmatprep.mubr.bf16.mxu0 %v1414
  %2307 = vmatmul.mubr.bf16.gmra.mrb[0].mxu0 %v1413
  %v2308 = vpop.f32.mrb[0].mxu0
  %v2309 = vadd.f32 0.0, %v2308
  %v2310 = vpop.f32.mrb[0].mxu0
  %v2311 = vpop.f32.mrb[0].mxu0
  %v2312 = vadd.f32 0.0, %v2311
  %v2313 = vpop.f32.mrb[0].mxu0
  %2314 = vmatprep.mubr.bf16.mxu0 %v1423
  %2315 = vmatmul.mubr.bf16.gmra.mrb[0].mxu0 %v1422
  %v2316 = vpop.f32.mrb[0].mxu0
  %v2317 = vadd.f32 0.0, %v2316
  %v2318 = vpop.f32.mrb[0].mxu0
  %v2319 = vpop.f32.mrb[0].mxu0
  %v2320 = vadd.f32 0.0, %v2319
  %v2321 = vpop.f32.mrb[0].mxu0
  %2322 = vmatprep.mubr.bf16.mxu0 %v1432
  %2323 = vmatmul.mubr.bf16.gmra.mrb[0].mxu0 %v1431
  %v2324 = vpop.f32.mrb[0].mxu0
  %v2325 = vadd.f32 0.0, %v2324
  %v2326 = vpop.f32.mrb[0].mxu0
  %v2327 = vpop.f32.mrb[0].mxu0
  %v2328 = vadd.f32 0.0, %v2327
  %v2329 = vpop.f32.mrb[0].mxu0
  %2330 = vmatprep.mubr.bf16.mxu0 %v1441
  %2331 = vmatmul.mubr.bf16.gmra.mrb[0].mxu0 %v1440
  %v2332 = vpop.f32.mrb[0].mxu0
  %v2333 = vadd.f32 0.0, %v2332
  %v2334 = vpop.f32.mrb[0].mxu0
  %v2335 = vpop.f32.mrb[0].mxu0
  %v2336 = vadd.f32 0.0, %v2335
  %v2337 = vpop.f32.mrb[0].mxu0
  %2338 = vmatprep.mubr.bf16.mxu0 %v1450
  %2339 = vmatmul.mubr.bf16.gmra.mrb[0].mxu0 %v1449
  %v2340 = vpop.f32.mrb[0].mxu0
  %v2341 = vadd.f32 0.0, %v2340
  %v2342 = vpop.f32.mrb[0].mxu0
  %v2343 = vpop.f32.mrb[0].mxu0
  %v2344 = vadd.f32 0.0, %v2343
  %v2345 = vpop.f32.mrb[0].mxu0
  %2346 = vmatprep.mubr.bf16.mxu0 %v1459
  %2347 = vmatmul.mubr.bf16.gmra.mrb[0].mxu0 %v1458
  %v2348 = vpop.f32.mrb[0].mxu0
  %v2349 = vadd.f32 0.0, %v2348
  %v2350 = vpop.f32.mrb[0].mxu0
  %v2351 = vpop.f32.mrb[0].mxu0
  %v2352 = vadd.f32 0.0, %v2351
  %v2353 = vpop.f32.mrb[0].mxu0
  %2354 = vmatprep.mubr.bf16.mxu0 %v1468
  %2355 = vmatmul.mubr.bf16.gmra.mrb[0].mxu0 %v1467
  %v2356 = vpop.f32.mrb[0].mxu0
  %v2357 = vadd.f32 0.0, %v2356
  %v2358 = vpop.f32.mrb[0].mxu0
  %v2359 = vpop.f32.mrb[0].mxu0
  %v2360 = vadd.f32 0.0, %v2359
  %v2361 = vpop.f32.mrb[0].mxu0
  %2362 = vmatprep.mubr.bf16.mxu0 %v1477
  %2363 = vmatmul.mubr.bf16.gmra.mrb[0].mxu0 %v1476
  %v2364 = vpop.f32.mrb[0].mxu0
  %v2365 = vadd.f32 0.0, %v2364
  %v2366 = vpop.f32.mrb[0].mxu0
  %v2367 = vpop.f32.mrb[0].mxu0
  %v2368 = vadd.f32 0.0, %v2367
  %v2369 = vpop.f32.mrb[0].mxu0
  %2370 = vmatprep.mubr.bf16.mxu0 %v1486
  %2371 = vmatmul.mubr.bf16.gmra.mrb[0].mxu0 %v1485
  %v2372 = vpop.f32.mrb[0].mxu0
  %v2373 = vadd.f32 0.0, %v2372
  %v2374 = vpop.f32.mrb[0].mxu0
  %v2375 = vpop.f32.mrb[0].mxu0
  %v2376 = vadd.f32 0.0, %v2375
  %v2377 = vpop.f32.mrb[0].mxu0
  %2378 = vmatprep.mubr.bf16.mxu0 %v1495
  %2379 = vmatmul.mubr.bf16.gmra.mrb[0].mxu0 %v1494
  %v2380 = vpop.f32.mrb[0].mxu0
  %v2381 = vadd.f32 0.0, %v2380
  %v2382 = vpop.f32.mrb[0].mxu0
  %v2383 = vpop.f32.mrb[0].mxu0
  %v2384 = vadd.f32 0.0, %v2383
  %v2385 = vpop.f32.mrb[0].mxu0
  %2386 = vmatprep.mubr.bf16.mxu0 %v1504
  %2387 = vmatmul.mubr.bf16.gmra.mrb[0].mxu0 %v1503
  %v2388 = vpop.f32.mrb[0].mxu0
  %v2389 = vadd.f32 0.0, %v2388
  %v2390 = vpop.f32.mrb[0].mxu0
  %v2391 = vpop.f32.mrb[0].mxu0
  %v2392 = vadd.f32 0.0, %v2391
  %v2393 = vpop.f32.mrb[0].mxu0
  %2394 = vmatprep.mubr.bf16.mxu0 %v1513
  %2395 = vmatmul.mubr.bf16.gmra.mrb[0].mxu0 %v1512
  %v2396 = vpop.f32.mrb[0].mxu0
  %v2397 = vadd.f32 0.0, %v2396
  %v2398 = vpop.f32.mrb[0].mxu0
  %v2399 = vpop.f32.mrb[0].mxu0
  %v2400 = vadd.f32 0.0, %v2399
  %v2401 = vpop.f32.mrb[0].mxu0
  %2402 = vmatprep.mubr.bf16.mxu0 %v1522
  %2403 = vmatmul.mubr.bf16.gmra.mrb[0].mxu0 %v1521
  %v2404 = vpop.f32.mrb[0].mxu0
  %v2405 = vadd.f32 0.0, %v2404
  %v2406 = vpop.f32.mrb[0].mxu0
  %v2407 = vpop.f32.mrb[0].mxu0
  %v2408 = vadd.f32 0.0, %v2407
  %v2409 = vpop.f32.mrb[0].mxu0
  %2410 = vmatprep.mubr.bf16.mxu0 %v1531
  %2411 = vmatmul.mubr.bf16.gmra.mrb[0].mxu0 %v1530
  %v2412 = vpop.f32.mrb[0].mxu0
  %v2413 = vadd.f32 0.0, %v2412
  %v2414 = vpop.f32.mrb[0].mxu0
  %v2415 = vpop.f32.mrb[0].mxu0
  %v2416 = vadd.f32 0.0, %v2415
  %v2417 = vpop.f32.mrb[0].mxu0
  %2418 = vmatprep.mubr.bf16.mxu0 %v1540
  %2419 = vmatmul.mubr.bf16.gmra.mrb[0].mxu0 %v1539
  %v2420 = vpop.f32.mrb[0].mxu0
  %v2421 = vadd.f32 0.0, %v2420
  %v2422 = vpop.f32.mrb[0].mxu0
  %v2423 = vpop.f32.mrb[0].mxu0
  %v2424 = vadd.f32 0.0, %v2423
  %v2425 = vpop.f32.mrb[0].mxu0
  %2426 = vmatprep.mubr.bf16.mxu0 %v1549
  %2427 = vmatmul.mubr.bf16.gmra.mrb[0].mxu0 %v1548
  %v2428 = vpop.f32.mrb[0].mxu0
  %v2429 = vadd.f32 0.0, %v2428
  %v2430 = vpop.f32.mrb[0].mxu0
  %v2431 = vpop.f32.mrb[0].mxu0
  %v2432 = vadd.f32 0.0, %v2431
  %v2433 = vpop.f32.mrb[0].mxu0
  %2434 = vmatprep.mubr.bf16.mxu0 %v1558
  %2435 = vmatmul.mubr.bf16.gmra.mrb[0].mxu0 %v1557
  %v2436 = vpop.f32.mrb[0].mxu0
  %v2437 = vadd.f32 0.0, %v2436
  %v2438 = vpop.f32.mrb[0].mxu0
  %v2439 = vpop.f32.mrb[0].mxu0
  %v2440 = vadd.f32 0.0, %v2439
  %v2441 = vpop.f32.mrb[0].mxu0
  %2442 = vmatprep.mubr.bf16.mxu0 %v1567
  %2443 = vmatmul.mubr.bf16.gmra.mrb[0].mxu0 %v1566
  %v2444 = vpop.f32.mrb[0].mxu0
  %v2445 = vadd.f32 0.0, %v2444
  %v2446 = vpop.f32.mrb[0].mxu0
  %v2447 = vpop.f32.mrb[0].mxu0
  %v2448 = vadd.f32 0.0, %v2447
  %v2449 = vpop.f32.mrb[0].mxu0
  %2450 = vmatprep.mubr.bf16.mxu0 %v1576
  %2451 = vmatmul.mubr.bf16.gmra.mrb[0].mxu0 %v1575
  %v2452 = vpop.f32.mrb[0].mxu0
  %v2453 = vadd.f32 0.0, %v2452
  %v2454 = vpop.f32.mrb[0].mxu0
  %v2455 = vpop.f32.mrb[0].mxu0
  %v2456 = vadd.f32 0.0, %v2455
  %v2457 = vpop.f32.mrb[0].mxu0
  %2458 = vmatprep.mubr.bf16.mxu0 %v1585
  %2459 = vmatmul.mubr.bf16.gmra.mrb[0].mxu0 %v1584
  %v2460 = vpop.f32.mrb[0].mxu0
  %v2461 = vadd.f32 0.0, %v2460
  %v2462 = vpop.f32.mrb[0].mxu0
  %v2463 = vpop.f32.mrb[0].mxu0
  %v2464 = vadd.f32 0.0, %v2463
  %v2465 = vpop.f32.mrb[0].mxu0
  %2466 = vmatprep.mubr.bf16.mxu0 %v1594
  %2467 = vmatmul.mubr.bf16.gmra.mrb[0].mxu0 %v1593
  %v2468 = vpop.f32.mrb[0].mxu0
  %v2469 = vadd.f32 0.0, %v2468
  %v2470 = vpop.f32.mrb[0].mxu0
  %v2471 = vpop.f32.mrb[0].mxu0
  %v2472 = vadd.f32 0.0, %v2471
  %v2473 = vpop.f32.mrb[0].mxu0
  %2474 = vmatprep.mubr.bf16.mxu0 %v1603
  %2475 = vmatmul.mubr.bf16.gmra.mrb[0].mxu0 %v1602
  %v2476 = vpop.f32.mrb[0].mxu0
  %v2477 = vadd.f32 0.0, %v2476
  %v2478 = vpop.f32.mrb[0].mxu0
  %v2479 = vpop.f32.mrb[0].mxu0
  %v2480 = vadd.f32 0.0, %v2479
  %v2481 = vpop.f32.mrb[0].mxu0
  %2482 = vmatprep.mubr.bf16.mxu0 %v1612
  %2483 = vmatmul.mubr.bf16.gmra.mrb[0].mxu0 %v1611
  %v2484 = vpop.f32.mrb[0].mxu0
  %v2485 = vadd.f32 0.0, %v2484
  %v2486 = vpop.f32.mrb[0].mxu0
  %v2487 = vpop.f32.mrb[0].mxu0
  %v2488 = vadd.f32 0.0, %v2487
  %v2489 = vpop.f32.mrb[0].mxu0
  %2490 = vmatprep.mubr.bf16.mxu0 %v1621
  %2491 = vmatmul.mubr.bf16.gmra.mrb[0].mxu0 %v1620
  %v2492 = vpop.f32.mrb[0].mxu0
  %v2493 = vadd.f32 0.0, %v2492
  %v2494 = vpop.f32.mrb[0].mxu0
  %v2495 = vpop.f32.mrb[0].mxu0
  %v2496 = vadd.f32 0.0, %v2495
  %v2497 = vpop.f32.mrb[0].mxu0
  %2498 = vmatprep.mubr.bf16.mxu0 %v1630
  %2499 = vmatmul.mubr.bf16.gmra.mrb[0].mxu0 %v1629
  %v2500 = vpop.f32.mrb[0].mxu0
  %v2501 = vadd.f32 0.0, %v2500
  %v2502 = vpop.f32.mrb[0].mxu0
  %v2503 = vpop.f32.mrb[0].mxu0
  %v2504 = vadd.f32 0.0, %v2503
  %v2505 = vpop.f32.mrb[0].mxu0
  %2506 = vmatprep.mubr.bf16.mxu0 %v1639
  %2507 = vmatmul.mubr.bf16.gmra.mrb[0].mxu0 %v1638
  %v2508 = vpop.f32.mrb[0].mxu0
  %v2509 = vadd.f32 0.0, %v2508
  %v2510 = vpop.f32.mrb[0].mxu0
  %v2511 = vpop.f32.mrb[0].mxu0
  %v2512 = vadd.f32 0.0, %v2511
  %v2513 = vpop.f32.mrb[0].mxu0
  %2514 = vmatprep.mubr.bf16.mxu0 %v1648
  %2515 = vmatmul.mubr.bf16.gmra.mrb[0].mxu0 %v1647
  %v2516 = vpop.f32.mrb[0].mxu0
  %v2517 = vadd.f32 0.0, %v2516
  %v2518 = vpop.f32.mrb[0].mxu0
  %v2519 = vpop.f32.mrb[0].mxu0
  %v2520 = vadd.f32 0.0, %v2519
  %v2521 = vpop.f32.mrb[0].mxu0
  %2522 = vmatprep.mubr.bf16.mxu0 %v1657
  %2523 = vmatmul.mubr.bf16.gmra.mrb[0].mxu0 %v1656
  %v2524 = vpop.f32.mrb[0].mxu0
  %v2525 = vadd.f32 0.0, %v2524
  %v2526 = vpop.f32.mrb[0].mxu0
  %v2527 = vpop.f32.mrb[0].mxu0
  %v2528 = vadd.f32 0.0, %v2527
  %v2529 = vpop.f32.mrb[0].mxu0
  %2530 = vmatprep.mubr.bf16.mxu0 %v1666
  %2531 = vmatmul.mubr.bf16.gmra.mrb[0].mxu0 %v1665
  %v2532 = vpop.f32.mrb[0].mxu0
  %v2533 = vadd.f32 0.0, %v2532
  %v2534 = vpop.f32.mrb[0].mxu0
  %v2535 = vpop.f32.mrb[0].mxu0
  %v2536 = vadd.f32 0.0, %v2535
  %v2537 = vpop.f32.mrb[0].mxu0
  %2538 = vdwg.mxu0
  %2539 = vmatprep.subr.bf16.mxu0 0
  %2540 = vmatpush1.bf16.msra.mxu0 %v2122
  %2541 = vmatprep.subr.bf16.mxu0 0
  %2542 = vmatpush1.bf16.msra.mxu0 %v2123
  %2543 = vmatprep.subr.bf16.mxu0 0
  %2544 = vmatpush1.bf16.msra.mxu0 %v2124
  %2545 = vmatprep.subr.bf16.mxu0 0
  %2546 = vmatpush1.bf16.msra.mxu0 %v2125
  %2547 = vmatprep.subr.bf16.mxu0 0
  %2548 = vmatpush1.bf16.msra.mxu0 %v2126
  %2549 = vmatprep.subr.bf16.mxu0 0
  %2550 = vmatpush1.bf16.msra.mxu0 %v2127
  %2551 = vmatprep.subr.bf16.mxu0 0
  %2552 = vmatpush1.bf16.msra.mxu0 %v2128
  %2553 = vmatprep.subr.bf16.mxu0 0
  %2554 = vmatpush1.bf16.msra.mxu0 %v2129
  %2555 = vmatprep.subr.bf16.mxu0 0
  %2556 = vmatpush1.bf16.msra.mxu0 %v2130
  %2557 = vmatprep.subr.bf16.mxu0 0
  %2558 = vmatpush1.bf16.msra.mxu0 %v2131
  %2559 = vmatprep.subr.bf16.mxu0 0
  %2560 = vmatpush1.bf16.msra.mxu0 %v2132
  %2561 = vmatprep.subr.bf16.mxu0 0
  %2562 = vmatpush1.bf16.msra.mxu0 %v2133
  %2563 = vmatprep.subr.bf16.mxu0 0
  %2564 = vmatpush1.bf16.msra.mxu0 %v2134
  %2565 = vmatprep.subr.bf16.mxu0 0
  %2566 = vmatpush1.bf16.msra.mxu0 %v2135
  %2567 = vmatprep.subr.bf16.mxu0 0
  %2568 = vmatpush1.bf16.msra.mxu0 %v2136
  %2569 = vmatprep.subr.bf16.mxu0 0
  %2570 = vmatpush1.bf16.msra.mxu0 %v2137
  %2571 = vmatprep.mubr.bf16.mxu0 %v1389
  %2572 = vmatmul.mubr.bf16.gmra.mrb[0].mxu0 %v1388
  %v2573 = vpop.f32.mrb[0].mxu0
  %v2574 = vadd.f32 %v2285, %v2573
  %v2575 = vpop.f32.mrb[0].mxu0
  %v2576 = vpop.f32.mrb[0].mxu0
  %v2577 = vadd.f32 %v2288, %v2576
  %v2578 = vpop.f32.mrb[0].mxu0
  %2579 = vmatprep.mubr.bf16.mxu0 %v1398
  %2580 = vmatmul.mubr.bf16.gmra.mrb[0].mxu0 %v1397
  %v2581 = vpop.f32.mrb[0].mxu0
  %v2582 = vadd.f32 %v2293, %v2581
  %v2583 = vpop.f32.mrb[0].mxu0
  %v2584 = vpop.f32.mrb[0].mxu0
  %v2585 = vadd.f32 %v2296, %v2584
  %v2586 = vpop.f32.mrb[0].mxu0
  %2587 = vmatprep.mubr.bf16.mxu0 %v1407
  %2588 = vmatmul.mubr.bf16.gmra.mrb[0].mxu0 %v1406
  %v2589 = vpop.f32.mrb[0].mxu0
  %v2590 = vadd.f32 %v2301, %v2589
  %v2591 = vpop.f32.mrb[0].mxu0
  %v2592 = vpop.f32.mrb[0].mxu0
  %v2593 = vadd.f32 %v2304, %v2592
  %v2594 = vpop.f32.mrb[0].mxu0
  %2595 = vmatprep.mubr.bf16.mxu0 %v1416
  %2596 = vmatmul.mubr.bf16.gmra.mrb[0].mxu0 %v1415
  %v2597 = vpop.f32.mrb[0].mxu0
  %v2598 = vadd.f32 %v2309, %v2597
  %v2599 = vpop.f32.mrb[0].mxu0
  %v2600 = vpop.f32.mrb[0].mxu0
  %v2601 = vadd.f32 %v2312, %v2600
  %v2602 = vpop.f32.mrb[0].mxu0
  %2603 = vmatprep.mubr.bf16.mxu0 %v1425
  %2604 = vmatmul.mubr.bf16.gmra.mrb[0].mxu0 %v1424
  %v2605 = vpop.f32.mrb[0].mxu0
  %v2606 = vadd.f32 %v2317, %v2605
  %v2607 = vpop.f32.mrb[0].mxu0
  %v2608 = vpop.f32.mrb[0].mxu0
  %v2609 = vadd.f32 %v2320, %v2608
  %v2610 = vpop.f32.mrb[0].mxu0
  %2611 = vmatprep.mubr.bf16.mxu0 %v1434
  %2612 = vmatmul.mubr.bf16.gmra.mrb[0].mxu0 %v1433
  %v2613 = vpop.f32.mrb[0].mxu0
  %v2614 = vadd.f32 %v2325, %v2613
  %v2615 = vpop.f32.mrb[0].mxu0
  %v2616 = vpop.f32.mrb[0].mxu0
  %v2617 = vadd.f32 %v2328, %v2616
  %v2618 = vpop.f32.mrb[0].mxu0
  %2619 = vmatprep.mubr.bf16.mxu0 %v1443
  %2620 = vmatmul.mubr.bf16.gmra.mrb[0].mxu0 %v1442
  %v2621 = vpop.f32.mrb[0].mxu0
  %v2622 = vadd.f32 %v2333, %v2621
  %v2623 = vpop.f32.mrb[0].mxu0
  %v2624 = vpop.f32.mrb[0].mxu0
  %v2625 = vadd.f32 %v2336, %v2624
  %v2626 = vpop.f32.mrb[0].mxu0
  %2627 = vmatprep.mubr.bf16.mxu0 %v1452
  %2628 = vmatmul.mubr.bf16.gmra.mrb[0].mxu0 %v1451
  %v2629 = vpop.f32.mrb[0].mxu0
  %v2630 = vadd.f32 %v2341, %v2629
  %v2631 = vpop.f32.mrb[0].mxu0
  %v2632 = vpop.f32.mrb[0].mxu0
  %v2633 = vadd.f32 %v2344, %v2632
  %v2634 = vpop.f32.mrb[0].mxu0
  %2635 = vmatprep.mubr.bf16.mxu0 %v1461
  %2636 = vmatmul.mubr.bf16.gmra.mrb[0].mxu0 %v1460
  %v2637 = vpop.f32.mrb[0].mxu0
  %v2638 = vadd.f32 %v2349, %v2637
  %v2639 = vpop.f32.mrb[0].mxu0
  %v2640 = vpop.f32.mrb[0].mxu0
  %v2641 = vadd.f32 %v2352, %v2640
  %v2642 = vpop.f32.mrb[0].mxu0
  %2643 = vmatprep.mubr.bf16.mxu0 %v1470
  %2644 = vmatmul.mubr.bf16.gmra.mrb[0].mxu0 %v1469
  %v2645 = vpop.f32.mrb[0].mxu0
  %v2646 = vadd.f32 %v2357, %v2645
  %v2647 = vpop.f32.mrb[0].mxu0
  %v2648 = vpop.f32.mrb[0].mxu0
  %v2649 = vadd.f32 %v2360, %v2648
  %v2650 = vpop.f32.mrb[0].mxu0
  %2651 = vmatprep.mubr.bf16.mxu0 %v1479
  %2652 = vmatmul.mubr.bf16.gmra.mrb[0].mxu0 %v1478
  %v2653 = vpop.f32.mrb[0].mxu0
  %v2654 = vadd.f32 %v2365, %v2653
  %v2655 = vpop.f32.mrb[0].mxu0
  %v2656 = vpop.f32.mrb[0].mxu0
  %v2657 = vadd.f32 %v2368, %v2656
  %v2658 = vpop.f32.mrb[0].mxu0
  %2659 = vmatprep.mubr.bf16.mxu0 %v1488
  %2660 = vmatmul.mubr.bf16.gmra.mrb[0].mxu0 %v1487
  %v2661 = vpop.f32.mrb[0].mxu0
  %v2662 = vadd.f32 %v2373, %v2661
  %v2663 = vpop.f32.mrb[0].mxu0
  %v2664 = vpop.f32.mrb[0].mxu0
  %v2665 = vadd.f32 %v2376, %v2664
  %v2666 = vpop.f32.mrb[0].mxu0
  %2667 = vmatprep.mubr.bf16.mxu0 %v1497
  %2668 = vmatmul.mubr.bf16.gmra.mrb[0].mxu0 %v1496
  %v2669 = vpop.f32.mrb[0].mxu0
  %v2670 = vadd.f32 %v2381, %v2669
  %v2671 = vpop.f32.mrb[0].mxu0
  %v2672 = vpop.f32.mrb[0].mxu0
  %v2673 = vadd.f32 %v2384, %v2672
  %v2674 = vpop.f32.mrb[0].mxu0
  %2675 = vmatprep.mubr.bf16.mxu0 %v1506
  %2676 = vmatmul.mubr.bf16.gmra.mrb[0].mxu0 %v1505
  %v2677 = vpop.f32.mrb[0].mxu0
  %v2678 = vadd.f32 %v2389, %v2677
  %v2679 = vpop.f32.mrb[0].mxu0
  %v2680 = vpop.f32.mrb[0].mxu0
  %v2681 = vadd.f32 %v2392, %v2680
  %v2682 = vpop.f32.mrb[0].mxu0
  %2683 = vmatprep.mubr.bf16.mxu0 %v1515
  %2684 = vmatmul.mubr.bf16.gmra.mrb[0].mxu0 %v1514
  %v2685 = vpop.f32.mrb[0].mxu0
  %v2686 = vadd.f32 %v2397, %v2685
  %v2687 = vpop.f32.mrb[0].mxu0
  %v2688 = vpop.f32.mrb[0].mxu0
  %v2689 = vadd.f32 %v2400, %v2688
  %v2690 = vpop.f32.mrb[0].mxu0
  %2691 = vmatprep.mubr.bf16.mxu0 %v1524
  %2692 = vmatmul.mubr.bf16.gmra.mrb[0].mxu0 %v1523
  %v2693 = vpop.f32.mrb[0].mxu0
  %v2694 = vadd.f32 %v2405, %v2693
  %v2695 = vpop.f32.mrb[0].mxu0
  %v2696 = vpop.f32.mrb[0].mxu0
  %v2697 = vadd.f32 %v2408, %v2696
  %v2698 = vpop.f32.mrb[0].mxu0
  %2699 = vmatprep.mubr.bf16.mxu0 %v1533
  %2700 = vmatmul.mubr.bf16.gmra.mrb[0].mxu0 %v1532
  %v2701 = vpop.f32.mrb[0].mxu0
  %v2702 = vadd.f32 %v2413, %v2701
  %v2703 = vpop.f32.mrb[0].mxu0
  %v2704 = vpop.f32.mrb[0].mxu0
  %v2705 = vadd.f32 %v2416, %v2704
  %v2706 = vpop.f32.mrb[0].mxu0
  %2707 = vmatprep.mubr.bf16.mxu0 %v1542
  %2708 = vmatmul.mubr.bf16.gmra.mrb[0].mxu0 %v1541
  %v2709 = vpop.f32.mrb[0].mxu0
  %v2710 = vadd.f32 %v2421, %v2709
  %v2711 = vpop.f32.mrb[0].mxu0
  %v2712 = vpop.f32.mrb[0].mxu0
  %v2713 = vadd.f32 %v2424, %v2712
  %v2714 = vpop.f32.mrb[0].mxu0
  %2715 = vmatprep.mubr.bf16.mxu0 %v1551
  %2716 = vmatmul.mubr.bf16.gmra.mrb[0].mxu0 %v1550
  %v2717 = vpop.f32.mrb[0].mxu0
  %v2718 = vadd.f32 %v2429, %v2717
  %v2719 = vpop.f32.mrb[0].mxu0
  %v2720 = vpop.f32.mrb[0].mxu0
  %v2721 = vadd.f32 %v2432, %v2720
  %v2722 = vpop.f32.mrb[0].mxu0
  %2723 = vmatprep.mubr.bf16.mxu0 %v1560
  %2724 = vmatmul.mubr.bf16.gmra.mrb[0].mxu0 %v1559
  %v2725 = vpop.f32.mrb[0].mxu0
  %v2726 = vadd.f32 %v2437, %v2725
  %v2727 = vpop.f32.mrb[0].mxu0
  %v2728 = vpop.f32.mrb[0].mxu0
  %v2729 = vadd.f32 %v2440, %v2728
  %v2730 = vpop.f32.mrb[0].mxu0
  %2731 = vmatprep.mubr.bf16.mxu0 %v1569
  %2732 = vmatmul.mubr.bf16.gmra.mrb[0].mxu0 %v1568
  %v2733 = vpop.f32.mrb[0].mxu0
  %v2734 = vadd.f32 %v2445, %v2733
  %v2735 = vpop.f32.mrb[0].mxu0
  %v2736 = vpop.f32.mrb[0].mxu0
  %v2737 = vadd.f32 %v2448, %v2736
  %v2738 = vpop.f32.mrb[0].mxu0
  %2739 = vmatprep.mubr.bf16.mxu0 %v1578
  %2740 = vmatmul.mubr.bf16.gmra.mrb[0].mxu0 %v1577
  %v2741 = vpop.f32.mrb[0].mxu0
  %v2742 = vadd.f32 %v2453, %v2741
  %v2743 = vpop.f32.mrb[0].mxu0
  %v2744 = vpop.f32.mrb[0].mxu0
  %v2745 = vadd.f32 %v2456, %v2744
  %v2746 = vpop.f32.mrb[0].mxu0
  %2747 = vmatprep.mubr.bf16.mxu0 %v1587
  %2748 = vmatmul.mubr.bf16.gmra.mrb[0].mxu0 %v1586
  %v2749 = vpop.f32.mrb[0].mxu0
  %v2750 = vadd.f32 %v2461, %v2749
  %v2751 = vpop.f32.mrb[0].mxu0
  %v2752 = vpop.f32.mrb[0].mxu0
  %v2753 = vadd.f32 %v2464, %v2752
  %v2754 = vpop.f32.mrb[0].mxu0
  %2755 = vmatprep.mubr.bf16.mxu0 %v1596
  %2756 = vmatmul.mubr.bf16.gmra.mrb[0].mxu0 %v1595
  %v2757 = vpop.f32.mrb[0].mxu0
  %v2758 = vadd.f32 %v2469, %v2757
  %v2759 = vpop.f32.mrb[0].mxu0
  %v2760 = vpop.f32.mrb[0].mxu0
  %v2761 = vadd.f32 %v2472, %v2760
  %v2762 = vpop.f32.mrb[0].mxu0
  %2763 = vmatprep.mubr.bf16.mxu0 %v1605
  %2764 = vmatmul.mubr.bf16.gmra.mrb[0].mxu0 %v1604
  %v2765 = vpop.f32.mrb[0].mxu0
  %v2766 = vadd.f32 %v2477, %v2765
  %v2767 = vpop.f32.mrb[0].mxu0
  %v2768 = vpop.f32.mrb[0].mxu0
  %v2769 = vadd.f32 %v2480, %v2768
  %v2770 = vpop.f32.mrb[0].mxu0
  %2771 = vmatprep.mubr.bf16.mxu0 %v1614
  %2772 = vmatmul.mubr.bf16.gmra.mrb[0].mxu0 %v1613
  %v2773 = vpop.f32.mrb[0].mxu0
  %v2774 = vadd.f32 %v2485, %v2773
  %v2775 = vpop.f32.mrb[0].mxu0
  %v2776 = vpop.f32.mrb[0].mxu0
  %v2777 = vadd.f32 %v2488, %v2776
  %v2778 = vpop.f32.mrb[0].mxu0
  %2779 = vmatprep.mubr.bf16.mxu0 %v1623
  %2780 = vmatmul.mubr.bf16.gmra.mrb[0].mxu0 %v1622
  %v2781 = vpop.f32.mrb[0].mxu0
  %v2782 = vadd.f32 %v2493, %v2781
  %v2783 = vpop.f32.mrb[0].mxu0
  %v2784 = vpop.f32.mrb[0].mxu0
  %v2785 = vadd.f32 %v2496, %v2784
  %v2786 = vpop.f32.mrb[0].mxu0
  %2787 = vmatprep.mubr.bf16.mxu0 %v1632
  %2788 = vmatmul.mubr.bf16.gmra.mrb[0].mxu0 %v1631
  %v2789 = vpop.f32.mrb[0].mxu0
  %v2790 = vadd.f32 %v2501, %v2789
  %v2791 = vpop.f32.mrb[0].mxu0
  %v2792 = vpop.f32.mrb[0].mxu0
  %v2793 = vadd.f32 %v2504, %v2792
  %v2794 = vpop.f32.mrb[0].mxu0
  %2795 = vmatprep.mubr.bf16.mxu0 %v1641
  %2796 = vmatmul.mubr.bf16.gmra.mrb[0].mxu0 %v1640
  %v2797 = vpop.f32.mrb[0].mxu0
  %v2798 = vadd.f32 %v2509, %v2797
  %v2799 = vpop.f32.mrb[0].mxu0
  %v2800 = vpop.f32.mrb[0].mxu0
  %v2801 = vadd.f32 %v2512, %v2800
  %v2802 = vpop.f32.mrb[0].mxu0
  %2803 = vmatprep.mubr.bf16.mxu0 %v1650
  %2804 = vmatmul.mubr.bf16.gmra.mrb[0].mxu0 %v1649
  %v2805 = vpop.f32.mrb[0].mxu0
  %v2806 = vadd.f32 %v2517, %v2805
  %v2807 = vpop.f32.mrb[0].mxu0
  %v2808 = vpop.f32.mrb[0].mxu0
  %v2809 = vadd.f32 %v2520, %v2808
  %v2810 = vpop.f32.mrb[0].mxu0
  %2811 = vmatprep.mubr.bf16.mxu0 %v1659
  %2812 = vmatmul.mubr.bf16.gmra.mrb[0].mxu0 %v1658
  %v2813 = vpop.f32.mrb[0].mxu0
  %v2814 = vadd.f32 %v2525, %v2813
  %v2815 = vpop.f32.mrb[0].mxu0
  %v2816 = vpop.f32.mrb[0].mxu0
  %v2817 = vadd.f32 %v2528, %v2816
  %v2818 = vpop.f32.mrb[0].mxu0
  %2819 = vmatprep.mubr.bf16.mxu0 %v1668
  %2820 = vmatmul.mubr.bf16.gmra.mrb[0].mxu0 %v1667
  %v2821 = vpop.f32.mrb[0].mxu0
  %v2822 = vadd.f32 %v2533, %v2821
  %v2823 = vpop.f32.mrb[0].mxu0
  %v2824 = vpop.f32.mrb[0].mxu0
  %v2825 = vadd.f32 %v2536, %v2824
  %v2826 = vpop.f32.mrb[0].mxu0
  %2827 = vdwg.mxu0
  %2828 = vmatprep.subr.bf16.mxu0 0
  %2829 = vmatpush1.bf16.msra.mxu0 %v2138
  %2830 = vmatprep.subr.bf16.mxu0 0
  %2831 = vmatpush1.bf16.msra.mxu0 %v2139
  %2832 = vmatprep.subr.bf16.mxu0 0
  %2833 = vmatpush1.bf16.msra.mxu0 %v2140
  %2834 = vmatprep.subr.bf16.mxu0 0
  %2835 = vmatpush1.bf16.msra.mxu0 %v2141
  %2836 = vmatprep.subr.bf16.mxu0 0
  %2837 = vmatpush1.bf16.msra.mxu0 %v2142
  %2838 = vmatprep.subr.bf16.mxu0 0
  %2839 = vmatpush1.bf16.msra.mxu0 %v2143
  %2840 = vmatprep.subr.bf16.mxu0 0
  %2841 = vmatpush1.bf16.msra.mxu0 %v2144
  %2842 = vmatprep.subr.bf16.mxu0 0
  %2843 = vmatpush1.bf16.msra.mxu0 %v2145
  %2844 = vmatprep.subr.bf16.mxu0 0
  %2845 = vmatpush1.bf16.msra.mxu0 %v2146
  %2846 = vmatprep.subr.bf16.mxu0 0
  %2847 = vmatpush1.bf16.msra.mxu0 %v2147
  %2848 = vmatprep.subr.bf16.mxu0 0
  %2849 = vmatpush1.bf16.msra.mxu0 %v2148
  %2850 = vmatprep.subr.bf16.mxu0 0
  %2851 = vmatpush1.bf16.msra.mxu0 %v2149
  %2852 = vmatprep.subr.bf16.mxu0 0
  %2853 = vmatpush1.bf16.msra.mxu0 %v2150
  %2854 = vmatprep.subr.bf16.mxu0 0
  %2855 = vmatpush1.bf16.msra.mxu0 %v2151
  %2856 = vmatprep.subr.bf16.mxu0 0
  %2857 = vmatpush1.bf16.msra.mxu0 %v2152
  %2858 = vmatprep.subr.bf16.mxu0 0
  %2859 = vmatpush1.bf16.msra.mxu0 %v2153
  %2860 = vmatprep.mubr.bf16.mxu0 %v1391
  %2861 = vmatmul.mubr.bf16.gmra.mrb[0].mxu0 %v1390
  %v2862 = vpop.f32.mrb[0].mxu0
  %v2863 = vadd.f32 %v2574, %v2862
  %v2864 = vpop.f32.mrb[0].mxu0
  %v2865 = vpop.f32.mrb[0].mxu0
  %v2866 = vadd.f32 %v2577, %v2865
  %v2867 = vpop.f32.mrb[0].mxu0
  %2868 = vmatprep.mubr.bf16.mxu0 %v1400
  %2869 = vmatmul.mubr.bf16.gmra.mrb[0].mxu0 %v1399
  %v2870 = vpop.f32.mrb[0].mxu0
  %v2871 = vadd.f32 %v2582, %v2870
  %v2872 = vpop.f32.mrb[0].mxu0
  %v2873 = vpop.f32.mrb[0].mxu0
  %v2874 = vadd.f32 %v2585, %v2873
  %v2875 = vpop.f32.mrb[0].mxu0
  %2876 = vmatprep.mubr.bf16.mxu0 %v1409
  %2877 = vmatmul.mubr.bf16.gmra.mrb[0].mxu0 %v1408
  %v2878 = vpop.f32.mrb[0].mxu0
  %v2879 = vadd.f32 %v2590, %v2878
  %v2880 = vpop.f32.mrb[0].mxu0
  %v2881 = vpop.f32.mrb[0].mxu0
  %v2882 = vadd.f32 %v2593, %v2881
  %v2883 = vpop.f32.mrb[0].mxu0
  %2884 = vmatprep.mubr.bf16.mxu0 %v1418
  %2885 = vmatmul.mubr.bf16.gmra.mrb[0].mxu0 %v1417
  %v2886 = vpop.f32.mrb[0].mxu0
  %v2887 = vadd.f32 %v2598, %v2886
  %v2888 = vpop.f32.mrb[0].mxu0
  %v2889 = vpop.f32.mrb[0].mxu0
  %v2890 = vadd.f32 %v2601, %v2889
  %v2891 = vpop.f32.mrb[0].mxu0
  %2892 = vmatprep.mubr.bf16.mxu0 %v1427
  %2893 = vmatmul.mubr.bf16.gmra.mrb[0].mxu0 %v1426
  %v2894 = vpop.f32.mrb[0].mxu0
  %v2895 = vadd.f32 %v2606, %v2894
  %v2896 = vpop.f32.mrb[0].mxu0
  %v2897 = vpop.f32.mrb[0].mxu0
  %v2898 = vadd.f32 %v2609, %v2897
  %v2899 = vpop.f32.mrb[0].mxu0
  %2900 = vmatprep.mubr.bf16.mxu0 %v1436
  %2901 = vmatmul.mubr.bf16.gmra.mrb[0].mxu0 %v1435
  %v2902 = vpop.f32.mrb[0].mxu0
  %v2903 = vadd.f32 %v2614, %v2902
  %v2904 = vpop.f32.mrb[0].mxu0
  %v2905 = vpop.f32.mrb[0].mxu0
  %v2906 = vadd.f32 %v2617, %v2905
  %v2907 = vpop.f32.mrb[0].mxu0
  %2908 = vmatprep.mubr.bf16.mxu0 %v1445
  %2909 = vmatmul.mubr.bf16.gmra.mrb[0].mxu0 %v1444
  %v2910 = vpop.f32.mrb[0].mxu0
  %v2911 = vadd.f32 %v2622, %v2910
  %v2912 = vpop.f32.mrb[0].mxu0
  %v2913 = vpop.f32.mrb[0].mxu0
  %v2914 = vadd.f32 %v2625, %v2913
  %v2915 = vpop.f32.mrb[0].mxu0
  %2916 = vmatprep.mubr.bf16.mxu0 %v1454
  %2917 = vmatmul.mubr.bf16.gmra.mrb[0].mxu0 %v1453
  %v2918 = vpop.f32.mrb[0].mxu0
  %v2919 = vadd.f32 %v2630, %v2918
  %v2920 = vpop.f32.mrb[0].mxu0
  %v2921 = vpop.f32.mrb[0].mxu0
  %v2922 = vadd.f32 %v2633, %v2921
  %v2923 = vpop.f32.mrb[0].mxu0
  %2924 = vmatprep.mubr.bf16.mxu0 %v1463
  %2925 = vmatmul.mubr.bf16.gmra.mrb[0].mxu0 %v1462
  %v2926 = vpop.f32.mrb[0].mxu0
  %v2927 = vadd.f32 %v2638, %v2926
  %v2928 = vpop.f32.mrb[0].mxu0
  %v2929 = vpop.f32.mrb[0].mxu0
  %v2930 = vadd.f32 %v2641, %v2929
  %v2931 = vpop.f32.mrb[0].mxu0
  %2932 = vmatprep.mubr.bf16.mxu0 %v1472
  %2933 = vmatmul.mubr.bf16.gmra.mrb[0].mxu0 %v1471
  %v2934 = vpop.f32.mrb[0].mxu0
  %v2935 = vadd.f32 %v2646, %v2934
  %v2936 = vpop.f32.mrb[0].mxu0
  %v2937 = vpop.f32.mrb[0].mxu0
  %v2938 = vadd.f32 %v2649, %v2937
  %v2939 = vpop.f32.mrb[0].mxu0
  %2940 = vmatprep.mubr.bf16.mxu0 %v1481
  %2941 = vmatmul.mubr.bf16.gmra.mrb[0].mxu0 %v1480
  %v2942 = vpop.f32.mrb[0].mxu0
  %v2943 = vadd.f32 %v2654, %v2942
  %v2944 = vpop.f32.mrb[0].mxu0
  %v2945 = vpop.f32.mrb[0].mxu0
  %v2946 = vadd.f32 %v2657, %v2945
  %v2947 = vpop.f32.mrb[0].mxu0
  %2948 = vmatprep.mubr.bf16.mxu0 %v1490
  %2949 = vmatmul.mubr.bf16.gmra.mrb[0].mxu0 %v1489
  %v2950 = vpop.f32.mrb[0].mxu0
  %v2951 = vadd.f32 %v2662, %v2950
  %v2952 = vpop.f32.mrb[0].mxu0
  %v2953 = vpop.f32.mrb[0].mxu0
  %v2954 = vadd.f32 %v2665, %v2953
  %v2955 = vpop.f32.mrb[0].mxu0
  %2956 = vmatprep.mubr.bf16.mxu0 %v1499
  %2957 = vmatmul.mubr.bf16.gmra.mrb[0].mxu0 %v1498
  %v2958 = vpop.f32.mrb[0].mxu0
  %v2959 = vadd.f32 %v2670, %v2958
  %v2960 = vpop.f32.mrb[0].mxu0
  %v2961 = vpop.f32.mrb[0].mxu0
  %v2962 = vadd.f32 %v2673, %v2961
  %v2963 = vpop.f32.mrb[0].mxu0
  %2964 = vmatprep.mubr.bf16.mxu0 %v1508
  %2965 = vmatmul.mubr.bf16.gmra.mrb[0].mxu0 %v1507
  %v2966 = vpop.f32.mrb[0].mxu0
  %v2967 = vadd.f32 %v2678, %v2966
  %v2968 = vpop.f32.mrb[0].mxu0
  %v2969 = vpop.f32.mrb[0].mxu0
  %v2970 = vadd.f32 %v2681, %v2969
  %v2971 = vpop.f32.mrb[0].mxu0
  %2972 = vmatprep.mubr.bf16.mxu0 %v1517
  %2973 = vmatmul.mubr.bf16.gmra.mrb[0].mxu0 %v1516
  %v2974 = vpop.f32.mrb[0].mxu0
  %v2975 = vadd.f32 %v2686, %v2974
  %v2976 = vpop.f32.mrb[0].mxu0
  %v2977 = vpop.f32.mrb[0].mxu0
  %v2978 = vadd.f32 %v2689, %v2977
  %v2979 = vpop.f32.mrb[0].mxu0
  %2980 = vmatprep.mubr.bf16.mxu0 %v1526
  %2981 = vmatmul.mubr.bf16.gmra.mrb[0].mxu0 %v1525
  %v2982 = vpop.f32.mrb[0].mxu0
  %v2983 = vadd.f32 %v2694, %v2982
  %v2984 = vpop.f32.mrb[0].mxu0
  %v2985 = vpop.f32.mrb[0].mxu0
  %v2986 = vadd.f32 %v2697, %v2985
  %v2987 = vpop.f32.mrb[0].mxu0
  %2988 = vmatprep.mubr.bf16.mxu0 %v1535
  %2989 = vmatmul.mubr.bf16.gmra.mrb[0].mxu0 %v1534
  %v2990 = vpop.f32.mrb[0].mxu0
  %v2991 = vadd.f32 %v2702, %v2990
  %v2992 = vpop.f32.mrb[0].mxu0
  %v2993 = vpop.f32.mrb[0].mxu0
  %v2994 = vadd.f32 %v2705, %v2993
  %v2995 = vpop.f32.mrb[0].mxu0
  %2996 = vmatprep.mubr.bf16.mxu0 %v1544
  %2997 = vmatmul.mubr.bf16.gmra.mrb[0].mxu0 %v1543
  %v2998 = vpop.f32.mrb[0].mxu0
  %v2999 = vadd.f32 %v2710, %v2998
  %v3000 = vpop.f32.mrb[0].mxu0
  %v3001 = vpop.f32.mrb[0].mxu0
  %v3002 = vadd.f32 %v2713, %v3001
  %v3003 = vpop.f32.mrb[0].mxu0
  %3004 = vmatprep.mubr.bf16.mxu0 %v1553
  %3005 = vmatmul.mubr.bf16.gmra.mrb[0].mxu0 %v1552
  %v3006 = vpop.f32.mrb[0].mxu0
  %v3007 = vadd.f32 %v2718, %v3006
  %v3008 = vpop.f32.mrb[0].mxu0
  %v3009 = vpop.f32.mrb[0].mxu0
  %v3010 = vadd.f32 %v2721, %v3009
  %v3011 = vpop.f32.mrb[0].mxu0
  %3012 = vmatprep.mubr.bf16.mxu0 %v1562
  %3013 = vmatmul.mubr.bf16.gmra.mrb[0].mxu0 %v1561
  %v3014 = vpop.f32.mrb[0].mxu0
  %v3015 = vadd.f32 %v2726, %v3014
  %v3016 = vpop.f32.mrb[0].mxu0
  %v3017 = vpop.f32.mrb[0].mxu0
  %v3018 = vadd.f32 %v2729, %v3017
  %v3019 = vpop.f32.mrb[0].mxu0
  %3020 = vmatprep.mubr.bf16.mxu0 %v1571
  %3021 = vmatmul.mubr.bf16.gmra.mrb[0].mxu0 %v1570
  %v3022 = vpop.f32.mrb[0].mxu0
  %v3023 = vadd.f32 %v2734, %v3022
  %v3024 = vpop.f32.mrb[0].mxu0
  %v3025 = vpop.f32.mrb[0].mxu0
  %v3026 = vadd.f32 %v2737, %v3025
  %v3027 = vpop.f32.mrb[0].mxu0
  %3028 = vmatprep.mubr.bf16.mxu0 %v1580
  %3029 = vmatmul.mubr.bf16.gmra.mrb[0].mxu0 %v1579
  %v3030 = vpop.f32.mrb[0].mxu0
  %v3031 = vadd.f32 %v2742, %v3030
  %v3032 = vpop.f32.mrb[0].mxu0
  %v3033 = vpop.f32.mrb[0].mxu0
  %v3034 = vadd.f32 %v2745, %v3033
  %v3035 = vpop.f32.mrb[0].mxu0
  %3036 = vmatprep.mubr.bf16.mxu0 %v1589
  %3037 = vmatmul.mubr.bf16.gmra.mrb[0].mxu0 %v1588
  %v3038 = vpop.f32.mrb[0].mxu0
  %v3039 = vadd.f32 %v2750, %v3038
  %v3040 = vpop.f32.mrb[0].mxu0
  %v3041 = vpop.f32.mrb[0].mxu0
  %v3042 = vadd.f32 %v2753, %v3041
  %v3043 = vpop.f32.mrb[0].mxu0
  %3044 = vmatprep.mubr.bf16.mxu0 %v1598
  %3045 = vmatmul.mubr.bf16.gmra.mrb[0].mxu0 %v1597
  %v3046 = vpop.f32.mrb[0].mxu0
  %v3047 = vadd.f32 %v2758, %v3046
  %v3048 = vpop.f32.mrb[0].mxu0
  %v3049 = vpop.f32.mrb[0].mxu0
  %v3050 = vadd.f32 %v2761, %v3049
  %v3051 = vpop.f32.mrb[0].mxu0
  %3052 = vmatprep.mubr.bf16.mxu0 %v1607
  %3053 = vmatmul.mubr.bf16.gmra.mrb[0].mxu0 %v1606
  %v3054 = vpop.f32.mrb[0].mxu0
  %v3055 = vadd.f32 %v2766, %v3054
  %v3056 = vpop.f32.mrb[0].mxu0
  %v3057 = vpop.f32.mrb[0].mxu0
  %v3058 = vadd.f32 %v2769, %v3057
  %v3059 = vpop.f32.mrb[0].mxu0
  %3060 = vmatprep.mubr.bf16.mxu0 %v1616
  %3061 = vmatmul.mubr.bf16.gmra.mrb[0].mxu0 %v1615
  %v3062 = vpop.f32.mrb[0].mxu0
  %v3063 = vadd.f32 %v2774, %v3062
  %v3064 = vpop.f32.mrb[0].mxu0
  %v3065 = vpop.f32.mrb[0].mxu0
  %v3066 = vadd.f32 %v2777, %v3065
  %v3067 = vpop.f32.mrb[0].mxu0
  %3068 = vmatprep.mubr.bf16.mxu0 %v1625
  %3069 = vmatmul.mubr.bf16.gmra.mrb[0].mxu0 %v1624
  %v3070 = vpop.f32.mrb[0].mxu0
  %v3071 = vadd.f32 %v2782, %v3070
  %v3072 = vpop.f32.mrb[0].mxu0
  %v3073 = vpop.f32.mrb[0].mxu0
  %v3074 = vadd.f32 %v2785, %v3073
  %v3075 = vpop.f32.mrb[0].mxu0
  %3076 = vmatprep.mubr.bf16.mxu0 %v1634
  %3077 = vmatmul.mubr.bf16.gmra.mrb[0].mxu0 %v1633
  %v3078 = vpop.f32.mrb[0].mxu0
  %v3079 = vadd.f32 %v2790, %v3078
  %v3080 = vpop.f32.mrb[0].mxu0
  %v3081 = vpop.f32.mrb[0].mxu0
  %v3082 = vadd.f32 %v2793, %v3081
  %v3083 = vpop.f32.mrb[0].mxu0
  %3084 = vmatprep.mubr.bf16.mxu0 %v1643
  %3085 = vmatmul.mubr.bf16.gmra.mrb[0].mxu0 %v1642
  %v3086 = vpop.f32.mrb[0].mxu0
  %v3087 = vadd.f32 %v2798, %v3086
  %v3088 = vpop.f32.mrb[0].mxu0
  %v3089 = vpop.f32.mrb[0].mxu0
  %v3090 = vadd.f32 %v2801, %v3089
  %v3091 = vpop.f32.mrb[0].mxu0
  %3092 = vmatprep.mubr.bf16.mxu0 %v1652
  %3093 = vmatmul.mubr.bf16.gmra.mrb[0].mxu0 %v1651
  %v3094 = vpop.f32.mrb[0].mxu0
  %v3095 = vadd.f32 %v2806, %v3094
  %v3096 = vpop.f32.mrb[0].mxu0
  %v3097 = vpop.f32.mrb[0].mxu0
  %v3098 = vadd.f32 %v2809, %v3097
  %v3099 = vpop.f32.mrb[0].mxu0
  %3100 = vmatprep.mubr.bf16.mxu0 %v1661
  %3101 = vmatmul.mubr.bf16.gmra.mrb[0].mxu0 %v1660
  %v3102 = vpop.f32.mrb[0].mxu0
  %v3103 = vadd.f32 %v2814, %v3102
  %v3104 = vpop.f32.mrb[0].mxu0
  %v3105 = vpop.f32.mrb[0].mxu0
  %v3106 = vadd.f32 %v2817, %v3105
  %v3107 = vpop.f32.mrb[0].mxu0
  %3108 = vmatprep.mubr.bf16.mxu0 %v1670
  %3109 = vmatmul.mubr.bf16.gmra.mrb[0].mxu0 %v1669
  %v3110 = vpop.f32.mrb[0].mxu0
  %v3111 = vadd.f32 %v2822, %v3110
  %v3112 = vpop.f32.mrb[0].mxu0
  %v3113 = vpop.f32.mrb[0].mxu0
  %v3114 = vadd.f32 %v2825, %v3113
  %v3115 = vpop.f32.mrb[0].mxu0
  %3116 = vdwg.mxu0
  %3117 = vmatprep.subr.bf16.mxu0 0
  %3118 = vmatpush1.bf16.msra.mxu0 %v2154
  %3119 = vmatprep.subr.bf16.mxu0 0
  %3120 = vmatpush1.bf16.msra.mxu0 %v2155
  %3121 = vmatprep.subr.bf16.mxu0 0
  %3122 = vmatpush1.bf16.msra.mxu0 %v2156
  %3123 = vmatprep.subr.bf16.mxu0 0
  %3124 = vmatpush1.bf16.msra.mxu0 %v2157
  %3125 = vmatprep.subr.bf16.mxu0 0
  %3126 = vmatpush1.bf16.msra.mxu0 %v2158
  %3127 = vmatprep.subr.bf16.mxu0 0
  %3128 = vmatpush1.bf16.msra.mxu0 %v2159
  %3129 = vmatprep.subr.bf16.mxu0 0
  %3130 = vmatpush1.bf16.msra.mxu0 %v2160
  %3131 = vmatprep.subr.bf16.mxu0 0
  %3132 = vmatpush1.bf16.msra.mxu0 %v2161
  %3133 = vmatprep.subr.bf16.mxu0 0
  %3134 = vmatpush1.bf16.msra.mxu0 %v2162
  %3135 = vmatprep.subr.bf16.mxu0 0
  %3136 = vmatpush1.bf16.msra.mxu0 %v2163
  %3137 = vmatprep.subr.bf16.mxu0 0
  %3138 = vmatpush1.bf16.msra.mxu0 %v2164
  %3139 = vmatprep.subr.bf16.mxu0 0
  %3140 = vmatpush1.bf16.msra.mxu0 %v2165
  %3141 = vmatprep.subr.bf16.mxu0 0
  %3142 = vmatpush1.bf16.msra.mxu0 %v2166
  %3143 = vmatprep.subr.bf16.mxu0 0
  %3144 = vmatpush1.bf16.msra.mxu0 %v2167
  %3145 = vmatprep.subr.bf16.mxu0 0
  %3146 = vmatpush1.bf16.msra.mxu0 %v2168
  %3147 = vmatprep.subr.bf16.mxu0 0
  %3148 = vmatpush1.bf16.msra.mxu0 %v2169
  %3149 = vmatprep.mubr.bf16.mxu0 %v1393
  %3150 = vmatmul.mubr.bf16.gmra.mrb[0].mxu0 %v1392
  %v3151 = vpop.f32.mrb[0].mxu0
  %v3152 = vadd.f32 %v2863, %v3151
  %v3153 = vpop.f32.mrb[0].mxu0
  %v3154 = vpop.f32.mrb[0].mxu0
  %v3155 = vadd.f32 %v2866, %v3154
  %v3156 = vpop.f32.mrb[0].mxu0
  %3157 = vmatprep.mubr.bf16.mxu0 %v1402
  %3158 = vmatmul.mubr.bf16.gmra.mrb[0].mxu0 %v1401
  %v3159 = vpop.f32.mrb[0].mxu0
  %v3160 = vadd.f32 %v2871, %v3159
  %v3161 = vpop.f32.mrb[0].mxu0
  %v3162 = vpop.f32.mrb[0].mxu0
  %v3163 = vadd.f32 %v2874, %v3162
  %v3164 = vpop.f32.mrb[0].mxu0
  %3165 = vmatprep.mubr.bf16.mxu0 %v1411
  %3166 = vmatmul.mubr.bf16.gmra.mrb[0].mxu0 %v1410
  %v3167 = vpop.f32.mrb[0].mxu0
  %v3168 = vadd.f32 %v2879, %v3167
  %v3169 = vpop.f32.mrb[0].mxu0
  %v3170 = vpop.f32.mrb[0].mxu0
  %v3171 = vadd.f32 %v2882, %v3170
  %v3172 = vpop.f32.mrb[0].mxu0
  %3173 = vmatprep.mubr.bf16.mxu0 %v1420
  %3174 = vmatmul.mubr.bf16.gmra.mrb[0].mxu0 %v1419
  %v3175 = vpop.f32.mrb[0].mxu0
  %v3176 = vadd.f32 %v2887, %v3175
  %v3177 = vpop.f32.mrb[0].mxu0
  %v3178 = vpop.f32.mrb[0].mxu0
  %v3179 = vadd.f32 %v2890, %v3178
  %v3180 = vpop.f32.mrb[0].mxu0
  %3181 = vmatprep.mubr.bf16.mxu0 %v1429
  %3182 = vmatmul.mubr.bf16.gmra.mrb[0].mxu0 %v1428
  %v3183 = vpop.f32.mrb[0].mxu0
  %v3184 = vadd.f32 %v2895, %v3183
  %v3185 = vpop.f32.mrb[0].mxu0
  %v3186 = vpop.f32.mrb[0].mxu0
  %v3187 = vadd.f32 %v2898, %v3186
  %v3188 = vpop.f32.mrb[0].mxu0
  %3189 = vmatprep.mubr.bf16.mxu0 %v1438
  %3190 = vmatmul.mubr.bf16.gmra.mrb[0].mxu0 %v1437
  %v3191 = vpop.f32.mrb[0].mxu0
  %v3192 = vadd.f32 %v2903, %v3191
  %v3193 = vpop.f32.mrb[0].mxu0
  %v3194 = vpop.f32.mrb[0].mxu0
  %v3195 = vadd.f32 %v2906, %v3194
  %v3196 = vpop.f32.mrb[0].mxu0
  %3197 = vmatprep.mubr.bf16.mxu0 %v1447
  %3198 = vmatmul.mubr.bf16.gmra.mrb[0].mxu0 %v1446
  %v3199 = vpop.f32.mrb[0].mxu0
  %v3200 = vadd.f32 %v2911, %v3199
  %v3201 = vpop.f32.mrb[0].mxu0
  %v3202 = vpop.f32.mrb[0].mxu0
  %v3203 = vadd.f32 %v2914, %v3202
  %v3204 = vpop.f32.mrb[0].mxu0
  %3205 = vmatprep.mubr.bf16.mxu0 %v1456
  %3206 = vmatmul.mubr.bf16.gmra.mrb[0].mxu0 %v1455
  %v3207 = vpop.f32.mrb[0].mxu0
  %v3208 = vadd.f32 %v2919, %v3207
  %v3209 = vpop.f32.mrb[0].mxu0
  %v3210 = vpop.f32.mrb[0].mxu0
  %v3211 = vadd.f32 %v2922, %v3210
  %v3212 = vpop.f32.mrb[0].mxu0
  %3213 = vmatprep.mubr.bf16.mxu0 %v1465
  %3214 = vmatmul.mubr.bf16.gmra.mrb[0].mxu0 %v1464
  %v3215 = vpop.f32.mrb[0].mxu0
  %v3216 = vadd.f32 %v2927, %v3215
  %v3217 = vpop.f32.mrb[0].mxu0
  %v3218 = vpop.f32.mrb[0].mxu0
  %v3219 = vadd.f32 %v2930, %v3218
  %v3220 = vpop.f32.mrb[0].mxu0
  %3221 = vmatprep.mubr.bf16.mxu0 %v1474
  %3222 = vmatmul.mubr.bf16.gmra.mrb[0].mxu0 %v1473
  %v3223 = vpop.f32.mrb[0].mxu0
  %v3224 = vadd.f32 %v2935, %v3223
  %v3225 = vpop.f32.mrb[0].mxu0
  %v3226 = vpop.f32.mrb[0].mxu0
  %v3227 = vadd.f32 %v2938, %v3226
  %v3228 = vpop.f32.mrb[0].mxu0
  %3229 = vmatprep.mubr.bf16.mxu0 %v1483
  %3230 = vmatmul.mubr.bf16.gmra.mrb[0].mxu0 %v1482
  %v3231 = vpop.f32.mrb[0].mxu0
  %v3232 = vadd.f32 %v2943, %v3231
  %v3233 = vpop.f32.mrb[0].mxu0
  %v3234 = vpop.f32.mrb[0].mxu0
  %v3235 = vadd.f32 %v2946, %v3234
  %v3236 = vpop.f32.mrb[0].mxu0
  %3237 = vmatprep.mubr.bf16.mxu0 %v1492
  %3238 = vmatmul.mubr.bf16.gmra.mrb[0].mxu0 %v1491
  %v3239 = vpop.f32.mrb[0].mxu0
  %v3240 = vadd.f32 %v2951, %v3239
  %v3241 = vpop.f32.mrb[0].mxu0
  %v3242 = vpop.f32.mrb[0].mxu0
  %v3243 = vadd.f32 %v2954, %v3242
  %v3244 = vpop.f32.mrb[0].mxu0
  %3245 = vmatprep.mubr.bf16.mxu0 %v1501
  %3246 = vmatmul.mubr.bf16.gmra.mrb[0].mxu0 %v1500
  %v3247 = vpop.f32.mrb[0].mxu0
  %v3248 = vadd.f32 %v2959, %v3247
  %v3249 = vpop.f32.mrb[0].mxu0
  %v3250 = vpop.f32.mrb[0].mxu0
  %v3251 = vadd.f32 %v2962, %v3250
  %v3252 = vpop.f32.mrb[0].mxu0
  %3253 = vmatprep.mubr.bf16.mxu0 %v1510
  %3254 = vmatmul.mubr.bf16.gmra.mrb[0].mxu0 %v1509
  %v3255 = vpop.f32.mrb[0].mxu0
  %v3256 = vadd.f32 %v2967, %v3255
  %v3257 = vpop.f32.mrb[0].mxu0
  %v3258 = vpop.f32.mrb[0].mxu0
  %v3259 = vadd.f32 %v2970, %v3258
  %v3260 = vpop.f32.mrb[0].mxu0
  %3261 = vmatprep.mubr.bf16.mxu0 %v1519
  %3262 = vmatmul.mubr.bf16.gmra.mrb[0].mxu0 %v1518
  %v3263 = vpop.f32.mrb[0].mxu0
  %v3264 = vadd.f32 %v2975, %v3263
  %v3265 = vpop.f32.mrb[0].mxu0
  %v3266 = vpop.f32.mrb[0].mxu0
  %v3267 = vadd.f32 %v2978, %v3266
  %v3268 = vpop.f32.mrb[0].mxu0
  %3269 = vmatprep.mubr.bf16.mxu0 %v1528
  %3270 = vmatmul.mubr.bf16.gmra.mrb[0].mxu0 %v1527
  %v3271 = vpop.f32.mrb[0].mxu0
  %v3272 = vadd.f32 %v2983, %v3271
  %v3273 = vpop.f32.mrb[0].mxu0
  %v3274 = vpop.f32.mrb[0].mxu0
  %v3275 = vadd.f32 %v2986, %v3274
  %v3276 = vpop.f32.mrb[0].mxu0
  %3277 = vmatprep.mubr.bf16.mxu0 %v1537
  %3278 = vmatmul.mubr.bf16.gmra.mrb[0].mxu0 %v1536
  %v3279 = vpop.f32.mrb[0].mxu0
  %v3280 = vadd.f32 %v2991, %v3279
  %v3281 = vpop.f32.mrb[0].mxu0
  %v3282 = vpop.f32.mrb[0].mxu0
  %v3283 = vadd.f32 %v2994, %v3282
  %v3284 = vpop.f32.mrb[0].mxu0
  %3285 = vmatprep.mubr.bf16.mxu0 %v1546
  %3286 = vmatmul.mubr.bf16.gmra.mrb[0].mxu0 %v1545
  %v3287 = vpop.f32.mrb[0].mxu0
  %v3288 = vadd.f32 %v2999, %v3287
  %v3289 = vpop.f32.mrb[0].mxu0
  %v3290 = vpop.f32.mrb[0].mxu0
  %v3291 = vadd.f32 %v3002, %v3290
  %v3292 = vpop.f32.mrb[0].mxu0
  %3293 = vmatprep.mubr.bf16.mxu0 %v1555
  %3294 = vmatmul.mubr.bf16.gmra.mrb[0].mxu0 %v1554
  %v3295 = vpop.f32.mrb[0].mxu0
  %v3296 = vadd.f32 %v3007, %v3295
  %v3297 = vpop.f32.mrb[0].mxu0
  %v3298 = vpop.f32.mrb[0].mxu0
  %v3299 = vadd.f32 %v3010, %v3298
  %v3300 = vpop.f32.mrb[0].mxu0
  %3301 = vmatprep.mubr.bf16.mxu0 %v1564
  %3302 = vmatmul.mubr.bf16.gmra.mrb[0].mxu0 %v1563
  %v3303 = vpop.f32.mrb[0].mxu0
  %v3304 = vadd.f32 %v3015, %v3303
  %v3305 = vpop.f32.mrb[0].mxu0
  %v3306 = vpop.f32.mrb[0].mxu0
  %v3307 = vadd.f32 %v3018, %v3306
  %v3308 = vpop.f32.mrb[0].mxu0
  %3309 = vmatprep.mubr.bf16.mxu0 %v1573
  %3310 = vmatmul.mubr.bf16.gmra.mrb[0].mxu0 %v1572
  %v3311 = vpop.f32.mrb[0].mxu0
  %v3312 = vadd.f32 %v3023, %v3311
  %v3313 = vpop.f32.mrb[0].mxu0
  %v3314 = vpop.f32.mrb[0].mxu0
  %v3315 = vadd.f32 %v3026, %v3314
  %v3316 = vpop.f32.mrb[0].mxu0
  %3317 = vmatprep.mubr.bf16.mxu0 %v1582
  %3318 = vmatmul.mubr.bf16.gmra.mrb[0].mxu0 %v1581
  %v3319 = vpop.f32.mrb[0].mxu0
  %v3320 = vadd.f32 %v3031, %v3319
  %v3321 = vpop.f32.mrb[0].mxu0
  %v3322 = vpop.f32.mrb[0].mxu0
  %v3323 = vadd.f32 %v3034, %v3322
  %v3324 = vpop.f32.mrb[0].mxu0
  %3325 = vmatprep.mubr.bf16.mxu0 %v1591
  %3326 = vmatmul.mubr.bf16.gmra.mrb[0].mxu0 %v1590
  %v3327 = vpop.f32.mrb[0].mxu0
  %v3328 = vadd.f32 %v3039, %v3327
  %v3329 = vpop.f32.mrb[0].mxu0
  %v3330 = vpop.f32.mrb[0].mxu0
  %v3331 = vadd.f32 %v3042, %v3330
  %v3332 = vpop.f32.mrb[0].mxu0
  %3333 = vmatprep.mubr.bf16.mxu0 %v1600
  %3334 = vmatmul.mubr.bf16.gmra.mrb[0].mxu0 %v1599
  %v3335 = vpop.f32.mrb[0].mxu0
  %v3336 = vadd.f32 %v3047, %v3335
  %v3337 = vpop.f32.mrb[0].mxu0
  %v3338 = vpop.f32.mrb[0].mxu0
  %v3339 = vadd.f32 %v3050, %v3338
  %v3340 = vpop.f32.mrb[0].mxu0
  %3341 = vmatprep.mubr.bf16.mxu0 %v1609
  %3342 = vmatmul.mubr.bf16.gmra.mrb[0].mxu0 %v1608
  %v3343 = vpop.f32.mrb[0].mxu0
  %v3344 = vadd.f32 %v3055, %v3343
  %v3345 = vpop.f32.mrb[0].mxu0
  %v3346 = vpop.f32.mrb[0].mxu0
  %v3347 = vadd.f32 %v3058, %v3346
  %v3348 = vpop.f32.mrb[0].mxu0
  %3349 = vmatprep.mubr.bf16.mxu0 %v1618
  %3350 = vmatmul.mubr.bf16.gmra.mrb[0].mxu0 %v1617
  %v3351 = vpop.f32.mrb[0].mxu0
  %v3352 = vadd.f32 %v3063, %v3351
  %v3353 = vpop.f32.mrb[0].mxu0
  %v3354 = vpop.f32.mrb[0].mxu0
  %v3355 = vadd.f32 %v3066, %v3354
  %v3356 = vpop.f32.mrb[0].mxu0
  %3357 = vmatprep.mubr.bf16.mxu0 %v1627
  %3358 = vmatmul.mubr.bf16.gmra.mrb[0].mxu0 %v1626
  %v3359 = vpop.f32.mrb[0].mxu0
  %v3360 = vadd.f32 %v3071, %v3359
  %v3361 = vpop.f32.mrb[0].mxu0
  %v3362 = vpop.f32.mrb[0].mxu0
  %v3363 = vadd.f32 %v3074, %v3362
  %v3364 = vpop.f32.mrb[0].mxu0
  %3365 = vmatprep.mubr.bf16.mxu0 %v1636
  %3366 = vmatmul.mubr.bf16.gmra.mrb[0].mxu0 %v1635
  %v3367 = vpop.f32.mrb[0].mxu0
  %v3368 = vadd.f32 %v3079, %v3367
  %v3369 = vpop.f32.mrb[0].mxu0
  %v3370 = vpop.f32.mrb[0].mxu0
  %v3371 = vadd.f32 %v3082, %v3370
  %v3372 = vpop.f32.mrb[0].mxu0
  %3373 = vmatprep.mubr.bf16.mxu0 %v1645
  %3374 = vmatmul.mubr.bf16.gmra.mrb[0].mxu0 %v1644
  %v3375 = vpop.f32.mrb[0].mxu0
  %v3376 = vadd.f32 %v3087, %v3375
  %v3377 = vpop.f32.mrb[0].mxu0
  %v3378 = vpop.f32.mrb[0].mxu0
  %v3379 = vadd.f32 %v3090, %v3378
  %v3380 = vpop.f32.mrb[0].mxu0
  %3381 = vmatprep.mubr.bf16.mxu0 %v1654
  %3382 = vmatmul.mubr.bf16.gmra.mrb[0].mxu0 %v1653
  %v3383 = vpop.f32.mrb[0].mxu0
  %v3384 = vadd.f32 %v3095, %v3383
  %v3385 = vpop.f32.mrb[0].mxu0
  %v3386 = vpop.f32.mrb[0].mxu0
  %v3387 = vadd.f32 %v3098, %v3386
  %v3388 = vpop.f32.mrb[0].mxu0
  %3389 = vmatprep.mubr.bf16.mxu0 %v1663
  %3390 = vmatmul.mubr.bf16.gmra.mrb[0].mxu0 %v1662
  %v3391 = vpop.f32.mrb[0].mxu0
  %v3392 = vadd.f32 %v3103, %v3391
  %v3393 = vpop.f32.mrb[0].mxu0
  %v3394 = vpop.f32.mrb[0].mxu0
  %v3395 = vadd.f32 %v3106, %v3394
  %v3396 = vpop.f32.mrb[0].mxu0
  %3397 = vmatprep.mubr.bf16.mxu0 %v1672
  %3398 = vmatmul.mubr.bf16.gmra.mrb[0].mxu0 %v1671
  %v3399 = vpop.f32.mrb[0].mxu0
  %v3400 = vadd.f32 %v3111, %v3399
  %v3401 = vpop.f32.mrb[0].mxu0
  %v3402 = vpop.f32.mrb[0].mxu0
  %v3403 = vadd.f32 %v3114, %v3402
  %v3404 = vpop.f32.mrb[0].mxu0
  %3405 = vdwg.mxu0
  %3406 = vmatprep.subr.bf16.mxu0 0
  %3407 = vmatpush1.bf16.msra.mxu0 %v2170
  %3408 = vmatprep.subr.bf16.mxu0 0
  %3409 = vmatpush1.bf16.msra.mxu0 %v2171
  %3410 = vmatprep.subr.bf16.mxu0 0
  %3411 = vmatpush1.bf16.msra.mxu0 %v2172
  %3412 = vmatprep.subr.bf16.mxu0 0
  %3413 = vmatpush1.bf16.msra.mxu0 %v2173
  %3414 = vmatprep.subr.bf16.mxu0 0
  %3415 = vmatpush1.bf16.msra.mxu0 %v2174
  %3416 = vmatprep.subr.bf16.mxu0 0
  %3417 = vmatpush1.bf16.msra.mxu0 %v2175
  %3418 = vmatprep.subr.bf16.mxu0 0
  %3419 = vmatpush1.bf16.msra.mxu0 %v2176
  %3420 = vmatprep.subr.bf16.mxu0 0
  %3421 = vmatpush1.bf16.msra.mxu0 %v2177
  %3422 = vmatprep.subr.bf16.mxu0 0
  %3423 = vmatpush1.bf16.msra.mxu0 0
  %3424 = vmatprep.subr.bf16.mxu0 0
  %3425 = vmatpush1.bf16.msra.mxu0 0
  %3426 = vmatprep.subr.bf16.mxu0 0
  %3427 = vmatpush1.bf16.msra.mxu0 0
  %3428 = vmatprep.subr.bf16.mxu0 0
  %3429 = vmatpush1.bf16.msra.mxu0 0
  %3430 = vmatprep.subr.bf16.mxu0 0
  %3431 = vmatpush1.bf16.msra.mxu0 0
  %3432 = vmatprep.subr.bf16.mxu0 0
  %3433 = vmatpush1.bf16.msra.mxu0 0
  %3434 = vmatprep.subr.bf16.mxu0 0
  %3435 = vmatpush1.bf16.msra.mxu0 0
  %3436 = vmatprep.subr.bf16.mxu0 0
  %3437 = vmatpush1.bf16.msra.mxu0 0
  %3438 = vmatprep.mubr.bf16.mxu0 0
  %3439 = vmatmul.mubr.bf16.gmra.mrb[0].mxu0 %v1394
  %v3440 = vpop.f32.mrb[0].mxu0
  %v3441 = vadd.f32 %v3152, %v3440
  %v3442 = vpop.f32.mrb[0].mxu0
  %v3443 = vpop.f32.mrb[0].mxu0
  %v3444 = vadd.f32 %v3155, %v3443
  %v3445 = vpop.f32.mrb[0].mxu0
  %3446 = vmatprep.mubr.bf16.mxu0 0
  %3447 = vmatmul.mubr.bf16.gmra.mrb[0].mxu0 %v1403
  %v3448 = vpop.f32.mrb[0].mxu0
  %v3449 = vadd.f32 %v3160, %v3448
  %v3450 = vpop.f32.mrb[0].mxu0
  %v3451 = vpop.f32.mrb[0].mxu0
  %v3452 = vadd.f32 %v3163, %v3451
  %v3453 = vpop.f32.mrb[0].mxu0
  %3454 = vmatprep.mubr.bf16.mxu0 0
  %3455 = vmatmul.mubr.bf16.gmra.mrb[0].mxu0 %v1412
  %v3456 = vpop.f32.mrb[0].mxu0
  %v3457 = vadd.f32 %v3168, %v3456
  %v3458 = vpop.f32.mrb[0].mxu0
  %v3459 = vpop.f32.mrb[0].mxu0
  %v3460 = vadd.f32 %v3171, %v3459
  %v3461 = vpop.f32.mrb[0].mxu0
  %3462 = vmatprep.mubr.bf16.mxu0 0
  %3463 = vmatmul.mubr.bf16.gmra.mrb[0].mxu0 %v1421
  %v3464 = vpop.f32.mrb[0].mxu0
  %v3465 = vadd.f32 %v3176, %v3464
  %v3466 = vpop.f32.mrb[0].mxu0
  %v3467 = vpop.f32.mrb[0].mxu0
  %v3468 = vadd.f32 %v3179, %v3467
  %v3469 = vpop.f32.mrb[0].mxu0
  %3470 = vmatprep.mubr.bf16.mxu0 0
  %3471 = vmatmul.mubr.bf16.gmra.mrb[0].mxu0 %v1430
  %v3472 = vpop.f32.mrb[0].mxu0
  %v3473 = vadd.f32 %v3184, %v3472
  %v3474 = vpop.f32.mrb[0].mxu0
  %v3475 = vpop.f32.mrb[0].mxu0
  %v3476 = vadd.f32 %v3187, %v3475
  %v3477 = vpop.f32.mrb[0].mxu0
  %3478 = vmatprep.mubr.bf16.mxu0 0
  %3479 = vmatmul.mubr.bf16.gmra.mrb[0].mxu0 %v1439
  %v3480 = vpop.f32.mrb[0].mxu0
  %v3481 = vadd.f32 %v3192, %v3480
  %v3482 = vpop.f32.mrb[0].mxu0
  %v3483 = vpop.f32.mrb[0].mxu0
  %v3484 = vadd.f32 %v3195, %v3483
  %v3485 = vpop.f32.mrb[0].mxu0
  %3486 = vmatprep.mubr.bf16.mxu0 0
  %3487 = vmatmul.mubr.bf16.gmra.mrb[0].mxu0 %v1448
  %v3488 = vpop.f32.mrb[0].mxu0
  %v3489 = vadd.f32 %v3200, %v3488
  %v3490 = vpop.f32.mrb[0].mxu0
  %v3491 = vpop.f32.mrb[0].mxu0
  %v3492 = vadd.f32 %v3203, %v3491
  %v3493 = vpop.f32.mrb[0].mxu0
  %3494 = vmatprep.mubr.bf16.mxu0 0
  %3495 = vmatmul.mubr.bf16.gmra.mrb[0].mxu0 %v1457
  %v3496 = vpop.f32.mrb[0].mxu0
  %v3497 = vadd.f32 %v3208, %v3496
  %v3498 = vpop.f32.mrb[0].mxu0
  %v3499 = vpop.f32.mrb[0].mxu0
  %v3500 = vadd.f32 %v3211, %v3499
  %v3501 = vpop.f32.mrb[0].mxu0
  %3502 = vmatprep.mubr.bf16.mxu0 0
  %3503 = vmatmul.mubr.bf16.gmra.mrb[0].mxu0 %v1466
  %v3504 = vpop.f32.mrb[0].mxu0
  %v3505 = vadd.f32 %v3216, %v3504
  %v3506 = vpop.f32.mrb[0].mxu0
  %v3507 = vpop.f32.mrb[0].mxu0
  %v3508 = vadd.f32 %v3219, %v3507
  %v3509 = vpop.f32.mrb[0].mxu0
  %3510 = vmatprep.mubr.bf16.mxu0 0
  %3511 = vmatmul.mubr.bf16.gmra.mrb[0].mxu0 %v1475
  %v3512 = vpop.f32.mrb[0].mxu0
  %v3513 = vadd.f32 %v3224, %v3512
  %v3514 = vpop.f32.mrb[0].mxu0
  %v3515 = vpop.f32.mrb[0].mxu0
  %v3516 = vadd.f32 %v3227, %v3515
  %v3517 = vpop.f32.mrb[0].mxu0
  %3518 = vmatprep.mubr.bf16.mxu0 0
  %3519 = vmatmul.mubr.bf16.gmra.mrb[0].mxu0 %v1484
  %v3520 = vpop.f32.mrb[0].mxu0
  %v3521 = vadd.f32 %v3232, %v3520
  %v3522 = vpop.f32.mrb[0].mxu0
  %v3523 = vpop.f32.mrb[0].mxu0
  %v3524 = vadd.f32 %v3235, %v3523
  %v3525 = vpop.f32.mrb[0].mxu0
  %3526 = vmatprep.mubr.bf16.mxu0 0
  %3527 = vmatmul.mubr.bf16.gmra.mrb[0].mxu0 %v1493
  %v3528 = vpop.f32.mrb[0].mxu0
  %v3529 = vadd.f32 %v3240, %v3528
  %v3530 = vpop.f32.mrb[0].mxu0
  %v3531 = vpop.f32.mrb[0].mxu0
  %v3532 = vadd.f32 %v3243, %v3531
  %v3533 = vpop.f32.mrb[0].mxu0
  %3534 = vmatprep.mubr.bf16.mxu0 0
  %3535 = vmatmul.mubr.bf16.gmra.mrb[0].mxu0 %v1502
  %v3536 = vpop.f32.mrb[0].mxu0
  %v3537 = vadd.f32 %v3248, %v3536
  %v3538 = vpop.f32.mrb[0].mxu0
  %v3539 = vpop.f32.mrb[0].mxu0
  %v3540 = vadd.f32 %v3251, %v3539
  %v3541 = vpop.f32.mrb[0].mxu0
  %3542 = vmatprep.mubr.bf16.mxu0 0
  %3543 = vmatmul.mubr.bf16.gmra.mrb[0].mxu0 %v1511
  %v3544 = vpop.f32.mrb[0].mxu0
  %v3545 = vadd.f32 %v3256, %v3544
  %v3546 = vpop.f32.mrb[0].mxu0
  %v3547 = vpop.f32.mrb[0].mxu0
  %v3548 = vadd.f32 %v3259, %v3547
  %v3549 = vpop.f32.mrb[0].mxu0
  %3550 = vmatprep.mubr.bf16.mxu0 0
  %3551 = vmatmul.mubr.bf16.gmra.mrb[0].mxu0 %v1520
  %v3552 = vpop.f32.mrb[0].mxu0
  %v3553 = vadd.f32 %v3264, %v3552
  %v3554 = vpop.f32.mrb[0].mxu0
  %v3555 = vpop.f32.mrb[0].mxu0
  %v3556 = vadd.f32 %v3267, %v3555
  %v3557 = vpop.f32.mrb[0].mxu0
  %3558 = vmatprep.mubr.bf16.mxu0 0
  %3559 = vmatmul.mubr.bf16.gmra.mrb[0].mxu0 %v1529
  %v3560 = vpop.f32.mrb[0].mxu0
  %v3561 = vadd.f32 %v3272, %v3560
  %v3562 = vpop.f32.mrb[0].mxu0
  %v3563 = vpop.f32.mrb[0].mxu0
  %v3564 = vadd.f32 %v3275, %v3563
  %v3565 = vpop.f32.mrb[0].mxu0
  %3566 = vmatprep.mubr.bf16.mxu0 0
  %3567 = vmatmul.mubr.bf16.gmra.mrb[0].mxu0 %v1538
  %v3568 = vpop.f32.mrb[0].mxu0
  %v3569 = vadd.f32 %v3280, %v3568
  %v3570 = vpop.f32.mrb[0].mxu0
  %v3571 = vpop.f32.mrb[0].mxu0
  %v3572 = vadd.f32 %v3283, %v3571
  %v3573 = vpop.f32.mrb[0].mxu0
  %3574 = vmatprep.mubr.bf16.mxu0 0
  %3575 = vmatmul.mubr.bf16.gmra.mrb[0].mxu0 %v1547
  %v3576 = vpop.f32.mrb[0].mxu0
  %v3577 = vadd.f32 %v3288, %v3576
  %v3578 = vpop.f32.mrb[0].mxu0
  %v3579 = vpop.f32.mrb[0].mxu0
  %v3580 = vadd.f32 %v3291, %v3579
  %v3581 = vpop.f32.mrb[0].mxu0
  %3582 = vmatprep.mubr.bf16.mxu0 0
  %3583 = vmatmul.mubr.bf16.gmra.mrb[0].mxu0 %v1556
  %v3584 = vpop.f32.mrb[0].mxu0
  %v3585 = vadd.f32 %v3296, %v3584
  %v3586 = vpop.f32.mrb[0].mxu0
  %v3587 = vpop.f32.mrb[0].mxu0
  %v3588 = vadd.f32 %v3299, %v3587
  %v3589 = vpop.f32.mrb[0].mxu0
  %3590 = vmatprep.mubr.bf16.mxu0 0
  %3591 = vmatmul.mubr.bf16.gmra.mrb[0].mxu0 %v1565
  %v3592 = vpop.f32.mrb[0].mxu0
  %v3593 = vadd.f32 %v3304, %v3592
  %v3594 = vpop.f32.mrb[0].mxu0
  %v3595 = vpop.f32.mrb[0].mxu0
  %v3596 = vadd.f32 %v3307, %v3595
  %v3597 = vpop.f32.mrb[0].mxu0
  %3598 = vmatprep.mubr.bf16.mxu0 0
  %3599 = vmatmul.mubr.bf16.gmra.mrb[0].mxu0 %v1574
  %v3600 = vpop.f32.mrb[0].mxu0
  %v3601 = vadd.f32 %v3312, %v3600
  %v3602 = vpop.f32.mrb[0].mxu0
  %v3603 = vpop.f32.mrb[0].mxu0
  %v3604 = vadd.f32 %v3315, %v3603
  %v3605 = vpop.f32.mrb[0].mxu0
  %3606 = vmatprep.mubr.bf16.mxu0 0
  %3607 = vmatmul.mubr.bf16.gmra.mrb[0].mxu0 %v1583
  %v3608 = vpop.f32.mrb[0].mxu0
  %v3609 = vadd.f32 %v3320, %v3608
  %v3610 = vpop.f32.mrb[0].mxu0
  %v3611 = vpop.f32.mrb[0].mxu0
  %v3612 = vadd.f32 %v3323, %v3611
  %v3613 = vpop.f32.mrb[0].mxu0
  %3614 = vmatprep.mubr.bf16.mxu0 0
  %3615 = vmatmul.mubr.bf16.gmra.mrb[0].mxu0 %v1592
  %v3616 = vpop.f32.mrb[0].mxu0
  %v3617 = vadd.f32 %v3328, %v3616
  %v3618 = vpop.f32.mrb[0].mxu0
  %v3619 = vpop.f32.mrb[0].mxu0
  %v3620 = vadd.f32 %v3331, %v3619
  %v3621 = vpop.f32.mrb[0].mxu0
  %3622 = vmatprep.mubr.bf16.mxu0 0
  %3623 = vmatmul.mubr.bf16.gmra.mrb[0].mxu0 %v1601
  %v3624 = vpop.f32.mrb[0].mxu0
  %v3625 = vadd.f32 %v3336, %v3624
  %v3626 = vpop.f32.mrb[0].mxu0
  %v3627 = vpop.f32.mrb[0].mxu0
  %v3628 = vadd.f32 %v3339, %v3627
  %v3629 = vpop.f32.mrb[0].mxu0
  %3630 = vmatprep.mubr.bf16.mxu0 0
  %3631 = vmatmul.mubr.bf16.gmra.mrb[0].mxu0 %v1610
  %v3632 = vpop.f32.mrb[0].mxu0
  %v3633 = vadd.f32 %v3344, %v3632
  %v3634 = vpop.f32.mrb[0].mxu0
  %v3635 = vpop.f32.mrb[0].mxu0
  %v3636 = vadd.f32 %v3347, %v3635
  %v3637 = vpop.f32.mrb[0].mxu0
  %3638 = vmatprep.mubr.bf16.mxu0 0
  %3639 = vmatmul.mubr.bf16.gmra.mrb[0].mxu0 %v1619
  %v3640 = vpop.f32.mrb[0].mxu0
  %v3641 = vadd.f32 %v3352, %v3640
  %v3642 = vpop.f32.mrb[0].mxu0
  %v3643 = vpop.f32.mrb[0].mxu0
  %v3644 = vadd.f32 %v3355, %v3643
  %v3645 = vpop.f32.mrb[0].mxu0
  %3646 = vmatprep.mubr.bf16.mxu0 0
  %3647 = vmatmul.mubr.bf16.gmra.mrb[0].mxu0 %v1628
  %v3648 = vpop.f32.mrb[0].mxu0
  %v3649 = vadd.f32 %v3360, %v3648
  %v3650 = vpop.f32.mrb[0].mxu0
  %v3651 = vpop.f32.mrb[0].mxu0
  %v3652 = vadd.f32 %v3363, %v3651
  %v3653 = vpop.f32.mrb[0].mxu0
  %3654 = vmatprep.mubr.bf16.mxu0 0
  %3655 = vmatmul.mubr.bf16.gmra.mrb[0].mxu0 %v1637
  %v3656 = vpop.f32.mrb[0].mxu0
  %v3657 = vadd.f32 %v3368, %v3656
  %v3658 = vpop.f32.mrb[0].mxu0
  %v3659 = vpop.f32.mrb[0].mxu0
  %v3660 = vadd.f32 %v3371, %v3659
  %v3661 = vpop.f32.mrb[0].mxu0
  %3662 = vmatprep.mubr.bf16.mxu0 0
  %3663 = vmatmul.mubr.bf16.gmra.mrb[0].mxu0 %v1646
  %v3664 = vpop.f32.mrb[0].mxu0
  %v3665 = vadd.f32 %v3376, %v3664
  %v3666 = vpop.f32.mrb[0].mxu0
  %v3667 = vpop.f32.mrb[0].mxu0
  %v3668 = vadd.f32 %v3379, %v3667
  %v3669 = vpop.f32.mrb[0].mxu0
  %3670 = vmatprep.mubr.bf16.mxu0 0
  %3671 = vmatmul.mubr.bf16.gmra.mrb[0].mxu0 %v1655
  %v3672 = vpop.f32.mrb[0].mxu0
  %v3673 = vadd.f32 %v3384, %v3672
  %v3674 = vpop.f32.mrb[0].mxu0
  %v3675 = vpop.f32.mrb[0].mxu0
  %v3676 = vadd.f32 %v3387, %v3675
  %v3677 = vpop.f32.mrb[0].mxu0
  %3678 = vmatprep.mubr.bf16.mxu0 0
  %3679 = vmatmul.mubr.bf16.gmra.mrb[0].mxu0 %v1664
  %v3680 = vpop.f32.mrb[0].mxu0
  %v3681 = vadd.f32 %v3392, %v3680
  %v3682 = vpop.f32.mrb[0].mxu0
  %v3683 = vpop.f32.mrb[0].mxu0
  %v3684 = vadd.f32 %v3395, %v3683
  %v3685 = vpop.f32.mrb[0].mxu0
  %3686 = vmatprep.mubr.bf16.mxu0 0
  %3687 = vmatmul.mubr.bf16.gmra.mrb[0].mxu0 %v1673
  %v3688 = vpop.f32.mrb[0].mxu0
  %v3689 = vadd.f32 %v3400, %v3688
  %v3690 = vpop.f32.mrb[0].mxu0
  %v3691 = vpop.f32.mrb[0].mxu0
  %v3692 = vadd.f32 %v3403, %v3691
  %v3693 = vpop.f32.mrb[0].mxu0
  %3694 = vdwg.mxu0
  %v3695 = vadd.f32 %v3441, %v3444
  %v3696 = vadd.f32 %v3695, %v3449
  %v3697 = vadd.f32 %v3696, %v3452
  %v3698 = vadd.f32 %v3697, %v3457
  %v3699 = vadd.f32 %v3698, %v3460
  %v3700 = vadd.f32 %v3699, %v3465
  %v3701 = vadd.f32 %v3700, %v3468
  %v3702 = vadd.f32 %v3701, %v3473
  %v3703 = vadd.f32 %v3702, %v3476
  %v3704 = vadd.f32 %v3703, %v3481
  %v3705 = vadd.f32 %v3704, %v3484
  %v3706 = vadd.f32 %v3705, %v3489
  %v3707 = vadd.f32 %v3706, %v3492
  %v3708 = vadd.f32 %v3707, %v3497
  %v3709 = vadd.f32 %v3708, %v3500
  %v3710 = vadd.f32 %v3709, %v3505
  %v3711 = vadd.f32 %v3710, %v3508
  %v3712 = vadd.f32 %v3711, %v3513
  %v3713 = vadd.f32 %v3712, %v3516
  %v3714 = vadd.f32 %v3713, %v3521
  %v3715 = vadd.f32 %v3714, %v3524
  %v3716 = vadd.f32 %v3715, %v3529
  %v3717 = vadd.f32 %v3716, %v3532
  %v3718 = vadd.f32 %v3717, %v3537
  %v3719 = vadd.f32 %v3718, %v3540
  %v3720 = vadd.f32 %v3719, %v3545
  %v3721 = vadd.f32 %v3720, %v3548
  %v3722 = vadd.f32 %v3721, %v3553
  %v3723 = vadd.f32 %v3722, %v3556
  %v3724 = vadd.f32 %v3723, %v3561
  %v3725 = vadd.f32 %v3724, %v3564
  %v3726 = vadd.f32 %v3725, %v3569
  %v3727 = vadd.f32 %v3726, %v3572
  %v3728 = vadd.f32 %v3727, %v3577
  %v3729 = vadd.f32 %v3728, %v3580
  %v3730 = vadd.f32 %v3729, %v3585
  %v3731 = vadd.f32 %v3730, %v3588
  %v3732 = vadd.f32 %v3731, %v3593
  %v3733 = vadd.f32 %v3732, %v3596
  %v3734 = vadd.f32 %v3733, %v3601
  %v3735 = vadd.f32 %v3734, %v3604
  %v3736 = vadd.f32 %v3735, %v3609
  %v3737 = vadd.f32 %v3736, %v3612
  %v3738 = vadd.f32 %v3737, %v3617
  %v3739 = vadd.f32 %v3738, %v3620
  %v3740 = vadd.f32 %v3739, %v3625
  %v3741 = vadd.f32 %v3740, %v3628
  %v3742 = vadd.f32 %v3741, %v3633
  %v3743 = vadd.f32 %v3742, %v3636
  %v3744 = vadd.f32 %v3743, %v3641
  %v3745 = vadd.f32 %v3744, %v3644
  %v3746 = vadd.f32 %v3745, %v3649
  %v3747 = vadd.f32 %v3746, %v3652
  %v3748 = vadd.f32 %v3747, %v3657
  %v3749 = vadd.f32 %v3748, %v3660
  %v3750 = vadd.f32 %v3749, %v3665
  %v3751 = vadd.f32 %v3750, %v3668
  %v3752 = vadd.f32 %v3751, %v3673
  %v3753 = vadd.f32 %v3752, %v3676
  %v3754 = vadd.f32 %v3753, %v3681
  %v3755 = vadd.f32 %v3754, %v3684
  %v3756 = vadd.f32 %v3755, %v3689
  %v3757 = vadd.f32 %v3756, %v3692
  %v3758 = vrot.slane %v3757, 4
  %v3759 = vadd.f32 %v3757, %v3758
  %v3760 = vrot.slane %v3759, 2
  %v3761 = vadd.f32 %v3759, %v3760
  %v3762 = vrot.slane %v3761, 1
  %v3763 = vadd.f32 %v3761, %v3762
  %v3764 = vrcp.pop 512.0
  %v3765 = vmul.f32 %v3763, %v3764
  %v3766 = vsub.f32 %v3441, %v3765
  %v3767 = vsub.f32 %v3444, %v3765
  %v3768 = vsub.f32 %v3449, %v3765
  %v3769 = vsub.f32 %v3452, %v3765
  %v3770 = vsub.f32 %v3457, %v3765
  %v3771 = vsub.f32 %v3460, %v3765
  %v3772 = vsub.f32 %v3465, %v3765
  %v3773 = vsub.f32 %v3468, %v3765
  %v3774 = vsub.f32 %v3473, %v3765
  %v3775 = vsub.f32 %v3476, %v3765
  %v3776 = vsub.f32 %v3481, %v3765
  %v3777 = vsub.f32 %v3484, %v3765
  %v3778 = vsub.f32 %v3489, %v3765
  %v3779 = vsub.f32 %v3492, %v3765
  %v3780 = vsub.f32 %v3497, %v3765
  %v3781 = vsub.f32 %v3500, %v3765
  %v3782 = vsub.f32 %v3505, %v3765
  %v3783 = vsub.f32 %v3508, %v3765
  %v3784 = vsub.f32 %v3513, %v3765
  %v3785 = vsub.f32 %v3516, %v3765
  %v3786 = vsub.f32 %v3521, %v3765
  %v3787 = vsub.f32 %v3524, %v3765
  %v3788 = vsub.f32 %v3529, %v3765
  %v3789 = vsub.f32 %v3532, %v3765
  %v3790 = vsub.f32 %v3537, %v3765
  %v3791 = vsub.f32 %v3540, %v3765
  %v3792 = vsub.f32 %v3545, %v3765
  %v3793 = vsub.f32 %v3548, %v3765
  %v3794 = vsub.f32 %v3553, %v3765
  %v3795 = vsub.f32 %v3556, %v3765
  %v3796 = vsub.f32 %v3561, %v3765
  %v3797 = vsub.f32 %v3564, %v3765
  %v3798 = vsub.f32 %v3569, %v3765
  %v3799 = vsub.f32 %v3572, %v3765
  %v3800 = vsub.f32 %v3577, %v3765
  %v3801 = vsub.f32 %v3580, %v3765
  %v3802 = vsub.f32 %v3585, %v3765
  %v3803 = vsub.f32 %v3588, %v3765
  %v3804 = vsub.f32 %v3593, %v3765
  %v3805 = vsub.f32 %v3596, %v3765
  %v3806 = vsub.f32 %v3601, %v3765
  %v3807 = vsub.f32 %v3604, %v3765
  %v3808 = vsub.f32 %v3609, %v3765
  %v3809 = vsub.f32 %v3612, %v3765
  %v3810 = vsub.f32 %v3617, %v3765
  %v3811 = vsub.f32 %v3620, %v3765
  %v3812 = vsub.f32 %v3625, %v3765
  %v3813 = vsub.f32 %v3628, %v3765
  %v3814 = vsub.f32 %v3633, %v3765
  %v3815 = vsub.f32 %v3636, %v3765
  %v3816 = vsub.f32 %v3641, %v3765
  %v3817 = vsub.f32 %v3644, %v3765
  %v3818 = vsub.f32 %v3649, %v3765
  %v3819 = vsub.f32 %v3652, %v3765
  %v3820 = vsub.f32 %v3657, %v3765
  %v3821 = vsub.f32 %v3660, %v3765
  %v3822 = vsub.f32 %v3665, %v3765
  %v3823 = vsub.f32 %v3668, %v3765
  %v3824 = vsub.f32 %v3673, %v3765
  %v3825 = vsub.f32 %v3676, %v3765
  %v3826 = vsub.f32 %v3681, %v3765
  %v3827 = vsub.f32 %v3684, %v3765
  %v3828 = vsub.f32 %v3689, %v3765
  %v3829 = vsub.f32 %v3692, %v3765
  %v3830 = vmul.f32 %v3766, %v3766
  %v3831 = vmul.f32 %v3767, %v3767
  %v3832 = vmul.f32 %v3768, %v3768
  %v3833 = vmul.f32 %v3769, %v3769
  %v3834 = vmul.f32 %v3770, %v3770
  %v3835 = vmul.f32 %v3771, %v3771
  %v3836 = vmul.f32 %v3772, %v3772
  %v3837 = vmul.f32 %v3773, %v3773
  %v3838 = vmul.f32 %v3774, %v3774
  %v3839 = vmul.f32 %v3775, %v3775
  %v3840 = vmul.f32 %v3776, %v3776
  %v3841 = vmul.f32 %v3777, %v3777
  %v3842 = vmul.f32 %v3778, %v3778
  %v3843 = vmul.f32 %v3779, %v3779
  %v3844 = vmul.f32 %v3780, %v3780
  %v3845 = vmul.f32 %v3781, %v3781
  %v3846 = vmul.f32 %v3782, %v3782
  %v3847 = vmul.f32 %v3783, %v3783
  %v3848 = vmul.f32 %v3784, %v3784
  %v3849 = vmul.f32 %v3785, %v3785
  %v3850 = vmul.f32 %v3786, %v3786
  %v3851 = vmul.f32 %v3787, %v3787
  %v3852 = vmul.f32 %v3788, %v3788
  %v3853 = vmul.f32 %v3789, %v3789
  %v3854 = vmul.f32 %v3790, %v3790
  %v3855 = vmul.f32 %v3791, %v3791
  %v3856 = vmul.f32 %v3792, %v3792
  %v3857 = vmul.f32 %v3793, %v3793
  %v3858 = vmul.f32 %v3794, %v3794
  %v3859 = vmul.f32 %v3795, %v3795
  %v3860 = vmul.f32 %v3796, %v3796
  %v3861 = vmul.f32 %v3797, %v3797
  %v3862 = vmul.f32 %v3798, %v3798
  %v3863 = vmul.f32 %v3799, %v3799
  %v3864 = vmul.f32 %v3800, %v3800
  %v3865 = vmul.f32 %v3801, %v3801
  %v3866 = vmul.f32 %v3802, %v3802
  %v3867 = vmul.f32 %v3803, %v3803
  %v3868 = vmul.f32 %v3804, %v3804
  %v3869 = vmul.f32 %v3805, %v3805
  %v3870 = vmul.f32 %v3806, %v3806
  %v3871 = vmul.f32 %v3807, %v3807
  %v3872 = vmul.f32 %v3808, %v3808
  %v3873 = vmul.f32 %v3809, %v3809
  %v3874 = vmul.f32 %v3810, %v3810
  %v3875 = vmul.f32 %v3811, %v3811
  %v3876 = vmul.f32 %v3812, %v3812
  %v3877 = vmul.f32 %v3813, %v3813
  %v3878 = vmul.f32 %v3814, %v3814
  %v3879 = vmul.f32 %v3815, %v3815
  %v3880 = vmul.f32 %v3816, %v3816
  %v3881 = vmul.f32 %v3817, %v3817
  %v3882 = vmul.f32 %v3818, %v3818
  %v3883 = vmul.f32 %v3819, %v3819
  %v3884 = vmul.f32 %v3820, %v3820
  %v3885 = vmul.f32 %v3821, %v3821
  %v3886 = vmul.f32 %v3822, %v3822
  %v3887 = vmul.f32 %v3823, %v3823
  %v3888 = vmul.f32 %v3824, %v3824
  %v3889 = vmul.f32 %v3825, %v3825
  %v3890 = vmul.f32 %v3826, %v3826
  %v3891 = vmul.f32 %v3827, %v3827
  %v3892 = vmul.f32 %v3828, %v3828
  %v3893 = vmul.f32 %v3829, %v3829
  %v3894 = vadd.f32 %v3830, %v3831
  %v3895 = vadd.f32 %v3894, %v3832
  %v3896 = vadd.f32 %v3895, %v3833
  %v3897 = vadd.f32 %v3896, %v3834
  %v3898 = vadd.f32 %v3897, %v3835
  %v3899 = vadd.f32 %v3898, %v3836
  %v3900 = vadd.f32 %v3899, %v3837
  %v3901 = vadd.f32 %v3900, %v3838
  %v3902 = vadd.f32 %v3901, %v3839
  %v3903 = vadd.f32 %v3902, %v3840
  %v3904 = vadd.f32 %v3903, %v3841
  %v3905 = vadd.f32 %v3904, %v3842
  %v3906 = vadd.f32 %v3905, %v3843
  %v3907 = vadd.f32 %v3906, %v3844
  %v3908 = vadd.f32 %v3907, %v3845
  %v3909 = vadd.f32 %v3908, %v3846
  %v3910 = vadd.f32 %v3909, %v3847
  %v3911 = vadd.f32 %v3910, %v3848
  %v3912 = vadd.f32 %v3911, %v3849
  %v3913 = vadd.f32 %v3912, %v3850
  %v3914 = vadd.f32 %v3913, %v3851
  %v3915 = vadd.f32 %v3914, %v3852
  %v3916 = vadd.f32 %v3915, %v3853
  %v3917 = vadd.f32 %v3916, %v3854
  %v3918 = vadd.f32 %v3917, %v3855
  %v3919 = vadd.f32 %v3918, %v3856
  %v3920 = vadd.f32 %v3919, %v3857
  %v3921 = vadd.f32 %v3920, %v3858
  %v3922 = vadd.f32 %v3921, %v3859
  %v3923 = vadd.f32 %v3922, %v3860
  %v3924 = vadd.f32 %v3923, %v3861
  %v3925 = vadd.f32 %v3924, %v3862
  %v3926 = vadd.f32 %v3925, %v3863
  %v3927 = vadd.f32 %v3926, %v3864
  %v3928 = vadd.f32 %v3927, %v3865
  %v3929 = vadd.f32 %v3928, %v3866
  %v3930 = vadd.f32 %v3929, %v3867
  %v3931 = vadd.f32 %v3930, %v3868
  %v3932 = vadd.f32 %v3931, %v3869
  %v3933 = vadd.f32 %v3932, %v3870
  %v3934 = vadd.f32 %v3933, %v3871
  %v3935 = vadd.f32 %v3934, %v3872
  %v3936 = vadd.f32 %v3935, %v3873
  %v3937 = vadd.f32 %v3936, %v3874
  %v3938 = vadd.f32 %v3937, %v3875
  %v3939 = vadd.f32 %v3938, %v3876
  %v3940 = vadd.f32 %v3939, %v3877
  %v3941 = vadd.f32 %v3940, %v3878
  %v3942 = vadd.f32 %v3941, %v3879
  %v3943 = vadd.f32 %v3942, %v3880
  %v3944 = vadd.f32 %v3943, %v3881
  %v3945 = vadd.f32 %v3944, %v3882
  %v3946 = vadd.f32 %v3945, %v3883
  %v3947 = vadd.f32 %v3946, %v3884
  %v3948 = vadd.f32 %v3947, %v3885
  %v3949 = vadd.f32 %v3948, %v3886
  %v3950 = vadd.f32 %v3949, %v3887
  %v3951 = vadd.f32 %v3950, %v3888
  %v3952 = vadd.f32 %v3951, %v3889
  %v3953 = vadd.f32 %v3952, %v3890
  %v3954 = vadd.f32 %v3953, %v3891
  %v3955 = vadd.f32 %v3954, %v3892
  %v3956 = vadd.f32 %v3955, %v3893
  %v3957 = vrot.slane %v3956, 4
  %v3958 = vadd.f32 %v3956, %v3957
  %v3959 = vrot.slane %v3958, 2
  %v3960 = vadd.f32 %v3958, %v3959
  %v3961 = vrot.slane %v3960, 1
  %v3962 = vadd.f32 %v3960, %v3961
  %v3963 = vmul.f32 %v3962, %v3764
  %v3964 = vadd.f32 %v3963, 1e-05
  %v3965 = vrsqrt.pop %v3964
  %v3966 = vmul.f32 %v3766, %v3965
  %v3967 = vmul.f32 %v3767, %v3965
  %v3968 = vmul.f32 %v3768, %v3965
  %v3969 = vmul.f32 %v3769, %v3965
  %v3970 = vmul.f32 %v3770, %v3965
  %v3971 = vmul.f32 %v3771, %v3965
  %v3972 = vmul.f32 %v3772, %v3965
  %v3973 = vmul.f32 %v3773, %v3965
  %v3974 = vmul.f32 %v3774, %v3965
  %v3975 = vmul.f32 %v3775, %v3965
  %v3976 = vmul.f32 %v3776, %v3965
  %v3977 = vmul.f32 %v3777, %v3965
  %v3978 = vmul.f32 %v3778, %v3965
  %v3979 = vmul.f32 %v3779, %v3965
  %v3980 = vmul.f32 %v3780, %v3965
  %v3981 = vmul.f32 %v3781, %v3965
  %v3982 = vmul.f32 %v3782, %v3965
  %v3983 = vmul.f32 %v3783, %v3965
  %v3984 = vmul.f32 %v3784, %v3965
  %v3985 = vmul.f32 %v3785, %v3965
  %v3986 = vmul.f32 %v3786, %v3965
  %v3987 = vmul.f32 %v3787, %v3965
  %v3988 = vmul.f32 %v3788, %v3965
  %v3989 = vmul.f32 %v3789, %v3965
  %v3990 = vmul.f32 %v3790, %v3965
  %v3991 = vmul.f32 %v3791, %v3965
  %v3992 = vmul.f32 %v3792, %v3965
  %v3993 = vmul.f32 %v3793, %v3965
  %v3994 = vmul.f32 %v3794, %v3965
  %v3995 = vmul.f32 %v3795, %v3965
  %v3996 = vmul.f32 %v3796, %v3965
  %v3997 = vmul.f32 %v3797, %v3965
  %v3998 = vmul.f32 %v3798, %v3965
  %v3999 = vmul.f32 %v3799, %v3965
  %v4000 = vmul.f32 %v3800, %v3965
  %v4001 = vmul.f32 %v3801, %v3965
  %v4002 = vmul.f32 %v3802, %v3965
  %v4003 = vmul.f32 %v3803, %v3965
  %v4004 = vmul.f32 %v3804, %v3965
  %v4005 = vmul.f32 %v3805, %v3965
  %v4006 = vmul.f32 %v3806, %v3965
  %v4007 = vmul.f32 %v3807, %v3965
  %v4008 = vmul.f32 %v3808, %v3965
  %v4009 = vmul.f32 %v3809, %v3965
  %v4010 = vmul.f32 %v3810, %v3965
  %v4011 = vmul.f32 %v3811, %v3965
  %v4012 = vmul.f32 %v3812, %v3965
  %v4013 = vmul.f32 %v3813, %v3965
  %v4014 = vmul.f32 %v3814, %v3965
  %v4015 = vmul.f32 %v3815, %v3965
  %v4016 = vmul.f32 %v3816, %v3965
  %v4017 = vmul.f32 %v3817, %v3965
  %v4018 = vmul.f32 %v3818, %v3965
  %v4019 = vmul.f32 %v3819, %v3965
  %v4020 = vmul.f32 %v3820, %v3965
  %v4021 = vmul.f32 %v3821, %v3965
  %v4022 = vmul.f32 %v3822, %v3965
  %v4023 = vmul.f32 %v3823, %v3965
  %v4024 = vmul.f32 %v3824, %v3965
  %v4025 = vmul.f32 %v3825, %v3965
  %v4026 = vmul.f32 %v3826, %v3965
  %v4027 = vmul.f32 %v3827, %v3965
  %v4028 = vmul.f32 %v3828, %v3965
  %v4029 = vmul.f32 %v3829, %v3965
  %v4030 = vld [vmem:[%s3] sm:$0x1]
  %v4032 = vlaneseq
  %v4033 = vshrl.u32 %v4032, 7
  %v4034 = vsub.s32 0, %v4033
  %v4035 = vrot.slane %v4030, %v4034
  %v4037 = vmul.f32 %v3966, %v4035
  %v4038 = vmul.f32 %v3967, %v4035
  %v4039 = vmul.f32 %v3968, %v4035
  %v4040 = vmul.f32 %v3969, %v4035
  %v4041 = vmul.f32 %v3970, %v4035
  %v4042 = vmul.f32 %v3971, %v4035
  %v4043 = vmul.f32 %v3972, %v4035
  %v4044 = vmul.f32 %v3973, %v4035
  %v4045 = vmul.f32 %v3974, %v4035
  %v4046 = vmul.f32 %v3975, %v4035
  %v4047 = vmul.f32 %v3976, %v4035
  %v4048 = vmul.f32 %v3977, %v4035
  %v4049 = vmul.f32 %v3978, %v4035
  %v4050 = vmul.f32 %v3979, %v4035
  %v4051 = vmul.f32 %v3980, %v4035
  %v4052 = vmul.f32 %v3981, %v4035
  %v4053 = vmul.f32 %v3982, %v4035
  %v4054 = vmul.f32 %v3983, %v4035
  %v4055 = vmul.f32 %v3984, %v4035
  %v4056 = vmul.f32 %v3985, %v4035
  %v4057 = vmul.f32 %v3986, %v4035
  %v4058 = vmul.f32 %v3987, %v4035
  %v4059 = vmul.f32 %v3988, %v4035
  %v4060 = vmul.f32 %v3989, %v4035
  %v4061 = vmul.f32 %v3990, %v4035
  %v4062 = vmul.f32 %v3991, %v4035
  %v4063 = vmul.f32 %v3992, %v4035
  %v4064 = vmul.f32 %v3993, %v4035
  %v4065 = vmul.f32 %v3994, %v4035
  %v4066 = vmul.f32 %v3995, %v4035
  %v4067 = vmul.f32 %v3996, %v4035
  %v4068 = vmul.f32 %v3997, %v4035
  %v4069 = vmul.f32 %v3998, %v4035
  %v4070 = vmul.f32 %v3999, %v4035
  %v4071 = vmul.f32 %v4000, %v4035
  %v4072 = vmul.f32 %v4001, %v4035
  %v4073 = vmul.f32 %v4002, %v4035
  %v4074 = vmul.f32 %v4003, %v4035
  %v4075 = vmul.f32 %v4004, %v4035
  %v4076 = vmul.f32 %v4005, %v4035
  %v4077 = vmul.f32 %v4006, %v4035
  %v4078 = vmul.f32 %v4007, %v4035
  %v4079 = vmul.f32 %v4008, %v4035
  %v4080 = vmul.f32 %v4009, %v4035
  %v4081 = vmul.f32 %v4010, %v4035
  %v4082 = vmul.f32 %v4011, %v4035
  %v4083 = vmul.f32 %v4012, %v4035
  %v4084 = vmul.f32 %v4013, %v4035
  %v4085 = vmul.f32 %v4014, %v4035
  %v4086 = vmul.f32 %v4015, %v4035
  %v4087 = vmul.f32 %v4016, %v4035
  %v4088 = vmul.f32 %v4017, %v4035
  %v4089 = vmul.f32 %v4018, %v4035
  %v4090 = vmul.f32 %v4019, %v4035
  %v4091 = vmul.f32 %v4020, %v4035
  %v4092 = vmul.f32 %v4021, %v4035
  %v4093 = vmul.f32 %v4022, %v4035
  %v4094 = vmul.f32 %v4023, %v4035
  %v4095 = vmul.f32 %v4024, %v4035
  %v4096 = vmul.f32 %v4025, %v4035
  %v4097 = vmul.f32 %v4026, %v4035
  %v4098 = vmul.f32 %v4027, %v4035
  %v4099 = vmul.f32 %v4028, %v4035
  %v4100 = vmul.f32 %v4029, %v4035
  %v4101 = vld [vmem:[%s4] sm:$0x1]
  %v4103 = vlaneseq
  %v4104 = vshrl.u32 %v4103, 7
  %v4105 = vsub.s32 0, %v4104
  %v4106 = vrot.slane %v4101, %v4105
  %v4108 = vadd.f32 %v4037, %v4106
  %v4109 = vadd.f32 %v4038, %v4106
  %v4110 = vadd.f32 %v4039, %v4106
  %v4111 = vadd.f32 %v4040, %v4106
  %v4112 = vadd.f32 %v4041, %v4106
  %v4113 = vadd.f32 %v4042, %v4106
  %v4114 = vadd.f32 %v4043, %v4106
  %v4115 = vadd.f32 %v4044, %v4106
  %v4116 = vadd.f32 %v4045, %v4106
  %v4117 = vadd.f32 %v4046, %v4106
  %v4118 = vadd.f32 %v4047, %v4106
  %v4119 = vadd.f32 %v4048, %v4106
  %v4120 = vadd.f32 %v4049, %v4106
  %v4121 = vadd.f32 %v4050, %v4106
  %v4122 = vadd.f32 %v4051, %v4106
  %v4123 = vadd.f32 %v4052, %v4106
  %v4124 = vadd.f32 %v4053, %v4106
  %v4125 = vadd.f32 %v4054, %v4106
  %v4126 = vadd.f32 %v4055, %v4106
  %v4127 = vadd.f32 %v4056, %v4106
  %v4128 = vadd.f32 %v4057, %v4106
  %v4129 = vadd.f32 %v4058, %v4106
  %v4130 = vadd.f32 %v4059, %v4106
  %v4131 = vadd.f32 %v4060, %v4106
  %v4132 = vadd.f32 %v4061, %v4106
  %v4133 = vadd.f32 %v4062, %v4106
  %v4134 = vadd.f32 %v4063, %v4106
  %v4135 = vadd.f32 %v4064, %v4106
  %v4136 = vadd.f32 %v4065, %v4106
  %v4137 = vadd.f32 %v4066, %v4106
  %v4138 = vadd.f32 %v4067, %v4106
  %v4139 = vadd.f32 %v4068, %v4106
  %v4140 = vadd.f32 %v4069, %v4106
  %v4141 = vadd.f32 %v4070, %v4106
  %v4142 = vadd.f32 %v4071, %v4106
  %v4143 = vadd.f32 %v4072, %v4106
  %v4144 = vadd.f32 %v4073, %v4106
  %v4145 = vadd.f32 %v4074, %v4106
  %v4146 = vadd.f32 %v4075, %v4106
  %v4147 = vadd.f32 %v4076, %v4106
  %v4148 = vadd.f32 %v4077, %v4106
  %v4149 = vadd.f32 %v4078, %v4106
  %v4150 = vadd.f32 %v4079, %v4106
  %v4151 = vadd.f32 %v4080, %v4106
  %v4152 = vadd.f32 %v4081, %v4106
  %v4153 = vadd.f32 %v4082, %v4106
  %v4154 = vadd.f32 %v4083, %v4106
  %v4155 = vadd.f32 %v4084, %v4106
  %v4156 = vadd.f32 %v4085, %v4106
  %v4157 = vadd.f32 %v4086, %v4106
  %v4158 = vadd.f32 %v4087, %v4106
  %v4159 = vadd.f32 %v4088, %v4106
  %v4160 = vadd.f32 %v4089, %v4106
  %v4161 = vadd.f32 %v4090, %v4106
  %v4162 = vadd.f32 %v4091, %v4106
  %v4163 = vadd.f32 %v4092, %v4106
  %v4164 = vadd.f32 %v4093, %v4106
  %v4165 = vadd.f32 %v4094, %v4106
  %v4166 = vadd.f32 %v4095, %v4106
  %v4167 = vadd.f32 %v4096, %v4106
  %v4168 = vadd.f32 %v4097, %v4106
  %v4169 = vadd.f32 %v4098, %v4106
  %v4170 = vadd.f32 %v4099, %v4106
  %v4171 = vadd.f32 %v4100, %v4106
  %v4172 = vmax.f32 %v4108, 0.0
  %v4173 = vmax.f32 %v4109, 0.0
  %v4174 = vmax.f32 %v4110, 0.0
  %v4175 = vmax.f32 %v4111, 0.0
  %v4176 = vmax.f32 %v4112, 0.0
  %v4177 = vmax.f32 %v4113, 0.0
  %v4178 = vmax.f32 %v4114, 0.0
  %v4179 = vmax.f32 %v4115, 0.0
  %v4180 = vmax.f32 %v4116, 0.0
  %v4181 = vmax.f32 %v4117, 0.0
  %v4182 = vmax.f32 %v4118, 0.0
  %v4183 = vmax.f32 %v4119, 0.0
  %v4184 = vmax.f32 %v4120, 0.0
  %v4185 = vmax.f32 %v4121, 0.0
  %v4186 = vmax.f32 %v4122, 0.0
  %v4187 = vmax.f32 %v4123, 0.0
  %v4188 = vmax.f32 %v4124, 0.0
  %v4189 = vmax.f32 %v4125, 0.0
  %v4190 = vmax.f32 %v4126, 0.0
  %v4191 = vmax.f32 %v4127, 0.0
  %v4192 = vmax.f32 %v4128, 0.0
  %v4193 = vmax.f32 %v4129, 0.0
  %v4194 = vmax.f32 %v4130, 0.0
  %v4195 = vmax.f32 %v4131, 0.0
  %v4196 = vmax.f32 %v4132, 0.0
  %v4197 = vmax.f32 %v4133, 0.0
  %v4198 = vmax.f32 %v4134, 0.0
  %v4199 = vmax.f32 %v4135, 0.0
  %v4200 = vmax.f32 %v4136, 0.0
  %v4201 = vmax.f32 %v4137, 0.0
  %v4202 = vmax.f32 %v4138, 0.0
  %v4203 = vmax.f32 %v4139, 0.0
  %v4204 = vmax.f32 %v4140, 0.0
  %v4205 = vmax.f32 %v4141, 0.0
  %v4206 = vmax.f32 %v4142, 0.0
  %v4207 = vmax.f32 %v4143, 0.0
  %v4208 = vmax.f32 %v4144, 0.0
  %v4209 = vmax.f32 %v4145, 0.0
  %v4210 = vmax.f32 %v4146, 0.0
  %v4211 = vmax.f32 %v4147, 0.0
  %v4212 = vmax.f32 %v4148, 0.0
  %v4213 = vmax.f32 %v4149, 0.0
  %v4214 = vmax.f32 %v4150, 0.0
  %v4215 = vmax.f32 %v4151, 0.0
  %v4216 = vmax.f32 %v4152, 0.0
  %v4217 = vmax.f32 %v4153, 0.0
  %v4218 = vmax.f32 %v4154, 0.0
  %v4219 = vmax.f32 %v4155, 0.0
  %v4220 = vmax.f32 %v4156, 0.0
  %v4221 = vmax.f32 %v4157, 0.0
  %v4222 = vmax.f32 %v4158, 0.0
  %v4223 = vmax.f32 %v4159, 0.0
  %v4224 = vmax.f32 %v4160, 0.0
  %v4225 = vmax.f32 %v4161, 0.0
  %v4226 = vmax.f32 %v4162, 0.0
  %v4227 = vmax.f32 %v4163, 0.0
  %v4228 = vmax.f32 %v4164, 0.0
  %v4229 = vmax.f32 %v4165, 0.0
  %v4230 = vmax.f32 %v4166, 0.0
  %v4231 = vmax.f32 %v4167, 0.0
  %v4232 = vmax.f32 %v4168, 0.0
  %v4233 = vmax.f32 %v4169, 0.0
  %v4234 = vmax.f32 %v4170, 0.0
  %v4235 = vmax.f32 %v4171, 0.0
  %4236 = vst [vmem:[%s40 + $0x1] sm:$0xff] %v4172
  %4237 = vst [vmem:[%s40 + $0x9] sm:$0xff] %v4173
  %4238 = vst [vmem:[%s40 + $0x19] sm:$0xff] %v4174
  %4239 = vst [vmem:[%s40 + $0x21] sm:$0xff] %v4175
  %4240 = vst [vmem:[%s40 + $0x31] sm:$0xff] %v4176
  %4241 = vst [vmem:[%s40 + $0x39] sm:$0xff] %v4177
  %4242 = vst [vmem:[%s40 + $0x49] sm:$0xff] %v4178
  %4243 = vst [vmem:[%s40 + $0x51] sm:$0xff] %v4179
  %4244 = vst [vmem:[%s40 + $0x61] sm:$0xff] %v4180
  %4245 = vst [vmem:[%s40 + $0x69] sm:$0xff] %v4181
  %4246 = vst [vmem:[%s40 + $0x79] sm:$0xff] %v4182
  %4247 = vst [vmem:[%s40 + $0x81] sm:$0xff] %v4183
  %4248 = vst [vmem:[%s40 + $0x91] sm:$0xff] %v4184
  %4249 = vst [vmem:[%s40 + $0x99] sm:$0xff] %v4185
  %4250 = vst [vmem:[%s40 + $0xa9] sm:$0xff] %v4186
  %4251 = vst [vmem:[%s40 + $0xb1] sm:$0xff] %v4187
  %4252 = vst [vmem:[%s40 + $0xc1] sm:$0xff] %v4188
  %4253 = vst [vmem:[%s40 + $0xc9] sm:$0xff] %v4189
  %4254 = vst [vmem:[%s40 + $0xd9] sm:$0xff] %v4190
  %4255 = vst [vmem:[%s40 + $0xe1] sm:$0xff] %v4191
  %4256 = vst [vmem:[%s40 + $0xf1] sm:$0xff] %v4192
  %4257 = vst [vmem:[%s40 + $0xf9] sm:$0xff] %v4193
  %4258 = vst [vmem:[%s40 + $0x109] sm:$0xff] %v4194
  %4259 = vst [vmem:[%s40 + $0x111] sm:$0xff] %v4195
  %4260 = vst [vmem:[%s40 + $0x121] sm:$0xff] %v4196
  %4261 = vst [vmem:[%s40 + $0x129] sm:$0xff] %v4197
  %4262 = vst [vmem:[%s40 + $0x139] sm:$0xff] %v4198
  %4263 = vst [vmem:[%s40 + $0x141] sm:$0xff] %v4199
  %4264 = vst [vmem:[%s40 + $0x151] sm:$0xff] %v4200
  %4265 = vst [vmem:[%s40 + $0x159] sm:$0xff] %v4201
  %4266 = vst [vmem:[%s40 + $0x169] sm:$0xff] %v4202
  %4267 = vst [vmem:[%s40 + $0x171] sm:$0xff] %v4203
  %4268 = vst [vmem:[%s40 + $0x1b1] sm:$0xff] %v4204
  %4269 = vst [vmem:[%s40 + $0x1b9] sm:$0xff] %v4205
  %4270 = vst [vmem:[%s40 + $0x1c9] sm:$0xff] %v4206
  %4271 = vst [vmem:[%s40 + $0x1d1] sm:$0xff] %v4207
  %4272 = vst [vmem:[%s40 + $0x1e1] sm:$0xff] %v4208
  %4273 = vst [vmem:[%s40 + $0x1e9] sm:$0xff] %v4209
  %4274 = vst [vmem:[%s40 + $0x1f9] sm:$0xff] %v4210
  %4275 = vst [vmem:[%s40 + $0x201] sm:$0xff] %v4211
  %4276 = vst [vmem:[%s40 + $0x211] sm:$0xff] %v4212
  %4277 = vst [vmem:[%s40 + $0x219] sm:$0xff] %v4213
  %4278 = vst [vmem:[%s40 + $0x229] sm:$0xff] %v4214
  %4279 = vst [vmem:[%s40 + $0x231] sm:$0xff] %v4215
  %4280 = vst [vmem:[%s40 + $0x241] sm:$0xff] %v4216
  %4281 = vst [vmem:[%s40 + $0x249] sm:$0xff] %v4217
  %4282 = vst [vmem:[%s40 + $0x259] sm:$0xff] %v4218
  %4283 = vst [vmem:[%s40 + $0x261] sm:$0xff] %v4219
  %4284 = vst [vmem:[%s40 + $0x271] sm:$0xff] %v4220
  %4285 = vst [vmem:[%s40 + $0x279] sm:$0xff] %v4221
  %4286 = vst [vmem:[%s40 + $0x289] sm:$0xff] %v4222
  %4287 = vst [vmem:[%s40 + $0x291] sm:$0xff] %v4223
  %4288 = vst [vmem:[%s40 + $0x2a1] sm:$0xff] %v4224
  %4289 = vst [vmem:[%s40 + $0x2a9] sm:$0xff] %v4225
  %4290 = vst [vmem:[%s40 + $0x2b9] sm:$0xff] %v4226
  %4291 = vst [vmem:[%s40 + $0x2c1] sm:$0xff] %v4227
  %4292 = vst [vmem:[%s40 + $0x2d1] sm:$0xff] %v4228
  %4293 = vst [vmem:[%s40 + $0x2d9] sm:$0xff] %v4229
  %4294 = vst [vmem:[%s40 + $0x2e9] sm:$0xff] %v4230
  %4295 = vst [vmem:[%s40 + $0x2f1] sm:$0xff] %v4231
  %4296 = vst [vmem:[%s40 + $0x301] sm:$0xff] %v4232
  %4297 = vst [vmem:[%s40 + $0x309] sm:$0xff] %v4233
  %4298 = vst [vmem:[%s40 + $0x319] sm:$0xff] %v4234
  %4299 = vst [vmem:[%s40 + $0x321] sm:$0xff] %v4235
  %v4300 = vld [vmem:[#allocation2] sm:$0xff]
  %v4301 = vld [vmem:[#allocation2 + $0x8] sm:$0xff]
  %v4302 = vld [vmem:[#allocation2 + $0x18] sm:$0xff]
  %v4303 = vld [vmem:[#allocation2 + $0x20] sm:$0xff]
  %v4304 = vld [vmem:[#allocation2 + $0x30] sm:$0xff]
  %v4305 = vld [vmem:[#allocation2 + $0x38] sm:$0xff]
  %v4306 = vld [vmem:[#allocation2 + $0x48] sm:$0xff]
  %v4307 = vld [vmem:[#allocation2 + $0x50] sm:$0xff]
  %v4308 = vld [vmem:[#allocation2 + $0x60] sm:$0xff]
  %v4309 = vld [vmem:[#allocation2 + $0x68] sm:$0xff]
  %v4310 = vld [vmem:[#allocation2 + $0x78] sm:$0xff]
  %v4311 = vld [vmem:[#allocation2 + $0x80] sm:$0xff]
  %v4312 = vld [vmem:[#allocation2 + $0x90] sm:$0xff]
  %v4313 = vld [vmem:[#allocation2 + $0x98] sm:$0xff]
  %v4314 = vld [vmem:[#allocation2 + $0xa8] sm:$0xff]
  %v4315 = vld [vmem:[#allocation2 + $0xb0] sm:$0xff]
  %v4316 = vld [vmem:[#allocation2 + $0xc0] sm:$0xff]
  %v4317 = vld [vmem:[#allocation2 + $0xc8] sm:$0xff]
  %v4318 = vld [vmem:[#allocation2 + $0xd8] sm:$0xff]
  %v4319 = vld [vmem:[#allocation2 + $0xe0] sm:$0xff]
  %v4320 = vld [vmem:[#allocation2 + $0xf0] sm:$0xff]
  %v4321 = vld [vmem:[#allocation2 + $0xf8] sm:$0xff]
  %v4322 = vld [vmem:[#allocation2 + $0x108] sm:$0xff]
  %v4323 = vld [vmem:[#allocation2 + $0x110] sm:$0xff]
  %v4324 = vld [vmem:[#allocation2 + $0x120] sm:$0xff]
  %v4325 = vld [vmem:[#allocation2 + $0x128] sm:$0xff]
  %v4326 = vld [vmem:[#allocation2 + $0x138] sm:$0xff]
  %v4327 = vld [vmem:[#allocation2 + $0x140] sm:$0xff]
  %v4328 = vld [vmem:[#allocation2 + $0x150] sm:$0xff]
  %v4329 = vld [vmem:[#allocation2 + $0x158] sm:$0xff]
  %v4330 = vld [vmem:[#allocation2 + $0x168] sm:$0xff]
  %v4331 = vld [vmem:[#allocation2 + $0x170] sm:$0xff]
  %v4332 = vld [vmem:[#allocation2 + $0x1b0] sm:$0xff]
  %v4333 = vld [vmem:[#allocation2 + $0x1b8] sm:$0xff]
  %v4334 = vld [vmem:[#allocation2 + $0x1c8] sm:$0xff]
  %v4335 = vld [vmem:[#allocation2 + $0x1d0] sm:$0xff]
  %v4336 = vld [vmem:[#allocation2 + $0x1e0] sm:$0xff]
  %v4337 = vld [vmem:[#allocation2 + $0x1e8] sm:$0xff]
  %v4338 = vld [vmem:[#allocation2 + $0x1f8] sm:$0xff]
  %v4339 = vld [vmem:[#allocation2 + $0x200] sm:$0xff]
  %v4340 = vld [vmem:[#allocation2 + $0x210] sm:$0xff]
  %v4341 = vld [vmem:[#allocation2 + $0x218] sm:$0xff]
  %v4342 = vld [vmem:[#allocation2 + $0x228] sm:$0xff]
  %v4343 = vld [vmem:[#allocation2 + $0x230] sm:$0xff]
  %v4344 = vld [vmem:[#allocation2 + $0x240] sm:$0xff]
  %v4345 = vld [vmem:[#allocation2 + $0x248] sm:$0xff]
  %v4346 = vld [vmem:[#allocation2 + $0x258] sm:$0xff]
  %v4347 = vld [vmem:[#allocation2 + $0x260] sm:$0xff]
  %v4348 = vld [vmem:[#allocation2 + $0x270] sm:$0xff]
  %v4349 = vld [vmem:[#allocation2 + $0x278] sm:$0xff]
  %v4350 = vld [vmem:[#allocation2 + $0x288] sm:$0xff]
  %v4351 = vld [vmem:[#allocation2 + $0x290] sm:$0xff]
  %v4352 = vld [vmem:[#allocation2 + $0x2a0] sm:$0xff]
  %v4353 = vld [vmem:[#allocation2 + $0x2a8] sm:$0xff]
  %v4354 = vld [vmem:[#allocation2 + $0x2b8] sm:$0xff]
  %v4355 = vld [vmem:[#allocation2 + $0x2c0] sm:$0xff]
  %v4356 = vld [vmem:[#allocation2 + $0x2d0] sm:$0xff]
  %v4357 = vld [vmem:[#allocation2 + $0x2d8] sm:$0xff]
  %v4358 = vld [vmem:[#allocation2 + $0x2e8] sm:$0xff]
  %v4359 = vld [vmem:[#allocation2 + $0x2f0] sm:$0xff]
  %v4360 = vld [vmem:[#allocation2 + $0x300] sm:$0xff]
  %v4361 = vld [vmem:[#allocation2 + $0x308] sm:$0xff]
  %v4362 = vld [vmem:[#allocation2 + $0x318] sm:$0xff]
  %v4363 = vld [vmem:[#allocation2 + $0x320] sm:$0xff]
  %v4364 = vpack.c.bf16 %v4301, %v4300
  %v4365 = vpack.c.bf16 %v4303, %v4302
  %v4366 = vpack.c.bf16 %v4305, %v4304
  %v4367 = vpack.c.bf16 %v4307, %v4306
  %v4368 = vpack.c.bf16 %v4309, %v4308
  %v4369 = vpack.c.bf16 %v4311, %v4310
  %v4370 = vpack.c.bf16 %v4313, %v4312
  %v4371 = vpack.c.bf16 %v4315, %v4314
  %v4372 = vpack.c.bf16 %v4317, %v4316
  %v4373 = vpack.c.bf16 %v4319, %v4318
  %v4374 = vpack.c.bf16 %v4321, %v4320
  %v4375 = vpack.c.bf16 %v4323, %v4322
  %v4376 = vpack.c.bf16 %v4325, %v4324
  %v4377 = vpack.c.bf16 %v4327, %v4326
  %v4378 = vpack.c.bf16 %v4329, %v4328
  %v4379 = vpack.c.bf16 %v4331, %v4330
  %v4380 = vpack.c.bf16 %v4333, %v4332
  %v4381 = vpack.c.bf16 %v4335, %v4334
  %v4382 = vpack.c.bf16 %v4337, %v4336
  %v4383 = vpack.c.bf16 %v4339, %v4338
  %v4384 = vpack.c.bf16 %v4341, %v4340
  %v4385 = vpack.c.bf16 %v4343, %v4342
  %v4386 = vpack.c.bf16 %v4345, %v4344
  %v4387 = vpack.c.bf16 %v4347, %v4346
  %v4388 = vpack.c.bf16 %v4349, %v4348
  %v4389 = vpack.c.bf16 %v4351, %v4350
  %v4390 = vpack.c.bf16 %v4353, %v4352
  %v4391 = vpack.c.bf16 %v4355, %v4354
  %v4392 = vpack.c.bf16 %v4357, %v4356
  %v4393 = vpack.c.bf16 %v4359, %v4358
  %v4394 = vpack.c.bf16 %v4361, %v4360
  %v4395 = vpack.c.bf16 %v4363, %v4362
  %4396 = vst [vmem:[#allocation3] sm:$0xff] %v4364
  %4397 = vst [vmem:[#allocation3 + $0x48] sm:$0xff] %v4365
  %4398 = vst [vmem:[#allocation3 + $0x90] sm:$0xff] %v4366
  %4399 = vst [vmem:[#allocation3 + $0xd8] sm:$0xff] %v4367
  %4400 = vst [vmem:[#allocation3 + $0x120] sm:$0xff] %v4368
  %4401 = vst [vmem:[#allocation3 + $0x168] sm:$0xff] %v4369
  %4402 = vst [vmem:[#allocation3 + $0x1b0] sm:$0xff] %v4370
  %4403 = vst [vmem:[#allocation3 + $0x1f8] sm:$0xff] %v4371
  %4404 = vst [vmem:[#allocation3 + $0x240] sm:$0xff] %v4372
  %4405 = vst [vmem:[#allocation3 + $0x288] sm:$0xff] %v4373
  %4406 = vst [vmem:[#allocation3 + $0x2d0] sm:$0xff] %v4374
  %4407 = vst [vmem:[#allocation3 + $0x318] sm:$0xff] %v4375
  %4408 = vst [vmem:[#allocation3 + $0x360] sm:$0xff] %v4376
  %4409 = vst [vmem:[#allocation3 + $0x3a8] sm:$0xff] %v4377
  %4410 = vst [vmem:[#allocation3 + $0x3f0] sm:$0xff] %v4378
  %4411 = vst [vmem:[#allocation3 + $0x438] sm:$0xff] %v4379
  %4412 = vst [vmem:[#allocation3 + $0x480] sm:$0xff] %v4380
  %4413 = vst [vmem:[#allocation3 + $0x4c8] sm:$0xff] %v4381
  %4414 = vst [vmem:[#allocation3 + $0x510] sm:$0xff] %v4382
  %4415 = vst [vmem:[#allocation3 + $0x558] sm:$0xff] %v4383
  %4416 = vst [vmem:[#allocation3 + $0x5a0] sm:$0xff] %v4384
  %4417 = vst [vmem:[#allocation3 + $0x5e8] sm:$0xff] %v4385
  %4418 = vst [vmem:[#allocation3 + $0x630] sm:$0xff] %v4386
  %4419 = vst [vmem:[#allocation3 + $0x678] sm:$0xff] %v4387
  %4420 = vst [vmem:[#allocation3 + $0x6c0] sm:$0xff] %v4388
  %4421 = vst [vmem:[#allocation3 + $0x708] sm:$0xff] %v4389
  %4422 = vst [vmem:[#allocation3 + $0x750] sm:$0xff] %v4390
  %4423 = vst [vmem:[#allocation3 + $0x798] sm:$0xff] %v4391
  %4424 = vst [vmem:[#allocation3 + $0x7e0] sm:$0xff] %v4392
  %4425 = vst [vmem:[#allocation3 + $0x828] sm:$0xff] %v4393
  %4426 = vst [vmem:[#allocation3 + $0x870] sm:$0xff] %v4394
  %4427 = vst [vmem:[#allocation3 + $0x8b8] sm:$0xff] %v4395
  %v4428 = vld [vmem:[#allocation2 + $0x1] sm:$0xff]
  %v4429 = vld [vmem:[#allocation2 + $0x9] sm:$0xff]
  %v4430 = vld [vmem:[#allocation2 + $0x19] sm:$0xff]
  %v4431 = vld [vmem:[#allocation2 + $0x21] sm:$0xff]
  %v4432 = vld [vmem:[#allocation2 + $0x31] sm:$0xff]
  %v4433 = vld [vmem:[#allocation2 + $0x39] sm:$0xff]
  %v4434 = vld [vmem:[#allocation2 + $0x49] sm:$0xff]
  %v4435 = vld [vmem:[#allocation2 + $0x51] sm:$0xff]
  %v4436 = vld [vmem:[#allocation2 + $0x61] sm:$0xff]
  %v4437 = vld [vmem:[#allocation2 + $0x69] sm:$0xff]
  %v4438 = vld [vmem:[#allocation2 + $0x79] sm:$0xff]
  %v4439 = vld [vmem:[#allocation2 + $0x81] sm:$0xff]
  %v4440 = vld [vmem:[#allocation2 + $0x91] sm:$0xff]
  %v4441 = vld [vmem:[#allocation2 + $0x99] sm:$0xff]
  %v4442 = vld [vmem:[#allocation2 + $0xa9] sm:$0xff]
  %v4443 = vld [vmem:[#allocation2 + $0xb1] sm:$0xff]
  %v4444 = vld [vmem:[#allocation2 + $0xc1] sm:$0xff]
  %v4445 = vld [vmem:[#allocation2 + $0xc9] sm:$0xff]
  %v4446 = vld [vmem:[#allocation2 + $0xd9] sm:$0xff]
  %v4447 = vld [vmem:[#allocation2 + $0xe1] sm:$0xff]
  %v4448 = vld [vmem:[#allocation2 + $0xf1] sm:$0xff]
  %v4449 = vld [vmem:[#allocation2 + $0xf9] sm:$0xff]
  %v4450 = vld [vmem:[#allocation2 + $0x109] sm:$0xff]
  %v4451 = vld [vmem:[#allocation2 + $0x111] sm:$0xff]
  %v4452 = vld [vmem:[#allocation2 + $0x121] sm:$0xff]
  %v4453 = vld [vmem:[#allocation2 + $0x129] sm:$0xff]
  %v4454 = vld [vmem:[#allocation2 + $0x139] sm:$0xff]
  %v4455 = vld [vmem:[#allocation2 + $0x141] sm:$0xff]
  %v4456 = vld [vmem:[#allocation2 + $0x151] sm:$0xff]
  %v4457 = vld [vmem:[#allocation2 + $0x159] sm:$0xff]
  %v4458 = vld [vmem:[#allocation2 + $0x169] sm:$0xff]
  %v4459 = vld [vmem:[#allocation2 + $0x171] sm:$0xff]
  %v4460 = vld [vmem:[#allocation2 + $0x1b1] sm:$0xff]
  %v4461 = vld [vmem:[#allocation2 + $0x1b9] sm:$0xff]
  %v4462 = vld [vmem:[#allocation2 + $0x1c9] sm:$0xff]
  %v4463 = vld [vmem:[#allocation2 + $0x1d1] sm:$0xff]
  %v4464 = vld [vmem:[#allocation2 + $0x1e1] sm:$0xff]
  %v4465 = vld [vmem:[#allocation2 + $0x1e9] sm:$0xff]
  %v4466 = vld [vmem:[#allocation2 + $0x1f9] sm:$0xff]
  %v4467 = vld [vmem:[#allocation2 + $0x201] sm:$0xff]
  %v4468 = vld [vmem:[#allocation2 + $0x211] sm:$0xff]
  %v4469 = vld [vmem:[#allocation2 + $0x219] sm:$0xff]
  %v4470 = vld [vmem:[#allocation2 + $0x229] sm:$0xff]
  %v4471 = vld [vmem:[#allocation2 + $0x231] sm:$0xff]
  %v4472 = vld [vmem:[#allocation2 + $0x241] sm:$0xff]
  %v4473 = vld [vmem:[#allocation2 + $0x249] sm:$0xff]
  %v4474 = vld [vmem:[#allocation2 + $0x259] sm:$0xff]
  %v4475 = vld [vmem:[#allocation2 + $0x261] sm:$0xff]
  %v4476 = vld [vmem:[#allocation2 + $0x271] sm:$0xff]
  %v4477 = vld [vmem:[#allocation2 + $0x279] sm:$0xff]
  %v4478 = vld [vmem:[#allocation2 + $0x289] sm:$0xff]
  %v4479 = vld [vmem:[#allocation2 + $0x291] sm:$0xff]
  %v4480 = vld [vmem:[#allocation2 + $0x2a1] sm:$0xff]
  %v4481 = vld [vmem:[#allocation2 + $0x2a9] sm:$0xff]
  %v4482 = vld [vmem:[#allocation2 + $0x2b9] sm:$0xff]
  %v4483 = vld [vmem:[#allocation2 + $0x2c1] sm:$0xff]
  %v4484 = vld [vmem:[#allocation2 + $0x2d1] sm:$0xff]
  %v4485 = vld [vmem:[#allocation2 + $0x2d9] sm:$0xff]
  %v4486 = vld [vmem:[#allocation2 + $0x2e9] sm:$0xff]
  %v4487 = vld [vmem:[#allocation2 + $0x2f1] sm:$0xff]
  %v4488 = vld [vmem:[#allocation2 + $0x301] sm:$0xff]
  %v4489 = vld [vmem:[#allocation2 + $0x309] sm:$0xff]
  %v4490 = vld [vmem:[#allocation2 + $0x319] sm:$0xff]
  %v4491 = vld [vmem:[#allocation2 + $0x321] sm:$0xff]
  %v4492 = vpack.c.bf16 %v4429, %v4428
  %v4493 = vpack.c.bf16 %v4431, %v4430
  %v4494 = vpack.c.bf16 %v4433, %v4432
  %v4495 = vpack.c.bf16 %v4435, %v4434
  %v4496 = vpack.c.bf16 %v4437, %v4436
  %v4497 = vpack.c.bf16 %v4439, %v4438
  %v4498 = vpack.c.bf16 %v4441, %v4440
  %v4499 = vpack.c.bf16 %v4443, %v4442
  %v4500 = vpack.c.bf16 %v4445, %v4444
  %v4501 = vpack.c.bf16 %v4447, %v4446
  %v4502 = vpack.c.bf16 %v4449, %v4448
  %v4503 = vpack.c.bf16 %v4451, %v4450
  %v4504 = vpack.c.bf16 %v4453, %v4452
  %v4505 = vpack.c.bf16 %v4455, %v4454
  %v4506 = vpack.c.bf16 %v4457, %v4456
  %v4507 = vpack.c.bf16 %v4459, %v4458
  %v4508 = vpack.c.bf16 %v4461, %v4460
  %v4509 = vpack.c.bf16 %v4463, %v4462
  %v4510 = vpack.c.bf16 %v4465, %v4464
  %v4511 = vpack.c.bf16 %v4467, %v4466
  %v4512 = vpack.c.bf16 %v4469, %v4468
  %v4513 = vpack.c.bf16 %v4471, %v4470
  %v4514 = vpack.c.bf16 %v4473, %v4472
  %v4515 = vpack.c.bf16 %v4475, %v4474
  %v4516 = vpack.c.bf16 %v4477, %v4476
  %v4517 = vpack.c.bf16 %v4479, %v4478
  %v4518 = vpack.c.bf16 %v4481, %v4480
  %v4519 = vpack.c.bf16 %v4483, %v4482
  %v4520 = vpack.c.bf16 %v4485, %v4484
  %v4521 = vpack.c.bf16 %v4487, %v4486
  %v4522 = vpack.c.bf16 %v4489, %v4488
  %v4523 = vpack.c.bf16 %v4491, %v4490
  %4524 = vst [vmem:[#allocation3 + $0x8] sm:$0xff] %v4492
  %4525 = vst [vmem:[#allocation3 + $0x50] sm:$0xff] %v4493
  %4526 = vst [vmem:[#allocation3 + $0x98] sm:$0xff] %v4494
  %4527 = vst [vmem:[#allocation3 + $0xe0] sm:$0xff] %v4495
  %4528 = vst [vmem:[#allocation3 + $0x128] sm:$0xff] %v4496
  %4529 = vst [vmem:[#allocation3 + $0x170] sm:$0xff] %v4497
  %4530 = vst [vmem:[#allocation3 + $0x1b8] sm:$0xff] %v4498
  %4531 = vst [vmem:[#allocation3 + $0x200] sm:$0xff] %v4499
  %4532 = vst [vmem:[#allocation3 + $0x248] sm:$0xff] %v4500
  %4533 = vst [vmem:[#allocation3 + $0x290] sm:$0xff] %v4501
  %4534 = vst [vmem:[#allocation3 + $0x2d8] sm:$0xff] %v4502
  %4535 = vst [vmem:[#allocation3 + $0x320] sm:$0xff] %v4503
  %4536 = vst [vmem:[#allocation3 + $0x368] sm:$0xff] %v4504
  %4537 = vst [vmem:[#allocation3 + $0x3b0] sm:$0xff] %v4505
  %4538 = vst [vmem:[#allocation3 + $0x3f8] sm:$0xff] %v4506
  %4539 = vst [vmem:[#allocation3 + $0x440] sm:$0xff] %v4507
  %4540 = vst [vmem:[#allocation3 + $0x488] sm:$0xff] %v4508
  %4541 = vst [vmem:[#allocation3 + $0x4d0] sm:$0xff] %v4509
  %4542 = vst [vmem:[#allocation3 + $0x518] sm:$0xff] %v4510
  %4543 = vst [vmem:[#allocation3 + $0x560] sm:$0xff] %v4511
  %4544 = vst [vmem:[#allocation3 + $0x5a8] sm:$0xff] %v4512
  %4545 = vst [vmem:[#allocation3 + $0x5f0] sm:$0xff] %v4513
  %4546 = vst [vmem:[#allocation3 + $0x638] sm:$0xff] %v4514
  %4547 = vst [vmem:[#allocation3 + $0x680] sm:$0xff] %v4515
  %4548 = vst [vmem:[#allocation3 + $0x6c8] sm:$0xff] %v4516
  %4549 = vst [vmem:[#allocation3 + $0x710] sm:$0xff] %v4517
  %4550 = vst [vmem:[#allocation3 + $0x758] sm:$0xff] %v4518
  %4551 = vst [vmem:[#allocation3 + $0x7a0] sm:$0xff] %v4519
  %4552 = vst [vmem:[#allocation3 + $0x7e8] sm:$0xff] %v4520
  %4553 = vst [vmem:[#allocation3 + $0x830] sm:$0xff] %v4521
  %4554 = vst [vmem:[#allocation3 + $0x878] sm:$0xff] %v4522
  %4555 = vst [vmem:[#allocation3 + $0x8c0] sm:$0xff] %v4523
  %v4556 = vld [vmem:[#allocation2 + $0x2] sm:$0xff]
  %v4557 = vld [vmem:[#allocation2 + $0xa] sm:$0xff]
  %v4558 = vld [vmem:[#allocation2 + $0x1a] sm:$0xff]
  %v4559 = vld [vmem:[#allocation2 + $0x22] sm:$0xff]
  %v4560 = vld [vmem:[#allocation2 + $0x32] sm:$0xff]
  %v4561 = vld [vmem:[#allocation2 + $0x3a] sm:$0xff]
  %v4562 = vld [vmem:[#allocation2 + $0x4a] sm:$0xff]
  %v4563 = vld [vmem:[#allocation2 + $0x52] sm:$0xff]
  %v4564 = vld [vmem:[#allocation2 + $0x62] sm:$0xff]
  %v4565 = vld [vmem:[#allocation2 + $0x6a] sm:$0xff]
  %v4566 = vld [vmem:[#allocation2 + $0x7a] sm:$0xff]
  %v4567 = vld [vmem:[#allocation2 + $0x82] sm:$0xff]
  %v4568 = vld [vmem:[#allocation2 + $0x92] sm:$0xff]
  %v4569 = vld [vmem:[#allocation2 + $0x9a] sm:$0xff]
  %v4570 = vld [vmem:[#allocation2 + $0xaa] sm:$0xff]
  %v4571 = vld [vmem:[#allocation2 + $0xb2] sm:$0xff]
  %v4572 = vld [vmem:[#allocation2 + $0xc2] sm:$0xff]
  %v4573 = vld [vmem:[#allocation2 + $0xca] sm:$0xff]
  %v4574 = vld [vmem:[#allocation2 + $0xda] sm:$0xff]
  %v4575 = vld [vmem:[#allocation2 + $0xe2] sm:$0xff]
  %v4576 = vld [vmem:[#allocation2 + $0xf2] sm:$0xff]
  %v4577 = vld [vmem:[#allocation2 + $0xfa] sm:$0xff]
  %v4578 = vld [vmem:[#allocation2 + $0x10a] sm:$0xff]
  %v4579 = vld [vmem:[#allocation2 + $0x112] sm:$0xff]
  %v4580 = vld [vmem:[#allocation2 + $0x122] sm:$0xff]
  %v4581 = vld [vmem:[#allocation2 + $0x12a] sm:$0xff]
  %v4582 = vld [vmem:[#allocation2 + $0x13a] sm:$0xff]
  %v4583 = vld [vmem:[#allocation2 + $0x142] sm:$0xff]
  %v4584 = vld [vmem:[#allocation2 + $0x152] sm:$0xff]
  %v4585 = vld [vmem:[#allocation2 + $0x15a] sm:$0xff]
  %v4586 = vld [vmem:[#allocation2 + $0x16a] sm:$0xff]
  %v4587 = vld [vmem:[#allocation2 + $0x172] sm:$0xff]
  %v4588 = vld [vmem:[#allocation2 + $0x1b2] sm:$0xff]
  %v4589 = vld [vmem:[#allocation2 + $0x1ba] sm:$0xff]
  %v4590 = vld [vmem:[#allocation2 + $0x1ca] sm:$0xff]
  %v4591 = vld [vmem:[#allocation2 + $0x1d2] sm:$0xff]
  %v4592 = vld [vmem:[#allocation2 + $0x1e2] sm:$0xff]
  %v4593 = vld [vmem:[#allocation2 + $0x1ea] sm:$0xff]
  %v4594 = vld [vmem:[#allocation2 + $0x1fa] sm:$0xff]
  %v4595 = vld [vmem:[#allocation2 + $0x202] sm:$0xff]
  %v4596 = vld [vmem:[#allocation2 + $0x212] sm:$0xff]
  %v4597 = vld [vmem:[#allocation2 + $0x21a] sm:$0xff]
  %v4598 = vld [vmem:[#allocation2 + $0x22a] sm:$0xff]
  %v4599 = vld [vmem:[#allocation2 + $0x232] sm:$0xff]
  %v4600 = vld [vmem:[#allocation2 + $0x242] sm:$0xff]
  %v4601 = vld [vmem:[#allocation2 + $0x24a] sm:$0xff]
  %v4602 = vld [vmem:[#allocation2 + $0x25a] sm:$0xff]
  %v4603 = vld [vmem:[#allocation2 + $0x262] sm:$0xff]
  %v4604 = vld [vmem:[#allocation2 + $0x272] sm:$0xff]
  %v4605 = vld [vmem:[#allocation2 + $0x27a] sm:$0xff]
  %v4606 = vld [vmem:[#allocation2 + $0x28a] sm:$0xff]
  %v4607 = vld [vmem:[#allocation2 + $0x292] sm:$0xff]
  %v4608 = vld [vmem:[#allocation2 + $0x2a2] sm:$0xff]
  %v4609 = vld [vmem:[#allocation2 + $0x2aa] sm:$0xff]
  %v4610 = vld [vmem:[#allocation2 + $0x2ba] sm:$0xff]
  %v4611 = vld [vmem:[#allocation2 + $0x2c2] sm:$0xff]
  %v4612 = vld [vmem:[#allocation2 + $0x2d2] sm:$0xff]
  %v4613 = vld [vmem:[#allocation2 + $0x2da] sm:$0xff]
  %v4614 = vld [vmem:[#allocation2 + $0x2ea] sm:$0xff]
  %v4615 = vld [vmem:[#allocation2 + $0x2f2] sm:$0xff]
  %v4616 = vld [vmem:[#allocation2 + $0x302] sm:$0xff]
  %v4617 = vld [vmem:[#allocation2 + $0x30a] sm:$0xff]
  %v4618 = vld [vmem:[#allocation2 + $0x31a] sm:$0xff]
  %v4619 = vld [vmem:[#allocation2 + $0x322] sm:$0xff]
  %v4620 = vpack.c.bf16 %v4557, %v4556
  %v4621 = vpack.c.bf16 %v4559, %v4558
  %v4622 = vpack.c.bf16 %v4561, %v4560
  %v4623 = vpack.c.bf16 %v4563, %v4562
  %v4624 = vpack.c.bf16 %v4565, %v4564
  %v4625 = vpack.c.bf16 %v4567, %v4566
  %v4626 = vpack.c.bf16 %v4569, %v4568
  %v4627 = vpack.c.bf16 %v4571, %v4570
  %v4628 = vpack.c.bf16 %v4573, %v4572
  %v4629 = vpack.c.bf16 %v4575, %v4574
  %v4630 = vpack.c.bf16 %v4577, %v4576
  %v4631 = vpack.c.bf16 %v4579, %v4578
  %v4632 = vpack.c.bf16 %v4581, %v4580
  %v4633 = vpack.c.bf16 %v4583, %v4582
  %v4634 = vpack.c.bf16 %v4585, %v4584
  %v4635 = vpack.c.bf16 %v4587, %v4586
  %v4636 = vpack.c.bf16 %v4589, %v4588
  %v4637 = vpack.c.bf16 %v4591, %v4590
  %v4638 = vpack.c.bf16 %v4593, %v4592
  %v4639 = vpack.c.bf16 %v4595, %v4594
  %v4640 = vpack.c.bf16 %v4597, %v4596
  %v4641 = vpack.c.bf16 %v4599, %v4598
  %v4642 = vpack.c.bf16 %v4601, %v4600
  %v4643 = vpack.c.bf16 %v4603, %v4602
  %v4644 = vpack.c.bf16 %v4605, %v4604
  %v4645 = vpack.c.bf16 %v4607, %v4606
  %v4646 = vpack.c.bf16 %v4609, %v4608
  %v4647 = vpack.c.bf16 %v4611, %v4610
  %v4648 = vpack.c.bf16 %v4613, %v4612
  %v4649 = vpack.c.bf16 %v4615, %v4614
  %v4650 = vpack.c.bf16 %v4617, %v4616
  %v4651 = vpack.c.bf16 %v4619, %v4618
  %4652 = vst [vmem:[#allocation3 + $0x10] sm:$0xff] %v4620
  %4653 = vst [vmem:[#allocation3 + $0x58] sm:$0xff] %v4621
  %4654 = vst [vmem:[#allocation3 + $0xa0] sm:$0xff] %v4622
  %4655 = vst [vmem:[#allocation3 + $0xe8] sm:$0xff] %v4623
  %4656 = vst [vmem:[#allocation3 + $0x130] sm:$0xff] %v4624
  %4657 = vst [vmem:[#allocation3 + $0x178] sm:$0xff] %v4625
  %4658 = vst [vmem:[#allocation3 + $0x1c0] sm:$0xff] %v4626
  %4659 = vst [vmem:[#allocation3 + $0x208] sm:$0xff] %v4627
  %4660 = vst [vmem:[#allocation3 + $0x250] sm:$0xff] %v4628
  %4661 = vst [vmem:[#allocation3 + $0x298] sm:$0xff] %v4629
  %4662 = vst [vmem:[#allocation3 + $0x2e0] sm:$0xff] %v4630
  %4663 = vst [vmem:[#allocation3 + $0x328] sm:$0xff] %v4631
  %4664 = vst [vmem:[#allocation3 + $0x370] sm:$0xff] %v4632
  %4665 = vst [vmem:[#allocation3 + $0x3b8] sm:$0xff] %v4633
  %4666 = vst [vmem:[#allocation3 + $0x400] sm:$0xff] %v4634
  %4667 = vst [vmem:[#allocation3 + $0x448] sm:$0xff] %v4635
  %4668 = vst [vmem:[#allocation3 + $0x490] sm:$0xff] %v4636
  %4669 = vst [vmem:[#allocation3 + $0x4d8] sm:$0xff] %v4637
  %4670 = vst [vmem:[#allocation3 + $0x520] sm:$0xff] %v4638
  %4671 = vst [vmem:[#allocation3 + $0x568] sm:$0xff] %v4639
  %4672 = vst [vmem:[#allocation3 + $0x5b0] sm:$0xff] %v4640
  %4673 = vst [vmem:[#allocation3 + $0x5f8] sm:$0xff] %v4641
  %4674 = vst [vmem:[#allocation3 + $0x640] sm:$0xff] %v4642
  %4675 = vst [vmem:[#allocation3 + $0x688] sm:$0xff] %v4643
  %4676 = vst [vmem:[#allocation3 + $0x6d0] sm:$0xff] %v4644
  %4677 = vst [vmem:[#allocation3 + $0x718] sm:$0xff] %v4645
  %4678 = vst [vmem:[#allocation3 + $0x760] sm:$0xff] %v4646
  %4679 = vst [vmem:[#allocation3 + $0x7a8] sm:$0xff] %v4647
  %4680 = vst [vmem:[#allocation3 + $0x7f0] sm:$0xff] %v4648
  %4681 = vst [vmem:[#allocation3 + $0x838] sm:$0xff] %v4649
  %4682 = vst [vmem:[#allocation3 + $0x880] sm:$0xff] %v4650
  %4683 = vst [vmem:[#allocation3 + $0x8c8] sm:$0xff] %v4651
  %v4684 = vld [vmem:[%s40] sm:$0xff]
  %v4685 = vld [vmem:[%s40 + $0x8] sm:$0xff]
  %v4686 = vld [vmem:[%s40 + $0x18] sm:$0xff]
  %v4687 = vld [vmem:[%s40 + $0x20] sm:$0xff]
  %v4688 = vld [vmem:[%s40 + $0x30] sm:$0xff]
  %v4689 = vld [vmem:[%s40 + $0x38] sm:$0xff]
  %v4690 = vld [vmem:[%s40 + $0x48] sm:$0xff]
  %v4691 = vld [vmem:[%s40 + $0x50] sm:$0xff]
  %v4692 = vld [vmem:[%s40 + $0x60] sm:$0xff]
  %v4693 = vld [vmem:[%s40 + $0x68] sm:$0xff]
  %v4694 = vld [vmem:[%s40 + $0x78] sm:$0xff]
  %v4695 = vld [vmem:[%s40 + $0x80] sm:$0xff]
  %v4696 = vld [vmem:[%s40 + $0x90] sm:$0xff]
  %v4697 = vld [vmem:[%s40 + $0x98] sm:$0xff]
  %v4698 = vld [vmem:[%s40 + $0xa8] sm:$0xff]
  %v4699 = vld [vmem:[%s40 + $0xb0] sm:$0xff]
  %v4700 = vld [vmem:[%s40 + $0xc0] sm:$0xff]
  %v4701 = vld [vmem:[%s40 + $0xc8] sm:$0xff]
  %v4702 = vld [vmem:[%s40 + $0xd8] sm:$0xff]
  %v4703 = vld [vmem:[%s40 + $0xe0] sm:$0xff]
  %v4704 = vld [vmem:[%s40 + $0xf0] sm:$0xff]
  %v4705 = vld [vmem:[%s40 + $0xf8] sm:$0xff]
  %v4706 = vld [vmem:[%s40 + $0x108] sm:$0xff]
  %v4707 = vld [vmem:[%s40 + $0x110] sm:$0xff]
  %v4708 = vld [vmem:[%s40 + $0x120] sm:$0xff]
  %v4709 = vld [vmem:[%s40 + $0x128] sm:$0xff]
  %v4710 = vld [vmem:[%s40 + $0x138] sm:$0xff]
  %v4711 = vld [vmem:[%s40 + $0x140] sm:$0xff]
  %v4712 = vld [vmem:[%s40 + $0x150] sm:$0xff]
  %v4713 = vld [vmem:[%s40 + $0x158] sm:$0xff]
  %v4714 = vld [vmem:[%s40 + $0x168] sm:$0xff]
  %v4715 = vld [vmem:[%s40 + $0x170] sm:$0xff]
  %v4716 = vld [vmem:[%s40 + $0x1b0] sm:$0xff]
  %v4717 = vld [vmem:[%s40 + $0x1b8] sm:$0xff]
  %v4718 = vld [vmem:[%s40 + $0x1c8] sm:$0xff]
  %v4719 = vld [vmem:[%s40 + $0x1d0] sm:$0xff]
  %v4720 = vld [vmem:[%s40 + $0x1e0] sm:$0xff]
  %v4721 = vld [vmem:[%s40 + $0x1e8] sm:$0xff]
  %v4722 = vld [vmem:[%s40 + $0x1f8] sm:$0xff]
  %v4723 = vld [vmem:[%s40 + $0x200] sm:$0xff]
  %v4724 = vld [vmem:[%s40 + $0x210] sm:$0xff]
  %v4725 = vld [vmem:[%s40 + $0x218] sm:$0xff]
  %v4726 = vld [vmem:[%s40 + $0x228] sm:$0xff]
  %v4727 = vld [vmem:[%s40 + $0x230] sm:$0xff]
  %v4728 = vld [vmem:[%s40 + $0x240] sm:$0xff]
  %v4729 = vld [vmem:[%s40 + $0x248] sm:$0xff]
  %v4730 = vld [vmem:[%s40 + $0x258] sm:$0xff]
  %v4731 = vld [vmem:[%s40 + $0x260] sm:$0xff]
  %v4732 = vld [vmem:[%s40 + $0x270] sm:$0xff]
  %v4733 = vld [vmem:[%s40 + $0x278] sm:$0xff]
  %v4734 = vld [vmem:[%s40 + $0x288] sm:$0xff]
  %v4735 = vld [vmem:[%s40 + $0x290] sm:$0xff]
  %v4736 = vld [vmem:[%s40 + $0x2a0] sm:$0xff]
  %v4737 = vld [vmem:[%s40 + $0x2a8] sm:$0xff]
  %v4738 = vld [vmem:[%s40 + $0x2b8] sm:$0xff]
  %v4739 = vld [vmem:[%s40 + $0x2c0] sm:$0xff]
  %v4740 = vld [vmem:[%s40 + $0x2d0] sm:$0xff]
  %v4741 = vld [vmem:[%s40 + $0x2d8] sm:$0xff]
  %v4742 = vld [vmem:[%s40 + $0x2e8] sm:$0xff]
  %v4743 = vld [vmem:[%s40 + $0x2f0] sm:$0xff]
  %v4744 = vld [vmem:[%s40 + $0x300] sm:$0xff]
  %v4745 = vld [vmem:[%s40 + $0x308] sm:$0xff]
  %v4746 = vld [vmem:[%s40 + $0x318] sm:$0xff]
  %v4747 = vld [vmem:[%s40 + $0x320] sm:$0xff]
  %v4748 = vpack.c.bf16 %v4685, %v4684
  %v4749 = vpack.c.bf16 %v4687, %v4686
  %v4750 = vpack.c.bf16 %v4689, %v4688
  %v4751 = vpack.c.bf16 %v4691, %v4690
  %v4752 = vpack.c.bf16 %v4693, %v4692
  %v4753 = vpack.c.bf16 %v4695, %v4694
  %v4754 = vpack.c.bf16 %v4697, %v4696
  %v4755 = vpack.c.bf16 %v4699, %v4698
  %v4756 = vpack.c.bf16 %v4701, %v4700
  %v4757 = vpack.c.bf16 %v4703, %v4702
  %v4758 = vpack.c.bf16 %v4705, %v4704
  %v4759 = vpack.c.bf16 %v4707, %v4706
  %v4760 = vpack.c.bf16 %v4709, %v4708
  %v4761 = vpack.c.bf16 %v4711, %v4710
  %v4762 = vpack.c.bf16 %v4713, %v4712
  %v4763 = vpack.c.bf16 %v4715, %v4714
  %v4764 = vpack.c.bf16 %v4717, %v4716
  %v4765 = vpack.c.bf16 %v4719, %v4718
  %v4766 = vpack.c.bf16 %v4721, %v4720
  %v4767 = vpack.c.bf16 %v4723, %v4722
  %v4768 = vpack.c.bf16 %v4725, %v4724
  %v4769 = vpack.c.bf16 %v4727, %v4726
  %v4770 = vpack.c.bf16 %v4729, %v4728
  %v4771 = vpack.c.bf16 %v4731, %v4730
  %v4772 = vpack.c.bf16 %v4733, %v4732
  %v4773 = vpack.c.bf16 %v4735, %v4734
  %v4774 = vpack.c.bf16 %v4737, %v4736
  %v4775 = vpack.c.bf16 %v4739, %v4738
  %v4776 = vpack.c.bf16 %v4741, %v4740
  %v4777 = vpack.c.bf16 %v4743, %v4742
  %v4778 = vpack.c.bf16 %v4745, %v4744
  %v4779 = vpack.c.bf16 %v4747, %v4746
  %4780 = vst [vmem:[#allocation3 + $0x18] sm:$0xff] %v4748
  %4781 = vst [vmem:[#allocation3 + $0x60] sm:$0xff] %v4749
  %4782 = vst [vmem:[#allocation3 + $0xa8] sm:$0xff] %v4750
  %4783 = vst [vmem:[#allocation3 + $0xf0] sm:$0xff] %v4751
  %4784 = vst [vmem:[#allocation3 + $0x138] sm:$0xff] %v4752
  %4785 = vst [vmem:[#allocation3 + $0x180] sm:$0xff] %v4753
  %4786 = vst [vmem:[#allocation3 + $0x1c8] sm:$0xff] %v4754
  %4787 = vst [vmem:[#allocation3 + $0x210] sm:$0xff] %v4755
  %4788 = vst [vmem:[#allocation3 + $0x258] sm:$0xff] %v4756
  %4789 = vst [vmem:[#allocation3 + $0x2a0] sm:$0xff] %v4757
  %4790 = vst [vmem:[#allocation3 + $0x2e8] sm:$0xff] %v4758
  %4791 = vst [vmem:[#allocation3 + $0x330] sm:$0xff] %v4759
  %4792 = vst [vmem:[#allocation3 + $0x378] sm:$0xff] %v4760
  %4793 = vst [vmem:[#allocation3 + $0x3c0] sm:$0xff] %v4761
  %4794 = vst [vmem:[#allocation3 + $0x408] sm:$0xff] %v4762
  %4795 = vst [vmem:[#allocation3 + $0x450] sm:$0xff] %v4763
  %4796 = vst [vmem:[#allocation3 + $0x498] sm:$0xff] %v4764
  %4797 = vst [vmem:[#allocation3 + $0x4e0] sm:$0xff] %v4765
  %4798 = vst [vmem:[#allocation3 + $0x528] sm:$0xff] %v4766
  %4799 = vst [vmem:[#allocation3 + $0x570] sm:$0xff] %v4767
  %4800 = vst [vmem:[#allocation3 + $0x5b8] sm:$0xff] %v4768
  %4801 = vst [vmem:[#allocation3 + $0x600] sm:$0xff] %v4769
  %4802 = vst [vmem:[#allocation3 + $0x648] sm:$0xff] %v4770
  %4803 = vst [vmem:[#allocation3 + $0x690] sm:$0xff] %v4771
  %4804 = vst [vmem:[#allocation3 + $0x6d8] sm:$0xff] %v4772
  %4805 = vst [vmem:[#allocation3 + $0x720] sm:$0xff] %v4773
  %4806 = vst [vmem:[#allocation3 + $0x768] sm:$0xff] %v4774
  %4807 = vst [vmem:[#allocation3 + $0x7b0] sm:$0xff] %v4775
  %4808 = vst [vmem:[#allocation3 + $0x7f8] sm:$0xff] %v4776
  %4809 = vst [vmem:[#allocation3 + $0x840] sm:$0xff] %v4777
  %4810 = vst [vmem:[#allocation3 + $0x888] sm:$0xff] %v4778
  %4811 = vst [vmem:[#allocation3 + $0x8d0] sm:$0xff] %v4779
  %v4812 = vld [vmem:[%s40 + $0x1] sm:$0xff]
  %v4813 = vld [vmem:[%s40 + $0x9] sm:$0xff]
  %v4814 = vld [vmem:[%s40 + $0x19] sm:$0xff]
  %v4815 = vld [vmem:[%s40 + $0x21] sm:$0xff]
  %v4816 = vld [vmem:[%s40 + $0x31] sm:$0xff]
  %v4817 = vld [vmem:[%s40 + $0x39] sm:$0xff]
  %v4818 = vld [vmem:[%s40 + $0x49] sm:$0xff]
  %v4819 = vld [vmem:[%s40 + $0x51] sm:$0xff]
  %v4820 = vld [vmem:[%s40 + $0x61] sm:$0xff]
  %v4821 = vld [vmem:[%s40 + $0x69] sm:$0xff]
  %v4822 = vld [vmem:[%s40 + $0x79] sm:$0xff]
  %v4823 = vld [vmem:[%s40 + $0x81] sm:$0xff]
  %v4824 = vld [vmem:[%s40 + $0x91] sm:$0xff]
  %v4825 = vld [vmem:[%s40 + $0x99] sm:$0xff]
  %v4826 = vld [vmem:[%s40 + $0xa9] sm:$0xff]
  %v4827 = vld [vmem:[%s40 + $0xb1] sm:$0xff]
  %v4828 = vld [vmem:[%s40 + $0xc1] sm:$0xff]
  %v4829 = vld [vmem:[%s40 + $0xc9] sm:$0xff]
  %v4830 = vld [vmem:[%s40 + $0xd9] sm:$0xff]
  %v4831 = vld [vmem:[%s40 + $0xe1] sm:$0xff]
  %v4832 = vld [vmem:[%s40 + $0xf1] sm:$0xff]
  %v4833 = vld [vmem:[%s40 + $0xf9] sm:$0xff]
  %v4834 = vld [vmem:[%s40 + $0x109] sm:$0xff]
  %v4835 = vld [vmem:[%s40 + $0x111] sm:$0xff]
  %v4836 = vld [vmem:[%s40 + $0x121] sm:$0xff]
  %v4837 = vld [vmem:[%s40 + $0x129] sm:$0xff]
  %v4838 = vld [vmem:[%s40 + $0x139] sm:$0xff]
  %v4839 = vld [vmem:[%s40 + $0x141] sm:$0xff]
  %v4840 = vld [vmem:[%s40 + $0x151] sm:$0xff]
  %v4841 = vld [vmem:[%s40 + $0x159] sm:$0xff]
  %v4842 = vld [vmem:[%s40 + $0x169] sm:$0xff]
  %v4843 = vld [vmem:[%s40 + $0x171] sm:$0xff]
  %v4844 = vld [vmem:[%s40 + $0x1b1] sm:$0xff]
  %v4845 = vld [vmem:[%s40 + $0x1b9] sm:$0xff]
  %v4846 = vld [vmem:[%s40 + $0x1c9] sm:$0xff]
  %v4847 = vld [vmem:[%s40 + $0x1d1] sm:$0xff]
  %v4848 = vld [vmem:[%s40 + $0x1e1] sm:$0xff]
  %v4849 = vld [vmem:[%s40 + $0x1e9] sm:$0xff]
  %v4850 = vld [vmem:[%s40 + $0x1f9] sm:$0xff]
  %v4851 = vld [vmem:[%s40 + $0x201] sm:$0xff]
  %v4852 = vld [vmem:[%s40 + $0x211] sm:$0xff]
  %v4853 = vld [vmem:[%s40 + $0x219] sm:$0xff]
  %v4854 = vld [vmem:[%s40 + $0x229] sm:$0xff]
  %v4855 = vld [vmem:[%s40 + $0x231] sm:$0xff]
  %v4856 = vld [vmem:[%s40 + $0x241] sm:$0xff]
  %v4857 = vld [vmem:[%s40 + $0x249] sm:$0xff]
  %v4858 = vld [vmem:[%s40 + $0x259] sm:$0xff]
  %v4859 = vld [vmem:[%s40 + $0x261] sm:$0xff]
  %v4860 = vld [vmem:[%s40 + $0x271] sm:$0xff]
  %v4861 = vld [vmem:[%s40 + $0x279] sm:$0xff]
  %v4862 = vld [vmem:[%s40 + $0x289] sm:$0xff]
  %v4863 = vld [vmem:[%s40 + $0x291] sm:$0xff]
  %v4864 = vld [vmem:[%s40 + $0x2a1] sm:$0xff]
  %v4865 = vld [vmem:[%s40 + $0x2a9] sm:$0xff]
  %v4866 = vld [vmem:[%s40 + $0x2b9] sm:$0xff]
  %v4867 = vld [vmem:[%s40 + $0x2c1] sm:$0xff]
  %v4868 = vld [vmem:[%s40 + $0x2d1] sm:$0xff]
  %v4869 = vld [vmem:[%s40 + $0x2d9] sm:$0xff]
  %v4870 = vld [vmem:[%s40 + $0x2e9] sm:$0xff]
  %v4871 = vld [vmem:[%s40 + $0x2f1] sm:$0xff]
  %v4872 = vld [vmem:[%s40 + $0x301] sm:$0xff]
  %v4873 = vld [vmem:[%s40 + $0x309] sm:$0xff]
  %v4874 = vld [vmem:[%s40 + $0x319] sm:$0xff]
  %v4875 = vld [vmem:[%s40 + $0x321] sm:$0xff]
  %v4876 = vpack.c.bf16 %v4813, %v4812
  %v4877 = vpack.c.bf16 %v4815, %v4814
  %v4878 = vpack.c.bf16 %v4817, %v4816
  %v4879 = vpack.c.bf16 %v4819, %v4818
  %v4880 = vpack.c.bf16 %v4821, %v4820
  %v4881 = vpack.c.bf16 %v4823, %v4822
  %v4882 = vpack.c.bf16 %v4825, %v4824
  %v4883 = vpack.c.bf16 %v4827, %v4826
  %v4884 = vpack.c.bf16 %v4829, %v4828
  %v4885 = vpack.c.bf16 %v4831, %v4830
  %v4886 = vpack.c.bf16 %v4833, %v4832
  %v4887 = vpack.c.bf16 %v4835, %v4834
  %v4888 = vpack.c.bf16 %v4837, %v4836
  %v4889 = vpack.c.bf16 %v4839, %v4838
  %v4890 = vpack.c.bf16 %v4841, %v4840
  %v4891 = vpack.c.bf16 %v4843, %v4842
  %v4892 = vpack.c.bf16 %v4845, %v4844
  %v4893 = vpack.c.bf16 %v4847, %v4846
  %v4894 = vpack.c.bf16 %v4849, %v4848
  %v4895 = vpack.c.bf16 %v4851, %v4850
  %v4896 = vpack.c.bf16 %v4853, %v4852
  %v4897 = vpack.c.bf16 %v4855, %v4854
  %v4898 = vpack.c.bf16 %v4857, %v4856
  %v4899 = vpack.c.bf16 %v4859, %v4858
  %v4900 = vpack.c.bf16 %v4861, %v4860
  %v4901 = vpack.c.bf16 %v4863, %v4862
  %v4902 = vpack.c.bf16 %v4865, %v4864
  %v4903 = vpack.c.bf16 %v4867, %v4866
  %v4904 = vpack.c.bf16 %v4869, %v4868
  %v4905 = vpack.c.bf16 %v4871, %v4870
  %v4906 = vpack.c.bf16 %v4873, %v4872
  %v4907 = vpack.c.bf16 %v4875, %v4874
  %4908 = vst [vmem:[#allocation3 + $0x20] sm:$0xff] %v4876
  %4909 = vst [vmem:[#allocation3 + $0x68] sm:$0xff] %v4877
  %4910 = vst [vmem:[#allocation3 + $0xb0] sm:$0xff] %v4878
  %4911 = vst [vmem:[#allocation3 + $0xf8] sm:$0xff] %v4879
  %4912 = vst [vmem:[#allocation3 + $0x140] sm:$0xff] %v4880
  %4913 = vst [vmem:[#allocation3 + $0x188] sm:$0xff] %v4881
  %4914 = vst [vmem:[#allocation3 + $0x1d0] sm:$0xff] %v4882
  %4915 = vst [vmem:[#allocation3 + $0x218] sm:$0xff] %v4883
  %4916 = vst [vmem:[#allocation3 + $0x260] sm:$0xff] %v4884
  %4917 = vst [vmem:[#allocation3 + $0x2a8] sm:$0xff] %v4885
  %4918 = vst [vmem:[#allocation3 + $0x2f0] sm:$0xff] %v4886
  %4919 = vst [vmem:[#allocation3 + $0x338] sm:$0xff] %v4887
  %4920 = vst [vmem:[#allocation3 + $0x380] sm:$0xff] %v4888
  %4921 = vst [vmem:[#allocation3 + $0x3c8] sm:$0xff] %v4889
  %4922 = vst [vmem:[#allocation3 + $0x410] sm:$0xff] %v4890
  %4923 = vst [vmem:[#allocation3 + $0x458] sm:$0xff] %v4891
  %4924 = vst [vmem:[#allocation3 + $0x4a0] sm:$0xff] %v4892
  %4925 = vst [vmem:[#allocation3 + $0x4e8] sm:$0xff] %v4893
  %4926 = vst [vmem:[#allocation3 + $0x530] sm:$0xff] %v4894
  %4927 = vst [vmem:[#allocation3 + $0x578] sm:$0xff] %v4895
  %4928 = vst [vmem:[#allocation3 + $0x5c0] sm:$0xff] %v4896
  %4929 = vst [vmem:[#allocation3 + $0x608] sm:$0xff] %v4897
  %4930 = vst [vmem:[#allocation3 + $0x650] sm:$0xff] %v4898
  %4931 = vst [vmem:[#allocation3 + $0x698] sm:$0xff] %v4899
  %4932 = vst [vmem:[#allocation3 + $0x6e0] sm:$0xff] %v4900
  %4933 = vst [vmem:[#allocation3 + $0x728] sm:$0xff] %v4901
  %4934 = vst [vmem:[#allocation3 + $0x770] sm:$0xff] %v4902
  %4935 = vst [vmem:[#allocation3 + $0x7b8] sm:$0xff] %v4903
  %4936 = vst [vmem:[#allocation3 + $0x800] sm:$0xff] %v4904
  %4937 = vst [vmem:[#allocation3 + $0x848] sm:$0xff] %v4905
  %4938 = vst [vmem:[#allocation3 + $0x890] sm:$0xff] %v4906
  %4939 = vst [vmem:[#allocation3 + $0x8d8] sm:$0xff] %v4907
  %v4940 = vld [vmem:[%s40 + $0x2] sm:$0xff]
  %v4941 = vld [vmem:[%s40 + $0xa] sm:$0xff]
  %v4942 = vld [vmem:[%s40 + $0x1a] sm:$0xff]
  %v4943 = vld [vmem:[%s40 + $0x22] sm:$0xff]
  %v4944 = vld [vmem:[%s40 + $0x32] sm:$0xff]
  %v4945 = vld [vmem:[%s40 + $0x3a] sm:$0xff]
  %v4946 = vld [vmem:[%s40 + $0x4a] sm:$0xff]
  %v4947 = vld [vmem:[%s40 + $0x52] sm:$0xff]
  %v4948 = vld [vmem:[%s40 + $0x62] sm:$0xff]
  %v4949 = vld [vmem:[%s40 + $0x6a] sm:$0xff]
  %v4950 = vld [vmem:[%s40 + $0x7a] sm:$0xff]
  %v4951 = vld [vmem:[%s40 + $0x82] sm:$0xff]
  %v4952 = vld [vmem:[%s40 + $0x92] sm:$0xff]
  %v4953 = vld [vmem:[%s40 + $0x9a] sm:$0xff]
  %v4954 = vld [vmem:[%s40 + $0xaa] sm:$0xff]
  %v4955 = vld [vmem:[%s40 + $0xb2] sm:$0xff]
  %v4956 = vld [vmem:[%s40 + $0xc2] sm:$0xff]
  %v4957 = vld [vmem:[%s40 + $0xca] sm:$0xff]
  %v4958 = vld [vmem:[%s40 + $0xda] sm:$0xff]
  %v4959 = vld [vmem:[%s40 + $0xe2] sm:$0xff]
  %v4960 = vld [vmem:[%s40 + $0xf2] sm:$0xff]
  %v4961 = vld [vmem:[%s40 + $0xfa] sm:$0xff]
  %v4962 = vld [vmem:[%s40 + $0x10a] sm:$0xff]
  %v4963 = vld [vmem:[%s40 + $0x112] sm:$0xff]
  %v4964 = vld [vmem:[%s40 + $0x122] sm:$0xff]
  %v4965 = vld [vmem:[%s40 + $0x12a] sm:$0xff]
  %v4966 = vld [vmem:[%s40 + $0x13a] sm:$0xff]
  %v4967 = vld [vmem:[%s40 + $0x142] sm:$0xff]
  %v4968 = vld [vmem:[%s40 + $0x152] sm:$0xff]
  %v4969 = vld [vmem:[%s40 + $0x15a] sm:$0xff]
  %v4970 = vld [vmem:[%s40 + $0x16a] sm:$0xff]
  %v4971 = vld [vmem:[%s40 + $0x172] sm:$0xff]
  %v4972 = vld [vmem:[%s40 + $0x1b2] sm:$0xff]
  %v4973 = vld [vmem:[%s40 + $0x1ba] sm:$0xff]
  %v4974 = vld [vmem:[%s40 + $0x1ca] sm:$0xff]
  %v4975 = vld [vmem:[%s40 + $0x1d2] sm:$0xff]
  %v4976 = vld [vmem:[%s40 + $0x1e2] sm:$0xff]
  %v4977 = vld [vmem:[%s40 + $0x1ea] sm:$0xff]
  %v4978 = vld [vmem:[%s40 + $0x1fa] sm:$0xff]
  %v4979 = vld [vmem:[%s40 + $0x202] sm:$0xff]
  %v4980 = vld [vmem:[%s40 + $0x212] sm:$0xff]
  %v4981 = vld [vmem:[%s40 + $0x21a] sm:$0xff]
  %v4982 = vld [vmem:[%s40 + $0x22a] sm:$0xff]
  %v4983 = vld [vmem:[%s40 + $0x232] sm:$0xff]
  %v4984 = vld [vmem:[%s40 + $0x242] sm:$0xff]
  %v4985 = vld [vmem:[%s40 + $0x24a] sm:$0xff]
  %v4986 = vld [vmem:[%s40 + $0x25a] sm:$0xff]
  %v4987 = vld [vmem:[%s40 + $0x262] sm:$0xff]
  %v4988 = vld [vmem:[%s40 + $0x272] sm:$0xff]
  %v4989 = vld [vmem:[%s40 + $0x27a] sm:$0xff]
  %v4990 = vld [vmem:[%s40 + $0x28a] sm:$0xff]
  %v4991 = vld [vmem:[%s40 + $0x292] sm:$0xff]
  %v4992 = vld [vmem:[%s40 + $0x2a2] sm:$0xff]
  %v4993 = vld [vmem:[%s40 + $0x2aa] sm:$0xff]
  %v4994 = vld [vmem:[%s40 + $0x2ba] sm:$0xff]
  %v4995 = vld [vmem:[%s40 + $0x2c2] sm:$0xff]
  %v4996 = vld [vmem:[%s40 + $0x2d2] sm:$0xff]
  %v4997 = vld [vmem:[%s40 + $0x2da] sm:$0xff]
  %v4998 = vld [vmem:[%s40 + $0x2ea] sm:$0xff]
  %v4999 = vld [vmem:[%s40 + $0x2f2] sm:$0xff]
  %v5000 = vld [vmem:[%s40 + $0x302] sm:$0xff]
  %v5001 = vld [vmem:[%s40 + $0x30a] sm:$0xff]
  %v5002 = vld [vmem:[%s40 + $0x31a] sm:$0xff]
  %v5003 = vld [vmem:[%s40 + $0x322] sm:$0xff]
  %v5004 = vpack.c.bf16 %v4941, %v4940
  %v5005 = vpack.c.bf16 %v4943, %v4942
  %v5006 = vpack.c.bf16 %v4945, %v4944
  %v5007 = vpack.c.bf16 %v4947, %v4946
  %v5008 = vpack.c.bf16 %v4949, %v4948
  %v5009 = vpack.c.bf16 %v4951, %v4950
  %v5010 = vpack.c.bf16 %v4953, %v4952
  %v5011 = vpack.c.bf16 %v4955, %v4954
  %v5012 = vpack.c.bf16 %v4957, %v4956
  %v5013 = vpack.c.bf16 %v4959, %v4958
  %v5014 = vpack.c.bf16 %v4961, %v4960
  %v5015 = vpack.c.bf16 %v4963, %v4962
  %v5016 = vpack.c.bf16 %v4965, %v4964
  %v5017 = vpack.c.bf16 %v4967, %v4966
  %v5018 = vpack.c.bf16 %v4969, %v4968
  %v5019 = vpack.c.bf16 %v4971, %v4970
  %v5020 = vpack.c.bf16 %v4973, %v4972
  %v5021 = vpack.c.bf16 %v4975, %v4974
  %v5022 = vpack.c.bf16 %v4977, %v4976
  %v5023 = vpack.c.bf16 %v4979, %v4978
  %v5024 = vpack.c.bf16 %v4981, %v4980
  %v5025 = vpack.c.bf16 %v4983, %v4982
  %v5026 = vpack.c.bf16 %v4985, %v4984
  %v5027 = vpack.c.bf16 %v4987, %v4986
  %v5028 = vpack.c.bf16 %v4989, %v4988
  %v5029 = vpack.c.bf16 %v4991, %v4990
  %v5030 = vpack.c.bf16 %v4993, %v4992
  %v5031 = vpack.c.bf16 %v4995, %v4994
  %v5032 = vpack.c.bf16 %v4997, %v4996
  %v5033 = vpack.c.bf16 %v4999, %v4998
  %v5034 = vpack.c.bf16 %v5001, %v5000
  %v5035 = vpack.c.bf16 %v5003, %v5002
  %5036 = vst [vmem:[#allocation3 + $0x28] sm:$0xff] %v5004
  %5037 = vst [vmem:[#allocation3 + $0x70] sm:$0xff] %v5005
  %5038 = vst [vmem:[#allocation3 + $0xb8] sm:$0xff] %v5006
  %5039 = vst [vmem:[#allocation3 + $0x100] sm:$0xff] %v5007
  %5040 = vst [vmem:[#allocation3 + $0x148] sm:$0xff] %v5008
  %5041 = vst [vmem:[#allocation3 + $0x190] sm:$0xff] %v5009
  %5042 = vst [vmem:[#allocation3 + $0x1d8] sm:$0xff] %v5010
  %5043 = vst [vmem:[#allocation3 + $0x220] sm:$0xff] %v5011
  %5044 = vst [vmem:[#allocation3 + $0x268] sm:$0xff] %v5012
  %5045 = vst [vmem:[#allocation3 + $0x2b0] sm:$0xff] %v5013
  %5046 = vst [vmem:[#allocation3 + $0x2f8] sm:$0xff] %v5014
  %5047 = vst [vmem:[#allocation3 + $0x340] sm:$0xff] %v5015
  %5048 = vst [vmem:[#allocation3 + $0x388] sm:$0xff] %v5016
  %5049 = vst [vmem:[#allocation3 + $0x3d0] sm:$0xff] %v5017
  %5050 = vst [vmem:[#allocation3 + $0x418] sm:$0xff] %v5018
  %5051 = vst [vmem:[#allocation3 + $0x460] sm:$0xff] %v5019
  %5052 = vst [vmem:[#allocation3 + $0x4a8] sm:$0xff] %v5020
  %5053 = vst [vmem:[#allocation3 + $0x4f0] sm:$0xff] %v5021
  %5054 = vst [vmem:[#allocation3 + $0x538] sm:$0xff] %v5022
  %5055 = vst [vmem:[#allocation3 + $0x580] sm:$0xff] %v5023
  %5056 = vst [vmem:[#allocation3 + $0x5c8] sm:$0xff] %v5024
  %5057 = vst [vmem:[#allocation3 + $0x610] sm:$0xff] %v5025
  %5058 = vst [vmem:[#allocation3 + $0x658] sm:$0xff] %v5026
  %5059 = vst [vmem:[#allocation3 + $0x6a0] sm:$0xff] %v5027
  %5060 = vst [vmem:[#allocation3 + $0x6e8] sm:$0xff] %v5028
  %5061 = vst [vmem:[#allocation3 + $0x730] sm:$0xff] %v5029
  %5062 = vst [vmem:[#allocation3 + $0x778] sm:$0xff] %v5030
  %5063 = vst [vmem:[#allocation3 + $0x7c0] sm:$0xff] %v5031
  %5064 = vst [vmem:[#allocation3 + $0x808] sm:$0xff] %v5032
  %5065 = vst [vmem:[#allocation3 + $0x850] sm:$0xff] %v5033
  %5066 = vst [vmem:[#allocation3 + $0x898] sm:$0xff] %v5034
  %5067 = vst [vmem:[#allocation3 + $0x8e0] sm:$0xff] %v5035
  %v5068 = vld [vmem:[%s1001] sm:$0xff]
  %v5069 = vld [vmem:[%s1001 + $0x8] sm:$0xff]
  %v5070 = vld [vmem:[%s1001 + $0x18] sm:$0xff]
  %v5071 = vld [vmem:[%s1001 + $0x20] sm:$0xff]
  %v5072 = vld [vmem:[%s1001 + $0x30] sm:$0xff]
  %v5073 = vld [vmem:[%s1001 + $0x38] sm:$0xff]
  %v5074 = vld [vmem:[%s1001 + $0x48] sm:$0xff]
  %v5075 = vld [vmem:[%s1001 + $0x50] sm:$0xff]
  %v5076 = vld [vmem:[%s1001 + $0x60] sm:$0xff]
  %v5077 = vld [vmem:[%s1001 + $0x68] sm:$0xff]
  %v5078 = vld [vmem:[%s1001 + $0x78] sm:$0xff]
  %v5079 = vld [vmem:[%s1001 + $0x80] sm:$0xff]
  %v5080 = vld [vmem:[%s1001 + $0x90] sm:$0xff]
  %v5081 = vld [vmem:[%s1001 + $0x98] sm:$0xff]
  %v5082 = vld [vmem:[%s1001 + $0xa8] sm:$0xff]
  %v5083 = vld [vmem:[%s1001 + $0xb0] sm:$0xff]
  %v5084 = vld [vmem:[%s1001 + $0xc0] sm:$0xff]
  %v5085 = vld [vmem:[%s1001 + $0xc8] sm:$0xff]
  %v5086 = vld [vmem:[%s1001 + $0xd8] sm:$0xff]
  %v5087 = vld [vmem:[%s1001 + $0xe0] sm:$0xff]
  %v5088 = vld [vmem:[%s1001 + $0xf0] sm:$0xff]
  %v5089 = vld [vmem:[%s1001 + $0xf8] sm:$0xff]
  %v5090 = vld [vmem:[%s1001 + $0x108] sm:$0xff]
  %v5091 = vld [vmem:[%s1001 + $0x110] sm:$0xff]
  %v5092 = vld [vmem:[%s1001 + $0x120] sm:$0xff]
  %v5093 = vld [vmem:[%s1001 + $0x128] sm:$0xff]
  %v5094 = vld [vmem:[%s1001 + $0x138] sm:$0xff]
  %v5095 = vld [vmem:[%s1001 + $0x140] sm:$0xff]
  %v5096 = vld [vmem:[%s1001 + $0x150] sm:$0xff]
  %v5097 = vld [vmem:[%s1001 + $0x158] sm:$0xff]
  %v5098 = vld [vmem:[%s1001 + $0x168] sm:$0xff]
  %v5099 = vld [vmem:[%s1001 + $0x170] sm:$0xff]
  %v5100 = vld [vmem:[%s1001 + $0x1b0] sm:$0xff]
  %v5101 = vld [vmem:[%s1001 + $0x1b8] sm:$0xff]
  %v5102 = vld [vmem:[%s1001 + $0x1c8] sm:$0xff]
  %v5103 = vld [vmem:[%s1001 + $0x1d0] sm:$0xff]
  %v5104 = vld [vmem:[%s1001 + $0x1e0] sm:$0xff]
  %v5105 = vld [vmem:[%s1001 + $0x1e8] sm:$0xff]
  %v5106 = vld [vmem:[%s1001 + $0x1f8] sm:$0xff]
  %v5107 = vld [vmem:[%s1001 + $0x200] sm:$0xff]
  %v5108 = vld [vmem:[%s1001 + $0x210] sm:$0xff]
  %v5109 = vld [vmem:[%s1001 + $0x218] sm:$0xff]
  %v5110 = vld [vmem:[%s1001 + $0x228] sm:$0xff]
  %v5111 = vld [vmem:[%s1001 + $0x230] sm:$0xff]
  %v5112 = vld [vmem:[%s1001 + $0x240] sm:$0xff]
  %v5113 = vld [vmem:[%s1001 + $0x248] sm:$0xff]
  %v5114 = vld [vmem:[%s1001 + $0x258] sm:$0xff]
  %v5115 = vld [vmem:[%s1001 + $0x260] sm:$0xff]
  %v5116 = vld [vmem:[%s1001 + $0x270] sm:$0xff]
  %v5117 = vld [vmem:[%s1001 + $0x278] sm:$0xff]
  %v5118 = vld [vmem:[%s1001 + $0x288] sm:$0xff]
  %v5119 = vld [vmem:[%s1001 + $0x290] sm:$0xff]
  %v5120 = vld [vmem:[%s1001 + $0x2a0] sm:$0xff]
  %v5121 = vld [vmem:[%s1001 + $0x2a8] sm:$0xff]
  %v5122 = vld [vmem:[%s1001 + $0x2b8] sm:$0xff]
  %v5123 = vld [vmem:[%s1001 + $0x2c0] sm:$0xff]
  %v5124 = vld [vmem:[%s1001 + $0x2d0] sm:$0xff]
  %v5125 = vld [vmem:[%s1001 + $0x2d8] sm:$0xff]
  %v5126 = vld [vmem:[%s1001 + $0x2e8] sm:$0xff]
  %v5127 = vld [vmem:[%s1001 + $0x2f0] sm:$0xff]
  %v5128 = vld [vmem:[%s1001 + $0x300] sm:$0xff]
  %v5129 = vld [vmem:[%s1001 + $0x308] sm:$0xff]
  %v5130 = vld [vmem:[%s1001 + $0x318] sm:$0xff]
  %v5131 = vld [vmem:[%s1001 + $0x320] sm:$0xff]
  %v5132 = vpack.c.bf16 %v5069, %v5068
  %v5133 = vpack.c.bf16 %v5071, %v5070
  %v5134 = vpack.c.bf16 %v5073, %v5072
  %v5135 = vpack.c.bf16 %v5075, %v5074
  %v5136 = vpack.c.bf16 %v5077, %v5076
  %v5137 = vpack.c.bf16 %v5079, %v5078
  %v5138 = vpack.c.bf16 %v5081, %v5080
  %v5139 = vpack.c.bf16 %v5083, %v5082
  %v5140 = vpack.c.bf16 %v5085, %v5084
  %v5141 = vpack.c.bf16 %v5087, %v5086
  %v5142 = vpack.c.bf16 %v5089, %v5088
  %v5143 = vpack.c.bf16 %v5091, %v5090
  %v5144 = vpack.c.bf16 %v5093, %v5092
  %v5145 = vpack.c.bf16 %v5095, %v5094
  %v5146 = vpack.c.bf16 %v5097, %v5096
  %v5147 = vpack.c.bf16 %v5099, %v5098
  %v5148 = vpack.c.bf16 %v5101, %v5100
  %v5149 = vpack.c.bf16 %v5103, %v5102
  %v5150 = vpack.c.bf16 %v5105, %v5104
  %v5151 = vpack.c.bf16 %v5107, %v5106
  %v5152 = vpack.c.bf16 %v5109, %v5108
  %v5153 = vpack.c.bf16 %v5111, %v5110
  %v5154 = vpack.c.bf16 %v5113, %v5112
  %v5155 = vpack.c.bf16 %v5115, %v5114
  %v5156 = vpack.c.bf16 %v5117, %v5116
  %v5157 = vpack.c.bf16 %v5119, %v5118
  %v5158 = vpack.c.bf16 %v5121, %v5120
  %v5159 = vpack.c.bf16 %v5123, %v5122
  %v5160 = vpack.c.bf16 %v5125, %v5124
  %v5161 = vpack.c.bf16 %v5127, %v5126
  %v5162 = vpack.c.bf16 %v5129, %v5128
  %v5163 = vpack.c.bf16 %v5131, %v5130
  %5164 = vst [vmem:[#allocation3 + $0x30] sm:$0xff] %v5132
  %5165 = vst [vmem:[#allocation3 + $0x78] sm:$0xff] %v5133
  %5166 = vst [vmem:[#allocation3 + $0xc0] sm:$0xff] %v5134
  %5167 = vst [vmem:[#allocation3 + $0x108] sm:$0xff] %v5135
  %5168 = vst [vmem:[#allocation3 + $0x150] sm:$0xff] %v5136
  %5169 = vst [vmem:[#allocation3 + $0x198] sm:$0xff] %v5137
  %5170 = vst [vmem:[#allocation3 + $0x1e0] sm:$0xff] %v5138
  %5171 = vst [vmem:[#allocation3 + $0x228] sm:$0xff] %v5139
  %5172 = vst [vmem:[#allocation3 + $0x270] sm:$0xff] %v5140
  %5173 = vst [vmem:[#allocation3 + $0x2b8] sm:$0xff] %v5141
  %5174 = vst [vmem:[#allocation3 + $0x300] sm:$0xff] %v5142
  %5175 = vst [vmem:[#allocation3 + $0x348] sm:$0xff] %v5143
  %5176 = vst [vmem:[#allocation3 + $0x390] sm:$0xff] %v5144
  %5177 = vst [vmem:[#allocation3 + $0x3d8] sm:$0xff] %v5145
  %5178 = vst [vmem:[#allocation3 + $0x420] sm:$0xff] %v5146
  %5179 = vst [vmem:[#allocation3 + $0x468] sm:$0xff] %v5147
  %5180 = vst [vmem:[#allocation3 + $0x4b0] sm:$0xff] %v5148
  %5181 = vst [vmem:[#allocation3 + $0x4f8] sm:$0xff] %v5149
  %5182 = vst [vmem:[#allocation3 + $0x540] sm:$0xff] %v5150
  %5183 = vst [vmem:[#allocation3 + $0x588] sm:$0xff] %v5151
  %5184 = vst [vmem:[#allocation3 + $0x5d0] sm:$0xff] %v5152
  %5185 = vst [vmem:[#allocation3 + $0x618] sm:$0xff] %v5153
  %5186 = vst [vmem:[#allocation3 + $0x660] sm:$0xff] %v5154
  %5187 = vst [vmem:[#allocation3 + $0x6a8] sm:$0xff] %v5155
  %5188 = vst [vmem:[#allocation3 + $0x6f0] sm:$0xff] %v5156
  %5189 = vst [vmem:[#allocation3 + $0x738] sm:$0xff] %v5157
  %5190 = vst [vmem:[#allocation3 + $0x780] sm:$0xff] %v5158
  %5191 = vst [vmem:[#allocation3 + $0x7c8] sm:$0xff] %v5159
  %5192 = vst [vmem:[#allocation3 + $0x810] sm:$0xff] %v5160
  %5193 = vst [vmem:[#allocation3 + $0x858] sm:$0xff] %v5161
  %5194 = vst [vmem:[#allocation3 + $0x8a0] sm:$0xff] %v5162
  %5195 = vst [vmem:[#allocation3 + $0x8e8] sm:$0xff] %v5163
  %v5196 = vld [vmem:[%s1001 + $0x1] sm:$0xff]
  %v5197 = vld [vmem:[%s1001 + $0x9] sm:$0xff]
  %v5198 = vld [vmem:[%s1001 + $0x19] sm:$0xff]
  %v5199 = vld [vmem:[%s1001 + $0x21] sm:$0xff]
  %v5200 = vld [vmem:[%s1001 + $0x31] sm:$0xff]
  %v5201 = vld [vmem:[%s1001 + $0x39] sm:$0xff]
  %v5202 = vld [vmem:[%s1001 + $0x49] sm:$0xff]
  %v5203 = vld [vmem:[%s1001 + $0x51] sm:$0xff]
  %v5204 = vld [vmem:[%s1001 + $0x61] sm:$0xff]
  %v5205 = vld [vmem:[%s1001 + $0x69] sm:$0xff]
  %v5206 = vld [vmem:[%s1001 + $0x79] sm:$0xff]
  %v5207 = vld [vmem:[%s1001 + $0x81] sm:$0xff]
  %v5208 = vld [vmem:[%s1001 + $0x91] sm:$0xff]
  %v5209 = vld [vmem:[%s1001 + $0x99] sm:$0xff]
  %v5210 = vld [vmem:[%s1001 + $0xa9] sm:$0xff]
  %v5211 = vld [vmem:[%s1001 + $0xb1] sm:$0xff]
  %v5212 = vld [vmem:[%s1001 + $0xc1] sm:$0xff]
  %v5213 = vld [vmem:[%s1001 + $0xc9] sm:$0xff]
  %v5214 = vld [vmem:[%s1001 + $0xd9] sm:$0xff]
  %v5215 = vld [vmem:[%s1001 + $0xe1] sm:$0xff]
  %v5216 = vld [vmem:[%s1001 + $0xf1] sm:$0xff]
  %v5217 = vld [vmem:[%s1001 + $0xf9] sm:$0xff]
  %v5218 = vld [vmem:[%s1001 + $0x109] sm:$0xff]
  %v5219 = vld [vmem:[%s1001 + $0x111] sm:$0xff]
  %v5220 = vld [vmem:[%s1001 + $0x121] sm:$0xff]
  %v5221 = vld [vmem:[%s1001 + $0x129] sm:$0xff]
  %v5222 = vld [vmem:[%s1001 + $0x139] sm:$0xff]
  %v5223 = vld [vmem:[%s1001 + $0x141] sm:$0xff]
  %v5224 = vld [vmem:[%s1001 + $0x151] sm:$0xff]
  %v5225 = vld [vmem:[%s1001 + $0x159] sm:$0xff]
  %v5226 = vld [vmem:[%s1001 + $0x169] sm:$0xff]
  %v5227 = vld [vmem:[%s1001 + $0x171] sm:$0xff]
  %v5228 = vld [vmem:[%s1001 + $0x1b1] sm:$0xff]
  %v5229 = vld [vmem:[%s1001 + $0x1b9] sm:$0xff]
  %v5230 = vld [vmem:[%s1001 + $0x1c9] sm:$0xff]
  %v5231 = vld [vmem:[%s1001 + $0x1d1] sm:$0xff]
  %v5232 = vld [vmem:[%s1001 + $0x1e1] sm:$0xff]
  %v5233 = vld [vmem:[%s1001 + $0x1e9] sm:$0xff]
  %v5234 = vld [vmem:[%s1001 + $0x1f9] sm:$0xff]
  %v5235 = vld [vmem:[%s1001 + $0x201] sm:$0xff]
  %v5236 = vld [vmem:[%s1001 + $0x211] sm:$0xff]
  %v5237 = vld [vmem:[%s1001 + $0x219] sm:$0xff]
  %v5238 = vld [vmem:[%s1001 + $0x229] sm:$0xff]
  %v5239 = vld [vmem:[%s1001 + $0x231] sm:$0xff]
  %v5240 = vld [vmem:[%s1001 + $0x241] sm:$0xff]
  %v5241 = vld [vmem:[%s1001 + $0x249] sm:$0xff]
  %v5242 = vld [vmem:[%s1001 + $0x259] sm:$0xff]
  %v5243 = vld [vmem:[%s1001 + $0x261] sm:$0xff]
  %v5244 = vld [vmem:[%s1001 + $0x271] sm:$0xff]
  %v5245 = vld [vmem:[%s1001 + $0x279] sm:$0xff]
  %v5246 = vld [vmem:[%s1001 + $0x289] sm:$0xff]
  %v5247 = vld [vmem:[%s1001 + $0x291] sm:$0xff]
  %v5248 = vld [vmem:[%s1001 + $0x2a1] sm:$0xff]
  %v5249 = vld [vmem:[%s1001 + $0x2a9] sm:$0xff]
  %v5250 = vld [vmem:[%s1001 + $0x2b9] sm:$0xff]
  %v5251 = vld [vmem:[%s1001 + $0x2c1] sm:$0xff]
  %v5252 = vld [vmem:[%s1001 + $0x2d1] sm:$0xff]
  %v5253 = vld [vmem:[%s1001 + $0x2d9] sm:$0xff]
  %v5254 = vld [vmem:[%s1001 + $0x2e9] sm:$0xff]
  %v5255 = vld [vmem:[%s1001 + $0x2f1] sm:$0xff]
  %v5256 = vld [vmem:[%s1001 + $0x301] sm:$0xff]
  %v5257 = vld [vmem:[%s1001 + $0x309] sm:$0xff]
  %v5258 = vld [vmem:[%s1001 + $0x319] sm:$0xff]
  %v5259 = vld [vmem:[%s1001 + $0x321] sm:$0xff]
  %v5260 = vpack.c.bf16 %v5197, %v5196
  %v5261 = vpack.c.bf16 %v5199, %v5198
  %v5262 = vpack.c.bf16 %v5201, %v5200
  %v5263 = vpack.c.bf16 %v5203, %v5202
  %v5264 = vpack.c.bf16 %v5205, %v5204
  %v5265 = vpack.c.bf16 %v5207, %v5206
  %v5266 = vpack.c.bf16 %v5209, %v5208
  %v5267 = vpack.c.bf16 %v5211, %v5210
  %v5268 = vpack.c.bf16 %v5213, %v5212
  %v5269 = vpack.c.bf16 %v5215, %v5214
  %v5270 = vpack.c.bf16 %v5217, %v5216
  %v5271 = vpack.c.bf16 %v5219, %v5218
  %v5272 = vpack.c.bf16 %v5221, %v5220
  %v5273 = vpack.c.bf16 %v5223, %v5222
  %v5274 = vpack.c.bf16 %v5225, %v5224
  %v5275 = vpack.c.bf16 %v5227, %v5226
  %v5276 = vpack.c.bf16 %v5229, %v5228
  %v5277 = vpack.c.bf16 %v5231, %v5230
  %v5278 = vpack.c.bf16 %v5233, %v5232
  %v5279 = vpack.c.bf16 %v5235, %v5234
  %v5280 = vpack.c.bf16 %v5237, %v5236
  %v5281 = vpack.c.bf16 %v5239, %v5238
  %v5282 = vpack.c.bf16 %v5241, %v5240
  %v5283 = vpack.c.bf16 %v5243, %v5242
  %v5284 = vpack.c.bf16 %v5245, %v5244
  %v5285 = vpack.c.bf16 %v5247, %v5246
  %v5286 = vpack.c.bf16 %v5249, %v5248
  %v5287 = vpack.c.bf16 %v5251, %v5250
  %v5288 = vpack.c.bf16 %v5253, %v5252
  %v5289 = vpack.c.bf16 %v5255, %v5254
  %v5290 = vpack.c.bf16 %v5257, %v5256
  %v5291 = vpack.c.bf16 %v5259, %v5258
  %5292 = vst [vmem:[#allocation3 + $0x38] sm:$0xff] %v5260
  %5293 = vst [vmem:[#allocation3 + $0x80] sm:$0xff] %v5261
  %5294 = vst [vmem:[#allocation3 + $0xc8] sm:$0xff] %v5262
  %5295 = vst [vmem:[#allocation3 + $0x110] sm:$0xff] %v5263
  %5296 = vst [vmem:[#allocation3 + $0x158] sm:$0xff] %v5264
  %5297 = vst [vmem:[#allocation3 + $0x1a0] sm:$0xff] %v5265
  %5298 = vst [vmem:[#allocation3 + $0x1e8] sm:$0xff] %v5266
  %5299 = vst [vmem:[#allocation3 + $0x230] sm:$0xff] %v5267
  %5300 = vst [vmem:[#allocation3 + $0x278] sm:$0xff] %v5268
  %5301 = vst [vmem:[#allocation3 + $0x2c0] sm:$0xff] %v5269
  %5302 = vst [vmem:[#allocation3 + $0x308] sm:$0xff] %v5270
  %5303 = vst [vmem:[#allocation3 + $0x350] sm:$0xff] %v5271
  %5304 = vst [vmem:[#allocation3 + $0x398] sm:$0xff] %v5272
  %5305 = vst [vmem:[#allocation3 + $0x3e0] sm:$0xff] %v5273
  %5306 = vst [vmem:[#allocation3 + $0x428] sm:$0xff] %v5274
  %5307 = vst [vmem:[#allocation3 + $0x470] sm:$0xff] %v5275
  %5308 = vst [vmem:[#allocation3 + $0x4b8] sm:$0xff] %v5276
  %5309 = vst [vmem:[#allocation3 + $0x500] sm:$0xff] %v5277
  %5310 = vst [vmem:[#allocation3 + $0x548] sm:$0xff] %v5278
  %5311 = vst [vmem:[#allocation3 + $0x590] sm:$0xff] %v5279
  %5312 = vst [vmem:[#allocation3 + $0x5d8] sm:$0xff] %v5280
  %5313 = vst [vmem:[#allocation3 + $0x620] sm:$0xff] %v5281
  %5314 = vst [vmem:[#allocation3 + $0x668] sm:$0xff] %v5282
  %5315 = vst [vmem:[#allocation3 + $0x6b0] sm:$0xff] %v5283
  %5316 = vst [vmem:[#allocation3 + $0x6f8] sm:$0xff] %v5284
  %5317 = vst [vmem:[#allocation3 + $0x740] sm:$0xff] %v5285
  %5318 = vst [vmem:[#allocation3 + $0x788] sm:$0xff] %v5286
  %5319 = vst [vmem:[#allocation3 + $0x7d0] sm:$0xff] %v5287
  %5320 = vst [vmem:[#allocation3 + $0x818] sm:$0xff] %v5288
  %5321 = vst [vmem:[#allocation3 + $0x860] sm:$0xff] %v5289
  %5322 = vst [vmem:[#allocation3 + $0x8a8] sm:$0xff] %v5290
  %5323 = vst [vmem:[#allocation3 + $0x8f0] sm:$0xff] %v5291
  %v5324 = vld [vmem:[%s1001 + $0x2] sm:$0xff]
  %v5325 = vld [vmem:[%s1001 + $0xa] sm:$0xff]
  %v5326 = vld [vmem:[%s1001 + $0x1a] sm:$0xff]
  %v5327 = vld [vmem:[%s1001 + $0x22] sm:$0xff]
  %v5328 = vld [vmem:[%s1001 + $0x32] sm:$0xff]
  %v5329 = vld [vmem:[%s1001 + $0x3a] sm:$0xff]
  %v5330 = vld [vmem:[%s1001 + $0x4a] sm:$0xff]
  %v5331 = vld [vmem:[%s1001 + $0x52] sm:$0xff]
  %v5332 = vld [vmem:[%s1001 + $0x62] sm:$0xff]
  %v5333 = vld [vmem:[%s1001 + $0x6a] sm:$0xff]
  %v5334 = vld [vmem:[%s1001 + $0x7a] sm:$0xff]
  %v5335 = vld [vmem:[%s1001 + $0x82] sm:$0xff]
  %v5336 = vld [vmem:[%s1001 + $0x92] sm:$0xff]
  %v5337 = vld [vmem:[%s1001 + $0x9a] sm:$0xff]
  %v5338 = vld [vmem:[%s1001 + $0xaa] sm:$0xff]
  %v5339 = vld [vmem:[%s1001 + $0xb2] sm:$0xff]
  %v5340 = vld [vmem:[%s1001 + $0xc2] sm:$0xff]
  %v5341 = vld [vmem:[%s1001 + $0xca] sm:$0xff]
  %v5342 = vld [vmem:[%s1001 + $0xda] sm:$0xff]
  %v5343 = vld [vmem:[%s1001 + $0xe2] sm:$0xff]
  %v5344 = vld [vmem:[%s1001 + $0xf2] sm:$0xff]
  %v5345 = vld [vmem:[%s1001 + $0xfa] sm:$0xff]
  %v5346 = vld [vmem:[%s1001 + $0x10a] sm:$0xff]
  %v5347 = vld [vmem:[%s1001 + $0x112] sm:$0xff]
  %v5348 = vld [vmem:[%s1001 + $0x122] sm:$0xff]
  %v5349 = vld [vmem:[%s1001 + $0x12a] sm:$0xff]
  %v5350 = vld [vmem:[%s1001 + $0x13a] sm:$0xff]
  %v5351 = vld [vmem:[%s1001 + $0x142] sm:$0xff]
  %v5352 = vld [vmem:[%s1001 + $0x152] sm:$0xff]
  %v5353 = vld [vmem:[%s1001 + $0x15a] sm:$0xff]
  %v5354 = vld [vmem:[%s1001 + $0x16a] sm:$0xff]
  %v5355 = vld [vmem:[%s1001 + $0x172] sm:$0xff]
  %v5356 = vld [vmem:[%s1001 + $0x1b2] sm:$0xff]
  %v5357 = vld [vmem:[%s1001 + $0x1ba] sm:$0xff]
  %v5358 = vld [vmem:[%s1001 + $0x1ca] sm:$0xff]
  %v5359 = vld [vmem:[%s1001 + $0x1d2] sm:$0xff]
  %v5360 = vld [vmem:[%s1001 + $0x1e2] sm:$0xff]
  %v5361 = vld [vmem:[%s1001 + $0x1ea] sm:$0xff]
  %v5362 = vld [vmem:[%s1001 + $0x1fa] sm:$0xff]
  %v5363 = vld [vmem:[%s1001 + $0x202] sm:$0xff]
  %v5364 = vld [vmem:[%s1001 + $0x212] sm:$0xff]
  %v5365 = vld [vmem:[%s1001 + $0x21a] sm:$0xff]
  %v5366 = vld [vmem:[%s1001 + $0x22a] sm:$0xff]
  %v5367 = vld [vmem:[%s1001 + $0x232] sm:$0xff]
  %v5368 = vld [vmem:[%s1001 + $0x242] sm:$0xff]
  %v5369 = vld [vmem:[%s1001 + $0x24a] sm:$0xff]
  %v5370 = vld [vmem:[%s1001 + $0x25a] sm:$0xff]
  %v5371 = vld [vmem:[%s1001 + $0x262] sm:$0xff]
  %v5372 = vld [vmem:[%s1001 + $0x272] sm:$0xff]
  %v5373 = vld [vmem:[%s1001 + $0x27a] sm:$0xff]
  %v5374 = vld [vmem:[%s1001 + $0x28a] sm:$0xff]
  %v5375 = vld [vmem:[%s1001 + $0x292] sm:$0xff]
  %v5376 = vld [vmem:[%s1001 + $0x2a2] sm:$0xff]
  %v5377 = vld [vmem:[%s1001 + $0x2aa] sm:$0xff]
  %v5378 = vld [vmem:[%s1001 + $0x2ba] sm:$0xff]
  %v5379 = vld [vmem:[%s1001 + $0x2c2] sm:$0xff]
  %v5380 = vld [vmem:[%s1001 + $0x2d2] sm:$0xff]
  %v5381 = vld [vmem:[%s1001 + $0x2da] sm:$0xff]
  %v5382 = vld [vmem:[%s1001 + $0x2ea] sm:$0xff]
  %v5383 = vld [vmem:[%s1001 + $0x2f2] sm:$0xff]
  %v5384 = vld [vmem:[%s1001 + $0x302] sm:$0xff]
  %v5385 = vld [vmem:[%s1001 + $0x30a] sm:$0xff]
  %v5386 = vld [vmem:[%s1001 + $0x31a] sm:$0xff]
  %v5387 = vld [vmem:[%s1001 + $0x322] sm:$0xff]
  %v5388 = vpack.c.bf16 %v5325, %v5324
  %v5389 = vpack.c.bf16 %v5327, %v5326
  %v5390 = vpack.c.bf16 %v5329, %v5328
  %v5391 = vpack.c.bf16 %v5331, %v5330
  %v5392 = vpack.c.bf16 %v5333, %v5332
  %v5393 = vpack.c.bf16 %v5335, %v5334
  %v5394 = vpack.c.bf16 %v5337, %v5336
  %v5395 = vpack.c.bf16 %v5339, %v5338
  %v5396 = vpack.c.bf16 %v5341, %v5340
  %v5397 = vpack.c.bf16 %v5343, %v5342
  %v5398 = vpack.c.bf16 %v5345, %v5344
  %v5399 = vpack.c.bf16 %v5347, %v5346
  %v5400 = vpack.c.bf16 %v5349, %v5348
  %v5401 = vpack.c.bf16 %v5351, %v5350
  %v5402 = vpack.c.bf16 %v5353, %v5352
  %v5403 = vpack.c.bf16 %v5355, %v5354
  %v5404 = vpack.c.bf16 %v5357, %v5356
  %v5405 = vpack.c.bf16 %v5359, %v5358
  %v5406 = vpack.c.bf16 %v5361, %v5360
  %v5407 = vpack.c.bf16 %v5363, %v5362
  %v5408 = vpack.c.bf16 %v5365, %v5364
  %v5409 = vpack.c.bf16 %v5367, %v5366
  %v5410 = vpack.c.bf16 %v5369, %v5368
  %v5411 = vpack.c.bf16 %v5371, %v5370
  %v5412 = vpack.c.bf16 %v5373, %v5372
  %v5413 = vpack.c.bf16 %v5375, %v5374
  %v5414 = vpack.c.bf16 %v5377, %v5376
  %v5415 = vpack.c.bf16 %v5379, %v5378
  %v5416 = vpack.c.bf16 %v5381, %v5380
  %v5417 = vpack.c.bf16 %v5383, %v5382
  %v5418 = vpack.c.bf16 %v5385, %v5384
  %v5419 = vpack.c.bf16 %v5387, %v5386
  %5420 = vst [vmem:[#allocation3 + $0x40] sm:$0xff] %v5388
  %5421 = vst [vmem:[#allocation3 + $0x88] sm:$0xff] %v5389
  %5422 = vst [vmem:[#allocation3 + $0xd0] sm:$0xff] %v5390
  %5423 = vst [vmem:[#allocation3 + $0x118] sm:$0xff] %v5391
  %5424 = vst [vmem:[#allocation3 + $0x160] sm:$0xff] %v5392
  %5425 = vst [vmem:[#allocation3 + $0x1a8] sm:$0xff] %v5393
  %5426 = vst [vmem:[#allocation3 + $0x1f0] sm:$0xff] %v5394
  %5427 = vst [vmem:[#allocation3 + $0x238] sm:$0xff] %v5395
  %5428 = vst [vmem:[#allocation3 + $0x280] sm:$0xff] %v5396
  %5429 = vst [vmem:[#allocation3 + $0x2c8] sm:$0xff] %v5397
  %5430 = vst [vmem:[#allocation3 + $0x310] sm:$0xff] %v5398
  %5431 = vst [vmem:[#allocation3 + $0x358] sm:$0xff] %v5399
  %5432 = vst [vmem:[#allocation3 + $0x3a0] sm:$0xff] %v5400
  %5433 = vst [vmem:[#allocation3 + $0x3e8] sm:$0xff] %v5401
  %5434 = vst [vmem:[#allocation3 + $0x430] sm:$0xff] %v5402
  %5435 = vst [vmem:[#allocation3 + $0x478] sm:$0xff] %v5403
  %5436 = vst [vmem:[#allocation3 + $0x4c0] sm:$0xff] %v5404
  %5437 = vst [vmem:[#allocation3 + $0x508] sm:$0xff] %v5405
  %5438 = vst [vmem:[#allocation3 + $0x550] sm:$0xff] %v5406
  %5439 = vst [vmem:[#allocation3 + $0x598] sm:$0xff] %v5407
  %5440 = vst [vmem:[#allocation3 + $0x5e0] sm:$0xff] %v5408
  %5441 = vst [vmem:[#allocation3 + $0x628] sm:$0xff] %v5409
  %5442 = vst [vmem:[#allocation3 + $0x670] sm:$0xff] %v5410
  %5443 = vst [vmem:[#allocation3 + $0x6b8] sm:$0xff] %v5411
  %5444 = vst [vmem:[#allocation3 + $0x700] sm:$0xff] %v5412
  %5445 = vst [vmem:[#allocation3 + $0x748] sm:$0xff] %v5413
  %5446 = vst [vmem:[#allocation3 + $0x790] sm:$0xff] %v5414
  %5447 = vst [vmem:[#allocation3 + $0x7d8] sm:$0xff] %v5415
  %5448 = vst [vmem:[#allocation3 + $0x820] sm:$0xff] %v5416
  %5449 = vst [vmem:[#allocation3 + $0x868] sm:$0xff] %v5417
  %5450 = vst [vmem:[#allocation3 + $0x8b0] sm:$0xff] %v5418
  %5451 = vst [vmem:[#allocation3 + $0x8f8] sm:$0xff] %v5419
  %v5452 = vld [vmem:[#allocation3] sm:$0xff]
  %v5453 = vld [vmem:[#allocation3 + $0x8] sm:$0xff]
  %v5454 = vld [vmem:[#allocation3 + $0x10] sm:$0xff]
  %v5455 = vld [vmem:[#allocation3 + $0x18] sm:$0xff]
  %v5456 = vld [vmem:[#allocation3 + $0x20] sm:$0xff]
  %v5457 = vld [vmem:[#allocation3 + $0x28] sm:$0xff]
  %v5458 = vld [vmem:[#allocation3 + $0x30] sm:$0xff]
  %v5459 = vld [vmem:[#allocation3 + $0x38] sm:$0xff]
  %v5460 = vld [vmem:[#allocation3 + $0x40] sm:$0xff]
  %v5461 = vld [vmem:[#allocation3 + $0x48] sm:$0xff]
  %v5462 = vld [vmem:[#allocation3 + $0x50] sm:$0xff]
  %v5463 = vld [vmem:[#allocation3 + $0x58] sm:$0xff]
  %v5464 = vld [vmem:[#allocation3 + $0x60] sm:$0xff]
  %v5465 = vld [vmem:[#allocation3 + $0x68] sm:$0xff]
  %v5466 = vld [vmem:[#allocation3 + $0x70] sm:$0xff]
  %v5467 = vld [vmem:[#allocation3 + $0x78] sm:$0xff]
  %v5468 = vld [vmem:[#allocation3 + $0x80] sm:$0xff]
  %v5469 = vld [vmem:[#allocation3 + $0x88] sm:$0xff]
  %v5470 = vld [vmem:[#allocation3 + $0x90] sm:$0xff]
  %v5471 = vld [vmem:[#allocation3 + $0x98] sm:$0xff]
  %v5472 = vld [vmem:[#allocation3 + $0xa0] sm:$0xff]
  %v5473 = vld [vmem:[#allocation3 + $0xa8] sm:$0xff]
  %v5474 = vld [vmem:[#allocation3 + $0xb0] sm:$0xff]
  %v5475 = vld [vmem:[#allocation3 + $0xb8] sm:$0xff]
  %v5476 = vld [vmem:[#allocation3 + $0xc0] sm:$0xff]
  %v5477 = vld [vmem:[#allocation3 + $0xc8] sm:$0xff]
  %v5478 = vld [vmem:[#allocation3 + $0xd0] sm:$0xff]
  %v5479 = vld [vmem:[#allocation3 + $0xd8] sm:$0xff]
  %v5480 = vld [vmem:[#allocation3 + $0xe0] sm:$0xff]
  %v5481 = vld [vmem:[#allocation3 + $0xe8] sm:$0xff]
  %v5482 = vld [vmem:[#allocation3 + $0xf0] sm:$0xff]
  %v5483 = vld [vmem:[#allocation3 + $0xf8] sm:$0xff]
  %v5484 = vld [vmem:[#allocation3 + $0x100] sm:$0xff]
  %v5485 = vld [vmem:[#allocation3 + $0x108] sm:$0xff]
  %v5486 = vld [vmem:[#allocation3 + $0x110] sm:$0xff]
  %v5487 = vld [vmem:[#allocation3 + $0x118] sm:$0xff]
  %v5488 = vld [vmem:[#allocation3 + $0x120] sm:$0xff]
  %v5489 = vld [vmem:[#allocation3 + $0x128] sm:$0xff]
  %v5490 = vld [vmem:[#allocation3 + $0x130] sm:$0xff]
  %v5491 = vld [vmem:[#allocation3 + $0x138] sm:$0xff]
  %v5492 = vld [vmem:[#allocation3 + $0x140] sm:$0xff]
  %v5493 = vld [vmem:[#allocation3 + $0x148] sm:$0xff]
  %v5494 = vld [vmem:[#allocation3 + $0x150] sm:$0xff]
  %v5495 = vld [vmem:[#allocation3 + $0x158] sm:$0xff]
  %v5496 = vld [vmem:[#allocation3 + $0x160] sm:$0xff]
  %v5497 = vld [vmem:[#allocation3 + $0x168] sm:$0xff]
  %v5498 = vld [vmem:[#allocation3 + $0x170] sm:$0xff]
  %v5499 = vld [vmem:[#allocation3 + $0x178] sm:$0xff]
  %v5500 = vld [vmem:[#allocation3 + $0x180] sm:$0xff]
  %v5501 = vld [vmem:[#allocation3 + $0x188] sm:$0xff]
  %v5502 = vld [vmem:[#allocation3 + $0x190] sm:$0xff]
  %v5503 = vld [vmem:[#allocation3 + $0x198] sm:$0xff]
  %v5504 = vld [vmem:[#allocation3 + $0x1a0] sm:$0xff]
  %v5505 = vld [vmem:[#allocation3 + $0x1a8] sm:$0xff]
  %v5506 = vld [vmem:[#allocation3 + $0x1b0] sm:$0xff]
  %v5507 = vld [vmem:[#allocation3 + $0x1b8] sm:$0xff]
  %v5508 = vld [vmem:[#allocation3 + $0x1c0] sm:$0xff]
  %v5509 = vld [vmem:[#allocation3 + $0x1c8] sm:$0xff]
  %v5510 = vld [vmem:[#allocation3 + $0x1d0] sm:$0xff]
  %v5511 = vld [vmem:[#allocation3 + $0x1d8] sm:$0xff]
  %v5512 = vld [vmem:[#allocation3 + $0x1e0] sm:$0xff]
  %v5513 = vld [vmem:[#allocation3 + $0x1e8] sm:$0xff]
  %v5514 = vld [vmem:[#allocation3 + $0x1f0] sm:$0xff]
  %v5515 = vld [vmem:[#allocation3 + $0x1f8] sm:$0xff]
  %v5516 = vld [vmem:[#allocation3 + $0x200] sm:$0xff]
  %v5517 = vld [vmem:[#allocation3 + $0x208] sm:$0xff]
  %v5518 = vld [vmem:[#allocation3 + $0x210] sm:$0xff]
  %v5519 = vld [vmem:[#allocation3 + $0x218] sm:$0xff]
  %v5520 = vld [vmem:[#allocation3 + $0x220] sm:$0xff]
  %v5521 = vld [vmem:[#allocation3 + $0x228] sm:$0xff]
  %v5522 = vld [vmem:[#allocation3 + $0x230] sm:$0xff]
  %v5523 = vld [vmem:[#allocation3 + $0x238] sm:$0xff]
  %v5524 = vld [vmem:[#allocation3 + $0x240] sm:$0xff]
  %v5525 = vld [vmem:[#allocation3 + $0x248] sm:$0xff]
  %v5526 = vld [vmem:[#allocation3 + $0x250] sm:$0xff]
  %v5527 = vld [vmem:[#allocation3 + $0x258] sm:$0xff]
  %v5528 = vld [vmem:[#allocation3 + $0x260] sm:$0xff]
  %v5529 = vld [vmem:[#allocation3 + $0x268] sm:$0xff]
  %v5530 = vld [vmem:[#allocation3 + $0x270] sm:$0xff]
  %v5531 = vld [vmem:[#allocation3 + $0x278] sm:$0xff]
  %v5532 = vld [vmem:[#allocation3 + $0x280] sm:$0xff]
  %v5533 = vld [vmem:[#allocation3 + $0x288] sm:$0xff]
  %v5534 = vld [vmem:[#allocation3 + $0x290] sm:$0xff]
  %v5535 = vld [vmem:[#allocation3 + $0x298] sm:$0xff]
  %v5536 = vld [vmem:[#allocation3 + $0x2a0] sm:$0xff]
  %v5537 = vld [vmem:[#allocation3 + $0x2a8] sm:$0xff]
  %v5538 = vld [vmem:[#allocation3 + $0x2b0] sm:$0xff]
  %v5539 = vld [vmem:[#allocation3 + $0x2b8] sm:$0xff]
  %v5540 = vld [vmem:[#allocation3 + $0x2c0] sm:$0xff]
  %v5541 = vld [vmem:[#allocation3 + $0x2c8] sm:$0xff]
  %v5542 = vld [vmem:[#allocation3 + $0x2d0] sm:$0xff]
  %v5543 = vld [vmem:[#allocation3 + $0x2d8] sm:$0xff]
  %v5544 = vld [vmem:[#allocation3 + $0x2e0] sm:$0xff]
  %v5545 = vld [vmem:[#allocation3 + $0x2e8] sm:$0xff]
  %v5546 = vld [vmem:[#allocation3 + $0x2f0] sm:$0xff]
  %v5547 = vld [vmem:[#allocation3 + $0x2f8] sm:$0xff]
  %v5548 = vld [vmem:[#allocation3 + $0x300] sm:$0xff]
  %v5549 = vld [vmem:[#allocation3 + $0x308] sm:$0xff]
  %v5550 = vld [vmem:[#allocation3 + $0x310] sm:$0xff]
  %v5551 = vld [vmem:[#allocation3 + $0x318] sm:$0xff]
  %v5552 = vld [vmem:[#allocation3 + $0x320] sm:$0xff]
  %v5553 = vld [vmem:[#allocation3 + $0x328] sm:$0xff]
  %v5554 = vld [vmem:[#allocation3 + $0x330] sm:$0xff]
  %v5555 = vld [vmem:[#allocation3 + $0x338] sm:$0xff]
  %v5556 = vld [vmem:[#allocation3 + $0x340] sm:$0xff]
  %v5557 = vld [vmem:[#allocation3 + $0x348] sm:$0xff]
  %v5558 = vld [vmem:[#allocation3 + $0x350] sm:$0xff]
  %v5559 = vld [vmem:[#allocation3 + $0x358] sm:$0xff]
  %v5560 = vld [vmem:[#allocation3 + $0x360] sm:$0xff]
  %v5561 = vld [vmem:[#allocation3 + $0x368] sm:$0xff]
  %v5562 = vld [vmem:[#allocation3 + $0x370] sm:$0xff]
  %v5563 = vld [vmem:[#allocation3 + $0x378] sm:$0xff]
  %v5564 = vld [vmem:[#allocation3 + $0x380] sm:$0xff]
  %v5565 = vld [vmem:[#allocation3 + $0x388] sm:$0xff]
  %v5566 = vld [vmem:[#allocation3 + $0x390] sm:$0xff]
  %v5567 = vld [vmem:[#allocation3 + $0x398] sm:$0xff]
  %v5568 = vld [vmem:[#allocation3 + $0x3a0] sm:$0xff]
  %v5569 = vld [vmem:[#allocation3 + $0x3a8] sm:$0xff]
  %v5570 = vld [vmem:[#allocation3 + $0x3b0] sm:$0xff]
  %v5571 = vld [vmem:[#allocation3 + $0x3b8] sm:$0xff]
  %v5572 = vld [vmem:[#allocation3 + $0x3c0] sm:$0xff]
  %v5573 = vld [vmem:[#allocation3 + $0x3c8] sm:$0xff]
  %v5574 = vld [vmem:[#allocation3 + $0x3d0] sm:$0xff]
  %v5575 = vld [vmem:[#allocation3 + $0x3d8] sm:$0xff]
  %v5576 = vld [vmem:[#allocation3 + $0x3e0] sm:$0xff]
  %v5577 = vld [vmem:[#allocation3 + $0x3e8] sm:$0xff]
  %v5578 = vld [vmem:[#allocation3 + $0x3f0] sm:$0xff]
  %v5579 = vld [vmem:[#allocation3 + $0x3f8] sm:$0xff]
  %v5580 = vld [vmem:[#allocation3 + $0x400] sm:$0xff]
  %v5581 = vld [vmem:[#allocation3 + $0x408] sm:$0xff]
  %v5582 = vld [vmem:[#allocation3 + $0x410] sm:$0xff]
  %v5583 = vld [vmem:[#allocation3 + $0x418] sm:$0xff]
  %v5584 = vld [vmem:[#allocation3 + $0x420] sm:$0xff]
  %v5585 = vld [vmem:[#allocation3 + $0x428] sm:$0xff]
  %v5586 = vld [vmem:[#allocation3 + $0x430] sm:$0xff]
  %v5587 = vld [vmem:[#allocation3 + $0x438] sm:$0xff]
  %v5588 = vld [vmem:[#allocation3 + $0x440] sm:$0xff]
  %v5589 = vld [vmem:[#allocation3 + $0x448] sm:$0xff]
  %v5590 = vld [vmem:[#allocation3 + $0x450] sm:$0xff]
  %v5591 = vld [vmem:[#allocation3 + $0x458] sm:$0xff]
  %v5592 = vld [vmem:[#allocation3 + $0x460] sm:$0xff]
  %v5593 = vld [vmem:[#allocation3 + $0x468] sm:$0xff]
  %v5594 = vld [vmem:[#allocation3 + $0x470] sm:$0xff]
  %v5595 = vld [vmem:[#allocation3 + $0x478] sm:$0xff]
  %v5596 = vld [vmem:[#allocation3 + $0x480] sm:$0xff]
  %v5597 = vld [vmem:[#allocation3 + $0x488] sm:$0xff]
  %v5598 = vld [vmem:[#allocation3 + $0x490] sm:$0xff]
  %v5599 = vld [vmem:[#allocation3 + $0x498] sm:$0xff]
  %v5600 = vld [vmem:[#allocation3 + $0x4a0] sm:$0xff]
  %v5601 = vld [vmem:[#allocation3 + $0x4a8] sm:$0xff]
  %v5602 = vld [vmem:[#allocation3 + $0x4b0] sm:$0xff]
  %v5603 = vld [vmem:[#allocation3 + $0x4b8] sm:$0xff]
  %v5604 = vld [vmem:[#allocation3 + $0x4c0] sm:$0xff]
  %v5605 = vld [vmem:[#allocation3 + $0x4c8] sm:$0xff]
  %v5606 = vld [vmem:[#allocation3 + $0x4d0] sm:$0xff]
  %v5607 = vld [vmem:[#allocation3 + $0x4d8] sm:$0xff]
  %v5608 = vld [vmem:[#allocation3 + $0x4e0] sm:$0xff]
  %v5609 = vld [vmem:[#allocation3 + $0x4e8] sm:$0xff]
  %v5610 = vld [vmem:[#allocation3 + $0x4f0] sm:$0xff]
  %v5611 = vld [vmem:[#allocation3 + $0x4f8] sm:$0xff]
  %v5612 = vld [vmem:[#allocation3 + $0x500] sm:$0xff]
  %v5613 = vld [vmem:[#allocation3 + $0x508] sm:$0xff]
  %v5614 = vld [vmem:[#allocation3 + $0x510] sm:$0xff]
  %v5615 = vld [vmem:[#allocation3 + $0x518] sm:$0xff]
  %v5616 = vld [vmem:[#allocation3 + $0x520] sm:$0xff]
  %v5617 = vld [vmem:[#allocation3 + $0x528] sm:$0xff]
  %v5618 = vld [vmem:[#allocation3 + $0x530] sm:$0xff]
  %v5619 = vld [vmem:[#allocation3 + $0x538] sm:$0xff]
  %v5620 = vld [vmem:[#allocation3 + $0x540] sm:$0xff]
  %v5621 = vld [vmem:[#allocation3 + $0x548] sm:$0xff]
  %v5622 = vld [vmem:[#allocation3 + $0x550] sm:$0xff]
  %v5623 = vld [vmem:[#allocation3 + $0x558] sm:$0xff]
  %v5624 = vld [vmem:[#allocation3 + $0x560] sm:$0xff]
  %v5625 = vld [vmem:[#allocation3 + $0x568] sm:$0xff]
  %v5626 = vld [vmem:[#allocation3 + $0x570] sm:$0xff]
  %v5627 = vld [vmem:[#allocation3 + $0x578] sm:$0xff]
  %v5628 = vld [vmem:[#allocation3 + $0x580] sm:$0xff]
  %v5629 = vld [vmem:[#allocation3 + $0x588] sm:$0xff]
  %v5630 = vld [vmem:[#allocation3 + $0x590] sm:$0xff]
  %v5631 = vld [vmem:[#allocation3 + $0x598] sm:$0xff]
  %v5632 = vld [vmem:[#allocation3 + $0x5a0] sm:$0xff]
  %v5633 = vld [vmem:[#allocation3 + $0x5a8] sm:$0xff]
  %v5634 = vld [vmem:[#allocation3 + $0x5b0] sm:$0xff]
  %v5635 = vld [vmem:[#allocation3 + $0x5b8] sm:$0xff]
  %v5636 = vld [vmem:[#allocation3 + $0x5c0] sm:$0xff]
  %v5637 = vld [vmem:[#allocation3 + $0x5c8] sm:$0xff]
  %v5638 = vld [vmem:[#allocation3 + $0x5d0] sm:$0xff]
  %v5639 = vld [vmem:[#allocation3 + $0x5d8] sm:$0xff]
  %v5640 = vld [vmem:[#allocation3 + $0x5e0] sm:$0xff]
  %v5641 = vld [vmem:[#allocation3 + $0x5e8] sm:$0xff]
  %v5642 = vld [vmem:[#allocation3 + $0x5f0] sm:$0xff]
  %v5643 = vld [vmem:[#allocation3 + $0x5f8] sm:$0xff]
  %v5644 = vld [vmem:[#allocation3 + $0x600] sm:$0xff]
  %v5645 = vld [vmem:[#allocation3 + $0x608] sm:$0xff]
  %v5646 = vld [vmem:[#allocation3 + $0x610] sm:$0xff]
  %v5647 = vld [vmem:[#allocation3 + $0x618] sm:$0xff]
  %v5648 = vld [vmem:[#allocation3 + $0x620] sm:$0xff]
  %v5649 = vld [vmem:[#allocation3 + $0x628] sm:$0xff]
  %v5650 = vld [vmem:[#allocation3 + $0x630] sm:$0xff]
  %v5651 = vld [vmem:[#allocation3 + $0x638] sm:$0xff]
  %v5652 = vld [vmem:[#allocation3 + $0x640] sm:$0xff]
  %v5653 = vld [vmem:[#allocation3 + $0x648] sm:$0xff]
  %v5654 = vld [vmem:[#allocation3 + $0x650] sm:$0xff]
  %v5655 = vld [vmem:[#allocation3 + $0x658] sm:$0xff]
  %v5656 = vld [vmem:[#allocation3 + $0x660] sm:$0xff]
  %v5657 = vld [vmem:[#allocation3 + $0x668] sm:$0xff]
  %v5658 = vld [vmem:[#allocation3 + $0x670] sm:$0xff]
  %v5659 = vld [vmem:[#allocation3 + $0x678] sm:$0xff]
  %v5660 = vld [vmem:[#allocation3 + $0x680] sm:$0xff]
  %v5661 = vld [vmem:[#allocation3 + $0x688] sm:$0xff]
  %v5662 = vld [vmem:[#allocation3 + $0x690] sm:$0xff]
  %v5663 = vld [vmem:[#allocation3 + $0x698] sm:$0xff]
  %v5664 = vld [vmem:[#allocation3 + $0x6a0] sm:$0xff]
  %v5665 = vld [vmem:[#allocation3 + $0x6a8] sm:$0xff]
  %v5666 = vld [vmem:[#allocation3 + $0x6b0] sm:$0xff]
  %v5667 = vld [vmem:[#allocation3 + $0x6b8] sm:$0xff]
  %v5668 = vld [vmem:[#allocation3 + $0x6c0] sm:$0xff]
  %v5669 = vld [vmem:[#allocation3 + $0x6c8] sm:$0xff]
  %v5670 = vld [vmem:[#allocation3 + $0x6d0] sm:$0xff]
  %v5671 = vld [vmem:[#allocation3 + $0x6d8] sm:$0xff]
  %v5672 = vld [vmem:[#allocation3 + $0x6e0] sm:$0xff]
  %v5673 = vld [vmem:[#allocation3 + $0x6e8] sm:$0xff]
  %v5674 = vld [vmem:[#allocation3 + $0x6f0] sm:$0xff]
  %v5675 = vld [vmem:[#allocation3 + $0x6f8] sm:$0xff]
  %v5676 = vld [vmem:[#allocation3 + $0x700] sm:$0xff]
  %v5677 = vld [vmem:[#allocation3 + $0x708] sm:$0xff]
  %v5678 = vld [vmem:[#allocation3 + $0x710] sm:$0xff]
  %v5679 = vld [vmem:[#allocation3 + $0x718] sm:$0xff]
  %v5680 = vld [vmem:[#allocation3 + $0x720] sm:$0xff]
  %v5681 = vld [vmem:[#allocation3 + $0x728] sm:$0xff]
  %v5682 = vld [vmem:[#allocation3 + $0x730] sm:$0xff]
  %v5683 = vld [vmem:[#allocation3 + $0x738] sm:$0xff]
  %v5684 = vld [vmem:[#allocation3 + $0x740] sm:$0xff]
  %v5685 = vld [vmem:[#allocation3 + $0x748] sm:$0xff]
  %v5686 = vld [vmem:[#allocation3 + $0x750] sm:$0xff]
  %v5687 = vld [vmem:[#allocation3 + $0x758] sm:$0xff]
  %v5688 = vld [vmem:[#allocation3 + $0x760] sm:$0xff]
  %v5689 = vld [vmem:[#allocation3 + $0x768] sm:$0xff]
  %v5690 = vld [vmem:[#allocation3 + $0x770] sm:$0xff]
  %v5691 = vld [vmem:[#allocation3 + $0x778] sm:$0xff]
  %v5692 = vld [vmem:[#allocation3 + $0x780] sm:$0xff]
  %v5693 = vld [vmem:[#allocation3 + $0x788] sm:$0xff]
  %v5694 = vld [vmem:[#allocation3 + $0x790] sm:$0xff]
  %v5695 = vld [vmem:[#allocation3 + $0x798] sm:$0xff]
  %v5696 = vld [vmem:[#allocation3 + $0x7a0] sm:$0xff]
  %v5697 = vld [vmem:[#allocation3 + $0x7a8] sm:$0xff]
  %v5698 = vld [vmem:[#allocation3 + $0x7b0] sm:$0xff]
  %v5699 = vld [vmem:[#allocation3 + $0x7b8] sm:$0xff]
  %v5700 = vld [vmem:[#allocation3 + $0x7c0] sm:$0xff]
  %v5701 = vld [vmem:[#allocation3 + $0x7c8] sm:$0xff]
  %v5702 = vld [vmem:[#allocation3 + $0x7d0] sm:$0xff]
  %v5703 = vld [vmem:[#allocation3 + $0x7d8] sm:$0xff]
  %v5704 = vld [vmem:[#allocation3 + $0x7e0] sm:$0xff]
  %v5705 = vld [vmem:[#allocation3 + $0x7e8] sm:$0xff]
  %v5706 = vld [vmem:[#allocation3 + $0x7f0] sm:$0xff]
  %v5707 = vld [vmem:[#allocation3 + $0x7f8] sm:$0xff]
  %v5708 = vld [vmem:[#allocation3 + $0x800] sm:$0xff]
  %v5709 = vld [vmem:[#allocation3 + $0x808] sm:$0xff]
  %v5710 = vld [vmem:[#allocation3 + $0x810] sm:$0xff]
  %v5711 = vld [vmem:[#allocation3 + $0x818] sm:$0xff]
  %v5712 = vld [vmem:[#allocation3 + $0x820] sm:$0xff]
  %v5713 = vld [vmem:[#allocation3 + $0x828] sm:$0xff]
  %v5714 = vld [vmem:[#allocation3 + $0x830] sm:$0xff]
  %v5715 = vld [vmem:[#allocation3 + $0x838] sm:$0xff]
  %v5716 = vld [vmem:[#allocation3 + $0x840] sm:$0xff]
  %v5717 = vld [vmem:[#allocation3 + $0x848] sm:$0xff]
  %v5718 = vld [vmem:[#allocation3 + $0x850] sm:$0xff]
  %v5719 = vld [vmem:[#allocation3 + $0x858] sm:$0xff]
  %v5720 = vld [vmem:[#allocation3 + $0x860] sm:$0xff]
  %v5721 = vld [vmem:[#allocation3 + $0x868] sm:$0xff]
  %v5722 = vld [vmem:[#allocation3 + $0x870] sm:$0xff]
  %v5723 = vld [vmem:[#allocation3 + $0x878] sm:$0xff]
  %v5724 = vld [vmem:[#allocation3 + $0x880] sm:$0xff]
  %v5725 = vld [vmem:[#allocation3 + $0x888] sm:$0xff]
  %v5726 = vld [vmem:[#allocation3 + $0x890] sm:$0xff]
  %v5727 = vld [vmem:[#allocation3 + $0x898] sm:$0xff]
  %v5728 = vld [vmem:[#allocation3 + $0x8a0] sm:$0xff]
  %v5729 = vld [vmem:[#allocation3 + $0x8a8] sm:$0xff]
  %v5730 = vld [vmem:[#allocation3 + $0x8b0] sm:$0xff]
  %v5731 = vld [vmem:[#allocation3 + $0x8b8] sm:$0xff]
  %v5732 = vld [vmem:[#allocation3 + $0x8c0] sm:$0xff]
  %v5733 = vld [vmem:[#allocation3 + $0x8c8] sm:$0xff]
  %v5734 = vld [vmem:[#allocation3 + $0x8d0] sm:$0xff]
  %v5735 = vld [vmem:[#allocation3 + $0x8d8] sm:$0xff]
  %v5736 = vld [vmem:[#allocation3 + $0x8e0] sm:$0xff]
  %v5737 = vld [vmem:[#allocation3 + $0x8e8] sm:$0xff]
  %v5738 = vld [vmem:[#allocation3 + $0x8f0] sm:$0xff]
  %v5739 = vld [vmem:[#allocation3 + $0x8f8] sm:$0xff]
  %v5740 = vld [vmem:[%s2] sm:$0xf]
  %v5741 = vld [vmem:[%s2 + $0x4] sm:$0xf]
  %v5742 = vld [vmem:[%s2 + $0x8] sm:$0xf]
  %v5743 = vld [vmem:[%s2 + $0xc] sm:$0xf]
  %v5744 = vld [vmem:[%s2 + $0x10] sm:$0xf]
  %v5745 = vld [vmem:[%s2 + $0x14] sm:$0xf]
  %v5746 = vld [vmem:[%s2 + $0x18] sm:$0xf]
  %v5747 = vld [vmem:[%s2 + $0x1c] sm:$0xf]
  %v5748 = vld [vmem:[%s2 + $0x20] sm:$0xf]
  %v5749 = vld [vmem:[%s2 + $0x24] sm:$0xf]
  %v5750 = vld [vmem:[%s2 + $0x28] sm:$0xf]
  %v5751 = vld [vmem:[%s2 + $0x2c] sm:$0xf]
  %v5752 = vld [vmem:[%s2 + $0x30] sm:$0xf]
  %v5753 = vld [vmem:[%s2 + $0x34] sm:$0xf]
  %v5754 = vld [vmem:[%s2 + $0x38] sm:$0xf]
  %v5755 = vld [vmem:[%s2 + $0x3c] sm:$0xf]
  %v5756 = vld [vmem:[%s2 + $0x40] sm:$0xf]
  %v5757 = vld [vmem:[%s2 + $0x44] sm:$0xf]
  %v5758 = vld [vmem:[%s2 + $0x48] sm:$0xf]
  %v5759 = vld [vmem:[%s2 + $0x4c] sm:$0xf]
  %v5760 = vld [vmem:[%s2 + $0x50] sm:$0xf]
  %v5761 = vld [vmem:[%s2 + $0x54] sm:$0xf]
  %v5762 = vld [vmem:[%s2 + $0x58] sm:$0xf]
  %v5763 = vld [vmem:[%s2 + $0x5c] sm:$0xf]
  %v5764 = vld [vmem:[%s2 + $0x60] sm:$0xf]
  %v5765 = vld [vmem:[%s2 + $0x64] sm:$0xf]
  %v5766 = vld [vmem:[%s2 + $0x68] sm:$0xf]
  %v5767 = vld [vmem:[%s2 + $0x6c] sm:$0xf]
  %v5768 = vld [vmem:[%s2 + $0x70] sm:$0xf]
  %v5769 = vld [vmem:[%s2 + $0x74] sm:$0xf]
  %v5770 = vld [vmem:[%s2 + $0x78] sm:$0xf]
  %v5771 = vld [vmem:[%s2 + $0x7c] sm:$0xf]
  %v5772 = vld [vmem:[%s2 + $0x80] sm:$0xf]
  %v5773 = vld [vmem:[%s2 + $0x84] sm:$0xf]
  %v5774 = vld [vmem:[%s2 + $0x88] sm:$0xf]
  %v5775 = vld [vmem:[%s2 + $0x8c] sm:$0xf]
  %v5776 = vld [vmem:[%s2 + $0x90] sm:$0xf]
  %v5777 = vld [vmem:[%s2 + $0x94] sm:$0xf]
  %v5778 = vld [vmem:[%s2 + $0x98] sm:$0xf]
  %v5779 = vld [vmem:[%s2 + $0x9c] sm:$0xf]
  %v5780 = vld [vmem:[%s2 + $0xa0] sm:$0xf]
  %v5781 = vld [vmem:[%s2 + $0xa4] sm:$0xf]
  %v5782 = vld [vmem:[%s2 + $0xa8] sm:$0xf]
  %v5783 = vld [vmem:[%s2 + $0xac] sm:$0xf]
  %v5784 = vld [vmem:[%s2 + $0xb0] sm:$0xf]
  %v5785 = vld [vmem:[%s2 + $0xb4] sm:$0xf]
  %v5786 = vld [vmem:[%s2 + $0xb8] sm:$0xf]
  %v5787 = vld [vmem:[%s2 + $0xbc] sm:$0xf]
  %v5788 = vld [vmem:[%s2 + $0xc0] sm:$0xf]
  %v5789 = vld [vmem:[%s2 + $0xc4] sm:$0xf]
  %v5790 = vld [vmem:[%s2 + $0xc8] sm:$0xf]
  %v5791 = vld [vmem:[%s2 + $0xcc] sm:$0xf]
  %v5792 = vld [vmem:[%s2 + $0xd0] sm:$0xf]
  %v5793 = vld [vmem:[%s2 + $0xd4] sm:$0xf]
  %v5794 = vld [vmem:[%s2 + $0xd8] sm:$0xf]
  %v5795 = vld [vmem:[%s2 + $0xdc] sm:$0xf]
  %v5796 = vld [vmem:[%s2 + $0xe0] sm:$0xf]
  %v5797 = vld [vmem:[%s2 + $0xe4] sm:$0xf]
  %v5798 = vld [vmem:[%s2 + $0xe8] sm:$0xf]
  %v5799 = vld [vmem:[%s2 + $0xec] sm:$0xf]
  %v5800 = vld [vmem:[%s2 + $0xf0] sm:$0xf]
  %v5801 = vld [vmem:[%s2 + $0xf4] sm:$0xf]
  %v5802 = vld [vmem:[%s2 + $0xf8] sm:$0xf]
  %v5803 = vld [vmem:[%s2 + $0xfc] sm:$0xf]
  %v5804 = vld [vmem:[%s2 + $0x100] sm:$0xf]
  %v5805 = vld [vmem:[%s2 + $0x104] sm:$0xf]
  %v5806 = vld [vmem:[%s2 + $0x108] sm:$0xf]
  %v5807 = vld [vmem:[%s2 + $0x10c] sm:$0xf]
  %v5808 = vld [vmem:[%s2 + $0x110] sm:$0xf]
  %v5809 = vld [vmem:[%s2 + $0x114] sm:$0xf]
  %v5810 = vld [vmem:[%s2 + $0x118] sm:$0xf]
  %v5811 = vld [vmem:[%s2 + $0x11c] sm:$0xf]
  %v5812 = vld [vmem:[%s2 + $0x120] sm:$0xf]
  %v5813 = vld [vmem:[%s2 + $0x124] sm:$0xf]
  %v5814 = vld [vmem:[%s2 + $0x128] sm:$0xf]
  %v5815 = vld [vmem:[%s2 + $0x12c] sm:$0xf]
  %v5816 = vld [vmem:[%s2 + $0x130] sm:$0xf]
  %v5817 = vld [vmem:[%s2 + $0x134] sm:$0xf]
  %v5818 = vld [vmem:[%s2 + $0x138] sm:$0xf]
  %v5819 = vld [vmem:[%s2 + $0x13c] sm:$0xf]
  %v5820 = vld [vmem:[%s2 + $0x140] sm:$0xf]
  %v5821 = vld [vmem:[%s2 + $0x144] sm:$0xf]
  %v5822 = vld [vmem:[%s2 + $0x148] sm:$0xf]
  %v5823 = vld [vmem:[%s2 + $0x14c] sm:$0xf]
  %v5824 = vld [vmem:[%s2 + $0x150] sm:$0xf]
  %v5825 = vld [vmem:[%s2 + $0x154] sm:$0xf]
  %v5826 = vld [vmem:[%s2 + $0x158] sm:$0xf]
  %v5827 = vld [vmem:[%s2 + $0x15c] sm:$0xf]
  %v5828 = vld [vmem:[%s2 + $0x160] sm:$0xf]
  %v5829 = vld [vmem:[%s2 + $0x164] sm:$0xf]
  %v5830 = vld [vmem:[%s2 + $0x168] sm:$0xf]
  %v5831 = vld [vmem:[%s2 + $0x16c] sm:$0xf]
  %v5832 = vld [vmem:[%s2 + $0x170] sm:$0xf]
  %v5833 = vld [vmem:[%s2 + $0x174] sm:$0xf]
  %v5834 = vld [vmem:[%s2 + $0x178] sm:$0xf]
  %v5835 = vld [vmem:[%s2 + $0x17c] sm:$0xf]
  %v5836 = vld [vmem:[%s2 + $0x180] sm:$0xf]
  %v5837 = vld [vmem:[%s2 + $0x184] sm:$0xf]
  %v5838 = vld [vmem:[%s2 + $0x188] sm:$0xf]
  %v5839 = vld [vmem:[%s2 + $0x18c] sm:$0xf]
  %v5840 = vld [vmem:[%s2 + $0x190] sm:$0xf]
  %v5841 = vld [vmem:[%s2 + $0x194] sm:$0xf]
  %v5842 = vld [vmem:[%s2 + $0x198] sm:$0xf]
  %v5843 = vld [vmem:[%s2 + $0x19c] sm:$0xf]
  %v5844 = vld [vmem:[%s2 + $0x1a0] sm:$0xf]
  %v5845 = vld [vmem:[%s2 + $0x1a4] sm:$0xf]
  %v5846 = vld [vmem:[%s2 + $0x1a8] sm:$0xf]
  %v5847 = vld [vmem:[%s2 + $0x1ac] sm:$0xf]
  %v5848 = vld [vmem:[%s2 + $0x1b0] sm:$0xf]
  %v5849 = vld [vmem:[%s2 + $0x1b4] sm:$0xf]
  %v5850 = vld [vmem:[%s2 + $0x1b8] sm:$0xf]
  %v5851 = vld [vmem:[%s2 + $0x1bc] sm:$0xf]
  %v5852 = vld [vmem:[%s2 + $0x1c0] sm:$0xf]
  %v5853 = vld [vmem:[%s2 + $0x1c4] sm:$0xf]
  %v5854 = vld [vmem:[%s2 + $0x1c8] sm:$0xf]
  %v5855 = vld [vmem:[%s2 + $0x1cc] sm:$0xf]
  %v5856 = vld [vmem:[%s2 + $0x1d0] sm:$0xf]
  %v5857 = vld [vmem:[%s2 + $0x1d4] sm:$0xf]
  %v5858 = vld [vmem:[%s2 + $0x1d8] sm:$0xf]
  %v5859 = vld [vmem:[%s2 + $0x1dc] sm:$0xf]
  %v5860 = vld [vmem:[%s2 + $0x1e0] sm:$0xf]
  %v5861 = vld [vmem:[%s2 + $0x1e4] sm:$0xf]
  %v5862 = vld [vmem:[%s2 + $0x1e8] sm:$0xf]
  %v5863 = vld [vmem:[%s2 + $0x1ec] sm:$0xf]
  %v5864 = vld [vmem:[%s2 + $0x1f0] sm:$0xf]
  %v5865 = vld [vmem:[%s2 + $0x1f4] sm:$0xf]
  %v5866 = vld [vmem:[%s2 + $0x1f8] sm:$0xf]
  %v5867 = vld [vmem:[%s2 + $0x1fc] sm:$0xf]
  %v5868 = vld [vmem:[%s2 + $0x200] sm:$0xf]
  %v5869 = vld [vmem:[%s2 + $0x204] sm:$0xf]
  %v5870 = vld [vmem:[%s2 + $0x208] sm:$0xf]
  %v5871 = vld [vmem:[%s2 + $0x20c] sm:$0xf]
  %v5872 = vld [vmem:[%s2 + $0x210] sm:$0xf]
  %v5873 = vld [vmem:[%s2 + $0x214] sm:$0xf]
  %v5874 = vld [vmem:[%s2 + $0x218] sm:$0xf]
  %v5875 = vld [vmem:[%s2 + $0x21c] sm:$0xf]
  %v5876 = vld [vmem:[%s2 + $0x220] sm:$0xf]
  %v5877 = vld [vmem:[%s2 + $0x224] sm:$0xf]
  %v5878 = vld [vmem:[%s2 + $0x228] sm:$0xf]
  %v5879 = vld [vmem:[%s2 + $0x22c] sm:$0xf]
  %v5880 = vld [vmem:[%s2 + $0x230] sm:$0xf]
  %v5881 = vld [vmem:[%s2 + $0x234] sm:$0xf]
  %v5882 = vld [vmem:[%s2 + $0x238] sm:$0xf]
  %v5883 = vld [vmem:[%s2 + $0x23c] sm:$0xf]
  %v6028 = vunpack.c.l.b16 %v5740
  %v6029 = vunpack.c.l.b16 %v5741
  %v6030 = vunpack.c.l.b16 %v5742
  %v6031 = vunpack.c.l.b16 %v5743
  %v6032 = vunpack.c.l.b16 %v5744
  %v6033 = vunpack.c.l.b16 %v5745
  %v6034 = vunpack.c.l.b16 %v5746
  %v6035 = vunpack.c.l.b16 %v5747
  %v6036 = vunpack.c.l.b16 %v5748
  %v6037 = vunpack.c.l.b16 %v5749
  %v6038 = vunpack.c.l.b16 %v5750
  %v6039 = vunpack.c.l.b16 %v5751
  %v6040 = vunpack.c.l.b16 %v5752
  %v6041 = vunpack.c.l.b16 %v5753
  %v6042 = vunpack.c.l.b16 %v5754
  %v6043 = vunpack.c.l.b16 %v5755
  %v6044 = vunpack.c.l.b16 %v5756
  %v6045 = vunpack.c.l.b16 %v5757
  %v6046 = vunpack.c.l.b16 %v5758
  %v6047 = vunpack.c.l.b16 %v5759
  %v6048 = vunpack.c.l.b16 %v5760
  %v6049 = vunpack.c.l.b16 %v5761
  %v6050 = vunpack.c.l.b16 %v5762
  %v6051 = vunpack.c.l.b16 %v5763
  %v6052 = vunpack.c.l.b16 %v5764
  %v6053 = vunpack.c.l.b16 %v5765
  %v6054 = vunpack.c.l.b16 %v5766
  %v6055 = vunpack.c.l.b16 %v5767
  %v6056 = vunpack.c.l.b16 %v5768
  %v6057 = vunpack.c.l.b16 %v5769
  %v6058 = vunpack.c.l.b16 %v5770
  %v6059 = vunpack.c.l.b16 %v5771
  %v6060 = vunpack.c.l.b16 %v5772
  %v6061 = vunpack.c.l.b16 %v5773
  %v6062 = vunpack.c.l.b16 %v5774
  %v6063 = vunpack.c.l.b16 %v5775
  %v6064 = vunpack.c.l.b16 %v5776
  %v6065 = vunpack.c.l.b16 %v5777
  %v6066 = vunpack.c.l.b16 %v5778
  %v6067 = vunpack.c.l.b16 %v5779
  %v6068 = vunpack.c.l.b16 %v5780
  %v6069 = vunpack.c.l.b16 %v5781
  %v6070 = vunpack.c.l.b16 %v5782
  %v6071 = vunpack.c.l.b16 %v5783
  %v6072 = vunpack.c.l.b16 %v5784
  %v6073 = vunpack.c.l.b16 %v5785
  %v6074 = vunpack.c.l.b16 %v5786
  %v6075 = vunpack.c.l.b16 %v5787
  %v6076 = vunpack.c.l.b16 %v5788
  %v6077 = vunpack.c.l.b16 %v5789
  %v6078 = vunpack.c.l.b16 %v5790
  %v6079 = vunpack.c.l.b16 %v5791
  %v6080 = vunpack.c.l.b16 %v5792
  %v6081 = vunpack.c.l.b16 %v5793
  %v6082 = vunpack.c.l.b16 %v5794
  %v6083 = vunpack.c.l.b16 %v5795
  %v6084 = vunpack.c.l.b16 %v5796
  %v6085 = vunpack.c.l.b16 %v5797
  %v6086 = vunpack.c.l.b16 %v5798
  %v6087 = vunpack.c.l.b16 %v5799
  %v6088 = vunpack.c.l.b16 %v5800
  %v6089 = vunpack.c.l.b16 %v5801
  %v6090 = vunpack.c.l.b16 %v5802
  %v6091 = vunpack.c.l.b16 %v5803
  %v6092 = vunpack.c.l.b16 %v5804
  %v6093 = vunpack.c.l.b16 %v5805
  %v6094 = vunpack.c.l.b16 %v5806
  %v6095 = vunpack.c.l.b16 %v5807
  %v6096 = vunpack.c.l.b16 %v5808
  %v6097 = vunpack.c.l.b16 %v5809
  %v6098 = vunpack.c.l.b16 %v5810
  %v6099 = vunpack.c.l.b16 %v5811
  %v6100 = vunpack.c.l.b16 %v5812
  %v6101 = vunpack.c.l.b16 %v5813
  %v6102 = vunpack.c.l.b16 %v5814
  %v6103 = vunpack.c.l.b16 %v5815
  %v6104 = vunpack.c.l.b16 %v5816
  %v6105 = vunpack.c.l.b16 %v5817
  %v6106 = vunpack.c.l.b16 %v5818
  %v6107 = vunpack.c.l.b16 %v5819
  %v6108 = vunpack.c.l.b16 %v5820
  %v6109 = vunpack.c.l.b16 %v5821
  %v6110 = vunpack.c.l.b16 %v5822
  %v6111 = vunpack.c.l.b16 %v5823
  %v6112 = vunpack.c.l.b16 %v5824
  %v6113 = vunpack.c.l.b16 %v5825
  %v6114 = vunpack.c.l.b16 %v5826
  %v6115 = vunpack.c.l.b16 %v5827
  %v6116 = vunpack.c.l.b16 %v5828
  %v6117 = vunpack.c.l.b16 %v5829
  %v6118 = vunpack.c.l.b16 %v5830
  %v6119 = vunpack.c.l.b16 %v5831
  %v6120 = vunpack.c.l.b16 %v5832
  %v6121 = vunpack.c.l.b16 %v5833
  %v6122 = vunpack.c.l.b16 %v5834
  %v6123 = vunpack.c.l.b16 %v5835
  %v6124 = vunpack.c.l.b16 %v5836
  %v6125 = vunpack.c.l.b16 %v5837
  %v6126 = vunpack.c.l.b16 %v5838
  %v6127 = vunpack.c.l.b16 %v5839
  %v6128 = vunpack.c.l.b16 %v5840
  %v6129 = vunpack.c.l.b16 %v5841
  %v6130 = vunpack.c.l.b16 %v5842
  %v6131 = vunpack.c.l.b16 %v5843
  %v6132 = vunpack.c.l.b16 %v5844
  %v6133 = vunpack.c.l.b16 %v5845
  %v6134 = vunpack.c.l.b16 %v5846
  %v6135 = vunpack.c.l.b16 %v5847
  %v6136 = vunpack.c.l.b16 %v5848
  %v6137 = vunpack.c.l.b16 %v5849
  %v6138 = vunpack.c.l.b16 %v5850
  %v6139 = vunpack.c.l.b16 %v5851
  %v6140 = vunpack.c.l.b16 %v5852
  %v6141 = vunpack.c.l.b16 %v5853
  %v6142 = vunpack.c.l.b16 %v5854
  %v6143 = vunpack.c.l.b16 %v5855
  %v6144 = vunpack.c.l.b16 %v5856
  %v6145 = vunpack.c.l.b16 %v5857
  %v6146 = vunpack.c.l.b16 %v5858
  %v6147 = vunpack.c.l.b16 %v5859
  %v6148 = vunpack.c.l.b16 %v5860
  %v6149 = vunpack.c.l.b16 %v5861
  %v6150 = vunpack.c.l.b16 %v5862
  %v6151 = vunpack.c.l.b16 %v5863
  %v6152 = vunpack.c.l.b16 %v5864
  %v6153 = vunpack.c.l.b16 %v5865
  %v6154 = vunpack.c.l.b16 %v5866
  %v6155 = vunpack.c.l.b16 %v5867
  %v6156 = vunpack.c.l.b16 %v5868
  %v6157 = vunpack.c.l.b16 %v5869
  %v6158 = vunpack.c.l.b16 %v5870
  %v6159 = vunpack.c.l.b16 %v5871
  %v6160 = vunpack.c.l.b16 %v5872
  %v6161 = vunpack.c.l.b16 %v5873
  %v6162 = vunpack.c.l.b16 %v5874
  %v6163 = vunpack.c.l.b16 %v5875
  %v6164 = vunpack.c.l.b16 %v5876
  %v6165 = vunpack.c.l.b16 %v5877
  %v6166 = vunpack.c.l.b16 %v5878
  %v6167 = vunpack.c.l.b16 %v5879
  %v6168 = vunpack.c.l.b16 %v5880
  %v6169 = vunpack.c.l.b16 %v5881
  %v6170 = vunpack.c.l.b16 %v5882
  %v6171 = vunpack.c.l.b16 %v5883
  %v6172 = vpack.c.b16 %v6029, %v6028
  %v6173 = vpack.c.b16 %v6031, %v6030
  %v6174 = vpack.c.b16 %v6033, %v6032
  %v6175 = vpack.c.b16 %v6035, %v6034
  %v6176 = vpack.c.b16 %v6037, %v6036
  %v6177 = vpack.c.b16 %v6039, %v6038
  %v6178 = vpack.c.b16 %v6041, %v6040
  %v6179 = vpack.c.b16 %v6043, %v6042
  %v6180 = vpack.c.b16 %v6045, %v6044
  %v6181 = vpack.c.b16 %v6047, %v6046
  %v6182 = vpack.c.b16 %v6049, %v6048
  %v6183 = vpack.c.b16 %v6051, %v6050
  %v6184 = vpack.c.b16 %v6053, %v6052
  %v6185 = vpack.c.b16 %v6055, %v6054
  %v6186 = vpack.c.b16 %v6057, %v6056
  %v6187 = vpack.c.b16 %v6059, %v6058
  %v6188 = vpack.c.b16 %v6061, %v6060
  %v6189 = vpack.c.b16 %v6063, %v6062
  %v6190 = vpack.c.b16 %v6065, %v6064
  %v6191 = vpack.c.b16 %v6067, %v6066
  %v6192 = vpack.c.b16 %v6069, %v6068
  %v6193 = vpack.c.b16 %v6071, %v6070
  %v6194 = vpack.c.b16 %v6073, %v6072
  %v6195 = vpack.c.b16 %v6075, %v6074
  %v6196 = vpack.c.b16 %v6077, %v6076
  %v6197 = vpack.c.b16 %v6079, %v6078
  %v6198 = vpack.c.b16 %v6081, %v6080
  %v6199 = vpack.c.b16 %v6083, %v6082
  %v6200 = vpack.c.b16 %v6085, %v6084
  %v6201 = vpack.c.b16 %v6087, %v6086
  %v6202 = vpack.c.b16 %v6089, %v6088
  %v6203 = vpack.c.b16 %v6091, %v6090
  %v6204 = vpack.c.b16 %v6093, %v6092
  %v6205 = vpack.c.b16 %v6095, %v6094
  %v6206 = vpack.c.b16 %v6097, %v6096
  %v6207 = vpack.c.b16 %v6099, %v6098
  %v6208 = vpack.c.b16 %v6101, %v6100
  %v6209 = vpack.c.b16 %v6103, %v6102
  %v6210 = vpack.c.b16 %v6105, %v6104
  %v6211 = vpack.c.b16 %v6107, %v6106
  %v6212 = vpack.c.b16 %v6109, %v6108
  %v6213 = vpack.c.b16 %v6111, %v6110
  %v6214 = vpack.c.b16 %v6113, %v6112
  %v6215 = vpack.c.b16 %v6115, %v6114
  %v6216 = vpack.c.b16 %v6117, %v6116
  %v6217 = vpack.c.b16 %v6119, %v6118
  %v6218 = vpack.c.b16 %v6121, %v6120
  %v6219 = vpack.c.b16 %v6123, %v6122
  %v6220 = vpack.c.b16 %v6125, %v6124
  %v6221 = vpack.c.b16 %v6127, %v6126
  %v6222 = vpack.c.b16 %v6129, %v6128
  %v6223 = vpack.c.b16 %v6131, %v6130
  %v6224 = vpack.c.b16 %v6133, %v6132
  %v6225 = vpack.c.b16 %v6135, %v6134
  %v6226 = vpack.c.b16 %v6137, %v6136
  %v6227 = vpack.c.b16 %v6139, %v6138
  %v6228 = vpack.c.b16 %v6141, %v6140
  %v6229 = vpack.c.b16 %v6143, %v6142
  %v6230 = vpack.c.b16 %v6145, %v6144
  %v6231 = vpack.c.b16 %v6147, %v6146
  %v6232 = vpack.c.b16 %v6149, %v6148
  %v6233 = vpack.c.b16 %v6151, %v6150
  %v6234 = vpack.c.b16 %v6153, %v6152
  %v6235 = vpack.c.b16 %v6155, %v6154
  %v6236 = vpack.c.b16 %v6157, %v6156
  %v6237 = vpack.c.b16 %v6159, %v6158
  %v6238 = vpack.c.b16 %v6161, %v6160
  %v6239 = vpack.c.b16 %v6163, %v6162
  %v6240 = vpack.c.b16 %v6165, %v6164
  %v6241 = vpack.c.b16 %v6167, %v6166
  %v6242 = vpack.c.b16 %v6169, %v6168
  %v6243 = vpack.c.b16 %v6171, %v6170
  %6316 = vmatprep.subr.bf16.mxu0 0
  %6317 = vmatpush1.bf16.msra.mxu0 %v6172
  %6318 = vmatprep.subr.bf16.mxu0 0
  %6319 = vmatpush1.bf16.msra.mxu0 %v6173
  %6320 = vmatprep.subr.bf16.mxu0 0
  %6321 = vmatpush1.bf16.msra.mxu0 %v6174
  %6322 = vmatprep.subr.bf16.mxu0 0
  %6323 = vmatpush1.bf16.msra.mxu0 %v6175
  %6324 = vmatprep.subr.bf16.mxu0 0
  %6325 = vmatpush1.bf16.msra.mxu0 %v6176
  %6326 = vmatprep.subr.bf16.mxu0 0
  %6327 = vmatpush1.bf16.msra.mxu0 %v6177
  %6328 = vmatprep.subr.bf16.mxu0 0
  %6329 = vmatpush1.bf16.msra.mxu0 %v6178
  %6330 = vmatprep.subr.bf16.mxu0 0
  %6331 = vmatpush1.bf16.msra.mxu0 %v6179
  %6332 = vmatprep.subr.bf16.mxu0 0
  %6333 = vmatpush1.bf16.msra.mxu0 %v6180
  %6334 = vmatprep.subr.bf16.mxu0 0
  %6335 = vmatpush1.bf16.msra.mxu0 %v6181
  %6336 = vmatprep.subr.bf16.mxu0 0
  %6337 = vmatpush1.bf16.msra.mxu0 %v6182
  %6338 = vmatprep.subr.bf16.mxu0 0
  %6339 = vmatpush1.bf16.msra.mxu0 %v6183
  %6340 = vmatprep.subr.bf16.mxu0 0
  %6341 = vmatpush1.bf16.msra.mxu0 %v6184
  %6342 = vmatprep.subr.bf16.mxu0 0
  %6343 = vmatpush1.bf16.msra.mxu0 %v6185
  %6344 = vmatprep.subr.bf16.mxu0 0
  %6345 = vmatpush1.bf16.msra.mxu0 %v6186
  %6346 = vmatprep.subr.bf16.mxu0 0
  %6347 = vmatpush1.bf16.msra.mxu0 %v6187
  %6348 = vmatprep.mubr.bf16.mxu0 %v5453
  %6349 = vmatmul.mubr.bf16.gmra.mrb[0].mxu0 %v5452
  %v6350 = vpop.f32.mrb[0].mxu0
  %v6351 = vadd.f32 0.0, %v6350
  %v6352 = vpop.f32.mrb[0].mxu0
  %v6353 = vpop.f32.mrb[0].mxu0
  %v6354 = vadd.f32 0.0, %v6353
  %v6355 = vpop.f32.mrb[0].mxu0
  %6356 = vmatprep.mubr.bf16.mxu0 %v5462
  %6357 = vmatmul.mubr.bf16.gmra.mrb[0].mxu0 %v5461
  %v6358 = vpop.f32.mrb[0].mxu0
  %v6359 = vadd.f32 0.0, %v6358
  %v6360 = vpop.f32.mrb[0].mxu0
  %v6361 = vpop.f32.mrb[0].mxu0
  %v6362 = vadd.f32 0.0, %v6361
  %v6363 = vpop.f32.mrb[0].mxu0
  %6364 = vmatprep.mubr.bf16.mxu0 %v5471
  %6365 = vmatmul.mubr.bf16.gmra.mrb[0].mxu0 %v5470
  %v6366 = vpop.f32.mrb[0].mxu0
  %v6367 = vadd.f32 0.0, %v6366
  %v6368 = vpop.f32.mrb[0].mxu0
  %v6369 = vpop.f32.mrb[0].mxu0
  %v6370 = vadd.f32 0.0, %v6369
  %v6371 = vpop.f32.mrb[0].mxu0
  %6372 = vmatprep.mubr.bf16.mxu0 %v5480
  %6373 = vmatmul.mubr.bf16.gmra.mrb[0].mxu0 %v5479
  %v6374 = vpop.f32.mrb[0].mxu0
  %v6375 = vadd.f32 0.0, %v6374
  %v6376 = vpop.f32.mrb[0].mxu0
  %v6377 = vpop.f32.mrb[0].mxu0
  %v6378 = vadd.f32 0.0, %v6377
  %v6379 = vpop.f32.mrb[0].mxu0
  %6380 = vmatprep.mubr.bf16.mxu0 %v5489
  %6381 = vmatmul.mubr.bf16.gmra.mrb[0].mxu0 %v5488
  %v6382 = vpop.f32.mrb[0].mxu0
  %v6383 = vadd.f32 0.0, %v6382
  %v6384 = vpop.f32.mrb[0].mxu0
  %v6385 = vpop.f32.mrb[0].mxu0
  %v6386 = vadd.f32 0.0, %v6385
  %v6387 = vpop.f32.mrb[0].mxu0
  %6388 = vmatprep.mubr.bf16.mxu0 %v5498
  %6389 = vmatmul.mubr.bf16.gmra.mrb[0].mxu0 %v5497
  %v6390 = vpop.f32.mrb[0].mxu0
  %v6391 = vadd.f32 0.0, %v6390
  %v6392 = vpop.f32.mrb[0].mxu0
  %v6393 = vpop.f32.mrb[0].mxu0
  %v6394 = vadd.f32 0.0, %v6393
  %v6395 = vpop.f32.mrb[0].mxu0
  %6396 = vmatprep.mubr.bf16.mxu0 %v5507
  %6397 = vmatmul.mubr.bf16.gmra.mrb[0].mxu0 %v5506
  %v6398 = vpop.f32.mrb[0].mxu0
  %v6399 = vadd.f32 0.0, %v6398
  %v6400 = vpop.f32.mrb[0].mxu0
  %v6401 = vpop.f32.mrb[0].mxu0
  %v6402 = vadd.f32 0.0, %v6401
  %v6403 = vpop.f32.mrb[0].mxu0
  %6404 = vmatprep.mubr.bf16.mxu0 %v5516
  %6405 = vmatmul.mubr.bf16.gmra.mrb[0].mxu0 %v5515
  %v6406 = vpop.f32.mrb[0].mxu0
  %v6407 = vadd.f32 0.0, %v6406
  %v6408 = vpop.f32.mrb[0].mxu0
  %v6409 = vpop.f32.mrb[0].mxu0
  %v6410 = vadd.f32 0.0, %v6409
  %v6411 = vpop.f32.mrb[0].mxu0
  %6412 = vmatprep.mubr.bf16.mxu0 %v5525
  %6413 = vmatmul.mubr.bf16.gmra.mrb[0].mxu0 %v5524
  %v6414 = vpop.f32.mrb[0].mxu0
  %v6415 = vadd.f32 0.0, %v6414
  %v6416 = vpop.f32.mrb[0].mxu0
  %v6417 = vpop.f32.mrb[0].mxu0
  %v6418 = vadd.f32 0.0, %v6417
  %v6419 = vpop.f32.mrb[0].mxu0
  %6420 = vmatprep.mubr.bf16.mxu0 %v5534
  %6421 = vmatmul.mubr.bf16.gmra.mrb[0].mxu0 %v5533
  %v6422 = vpop.f32.mrb[0].mxu0
  %v6423 = vadd.f32 0.0, %v6422
  %v6424 = vpop.f32.mrb[0].mxu0
  %v6425 = vpop.f32.mrb[0].mxu0
  %v6426 = vadd.f32 0.0, %v6425
  %v6427 = vpop.f32.mrb[0].mxu0
  %6428 = vmatprep.mubr.bf16.mxu0 %v5543
  %6429 = vmatmul.mubr.bf16.gmra.mrb[0].mxu0 %v5542
  %v6430 = vpop.f32.mrb[0].mxu0
  %v6431 = vadd.f32 0.0, %v6430
  %v6432 = vpop.f32.mrb[0].mxu0
  %v6433 = vpop.f32.mrb[0].mxu0
  %v6434 = vadd.f32 0.0, %v6433
  %v6435 = vpop.f32.mrb[0].mxu0
  %6436 = vmatprep.mubr.bf16.mxu0 %v5552
  %6437 = vmatmul.mubr.bf16.gmra.mrb[0].mxu0 %v5551
  %v6438 = vpop.f32.mrb[0].mxu0
  %v6439 = vadd.f32 0.0, %v6438
  %v6440 = vpop.f32.mrb[0].mxu0
  %v6441 = vpop.f32.mrb[0].mxu0
  %v6442 = vadd.f32 0.0, %v6441
  %v6443 = vpop.f32.mrb[0].mxu0
  %6444 = vmatprep.mubr.bf16.mxu0 %v5561
  %6445 = vmatmul.mubr.bf16.gmra.mrb[0].mxu0 %v5560
  %v6446 = vpop.f32.mrb[0].mxu0
  %v6447 = vadd.f32 0.0, %v6446
  %v6448 = vpop.f32.mrb[0].mxu0
  %v6449 = vpop.f32.mrb[0].mxu0
  %v6450 = vadd.f32 0.0, %v6449
  %v6451 = vpop.f32.mrb[0].mxu0
  %6452 = vmatprep.mubr.bf16.mxu0 %v5570
  %6453 = vmatmul.mubr.bf16.gmra.mrb[0].mxu0 %v5569
  %v6454 = vpop.f32.mrb[0].mxu0
  %v6455 = vadd.f32 0.0, %v6454
  %v6456 = vpop.f32.mrb[0].mxu0
  %v6457 = vpop.f32.mrb[0].mxu0
  %v6458 = vadd.f32 0.0, %v6457
  %v6459 = vpop.f32.mrb[0].mxu0
  %6460 = vmatprep.mubr.bf16.mxu0 %v5579
  %6461 = vmatmul.mubr.bf16.gmra.mrb[0].mxu0 %v5578
  %v6462 = vpop.f32.mrb[0].mxu0
  %v6463 = vadd.f32 0.0, %v6462
  %v6464 = vpop.f32.mrb[0].mxu0
  %v6465 = vpop.f32.mrb[0].mxu0
  %v6466 = vadd.f32 0.0, %v6465
  %v6467 = vpop.f32.mrb[0].mxu0
  %6468 = vmatprep.mubr.bf16.mxu0 %v5588
  %6469 = vmatmul.mubr.bf16.gmra.mrb[0].mxu0 %v5587
  %v6470 = vpop.f32.mrb[0].mxu0
  %v6471 = vadd.f32 0.0, %v6470
  %v6472 = vpop.f32.mrb[0].mxu0
  %v6473 = vpop.f32.mrb[0].mxu0
  %v6474 = vadd.f32 0.0, %v6473
  %v6475 = vpop.f32.mrb[0].mxu0
  %6476 = vmatprep.mubr.bf16.mxu0 %v5597
  %6477 = vmatmul.mubr.bf16.gmra.mrb[0].mxu0 %v5596
  %v6478 = vpop.f32.mrb[0].mxu0
  %v6479 = vadd.f32 0.0, %v6478
  %v6480 = vpop.f32.mrb[0].mxu0
  %v6481 = vpop.f32.mrb[0].mxu0
  %v6482 = vadd.f32 0.0, %v6481
  %v6483 = vpop.f32.mrb[0].mxu0
  %6484 = vmatprep.mubr.bf16.mxu0 %v5606
  %6485 = vmatmul.mubr.bf16.gmra.mrb[0].mxu0 %v5605
  %v6486 = vpop.f32.mrb[0].mxu0
  %v6487 = vadd.f32 0.0, %v6486
  %v6488 = vpop.f32.mrb[0].mxu0
  %v6489 = vpop.f32.mrb[0].mxu0
  %v6490 = vadd.f32 0.0, %v6489
  %v6491 = vpop.f32.mrb[0].mxu0
  %6492 = vmatprep.mubr.bf16.mxu0 %v5615
  %6493 = vmatmul.mubr.bf16.gmra.mrb[0].mxu0 %v5614
  %v6494 = vpop.f32.mrb[0].mxu0
  %v6495 = vadd.f32 0.0, %v6494
  %v6496 = vpop.f32.mrb[0].mxu0
  %v6497 = vpop.f32.mrb[0].mxu0
  %v6498 = vadd.f32 0.0, %v6497
  %v6499 = vpop.f32.mrb[0].mxu0
  %6500 = vmatprep.mubr.bf16.mxu0 %v5624
  %6501 = vmatmul.mubr.bf16.gmra.mrb[0].mxu0 %v5623
  %v6502 = vpop.f32.mrb[0].mxu0
  %v6503 = vadd.f32 0.0, %v6502
  %v6504 = vpop.f32.mrb[0].mxu0
  %v6505 = vpop.f32.mrb[0].mxu0
  %v6506 = vadd.f32 0.0, %v6505
  %v6507 = vpop.f32.mrb[0].mxu0
  %6508 = vmatprep.mubr.bf16.mxu0 %v5633
  %6509 = vmatmul.mubr.bf16.gmra.mrb[0].mxu0 %v5632
  %v6510 = vpop.f32.mrb[0].mxu0
  %v6511 = vadd.f32 0.0, %v6510
  %v6512 = vpop.f32.mrb[0].mxu0
  %v6513 = vpop.f32.mrb[0].mxu0
  %v6514 = vadd.f32 0.0, %v6513
  %v6515 = vpop.f32.mrb[0].mxu0
  %6516 = vmatprep.mubr.bf16.mxu0 %v5642
  %6517 = vmatmul.mubr.bf16.gmra.mrb[0].mxu0 %v5641
  %v6518 = vpop.f32.mrb[0].mxu0
  %v6519 = vadd.f32 0.0, %v6518
  %v6520 = vpop.f32.mrb[0].mxu0
  %v6521 = vpop.f32.mrb[0].mxu0
  %v6522 = vadd.f32 0.0, %v6521
  %v6523 = vpop.f32.mrb[0].mxu0
  %6524 = vmatprep.mubr.bf16.mxu0 %v5651
  %6525 = vmatmul.mubr.bf16.gmra.mrb[0].mxu0 %v5650
  %v6526 = vpop.f32.mrb[0].mxu0
  %v6527 = vadd.f32 0.0, %v6526
  %v6528 = vpop.f32.mrb[0].mxu0
  %v6529 = vpop.f32.mrb[0].mxu0
  %v6530 = vadd.f32 0.0, %v6529
  %v6531 = vpop.f32.mrb[0].mxu0
  %6532 = vmatprep.mubr.bf16.mxu0 %v5660
  %6533 = vmatmul.mubr.bf16.gmra.mrb[0].mxu0 %v5659
  %v6534 = vpop.f32.mrb[0].mxu0
  %v6535 = vadd.f32 0.0, %v6534
  %v6536 = vpop.f32.mrb[0].mxu0
  %v6537 = vpop.f32.mrb[0].mxu0
  %v6538 = vadd.f32 0.0, %v6537
  %v6539 = vpop.f32.mrb[0].mxu0
  %6540 = vmatprep.mubr.bf16.mxu0 %v5669
  %6541 = vmatmul.mubr.bf16.gmra.mrb[0].mxu0 %v5668
  %v6542 = vpop.f32.mrb[0].mxu0
  %v6543 = vadd.f32 0.0, %v6542
  %v6544 = vpop.f32.mrb[0].mxu0
  %v6545 = vpop.f32.mrb[0].mxu0
  %v6546 = vadd.f32 0.0, %v6545
  %v6547 = vpop.f32.mrb[0].mxu0
  %6548 = vmatprep.mubr.bf16.mxu0 %v5678
  %6549 = vmatmul.mubr.bf16.gmra.mrb[0].mxu0 %v5677
  %v6550 = vpop.f32.mrb[0].mxu0
  %v6551 = vadd.f32 0.0, %v6550
  %v6552 = vpop.f32.mrb[0].mxu0
  %v6553 = vpop.f32.mrb[0].mxu0
  %v6554 = vadd.f32 0.0, %v6553
  %v6555 = vpop.f32.mrb[0].mxu0
  %6556 = vmatprep.mubr.bf16.mxu0 %v5687
  %6557 = vmatmul.mubr.bf16.gmra.mrb[0].mxu0 %v5686
  %v6558 = vpop.f32.mrb[0].mxu0
  %v6559 = vadd.f32 0.0, %v6558
  %v6560 = vpop.f32.mrb[0].mxu0
  %v6561 = vpop.f32.mrb[0].mxu0
  %v6562 = vadd.f32 0.0, %v6561
  %v6563 = vpop.f32.mrb[0].mxu0
  %6564 = vmatprep.mubr.bf16.mxu0 %v5696
  %6565 = vmatmul.mubr.bf16.gmra.mrb[0].mxu0 %v5695
  %v6566 = vpop.f32.mrb[0].mxu0
  %v6567 = vadd.f32 0.0, %v6566
  %v6568 = vpop.f32.mrb[0].mxu0
  %v6569 = vpop.f32.mrb[0].mxu0
  %v6570 = vadd.f32 0.0, %v6569
  %v6571 = vpop.f32.mrb[0].mxu0
  %6572 = vmatprep.mubr.bf16.mxu0 %v5705
  %6573 = vmatmul.mubr.bf16.gmra.mrb[0].mxu0 %v5704
  %v6574 = vpop.f32.mrb[0].mxu0
  %v6575 = vadd.f32 0.0, %v6574
  %v6576 = vpop.f32.mrb[0].mxu0
  %v6577 = vpop.f32.mrb[0].mxu0
  %v6578 = vadd.f32 0.0, %v6577
  %v6579 = vpop.f32.mrb[0].mxu0
  %6580 = vmatprep.mubr.bf16.mxu0 %v5714
  %6581 = vmatmul.mubr.bf16.gmra.mrb[0].mxu0 %v5713
  %v6582 = vpop.f32.mrb[0].mxu0
  %v6583 = vadd.f32 0.0, %v6582
  %v6584 = vpop.f32.mrb[0].mxu0
  %v6585 = vpop.f32.mrb[0].mxu0
  %v6586 = vadd.f32 0.0, %v6585
  %v6587 = vpop.f32.mrb[0].mxu0
  %6588 = vmatprep.mubr.bf16.mxu0 %v5723
  %6589 = vmatmul.mubr.bf16.gmra.mrb[0].mxu0 %v5722
  %v6590 = vpop.f32.mrb[0].mxu0
  %v6591 = vadd.f32 0.0, %v6590
  %v6592 = vpop.f32.mrb[0].mxu0
  %v6593 = vpop.f32.mrb[0].mxu0
  %v6594 = vadd.f32 0.0, %v6593
  %v6595 = vpop.f32.mrb[0].mxu0
  %6596 = vmatprep.mubr.bf16.mxu0 %v5732
  %6597 = vmatmul.mubr.bf16.gmra.mrb[0].mxu0 %v5731
  %v6598 = vpop.f32.mrb[0].mxu0
  %v6599 = vadd.f32 0.0, %v6598
  %v6600 = vpop.f32.mrb[0].mxu0
  %v6601 = vpop.f32.mrb[0].mxu0
  %v6602 = vadd.f32 0.0, %v6601
  %v6603 = vpop.f32.mrb[0].mxu0
  %6604 = vdwg.mxu0
  %6605 = vmatprep.subr.bf16.mxu0 0
  %6606 = vmatpush1.bf16.msra.mxu0 %v6188
  %6607 = vmatprep.subr.bf16.mxu0 0
  %6608 = vmatpush1.bf16.msra.mxu0 %v6189
  %6609 = vmatprep.subr.bf16.mxu0 0
  %6610 = vmatpush1.bf16.msra.mxu0 %v6190
  %6611 = vmatprep.subr.bf16.mxu0 0
  %6612 = vmatpush1.bf16.msra.mxu0 %v6191
  %6613 = vmatprep.subr.bf16.mxu0 0
  %6614 = vmatpush1.bf16.msra.mxu0 %v6192
  %6615 = vmatprep.subr.bf16.mxu0 0
  %6616 = vmatpush1.bf16.msra.mxu0 %v6193
  %6617 = vmatprep.subr.bf16.mxu0 0
  %6618 = vmatpush1.bf16.msra.mxu0 %v6194
  %6619 = vmatprep.subr.bf16.mxu0 0
  %6620 = vmatpush1.bf16.msra.mxu0 %v6195
  %6621 = vmatprep.subr.bf16.mxu0 0
  %6622 = vmatpush1.bf16.msra.mxu0 %v6196
  %6623 = vmatprep.subr.bf16.mxu0 0
  %6624 = vmatpush1.bf16.msra.mxu0 %v6197
  %6625 = vmatprep.subr.bf16.mxu0 0
  %6626 = vmatpush1.bf16.msra.mxu0 %v6198
  %6627 = vmatprep.subr.bf16.mxu0 0
  %6628 = vmatpush1.bf16.msra.mxu0 %v6199
  %6629 = vmatprep.subr.bf16.mxu0 0
  %6630 = vmatpush1.bf16.msra.mxu0 %v6200
  %6631 = vmatprep.subr.bf16.mxu0 0
  %6632 = vmatpush1.bf16.msra.mxu0 %v6201
  %6633 = vmatprep.subr.bf16.mxu0 0
  %6634 = vmatpush1.bf16.msra.mxu0 %v6202
  %6635 = vmatprep.subr.bf16.mxu0 0
  %6636 = vmatpush1.bf16.msra.mxu0 %v6203
  %6637 = vmatprep.mubr.bf16.mxu0 %v5455
  %6638 = vmatmul.mubr.bf16.gmra.mrb[0].mxu0 %v5454
  %v6639 = vpop.f32.mrb[0].mxu0
  %v6640 = vadd.f32 %v6351, %v6639
  %v6641 = vpop.f32.mrb[0].mxu0
  %v6642 = vpop.f32.mrb[0].mxu0
  %v6643 = vadd.f32 %v6354, %v6642
  %v6644 = vpop.f32.mrb[0].mxu0
  %6645 = vmatprep.mubr.bf16.mxu0 %v5464
  %6646 = vmatmul.mubr.bf16.gmra.mrb[0].mxu0 %v5463
  %v6647 = vpop.f32.mrb[0].mxu0
  %v6648 = vadd.f32 %v6359, %v6647
  %v6649 = vpop.f32.mrb[0].mxu0
  %v6650 = vpop.f32.mrb[0].mxu0
  %v6651 = vadd.f32 %v6362, %v6650
  %v6652 = vpop.f32.mrb[0].mxu0
  %6653 = vmatprep.mubr.bf16.mxu0 %v5473
  %6654 = vmatmul.mubr.bf16.gmra.mrb[0].mxu0 %v5472
  %v6655 = vpop.f32.mrb[0].mxu0
  %v6656 = vadd.f32 %v6367, %v6655
  %v6657 = vpop.f32.mrb[0].mxu0
  %v6658 = vpop.f32.mrb[0].mxu0
  %v6659 = vadd.f32 %v6370, %v6658
  %v6660 = vpop.f32.mrb[0].mxu0
  %6661 = vmatprep.mubr.bf16.mxu0 %v5482
  %6662 = vmatmul.mubr.bf16.gmra.mrb[0].mxu0 %v5481
  %v6663 = vpop.f32.mrb[0].mxu0
  %v6664 = vadd.f32 %v6375, %v6663
  %v6665 = vpop.f32.mrb[0].mxu0
  %v6666 = vpop.f32.mrb[0].mxu0
  %v6667 = vadd.f32 %v6378, %v6666
  %v6668 = vpop.f32.mrb[0].mxu0
  %6669 = vmatprep.mubr.bf16.mxu0 %v5491
  %6670 = vmatmul.mubr.bf16.gmra.mrb[0].mxu0 %v5490
  %v6671 = vpop.f32.mrb[0].mxu0
  %v6672 = vadd.f32 %v6383, %v6671
  %v6673 = vpop.f32.mrb[0].mxu0
  %v6674 = vpop.f32.mrb[0].mxu0
  %v6675 = vadd.f32 %v6386, %v6674
  %v6676 = vpop.f32.mrb[0].mxu0
  %6677 = vmatprep.mubr.bf16.mxu0 %v5500
  %6678 = vmatmul.mubr.bf16.gmra.mrb[0].mxu0 %v5499
  %v6679 = vpop.f32.mrb[0].mxu0
  %v6680 = vadd.f32 %v6391, %v6679
  %v6681 = vpop.f32.mrb[0].mxu0
  %v6682 = vpop.f32.mrb[0].mxu0
  %v6683 = vadd.f32 %v6394, %v6682
  %v6684 = vpop.f32.mrb[0].mxu0
  %6685 = vmatprep.mubr.bf16.mxu0 %v5509
  %6686 = vmatmul.mubr.bf16.gmra.mrb[0].mxu0 %v5508
  %v6687 = vpop.f32.mrb[0].mxu0
  %v6688 = vadd.f32 %v6399, %v6687
  %v6689 = vpop.f32.mrb[0].mxu0
  %v6690 = vpop.f32.mrb[0].mxu0
  %v6691 = vadd.f32 %v6402, %v6690
  %v6692 = vpop.f32.mrb[0].mxu0
  %6693 = vmatprep.mubr.bf16.mxu0 %v5518
  %6694 = vmatmul.mubr.bf16.gmra.mrb[0].mxu0 %v5517
  %v6695 = vpop.f32.mrb[0].mxu0
  %v6696 = vadd.f32 %v6407, %v6695
  %v6697 = vpop.f32.mrb[0].mxu0
  %v6698 = vpop.f32.mrb[0].mxu0
  %v6699 = vadd.f32 %v6410, %v6698
  %v6700 = vpop.f32.mrb[0].mxu0
  %6701 = vmatprep.mubr.bf16.mxu0 %v5527
  %6702 = vmatmul.mubr.bf16.gmra.mrb[0].mxu0 %v5526
  %v6703 = vpop.f32.mrb[0].mxu0
  %v6704 = vadd.f32 %v6415, %v6703
  %v6705 = vpop.f32.mrb[0].mxu0
  %v6706 = vpop.f32.mrb[0].mxu0
  %v6707 = vadd.f32 %v6418, %v6706
  %v6708 = vpop.f32.mrb[0].mxu0
  %6709 = vmatprep.mubr.bf16.mxu0 %v5536
  %6710 = vmatmul.mubr.bf16.gmra.mrb[0].mxu0 %v5535
  %v6711 = vpop.f32.mrb[0].mxu0
  %v6712 = vadd.f32 %v6423, %v6711
  %v6713 = vpop.f32.mrb[0].mxu0
  %v6714 = vpop.f32.mrb[0].mxu0
  %v6715 = vadd.f32 %v6426, %v6714
  %v6716 = vpop.f32.mrb[0].mxu0
  %6717 = vmatprep.mubr.bf16.mxu0 %v5545
  %6718 = vmatmul.mubr.bf16.gmra.mrb[0].mxu0 %v5544
  %v6719 = vpop.f32.mrb[0].mxu0
  %v6720 = vadd.f32 %v6431, %v6719
  %v6721 = vpop.f32.mrb[0].mxu0
  %v6722 = vpop.f32.mrb[0].mxu0
  %v6723 = vadd.f32 %v6434, %v6722
  %v6724 = vpop.f32.mrb[0].mxu0
  %6725 = vmatprep.mubr.bf16.mxu0 %v5554
  %6726 = vmatmul.mubr.bf16.gmra.mrb[0].mxu0 %v5553
  %v6727 = vpop.f32.mrb[0].mxu0
  %v6728 = vadd.f32 %v6439, %v6727
  %v6729 = vpop.f32.mrb[0].mxu0
  %v6730 = vpop.f32.mrb[0].mxu0
  %v6731 = vadd.f32 %v6442, %v6730
  %v6732 = vpop.f32.mrb[0].mxu0
  %6733 = vmatprep.mubr.bf16.mxu0 %v5563
  %6734 = vmatmul.mubr.bf16.gmra.mrb[0].mxu0 %v5562
  %v6735 = vpop.f32.mrb[0].mxu0
  %v6736 = vadd.f32 %v6447, %v6735
  %v6737 = vpop.f32.mrb[0].mxu0
  %v6738 = vpop.f32.mrb[0].mxu0
  %v6739 = vadd.f32 %v6450, %v6738
  %v6740 = vpop.f32.mrb[0].mxu0
  %6741 = vmatprep.mubr.bf16.mxu0 %v5572
  %6742 = vmatmul.mubr.bf16.gmra.mrb[0].mxu0 %v5571
  %v6743 = vpop.f32.mrb[0].mxu0
  %v6744 = vadd.f32 %v6455, %v6743
  %v6745 = vpop.f32.mrb[0].mxu0
  %v6746 = vpop.f32.mrb[0].mxu0
  %v6747 = vadd.f32 %v6458, %v6746
  %v6748 = vpop.f32.mrb[0].mxu0
  %6749 = vmatprep.mubr.bf16.mxu0 %v5581
  %6750 = vmatmul.mubr.bf16.gmra.mrb[0].mxu0 %v5580
  %v6751 = vpop.f32.mrb[0].mxu0
  %v6752 = vadd.f32 %v6463, %v6751
  %v6753 = vpop.f32.mrb[0].mxu0
  %v6754 = vpop.f32.mrb[0].mxu0
  %v6755 = vadd.f32 %v6466, %v6754
  %v6756 = vpop.f32.mrb[0].mxu0
  %6757 = vmatprep.mubr.bf16.mxu0 %v5590
  %6758 = vmatmul.mubr.bf16.gmra.mrb[0].mxu0 %v5589
  %v6759 = vpop.f32.mrb[0].mxu0
  %v6760 = vadd.f32 %v6471, %v6759
  %v6761 = vpop.f32.mrb[0].mxu0
  %v6762 = vpop.f32.mrb[0].mxu0
  %v6763 = vadd.f32 %v6474, %v6762
  %v6764 = vpop.f32.mrb[0].mxu0
  %6765 = vmatprep.mubr.bf16.mxu0 %v5599
  %6766 = vmatmul.mubr.bf16.gmra.mrb[0].mxu0 %v5598
  %v6767 = vpop.f32.mrb[0].mxu0
  %v6768 = vadd.f32 %v6479, %v6767
  %v6769 = vpop.f32.mrb[0].mxu0
  %v6770 = vpop.f32.mrb[0].mxu0
  %v6771 = vadd.f32 %v6482, %v6770
  %v6772 = vpop.f32.mrb[0].mxu0
  %6773 = vmatprep.mubr.bf16.mxu0 %v5608
  %6774 = vmatmul.mubr.bf16.gmra.mrb[0].mxu0 %v5607
  %v6775 = vpop.f32.mrb[0].mxu0
  %v6776 = vadd.f32 %v6487, %v6775
  %v6777 = vpop.f32.mrb[0].mxu0
  %v6778 = vpop.f32.mrb[0].mxu0
  %v6779 = vadd.f32 %v6490, %v6778
  %v6780 = vpop.f32.mrb[0].mxu0
  %6781 = vmatprep.mubr.bf16.mxu0 %v5617
  %6782 = vmatmul.mubr.bf16.gmra.mrb[0].mxu0 %v5616
  %v6783 = vpop.f32.mrb[0].mxu0
  %v6784 = vadd.f32 %v6495, %v6783
  %v6785 = vpop.f32.mrb[0].mxu0
  %v6786 = vpop.f32.mrb[0].mxu0
  %v6787 = vadd.f32 %v6498, %v6786
  %v6788 = vpop.f32.mrb[0].mxu0
  %6789 = vmatprep.mubr.bf16.mxu0 %v5626
  %6790 = vmatmul.mubr.bf16.gmra.mrb[0].mxu0 %v5625
  %v6791 = vpop.f32.mrb[0].mxu0
  %v6792 = vadd.f32 %v6503, %v6791
  %v6793 = vpop.f32.mrb[0].mxu0
  %v6794 = vpop.f32.mrb[0].mxu0
  %v6795 = vadd.f32 %v6506, %v6794
  %v6796 = vpop.f32.mrb[0].mxu0
  %6797 = vmatprep.mubr.bf16.mxu0 %v5635
  %6798 = vmatmul.mubr.bf16.gmra.mrb[0].mxu0 %v5634
  %v6799 = vpop.f32.mrb[0].mxu0
  %v6800 = vadd.f32 %v6511, %v6799
  %v6801 = vpop.f32.mrb[0].mxu0
  %v6802 = vpop.f32.mrb[0].mxu0
  %v6803 = vadd.f32 %v6514, %v6802
  %v6804 = vpop.f32.mrb[0].mxu0
  %6805 = vmatprep.mubr.bf16.mxu0 %v5644
  %6806 = vmatmul.mubr.bf16.gmra.mrb[0].mxu0 %v5643
  %v6807 = vpop.f32.mrb[0].mxu0
  %v6808 = vadd.f32 %v6519, %v6807
  %v6809 = vpop.f32.mrb[0].mxu0
  %v6810 = vpop.f32.mrb[0].mxu0
  %v6811 = vadd.f32 %v6522, %v6810
  %v6812 = vpop.f32.mrb[0].mxu0
  %6813 = vmatprep.mubr.bf16.mxu0 %v5653
  %6814 = vmatmul.mubr.bf16.gmra.mrb[0].mxu0 %v5652
  %v6815 = vpop.f32.mrb[0].mxu0
  %v6816 = vadd.f32 %v6527, %v6815
  %v6817 = vpop.f32.mrb[0].mxu0
  %v6818 = vpop.f32.mrb[0].mxu0
  %v6819 = vadd.f32 %v6530, %v6818
  %v6820 = vpop.f32.mrb[0].mxu0
  %6821 = vmatprep.mubr.bf16.mxu0 %v5662
  %6822 = vmatmul.mubr.bf16.gmra.mrb[0].mxu0 %v5661
  %v6823 = vpop.f32.mrb[0].mxu0
  %v6824 = vadd.f32 %v6535, %v6823
  %v6825 = vpop.f32.mrb[0].mxu0
  %v6826 = vpop.f32.mrb[0].mxu0
  %v6827 = vadd.f32 %v6538, %v6826
  %v6828 = vpop.f32.mrb[0].mxu0
  %6829 = vmatprep.mubr.bf16.mxu0 %v5671
  %6830 = vmatmul.mubr.bf16.gmra.mrb[0].mxu0 %v5670
  %v6831 = vpop.f32.mrb[0].mxu0
  %v6832 = vadd.f32 %v6543, %v6831
  %v6833 = vpop.f32.mrb[0].mxu0
  %v6834 = vpop.f32.mrb[0].mxu0
  %v6835 = vadd.f32 %v6546, %v6834
  %v6836 = vpop.f32.mrb[0].mxu0
  %6837 = vmatprep.mubr.bf16.mxu0 %v5680
  %6838 = vmatmul.mubr.bf16.gmra.mrb[0].mxu0 %v5679
  %v6839 = vpop.f32.mrb[0].mxu0
  %v6840 = vadd.f32 %v6551, %v6839
  %v6841 = vpop.f32.mrb[0].mxu0
  %v6842 = vpop.f32.mrb[0].mxu0
  %v6843 = vadd.f32 %v6554, %v6842
  %v6844 = vpop.f32.mrb[0].mxu0
  %6845 = vmatprep.mubr.bf16.mxu0 %v5689
  %6846 = vmatmul.mubr.bf16.gmra.mrb[0].mxu0 %v5688
  %v6847 = vpop.f32.mrb[0].mxu0
  %v6848 = vadd.f32 %v6559, %v6847
  %v6849 = vpop.f32.mrb[0].mxu0
  %v6850 = vpop.f32.mrb[0].mxu0
  %v6851 = vadd.f32 %v6562, %v6850
  %v6852 = vpop.f32.mrb[0].mxu0
  %6853 = vmatprep.mubr.bf16.mxu0 %v5698
  %6854 = vmatmul.mubr.bf16.gmra.mrb[0].mxu0 %v5697
  %v6855 = vpop.f32.mrb[0].mxu0
  %v6856 = vadd.f32 %v6567, %v6855
  %v6857 = vpop.f32.mrb[0].mxu0
  %v6858 = vpop.f32.mrb[0].mxu0
  %v6859 = vadd.f32 %v6570, %v6858
  %v6860 = vpop.f32.mrb[0].mxu0
  %6861 = vmatprep.mubr.bf16.mxu0 %v5707
  %6862 = vmatmul.mubr.bf16.gmra.mrb[0].mxu0 %v5706
  %v6863 = vpop.f32.mrb[0].mxu0
  %v6864 = vadd.f32 %v6575, %v6863
  %v6865 = vpop.f32.mrb[0].mxu0
  %v6866 = vpop.f32.mrb[0].mxu0
  %v6867 = vadd.f32 %v6578, %v6866
  %v6868 = vpop.f32.mrb[0].mxu0
  %6869 = vmatprep.mubr.bf16.mxu0 %v5716
  %6870 = vmatmul.mubr.bf16.gmra.mrb[0].mxu0 %v5715
  %v6871 = vpop.f32.mrb[0].mxu0
  %v6872 = vadd.f32 %v6583, %v6871
  %v6873 = vpop.f32.mrb[0].mxu0
  %v6874 = vpop.f32.mrb[0].mxu0
  %v6875 = vadd.f32 %v6586, %v6874
  %v6876 = vpop.f32.mrb[0].mxu0
  %6877 = vmatprep.mubr.bf16.mxu0 %v5725
  %6878 = vmatmul.mubr.bf16.gmra.mrb[0].mxu0 %v5724
  %v6879 = vpop.f32.mrb[0].mxu0
  %v6880 = vadd.f32 %v6591, %v6879
  %v6881 = vpop.f32.mrb[0].mxu0
  %v6882 = vpop.f32.mrb[0].mxu0
  %v6883 = vadd.f32 %v6594, %v6882
  %v6884 = vpop.f32.mrb[0].mxu0
  %6885 = vmatprep.mubr.bf16.mxu0 %v5734
  %6886 = vmatmul.mubr.bf16.gmra.mrb[0].mxu0 %v5733
  %v6887 = vpop.f32.mrb[0].mxu0
  %v6888 = vadd.f32 %v6599, %v6887
  %v6889 = vpop.f32.mrb[0].mxu0
  %v6890 = vpop.f32.mrb[0].mxu0
  %v6891 = vadd.f32 %v6602, %v6890
  %v6892 = vpop.f32.mrb[0].mxu0
  %6893 = vdwg.mxu0
  %6894 = vmatprep.subr.bf16.mxu0 0
  %6895 = vmatpush1.bf16.msra.mxu0 %v6204
  %6896 = vmatprep.subr.bf16.mxu0 0
  %6897 = vmatpush1.bf16.msra.mxu0 %v6205
  %6898 = vmatprep.subr.bf16.mxu0 0
  %6899 = vmatpush1.bf16.msra.mxu0 %v6206
  %6900 = vmatprep.subr.bf16.mxu0 0
  %6901 = vmatpush1.bf16.msra.mxu0 %v6207
  %6902 = vmatprep.subr.bf16.mxu0 0
  %6903 = vmatpush1.bf16.msra.mxu0 %v6208
  %6904 = vmatprep.subr.bf16.mxu0 0
  %6905 = vmatpush1.bf16.msra.mxu0 %v6209
  %6906 = vmatprep.subr.bf16.mxu0 0
  %6907 = vmatpush1.bf16.msra.mxu0 %v6210
  %6908 = vmatprep.subr.bf16.mxu0 0
  %6909 = vmatpush1.bf16.msra.mxu0 %v6211
  %6910 = vmatprep.subr.bf16.mxu0 0
  %6911 = vmatpush1.bf16.msra.mxu0 %v6212
  %6912 = vmatprep.subr.bf16.mxu0 0
  %6913 = vmatpush1.bf16.msra.mxu0 %v6213
  %6914 = vmatprep.subr.bf16.mxu0 0
  %6915 = vmatpush1.bf16.msra.mxu0 %v6214
  %6916 = vmatprep.subr.bf16.mxu0 0
  %6917 = vmatpush1.bf16.msra.mxu0 %v6215
  %6918 = vmatprep.subr.bf16.mxu0 0
  %6919 = vmatpush1.bf16.msra.mxu0 %v6216
  %6920 = vmatprep.subr.bf16.mxu0 0
  %6921 = vmatpush1.bf16.msra.mxu0 %v6217
  %6922 = vmatprep.subr.bf16.mxu0 0
  %6923 = vmatpush1.bf16.msra.mxu0 %v6218
  %6924 = vmatprep.subr.bf16.mxu0 0
  %6925 = vmatpush1.bf16.msra.mxu0 %v6219
  %6926 = vmatprep.mubr.bf16.mxu0 %v5457
  %6927 = vmatmul.mubr.bf16.gmra.mrb[0].mxu0 %v5456
  %v6928 = vpop.f32.mrb[0].mxu0
  %v6929 = vadd.f32 %v6640, %v6928
  %v6930 = vpop.f32.mrb[0].mxu0
  %v6931 = vpop.f32.mrb[0].mxu0
  %v6932 = vadd.f32 %v6643, %v6931
  %v6933 = vpop.f32.mrb[0].mxu0
  %6934 = vmatprep.mubr.bf16.mxu0 %v5466
  %6935 = vmatmul.mubr.bf16.gmra.mrb[0].mxu0 %v5465
  %v6936 = vpop.f32.mrb[0].mxu0
  %v6937 = vadd.f32 %v6648, %v6936
  %v6938 = vpop.f32.mrb[0].mxu0
  %v6939 = vpop.f32.mrb[0].mxu0
  %v6940 = vadd.f32 %v6651, %v6939
  %v6941 = vpop.f32.mrb[0].mxu0
  %6942 = vmatprep.mubr.bf16.mxu0 %v5475
  %6943 = vmatmul.mubr.bf16.gmra.mrb[0].mxu0 %v5474
  %v6944 = vpop.f32.mrb[0].mxu0
  %v6945 = vadd.f32 %v6656, %v6944
  %v6946 = vpop.f32.mrb[0].mxu0
  %v6947 = vpop.f32.mrb[0].mxu0
  %v6948 = vadd.f32 %v6659, %v6947
  %v6949 = vpop.f32.mrb[0].mxu0
  %6950 = vmatprep.mubr.bf16.mxu0 %v5484
  %6951 = vmatmul.mubr.bf16.gmra.mrb[0].mxu0 %v5483
  %v6952 = vpop.f32.mrb[0].mxu0
  %v6953 = vadd.f32 %v6664, %v6952
  %v6954 = vpop.f32.mrb[0].mxu0
  %v6955 = vpop.f32.mrb[0].mxu0
  %v6956 = vadd.f32 %v6667, %v6955
  %v6957 = vpop.f32.mrb[0].mxu0
  %6958 = vmatprep.mubr.bf16.mxu0 %v5493
  %6959 = vmatmul.mubr.bf16.gmra.mrb[0].mxu0 %v5492
  %v6960 = vpop.f32.mrb[0].mxu0
  %v6961 = vadd.f32 %v6672, %v6960
  %v6962 = vpop.f32.mrb[0].mxu0
  %v6963 = vpop.f32.mrb[0].mxu0
  %v6964 = vadd.f32 %v6675, %v6963
  %v6965 = vpop.f32.mrb[0].mxu0
  %6966 = vmatprep.mubr.bf16.mxu0 %v5502
  %6967 = vmatmul.mubr.bf16.gmra.mrb[0].mxu0 %v5501
  %v6968 = vpop.f32.mrb[0].mxu0
  %v6969 = vadd.f32 %v6680, %v6968
  %v6970 = vpop.f32.mrb[0].mxu0
  %v6971 = vpop.f32.mrb[0].mxu0
  %v6972 = vadd.f32 %v6683, %v6971
  %v6973 = vpop.f32.mrb[0].mxu0
  %6974 = vmatprep.mubr.bf16.mxu0 %v5511
  %6975 = vmatmul.mubr.bf16.gmra.mrb[0].mxu0 %v5510
  %v6976 = vpop.f32.mrb[0].mxu0
  %v6977 = vadd.f32 %v6688, %v6976
  %v6978 = vpop.f32.mrb[0].mxu0
  %v6979 = vpop.f32.mrb[0].mxu0
  %v6980 = vadd.f32 %v6691, %v6979
  %v6981 = vpop.f32.mrb[0].mxu0
  %6982 = vmatprep.mubr.bf16.mxu0 %v5520
  %6983 = vmatmul.mubr.bf16.gmra.mrb[0].mxu0 %v5519
  %v6984 = vpop.f32.mrb[0].mxu0
  %v6985 = vadd.f32 %v6696, %v6984
  %v6986 = vpop.f32.mrb[0].mxu0
  %v6987 = vpop.f32.mrb[0].mxu0
  %v6988 = vadd.f32 %v6699, %v6987
  %v6989 = vpop.f32.mrb[0].mxu0
  %6990 = vmatprep.mubr.bf16.mxu0 %v5529
  %6991 = vmatmul.mubr.bf16.gmra.mrb[0].mxu0 %v5528
  %v6992 = vpop.f32.mrb[0].mxu0
  %v6993 = vadd.f32 %v6704, %v6992
  %v6994 = vpop.f32.mrb[0].mxu0
  %v6995 = vpop.f32.mrb[0].mxu0
  %v6996 = vadd.f32 %v6707, %v6995
  %v6997 = vpop.f32.mrb[0].mxu0
  %6998 = vmatprep.mubr.bf16.mxu0 %v5538
  %6999 = vmatmul.mubr.bf16.gmra.mrb[0].mxu0 %v5537
  %v7000 = vpop.f32.mrb[0].mxu0
  %v7001 = vadd.f32 %v6712, %v7000
  %v7002 = vpop.f32.mrb[0].mxu0
  %v7003 = vpop.f32.mrb[0].mxu0
  %v7004 = vadd.f32 %v6715, %v7003
  %v7005 = vpop.f32.mrb[0].mxu0
  %7006 = vmatprep.mubr.bf16.mxu0 %v5547
  %7007 = vmatmul.mubr.bf16.gmra.mrb[0].mxu0 %v5546
  %v7008 = vpop.f32.mrb[0].mxu0
  %v7009 = vadd.f32 %v6720, %v7008
  %v7010 = vpop.f32.mrb[0].mxu0
  %v7011 = vpop.f32.mrb[0].mxu0
  %v7012 = vadd.f32 %v6723, %v7011
  %v7013 = vpop.f32.mrb[0].mxu0
  %7014 = vmatprep.mubr.bf16.mxu0 %v5556
  %7015 = vmatmul.mubr.bf16.gmra.mrb[0].mxu0 %v5555
  %v7016 = vpop.f32.mrb[0].mxu0
  %v7017 = vadd.f32 %v6728, %v7016
  %v7018 = vpop.f32.mrb[0].mxu0
  %v7019 = vpop.f32.mrb[0].mxu0
  %v7020 = vadd.f32 %v6731, %v7019
  %v7021 = vpop.f32.mrb[0].mxu0
  %7022 = vmatprep.mubr.bf16.mxu0 %v5565
  %7023 = vmatmul.mubr.bf16.gmra.mrb[0].mxu0 %v5564
  %v7024 = vpop.f32.mrb[0].mxu0
  %v7025 = vadd.f32 %v6736, %v7024
  %v7026 = vpop.f32.mrb[0].mxu0
  %v7027 = vpop.f32.mrb[0].mxu0
  %v7028 = vadd.f32 %v6739, %v7027
  %v7029 = vpop.f32.mrb[0].mxu0
  %7030 = vmatprep.mubr.bf16.mxu0 %v5574
  %7031 = vmatmul.mubr.bf16.gmra.mrb[0].mxu0 %v5573
  %v7032 = vpop.f32.mrb[0].mxu0
  %v7033 = vadd.f32 %v6744, %v7032
  %v7034 = vpop.f32.mrb[0].mxu0
  %v7035 = vpop.f32.mrb[0].mxu0
  %v7036 = vadd.f32 %v6747, %v7035
  %v7037 = vpop.f32.mrb[0].mxu0
  %7038 = vmatprep.mubr.bf16.mxu0 %v5583
  %7039 = vmatmul.mubr.bf16.gmra.mrb[0].mxu0 %v5582
  %v7040 = vpop.f32.mrb[0].mxu0
  %v7041 = vadd.f32 %v6752, %v7040
  %v7042 = vpop.f32.mrb[0].mxu0
  %v7043 = vpop.f32.mrb[0].mxu0
  %v7044 = vadd.f32 %v6755, %v7043
  %v7045 = vpop.f32.mrb[0].mxu0
  %7046 = vmatprep.mubr.bf16.mxu0 %v5592
  %7047 = vmatmul.mubr.bf16.gmra.mrb[0].mxu0 %v5591
  %v7048 = vpop.f32.mrb[0].mxu0
  %v7049 = vadd.f32 %v6760, %v7048
  %v7050 = vpop.f32.mrb[0].mxu0
  %v7051 = vpop.f32.mrb[0].mxu0
  %v7052 = vadd.f32 %v6763, %v7051
  %v7053 = vpop.f32.mrb[0].mxu0
  %7054 = vmatprep.mubr.bf16.mxu0 %v5601
  %7055 = vmatmul.mubr.bf16.gmra.mrb[0].mxu0 %v5600
  %v7056 = vpop.f32.mrb[0].mxu0
  %v7057 = vadd.f32 %v6768, %v7056
  %v7058 = vpop.f32.mrb[0].mxu0
  %v7059 = vpop.f32.mrb[0].mxu0
  %v7060 = vadd.f32 %v6771, %v7059
  %v7061 = vpop.f32.mrb[0].mxu0
  %7062 = vmatprep.mubr.bf16.mxu0 %v5610
  %7063 = vmatmul.mubr.bf16.gmra.mrb[0].mxu0 %v5609
  %v7064 = vpop.f32.mrb[0].mxu0
  %v7065 = vadd.f32 %v6776, %v7064
  %v7066 = vpop.f32.mrb[0].mxu0
  %v7067 = vpop.f32.mrb[0].mxu0
  %v7068 = vadd.f32 %v6779, %v7067
  %v7069 = vpop.f32.mrb[0].mxu0
  %7070 = vmatprep.mubr.bf16.mxu0 %v5619
  %7071 = vmatmul.mubr.bf16.gmra.mrb[0].mxu0 %v5618
  %v7072 = vpop.f32.mrb[0].mxu0
  %v7073 = vadd.f32 %v6784, %v7072
  %v7074 = vpop.f32.mrb[0].mxu0
  %v7075 = vpop.f32.mrb[0].mxu0
  %v7076 = vadd.f32 %v6787, %v7075
  %v7077 = vpop.f32.mrb[0].mxu0
  %7078 = vmatprep.mubr.bf16.mxu0 %v5628
  %7079 = vmatmul.mubr.bf16.gmra.mrb[0].mxu0 %v5627
  %v7080 = vpop.f32.mrb[0].mxu0
  %v7081 = vadd.f32 %v6792, %v7080
  %v7082 = vpop.f32.mrb[0].mxu0
  %v7083 = vpop.f32.mrb[0].mxu0
  %v7084 = vadd.f32 %v6795, %v7083
  %v7085 = vpop.f32.mrb[0].mxu0
  %7086 = vmatprep.mubr.bf16.mxu0 %v5637
  %7087 = vmatmul.mubr.bf16.gmra.mrb[0].mxu0 %v5636
  %v7088 = vpop.f32.mrb[0].mxu0
  %v7089 = vadd.f32 %v6800, %v7088
  %v7090 = vpop.f32.mrb[0].mxu0
  %v7091 = vpop.f32.mrb[0].mxu0
  %v7092 = vadd.f32 %v6803, %v7091
  %v7093 = vpop.f32.mrb[0].mxu0
  %7094 = vmatprep.mubr.bf16.mxu0 %v5646
  %7095 = vmatmul.mubr.bf16.gmra.mrb[0].mxu0 %v5645
  %v7096 = vpop.f32.mrb[0].mxu0
  %v7097 = vadd.f32 %v6808, %v7096
  %v7098 = vpop.f32.mrb[0].mxu0
  %v7099 = vpop.f32.mrb[0].mxu0
  %v7100 = vadd.f32 %v6811, %v7099
  %v7101 = vpop.f32.mrb[0].mxu0
  %7102 = vmatprep.mubr.bf16.mxu0 %v5655
  %7103 = vmatmul.mubr.bf16.gmra.mrb[0].mxu0 %v5654
  %v7104 = vpop.f32.mrb[0].mxu0
  %v7105 = vadd.f32 %v6816, %v7104
  %v7106 = vpop.f32.mrb[0].mxu0
  %v7107 = vpop.f32.mrb[0].mxu0
  %v7108 = vadd.f32 %v6819, %v7107
  %v7109 = vpop.f32.mrb[0].mxu0
  %7110 = vmatprep.mubr.bf16.mxu0 %v5664
  %7111 = vmatmul.mubr.bf16.gmra.mrb[0].mxu0 %v5663
  %v7112 = vpop.f32.mrb[0].mxu0
  %v7113 = vadd.f32 %v6824, %v7112
  %v7114 = vpop.f32.mrb[0].mxu0
  %v7115 = vpop.f32.mrb[0].mxu0
  %v7116 = vadd.f32 %v6827, %v7115
  %v7117 = vpop.f32.mrb[0].mxu0
  %7118 = vmatprep.mubr.bf16.mxu0 %v5673
  %7119 = vmatmul.mubr.bf16.gmra.mrb[0].mxu0 %v5672
  %v7120 = vpop.f32.mrb[0].mxu0
  %v7121 = vadd.f32 %v6832, %v7120
  %v7122 = vpop.f32.mrb[0].mxu0
  %v7123 = vpop.f32.mrb[0].mxu0
  %v7124 = vadd.f32 %v6835, %v7123
  %v7125 = vpop.f32.mrb[0].mxu0
  %7126 = vmatprep.mubr.bf16.mxu0 %v5682
  %7127 = vmatmul.mubr.bf16.gmra.mrb[0].mxu0 %v5681
  %v7128 = vpop.f32.mrb[0].mxu0
  %v7129 = vadd.f32 %v6840, %v7128
  %v7130 = vpop.f32.mrb[0].mxu0
  %v7131 = vpop.f32.mrb[0].mxu0
  %v7132 = vadd.f32 %v6843, %v7131
  %v7133 = vpop.f32.mrb[0].mxu0
  %7134 = vmatprep.mubr.bf16.mxu0 %v5691
  %7135 = vmatmul.mubr.bf16.gmra.mrb[0].mxu0 %v5690
  %v7136 = vpop.f32.mrb[0].mxu0
  %v7137 = vadd.f32 %v6848, %v7136
  %v7138 = vpop.f32.mrb[0].mxu0
  %v7139 = vpop.f32.mrb[0].mxu0
  %v7140 = vadd.f32 %v6851, %v7139
  %v7141 = vpop.f32.mrb[0].mxu0
  %7142 = vmatprep.mubr.bf16.mxu0 %v5700
  %7143 = vmatmul.mubr.bf16.gmra.mrb[0].mxu0 %v5699
  %v7144 = vpop.f32.mrb[0].mxu0
  %v7145 = vadd.f32 %v6856, %v7144
  %v7146 = vpop.f32.mrb[0].mxu0
  %v7147 = vpop.f32.mrb[0].mxu0
  %v7148 = vadd.f32 %v6859, %v7147
  %v7149 = vpop.f32.mrb[0].mxu0
  %7150 = vmatprep.mubr.bf16.mxu0 %v5709
  %7151 = vmatmul.mubr.bf16.gmra.mrb[0].mxu0 %v5708
  %v7152 = vpop.f32.mrb[0].mxu0
  %v7153 = vadd.f32 %v6864, %v7152
  %v7154 = vpop.f32.mrb[0].mxu0
  %v7155 = vpop.f32.mrb[0].mxu0
  %v7156 = vadd.f32 %v6867, %v7155
  %v7157 = vpop.f32.mrb[0].mxu0
  %7158 = vmatprep.mubr.bf16.mxu0 %v5718
  %7159 = vmatmul.mubr.bf16.gmra.mrb[0].mxu0 %v5717
  %v7160 = vpop.f32.mrb[0].mxu0
  %v7161 = vadd.f32 %v6872, %v7160
  %v7162 = vpop.f32.mrb[0].mxu0
  %v7163 = vpop.f32.mrb[0].mxu0
  %v7164 = vadd.f32 %v6875, %v7163
  %v7165 = vpop.f32.mrb[0].mxu0
  %7166 = vmatprep.mubr.bf16.mxu0 %v5727
  %7167 = vmatmul.mubr.bf16.gmra.mrb[0].mxu0 %v5726
  %v7168 = vpop.f32.mrb[0].mxu0
  %v7169 = vadd.f32 %v6880, %v7168
  %v7170 = vpop.f32.mrb[0].mxu0
  %v7171 = vpop.f32.mrb[0].mxu0
  %v7172 = vadd.f32 %v6883, %v7171
  %v7173 = vpop.f32.mrb[0].mxu0
  %7174 = vmatprep.mubr.bf16.mxu0 %v5736
  %7175 = vmatmul.mubr.bf16.gmra.mrb[0].mxu0 %v5735
  %v7176 = vpop.f32.mrb[0].mxu0
  %v7177 = vadd.f32 %v6888, %v7176
  %v7178 = vpop.f32.mrb[0].mxu0
  %v7179 = vpop.f32.mrb[0].mxu0
  %v7180 = vadd.f32 %v6891, %v7179
  %v7181 = vpop.f32.mrb[0].mxu0
  %7182 = vdwg.mxu0
  %7183 = vmatprep.subr.bf16.mxu0 0
  %7184 = vmatpush1.bf16.msra.mxu0 %v6220
  %7185 = vmatprep.subr.bf16.mxu0 0
  %7186 = vmatpush1.bf16.msra.mxu0 %v6221
  %7187 = vmatprep.subr.bf16.mxu0 0
  %7188 = vmatpush1.bf16.msra.mxu0 %v6222
  %7189 = vmatprep.subr.bf16.mxu0 0
  %7190 = vmatpush1.bf16.msra.mxu0 %v6223
  %7191 = vmatprep.subr.bf16.mxu0 0
  %7192 = vmatpush1.bf16.msra.mxu0 %v6224
  %7193 = vmatprep.subr.bf16.mxu0 0
  %7194 = vmatpush1.bf16.msra.mxu0 %v6225
  %7195 = vmatprep.subr.bf16.mxu0 0
  %7196 = vmatpush1.bf16.msra.mxu0 %v6226
  %7197 = vmatprep.subr.bf16.mxu0 0
  %7198 = vmatpush1.bf16.msra.mxu0 %v6227
  %7199 = vmatprep.subr.bf16.mxu0 0
  %7200 = vmatpush1.bf16.msra.mxu0 %v6228
  %7201 = vmatprep.subr.bf16.mxu0 0
  %7202 = vmatpush1.bf16.msra.mxu0 %v6229
  %7203 = vmatprep.subr.bf16.mxu0 0
  %7204 = vmatpush1.bf16.msra.mxu0 %v6230
  %7205 = vmatprep.subr.bf16.mxu0 0
  %7206 = vmatpush1.bf16.msra.mxu0 %v6231
  %7207 = vmatprep.subr.bf16.mxu0 0
  %7208 = vmatpush1.bf16.msra.mxu0 %v6232
  %7209 = vmatprep.subr.bf16.mxu0 0
  %7210 = vmatpush1.bf16.msra.mxu0 %v6233
  %7211 = vmatprep.subr.bf16.mxu0 0
  %7212 = vmatpush1.bf16.msra.mxu0 %v6234
  %7213 = vmatprep.subr.bf16.mxu0 0
  %7214 = vmatpush1.bf16.msra.mxu0 %v6235
  %7215 = vmatprep.mubr.bf16.mxu0 %v5459
  %7216 = vmatmul.mubr.bf16.gmra.mrb[0].mxu0 %v5458
  %v7217 = vpop.f32.mrb[0].mxu0
  %v7218 = vadd.f32 %v6929, %v7217
  %v7219 = vpop.f32.mrb[0].mxu0
  %v7220 = vpop.f32.mrb[0].mxu0
  %v7221 = vadd.f32 %v6932, %v7220
  %v7222 = vpop.f32.mrb[0].mxu0
  %7223 = vmatprep.mubr.bf16.mxu0 %v5468
  %7224 = vmatmul.mubr.bf16.gmra.mrb[0].mxu0 %v5467
  %v7225 = vpop.f32.mrb[0].mxu0
  %v7226 = vadd.f32 %v6937, %v7225
  %v7227 = vpop.f32.mrb[0].mxu0
  %v7228 = vpop.f32.mrb[0].mxu0
  %v7229 = vadd.f32 %v6940, %v7228
  %v7230 = vpop.f32.mrb[0].mxu0
  %7231 = vmatprep.mubr.bf16.mxu0 %v5477
  %7232 = vmatmul.mubr.bf16.gmra.mrb[0].mxu0 %v5476
  %v7233 = vpop.f32.mrb[0].mxu0
  %v7234 = vadd.f32 %v6945, %v7233
  %v7235 = vpop.f32.mrb[0].mxu0
  %v7236 = vpop.f32.mrb[0].mxu0
  %v7237 = vadd.f32 %v6948, %v7236
  %v7238 = vpop.f32.mrb[0].mxu0
  %7239 = vmatprep.mubr.bf16.mxu0 %v5486
  %7240 = vmatmul.mubr.bf16.gmra.mrb[0].mxu0 %v5485
  %v7241 = vpop.f32.mrb[0].mxu0
  %v7242 = vadd.f32 %v6953, %v7241
  %v7243 = vpop.f32.mrb[0].mxu0
  %v7244 = vpop.f32.mrb[0].mxu0
  %v7245 = vadd.f32 %v6956, %v7244
  %v7246 = vpop.f32.mrb[0].mxu0
  %7247 = vmatprep.mubr.bf16.mxu0 %v5495
  %7248 = vmatmul.mubr.bf16.gmra.mrb[0].mxu0 %v5494
  %v7249 = vpop.f32.mrb[0].mxu0
  %v7250 = vadd.f32 %v6961, %v7249
  %v7251 = vpop.f32.mrb[0].mxu0
  %v7252 = vpop.f32.mrb[0].mxu0
  %v7253 = vadd.f32 %v6964, %v7252
  %v7254 = vpop.f32.mrb[0].mxu0
  %7255 = vmatprep.mubr.bf16.mxu0 %v5504
  %7256 = vmatmul.mubr.bf16.gmra.mrb[0].mxu0 %v5503
  %v7257 = vpop.f32.mrb[0].mxu0
  %v7258 = vadd.f32 %v6969, %v7257
  %v7259 = vpop.f32.mrb[0].mxu0
  %v7260 = vpop.f32.mrb[0].mxu0
  %v7261 = vadd.f32 %v6972, %v7260
  %v7262 = vpop.f32.mrb[0].mxu0
  %7263 = vmatprep.mubr.bf16.mxu0 %v5513
  %7264 = vmatmul.mubr.bf16.gmra.mrb[0].mxu0 %v5512
  %v7265 = vpop.f32.mrb[0].mxu0
  %v7266 = vadd.f32 %v6977, %v7265
  %v7267 = vpop.f32.mrb[0].mxu0
  %v7268 = vpop.f32.mrb[0].mxu0
  %v7269 = vadd.f32 %v6980, %v7268
  %v7270 = vpop.f32.mrb[0].mxu0
  %7271 = vmatprep.mubr.bf16.mxu0 %v5522
  %7272 = vmatmul.mubr.bf16.gmra.mrb[0].mxu0 %v5521
  %v7273 = vpop.f32.mrb[0].mxu0
  %v7274 = vadd.f32 %v6985, %v7273
  %v7275 = vpop.f32.mrb[0].mxu0
  %v7276 = vpop.f32.mrb[0].mxu0
  %v7277 = vadd.f32 %v6988, %v7276
  %v7278 = vpop.f32.mrb[0].mxu0
  %7279 = vmatprep.mubr.bf16.mxu0 %v5531
  %7280 = vmatmul.mubr.bf16.gmra.mrb[0].mxu0 %v5530
  %v7281 = vpop.f32.mrb[0].mxu0
  %v7282 = vadd.f32 %v6993, %v7281
  %v7283 = vpop.f32.mrb[0].mxu0
  %v7284 = vpop.f32.mrb[0].mxu0
  %v7285 = vadd.f32 %v6996, %v7284
  %v7286 = vpop.f32.mrb[0].mxu0
  %7287 = vmatprep.mubr.bf16.mxu0 %v5540
  %7288 = vmatmul.mubr.bf16.gmra.mrb[0].mxu0 %v5539
  %v7289 = vpop.f32.mrb[0].mxu0
  %v7290 = vadd.f32 %v7001, %v7289
  %v7291 = vpop.f32.mrb[0].mxu0
  %v7292 = vpop.f32.mrb[0].mxu0
  %v7293 = vadd.f32 %v7004, %v7292
  %v7294 = vpop.f32.mrb[0].mxu0
  %7295 = vmatprep.mubr.bf16.mxu0 %v5549
  %7296 = vmatmul.mubr.bf16.gmra.mrb[0].mxu0 %v5548
  %v7297 = vpop.f32.mrb[0].mxu0
  %v7298 = vadd.f32 %v7009, %v7297
  %v7299 = vpop.f32.mrb[0].mxu0
  %v7300 = vpop.f32.mrb[0].mxu0
  %v7301 = vadd.f32 %v7012, %v7300
  %v7302 = vpop.f32.mrb[0].mxu0
  %7303 = vmatprep.mubr.bf16.mxu0 %v5558
  %7304 = vmatmul.mubr.bf16.gmra.mrb[0].mxu0 %v5557
  %v7305 = vpop.f32.mrb[0].mxu0
  %v7306 = vadd.f32 %v7017, %v7305
  %v7307 = vpop.f32.mrb[0].mxu0
  %v7308 = vpop.f32.mrb[0].mxu0
  %v7309 = vadd.f32 %v7020, %v7308
  %v7310 = vpop.f32.mrb[0].mxu0
  %7311 = vmatprep.mubr.bf16.mxu0 %v5567
  %7312 = vmatmul.mubr.bf16.gmra.mrb[0].mxu0 %v5566
  %v7313 = vpop.f32.mrb[0].mxu0
  %v7314 = vadd.f32 %v7025, %v7313
  %v7315 = vpop.f32.mrb[0].mxu0
  %v7316 = vpop.f32.mrb[0].mxu0
  %v7317 = vadd.f32 %v7028, %v7316
  %v7318 = vpop.f32.mrb[0].mxu0
  %7319 = vmatprep.mubr.bf16.mxu0 %v5576
  %7320 = vmatmul.mubr.bf16.gmra.mrb[0].mxu0 %v5575
  %v7321 = vpop.f32.mrb[0].mxu0
  %v7322 = vadd.f32 %v7033, %v7321
  %v7323 = vpop.f32.mrb[0].mxu0
  %v7324 = vpop.f32.mrb[0].mxu0
  %v7325 = vadd.f32 %v7036, %v7324
  %v7326 = vpop.f32.mrb[0].mxu0
  %7327 = vmatprep.mubr.bf16.mxu0 %v5585
  %7328 = vmatmul.mubr.bf16.gmra.mrb[0].mxu0 %v5584
  %v7329 = vpop.f32.mrb[0].mxu0
  %v7330 = vadd.f32 %v7041, %v7329
  %v7331 = vpop.f32.mrb[0].mxu0
  %v7332 = vpop.f32.mrb[0].mxu0
  %v7333 = vadd.f32 %v7044, %v7332
  %v7334 = vpop.f32.mrb[0].mxu0
  %7335 = vmatprep.mubr.bf16.mxu0 %v5594
  %7336 = vmatmul.mubr.bf16.gmra.mrb[0].mxu0 %v5593
  %v7337 = vpop.f32.mrb[0].mxu0
  %v7338 = vadd.f32 %v7049, %v7337
  %v7339 = vpop.f32.mrb[0].mxu0
  %v7340 = vpop.f32.mrb[0].mxu0
  %v7341 = vadd.f32 %v7052, %v7340
  %v7342 = vpop.f32.mrb[0].mxu0
  %7343 = vmatprep.mubr.bf16.mxu0 %v5603
  %7344 = vmatmul.mubr.bf16.gmra.mrb[0].mxu0 %v5602
  %v7345 = vpop.f32.mrb[0].mxu0
  %v7346 = vadd.f32 %v7057, %v7345
  %v7347 = vpop.f32.mrb[0].mxu0
  %v7348 = vpop.f32.mrb[0].mxu0
  %v7349 = vadd.f32 %v7060, %v7348
  %v7350 = vpop.f32.mrb[0].mxu0
  %7351 = vmatprep.mubr.bf16.mxu0 %v5612
  %7352 = vmatmul.mubr.bf16.gmra.mrb[0].mxu0 %v5611
  %v7353 = vpop.f32.mrb[0].mxu0
  %v7354 = vadd.f32 %v7065, %v7353
  %v7355 = vpop.f32.mrb[0].mxu0
  %v7356 = vpop.f32.mrb[0].mxu0
  %v7357 = vadd.f32 %v7068, %v7356
  %v7358 = vpop.f32.mrb[0].mxu0
  %7359 = vmatprep.mubr.bf16.mxu0 %v5621
  %7360 = vmatmul.mubr.bf16.gmra.mrb[0].mxu0 %v5620
  %v7361 = vpop.f32.mrb[0].mxu0
  %v7362 = vadd.f32 %v7073, %v7361
  %v7363 = vpop.f32.mrb[0].mxu0
  %v7364 = vpop.f32.mrb[0].mxu0
  %v7365 = vadd.f32 %v7076, %v7364
  %v7366 = vpop.f32.mrb[0].mxu0
  %7367 = vmatprep.mubr.bf16.mxu0 %v5630
  %7368 = vmatmul.mubr.bf16.gmra.mrb[0].mxu0 %v5629
  %v7369 = vpop.f32.mrb[0].mxu0
  %v7370 = vadd.f32 %v7081, %v7369
  %v7371 = vpop.f32.mrb[0].mxu0
  %v7372 = vpop.f32.mrb[0].mxu0
  %v7373 = vadd.f32 %v7084, %v7372
  %v7374 = vpop.f32.mrb[0].mxu0
  %7375 = vmatprep.mubr.bf16.mxu0 %v5639
  %7376 = vmatmul.mubr.bf16.gmra.mrb[0].mxu0 %v5638
  %v7377 = vpop.f32.mrb[0].mxu0
  %v7378 = vadd.f32 %v7089, %v7377
  %v7379 = vpop.f32.mrb[0].mxu0
  %v7380 = vpop.f32.mrb[0].mxu0
  %v7381 = vadd.f32 %v7092, %v7380
  %v7382 = vpop.f32.mrb[0].mxu0
  %7383 = vmatprep.mubr.bf16.mxu0 %v5648
  %7384 = vmatmul.mubr.bf16.gmra.mrb[0].mxu0 %v5647
  %v7385 = vpop.f32.mrb[0].mxu0
  %v7386 = vadd.f32 %v7097, %v7385
  %v7387 = vpop.f32.mrb[0].mxu0
  %v7388 = vpop.f32.mrb[0].mxu0
  %v7389 = vadd.f32 %v7100, %v7388
  %v7390 = vpop.f32.mrb[0].mxu0
  %7391 = vmatprep.mubr.bf16.mxu0 %v5657
  %7392 = vmatmul.mubr.bf16.gmra.mrb[0].mxu0 %v5656
  %v7393 = vpop.f32.mrb[0].mxu0
  %v7394 = vadd.f32 %v7105, %v7393
  %v7395 = vpop.f32.mrb[0].mxu0
  %v7396 = vpop.f32.mrb[0].mxu0
  %v7397 = vadd.f32 %v7108, %v7396
  %v7398 = vpop.f32.mrb[0].mxu0
  %7399 = vmatprep.mubr.bf16.mxu0 %v5666
  %7400 = vmatmul.mubr.bf16.gmra.mrb[0].mxu0 %v5665
  %v7401 = vpop.f32.mrb[0].mxu0
  %v7402 = vadd.f32 %v7113, %v7401
  %v7403 = vpop.f32.mrb[0].mxu0
  %v7404 = vpop.f32.mrb[0].mxu0
  %v7405 = vadd.f32 %v7116, %v7404
  %v7406 = vpop.f32.mrb[0].mxu0
  %7407 = vmatprep.mubr.bf16.mxu0 %v5675
  %7408 = vmatmul.mubr.bf16.gmra.mrb[0].mxu0 %v5674
  %v7409 = vpop.f32.mrb[0].mxu0
  %v7410 = vadd.f32 %v7121, %v7409
  %v7411 = vpop.f32.mrb[0].mxu0
  %v7412 = vpop.f32.mrb[0].mxu0
  %v7413 = vadd.f32 %v7124, %v7412
  %v7414 = vpop.f32.mrb[0].mxu0
  %7415 = vmatprep.mubr.bf16.mxu0 %v5684
  %7416 = vmatmul.mubr.bf16.gmra.mrb[0].mxu0 %v5683
  %v7417 = vpop.f32.mrb[0].mxu0
  %v7418 = vadd.f32 %v7129, %v7417
  %v7419 = vpop.f32.mrb[0].mxu0
  %v7420 = vpop.f32.mrb[0].mxu0
  %v7421 = vadd.f32 %v7132, %v7420
  %v7422 = vpop.f32.mrb[0].mxu0
  %7423 = vmatprep.mubr.bf16.mxu0 %v5693
  %7424 = vmatmul.mubr.bf16.gmra.mrb[0].mxu0 %v5692
  %v7425 = vpop.f32.mrb[0].mxu0
  %v7426 = vadd.f32 %v7137, %v7425
  %v7427 = vpop.f32.mrb[0].mxu0
  %v7428 = vpop.f32.mrb[0].mxu0
  %v7429 = vadd.f32 %v7140, %v7428
  %v7430 = vpop.f32.mrb[0].mxu0
  %7431 = vmatprep.mubr.bf16.mxu0 %v5702
  %7432 = vmatmul.mubr.bf16.gmra.mrb[0].mxu0 %v5701
  %v7433 = vpop.f32.mrb[0].mxu0
  %v7434 = vadd.f32 %v7145, %v7433
  %v7435 = vpop.f32.mrb[0].mxu0
  %v7436 = vpop.f32.mrb[0].mxu0
  %v7437 = vadd.f32 %v7148, %v7436
  %v7438 = vpop.f32.mrb[0].mxu0
  %7439 = vmatprep.mubr.bf16.mxu0 %v5711
  %7440 = vmatmul.mubr.bf16.gmra.mrb[0].mxu0 %v5710
  %v7441 = vpop.f32.mrb[0].mxu0
  %v7442 = vadd.f32 %v7153, %v7441
  %v7443 = vpop.f32.mrb[0].mxu0
  %v7444 = vpop.f32.mrb[0].mxu0
  %v7445 = vadd.f32 %v7156, %v7444
  %v7446 = vpop.f32.mrb[0].mxu0
  %7447 = vmatprep.mubr.bf16.mxu0 %v5720
  %7448 = vmatmul.mubr.bf16.gmra.mrb[0].mxu0 %v5719
  %v7449 = vpop.f32.mrb[0].mxu0
  %v7450 = vadd.f32 %v7161, %v7449
  %v7451 = vpop.f32.mrb[0].mxu0
  %v7452 = vpop.f32.mrb[0].mxu0
  %v7453 = vadd.f32 %v7164, %v7452
  %v7454 = vpop.f32.mrb[0].mxu0
  %7455 = vmatprep.mubr.bf16.mxu0 %v5729
  %7456 = vmatmul.mubr.bf16.gmra.mrb[0].mxu0 %v5728
  %v7457 = vpop.f32.mrb[0].mxu0
  %v7458 = vadd.f32 %v7169, %v7457
  %v7459 = vpop.f32.mrb[0].mxu0
  %v7460 = vpop.f32.mrb[0].mxu0
  %v7461 = vadd.f32 %v7172, %v7460
  %v7462 = vpop.f32.mrb[0].mxu0
  %7463 = vmatprep.mubr.bf16.mxu0 %v5738
  %7464 = vmatmul.mubr.bf16.gmra.mrb[0].mxu0 %v5737
  %v7465 = vpop.f32.mrb[0].mxu0
  %v7466 = vadd.f32 %v7177, %v7465
  %v7467 = vpop.f32.mrb[0].mxu0
  %v7468 = vpop.f32.mrb[0].mxu0
  %v7469 = vadd.f32 %v7180, %v7468
  %v7470 = vpop.f32.mrb[0].mxu0
  %7471 = vdwg.mxu0
  %7472 = vmatprep.subr.bf16.mxu0 0
  %7473 = vmatpush1.bf16.msra.mxu0 %v6236
  %7474 = vmatprep.subr.bf16.mxu0 0
  %7475 = vmatpush1.bf16.msra.mxu0 %v6237
  %7476 = vmatprep.subr.bf16.mxu0 0
  %7477 = vmatpush1.bf16.msra.mxu0 %v6238
  %7478 = vmatprep.subr.bf16.mxu0 0
  %7479 = vmatpush1.bf16.msra.mxu0 %v6239
  %7480 = vmatprep.subr.bf16.mxu0 0
  %7481 = vmatpush1.bf16.msra.mxu0 %v6240
  %7482 = vmatprep.subr.bf16.mxu0 0
  %7483 = vmatpush1.bf16.msra.mxu0 %v6241
  %7484 = vmatprep.subr.bf16.mxu0 0
  %7485 = vmatpush1.bf16.msra.mxu0 %v6242
  %7486 = vmatprep.subr.bf16.mxu0 0
  %7487 = vmatpush1.bf16.msra.mxu0 %v6243
  %7488 = vmatprep.subr.bf16.mxu0 0
  %7489 = vmatpush1.bf16.msra.mxu0 0
  %7490 = vmatprep.subr.bf16.mxu0 0
  %7491 = vmatpush1.bf16.msra.mxu0 0
  %7492 = vmatprep.subr.bf16.mxu0 0
  %7493 = vmatpush1.bf16.msra.mxu0 0
  %7494 = vmatprep.subr.bf16.mxu0 0
  %7495 = vmatpush1.bf16.msra.mxu0 0
  %7496 = vmatprep.subr.bf16.mxu0 0
  %7497 = vmatpush1.bf16.msra.mxu0 0
  %7498 = vmatprep.subr.bf16.mxu0 0
  %7499 = vmatpush1.bf16.msra.mxu0 0
  %7500 = vmatprep.subr.bf16.mxu0 0
  %7501 = vmatpush1.bf16.msra.mxu0 0
  %7502 = vmatprep.subr.bf16.mxu0 0
  %7503 = vmatpush1.bf16.msra.mxu0 0
  %7504 = vmatprep.mubr.bf16.mxu0 0
  %7505 = vmatmul.mubr.bf16.gmra.mrb[0].mxu0 %v5460
  %v7506 = vpop.f32.mrb[0].mxu0
  %v7507 = vadd.f32 %v7218, %v7506
  %v7508 = vpop.f32.mrb[0].mxu0
  %v7509 = vpop.f32.mrb[0].mxu0
  %v7510 = vadd.f32 %v7221, %v7509
  %v7511 = vpop.f32.mrb[0].mxu0
  %7512 = vmatprep.mubr.bf16.mxu0 0
  %7513 = vmatmul.mubr.bf16.gmra.mrb[0].mxu0 %v5469
  %v7514 = vpop.f32.mrb[0].mxu0
  %v7515 = vadd.f32 %v7226, %v7514
  %v7516 = vpop.f32.mrb[0].mxu0
  %v7517 = vpop.f32.mrb[0].mxu0
  %v7518 = vadd.f32 %v7229, %v7517
  %v7519 = vpop.f32.mrb[0].mxu0
  %7520 = vmatprep.mubr.bf16.mxu0 0
  %7521 = vmatmul.mubr.bf16.gmra.mrb[0].mxu0 %v5478
  %v7522 = vpop.f32.mrb[0].mxu0
  %v7523 = vadd.f32 %v7234, %v7522
  %v7524 = vpop.f32.mrb[0].mxu0
  %v7525 = vpop.f32.mrb[0].mxu0
  %v7526 = vadd.f32 %v7237, %v7525
  %v7527 = vpop.f32.mrb[0].mxu0
  %7528 = vmatprep.mubr.bf16.mxu0 0
  %7529 = vmatmul.mubr.bf16.gmra.mrb[0].mxu0 %v5487
  %v7530 = vpop.f32.mrb[0].mxu0
  %v7531 = vadd.f32 %v7242, %v7530
  %v7532 = vpop.f32.mrb[0].mxu0
  %v7533 = vpop.f32.mrb[0].mxu0
  %v7534 = vadd.f32 %v7245, %v7533
  %v7535 = vpop.f32.mrb[0].mxu0
  %7536 = vmatprep.mubr.bf16.mxu0 0
  %7537 = vmatmul.mubr.bf16.gmra.mrb[0].mxu0 %v5496
  %v7538 = vpop.f32.mrb[0].mxu0
  %v7539 = vadd.f32 %v7250, %v7538
  %v7540 = vpop.f32.mrb[0].mxu0
  %v7541 = vpop.f32.mrb[0].mxu0
  %v7542 = vadd.f32 %v7253, %v7541
  %v7543 = vpop.f32.mrb[0].mxu0
  %7544 = vmatprep.mubr.bf16.mxu0 0
  %7545 = vmatmul.mubr.bf16.gmra.mrb[0].mxu0 %v5505
  %v7546 = vpop.f32.mrb[0].mxu0
  %v7547 = vadd.f32 %v7258, %v7546
  %v7548 = vpop.f32.mrb[0].mxu0
  %v7549 = vpop.f32.mrb[0].mxu0
  %v7550 = vadd.f32 %v7261, %v7549
  %v7551 = vpop.f32.mrb[0].mxu0
  %7552 = vmatprep.mubr.bf16.mxu0 0
  %7553 = vmatmul.mubr.bf16.gmra.mrb[0].mxu0 %v5514
  %v7554 = vpop.f32.mrb[0].mxu0
  %v7555 = vadd.f32 %v7266, %v7554
  %v7556 = vpop.f32.mrb[0].mxu0
  %v7557 = vpop.f32.mrb[0].mxu0
  %v7558 = vadd.f32 %v7269, %v7557
  %v7559 = vpop.f32.mrb[0].mxu0
  %7560 = vmatprep.mubr.bf16.mxu0 0
  %7561 = vmatmul.mubr.bf16.gmra.mrb[0].mxu0 %v5523
  %v7562 = vpop.f32.mrb[0].mxu0
  %v7563 = vadd.f32 %v7274, %v7562
  %v7564 = vpop.f32.mrb[0].mxu0
  %v7565 = vpop.f32.mrb[0].mxu0
  %v7566 = vadd.f32 %v7277, %v7565
  %v7567 = vpop.f32.mrb[0].mxu0
  %7568 = vmatprep.mubr.bf16.mxu0 0
  %7569 = vmatmul.mubr.bf16.gmra.mrb[0].mxu0 %v5532
  %v7570 = vpop.f32.mrb[0].mxu0
  %v7571 = vadd.f32 %v7282, %v7570
  %v7572 = vpop.f32.mrb[0].mxu0
  %v7573 = vpop.f32.mrb[0].mxu0
  %v7574 = vadd.f32 %v7285, %v7573
  %v7575 = vpop.f32.mrb[0].mxu0
  %7576 = vmatprep.mubr.bf16.mxu0 0
  %7577 = vmatmul.mubr.bf16.gmra.mrb[0].mxu0 %v5541
  %v7578 = vpop.f32.mrb[0].mxu0
  %v7579 = vadd.f32 %v7290, %v7578
  %v7580 = vpop.f32.mrb[0].mxu0
  %v7581 = vpop.f32.mrb[0].mxu0
  %v7582 = vadd.f32 %v7293, %v7581
  %v7583 = vpop.f32.mrb[0].mxu0
  %7584 = vmatprep.mubr.bf16.mxu0 0
  %7585 = vmatmul.mubr.bf16.gmra.mrb[0].mxu0 %v5550
  %v7586 = vpop.f32.mrb[0].mxu0
  %v7587 = vadd.f32 %v7298, %v7586
  %v7588 = vpop.f32.mrb[0].mxu0
  %v7589 = vpop.f32.mrb[0].mxu0
  %v7590 = vadd.f32 %v7301, %v7589
  %v7591 = vpop.f32.mrb[0].mxu0
  %7592 = vmatprep.mubr.bf16.mxu0 0
  %7593 = vmatmul.mubr.bf16.gmra.mrb[0].mxu0 %v5559
  %v7594 = vpop.f32.mrb[0].mxu0
  %v7595 = vadd.f32 %v7306, %v7594
  %v7596 = vpop.f32.mrb[0].mxu0
  %v7597 = vpop.f32.mrb[0].mxu0
  %v7598 = vadd.f32 %v7309, %v7597
  %v7599 = vpop.f32.mrb[0].mxu0
  %7600 = vmatprep.mubr.bf16.mxu0 0
  %7601 = vmatmul.mubr.bf16.gmra.mrb[0].mxu0 %v5568
  %v7602 = vpop.f32.mrb[0].mxu0
  %v7603 = vadd.f32 %v7314, %v7602
  %v7604 = vpop.f32.mrb[0].mxu0
  %v7605 = vpop.f32.mrb[0].mxu0
  %v7606 = vadd.f32 %v7317, %v7605
  %v7607 = vpop.f32.mrb[0].mxu0
  %7608 = vmatprep.mubr.bf16.mxu0 0
  %7609 = vmatmul.mubr.bf16.gmra.mrb[0].mxu0 %v5577
  %v7610 = vpop.f32.mrb[0].mxu0
  %v7611 = vadd.f32 %v7322, %v7610
  %v7612 = vpop.f32.mrb[0].mxu0
  %v7613 = vpop.f32.mrb[0].mxu0
  %v7614 = vadd.f32 %v7325, %v7613
  %v7615 = vpop.f32.mrb[0].mxu0
  %7616 = vmatprep.mubr.bf16.mxu0 0
  %7617 = vmatmul.mubr.bf16.gmra.mrb[0].mxu0 %v5586
  %v7618 = vpop.f32.mrb[0].mxu0
  %v7619 = vadd.f32 %v7330, %v7618
  %v7620 = vpop.f32.mrb[0].mxu0
  %v7621 = vpop.f32.mrb[0].mxu0
  %v7622 = vadd.f32 %v7333, %v7621
  %v7623 = vpop.f32.mrb[0].mxu0
  %7624 = vmatprep.mubr.bf16.mxu0 0
  %7625 = vmatmul.mubr.bf16.gmra.mrb[0].mxu0 %v5595
  %v7626 = vpop.f32.mrb[0].mxu0
  %v7627 = vadd.f32 %v7338, %v7626
  %v7628 = vpop.f32.mrb[0].mxu0
  %v7629 = vpop.f32.mrb[0].mxu0
  %v7630 = vadd.f32 %v7341, %v7629
  %v7631 = vpop.f32.mrb[0].mxu0
  %7632 = vmatprep.mubr.bf16.mxu0 0
  %7633 = vmatmul.mubr.bf16.gmra.mrb[0].mxu0 %v5604
  %v7634 = vpop.f32.mrb[0].mxu0
  %v7635 = vadd.f32 %v7346, %v7634
  %v7636 = vpop.f32.mrb[0].mxu0
  %v7637 = vpop.f32.mrb[0].mxu0
  %v7638 = vadd.f32 %v7349, %v7637
  %v7639 = vpop.f32.mrb[0].mxu0
  %7640 = vmatprep.mubr.bf16.mxu0 0
  %7641 = vmatmul.mubr.bf16.gmra.mrb[0].mxu0 %v5613
  %v7642 = vpop.f32.mrb[0].mxu0
  %v7643 = vadd.f32 %v7354, %v7642
  %v7644 = vpop.f32.mrb[0].mxu0
  %v7645 = vpop.f32.mrb[0].mxu0
  %v7646 = vadd.f32 %v7357, %v7645
  %v7647 = vpop.f32.mrb[0].mxu0
  %7648 = vmatprep.mubr.bf16.mxu0 0
  %7649 = vmatmul.mubr.bf16.gmra.mrb[0].mxu0 %v5622
  %v7650 = vpop.f32.mrb[0].mxu0
  %v7651 = vadd.f32 %v7362, %v7650
  %v7652 = vpop.f32.mrb[0].mxu0
  %v7653 = vpop.f32.mrb[0].mxu0
  %v7654 = vadd.f32 %v7365, %v7653
  %v7655 = vpop.f32.mrb[0].mxu0
  %7656 = vmatprep.mubr.bf16.mxu0 0
  %7657 = vmatmul.mubr.bf16.gmra.mrb[0].mxu0 %v5631
  %v7658 = vpop.f32.mrb[0].mxu0
  %v7659 = vadd.f32 %v7370, %v7658
  %v7660 = vpop.f32.mrb[0].mxu0
  %v7661 = vpop.f32.mrb[0].mxu0
  %v7662 = vadd.f32 %v7373, %v7661
  %v7663 = vpop.f32.mrb[0].mxu0
  %7664 = vmatprep.mubr.bf16.mxu0 0
  %7665 = vmatmul.mubr.bf16.gmra.mrb[0].mxu0 %v5640
  %v7666 = vpop.f32.mrb[0].mxu0
  %v7667 = vadd.f32 %v7378, %v7666
  %v7668 = vpop.f32.mrb[0].mxu0
  %v7669 = vpop.f32.mrb[0].mxu0
  %v7670 = vadd.f32 %v7381, %v7669
  %v7671 = vpop.f32.mrb[0].mxu0
  %7672 = vmatprep.mubr.bf16.mxu0 0
  %7673 = vmatmul.mubr.bf16.gmra.mrb[0].mxu0 %v5649
  %v7674 = vpop.f32.mrb[0].mxu0
  %v7675 = vadd.f32 %v7386, %v7674
  %v7676 = vpop.f32.mrb[0].mxu0
  %v7677 = vpop.f32.mrb[0].mxu0
  %v7678 = vadd.f32 %v7389, %v7677
  %v7679 = vpop.f32.mrb[0].mxu0
  %7680 = vmatprep.mubr.bf16.mxu0 0
  %7681 = vmatmul.mubr.bf16.gmra.mrb[0].mxu0 %v5658
  %v7682 = vpop.f32.mrb[0].mxu0
  %v7683 = vadd.f32 %v7394, %v7682
  %v7684 = vpop.f32.mrb[0].mxu0
  %v7685 = vpop.f32.mrb[0].mxu0
  %v7686 = vadd.f32 %v7397, %v7685
  %v7687 = vpop.f32.mrb[0].mxu0
  %7688 = vmatprep.mubr.bf16.mxu0 0
  %7689 = vmatmul.mubr.bf16.gmra.mrb[0].mxu0 %v5667
  %v7690 = vpop.f32.mrb[0].mxu0
  %v7691 = vadd.f32 %v7402, %v7690
  %v7692 = vpop.f32.mrb[0].mxu0
  %v7693 = vpop.f32.mrb[0].mxu0
  %v7694 = vadd.f32 %v7405, %v7693
  %v7695 = vpop.f32.mrb[0].mxu0
  %7696 = vmatprep.mubr.bf16.mxu0 0
  %7697 = vmatmul.mubr.bf16.gmra.mrb[0].mxu0 %v5676
  %v7698 = vpop.f32.mrb[0].mxu0
  %v7699 = vadd.f32 %v7410, %v7698
  %v7700 = vpop.f32.mrb[0].mxu0
  %v7701 = vpop.f32.mrb[0].mxu0
  %v7702 = vadd.f32 %v7413, %v7701
  %v7703 = vpop.f32.mrb[0].mxu0
  %7704 = vmatprep.mubr.bf16.mxu0 0
  %7705 = vmatmul.mubr.bf16.gmra.mrb[0].mxu0 %v5685
  %v7706 = vpop.f32.mrb[0].mxu0
  %v7707 = vadd.f32 %v7418, %v7706
  %v7708 = vpop.f32.mrb[0].mxu0
  %v7709 = vpop.f32.mrb[0].mxu0
  %v7710 = vadd.f32 %v7421, %v7709
  %v7711 = vpop.f32.mrb[0].mxu0
  %7712 = vmatprep.mubr.bf16.mxu0 0
  %7713 = vmatmul.mubr.bf16.gmra.mrb[0].mxu0 %v5694
  %v7714 = vpop.f32.mrb[0].mxu0
  %v7715 = vadd.f32 %v7426, %v7714
  %v7716 = vpop.f32.mrb[0].mxu0
  %v7717 = vpop.f32.mrb[0].mxu0
  %v7718 = vadd.f32 %v7429, %v7717
  %v7719 = vpop.f32.mrb[0].mxu0
  %7720 = vmatprep.mubr.bf16.mxu0 0
  %7721 = vmatmul.mubr.bf16.gmra.mrb[0].mxu0 %v5703
  %v7722 = vpop.f32.mrb[0].mxu0
  %v7723 = vadd.f32 %v7434, %v7722
  %v7724 = vpop.f32.mrb[0].mxu0
  %v7725 = vpop.f32.mrb[0].mxu0
  %v7726 = vadd.f32 %v7437, %v7725
  %v7727 = vpop.f32.mrb[0].mxu0
  %7728 = vmatprep.mubr.bf16.mxu0 0
  %7729 = vmatmul.mubr.bf16.gmra.mrb[0].mxu0 %v5712
  %v7730 = vpop.f32.mrb[0].mxu0
  %v7731 = vadd.f32 %v7442, %v7730
  %v7732 = vpop.f32.mrb[0].mxu0
  %v7733 = vpop.f32.mrb[0].mxu0
  %v7734 = vadd.f32 %v7445, %v7733
  %v7735 = vpop.f32.mrb[0].mxu0
  %7736 = vmatprep.mubr.bf16.mxu0 0
  %7737 = vmatmul.mubr.bf16.gmra.mrb[0].mxu0 %v5721
  %v7738 = vpop.f32.mrb[0].mxu0
  %v7739 = vadd.f32 %v7450, %v7738
  %v7740 = vpop.f32.mrb[0].mxu0
  %v7741 = vpop.f32.mrb[0].mxu0
  %v7742 = vadd.f32 %v7453, %v7741
  %v7743 = vpop.f32.mrb[0].mxu0
  %7744 = vmatprep.mubr.bf16.mxu0 0
  %7745 = vmatmul.mubr.bf16.gmra.mrb[0].mxu0 %v5730
  %v7746 = vpop.f32.mrb[0].mxu0
  %v7747 = vadd.f32 %v7458, %v7746
  %v7748 = vpop.f32.mrb[0].mxu0
  %v7749 = vpop.f32.mrb[0].mxu0
  %v7750 = vadd.f32 %v7461, %v7749
  %v7751 = vpop.f32.mrb[0].mxu0
  %7752 = vmatprep.mubr.bf16.mxu0 0
  %7753 = vmatmul.mubr.bf16.gmra.mrb[0].mxu0 %v5739
  %v7754 = vpop.f32.mrb[0].mxu0
  %v7755 = vadd.f32 %v7466, %v7754
  %v7756 = vpop.f32.mrb[0].mxu0
  %v7757 = vpop.f32.mrb[0].mxu0
  %v7758 = vadd.f32 %v7469, %v7757
  %v7759 = vpop.f32.mrb[0].mxu0
  %7760 = vdwg.mxu0
  %v7761 = vadd.f32 %v7507, %v7510
  %v7762 = vadd.f32 %v7761, %v7515
  %v7763 = vadd.f32 %v7762, %v7518
  %v7764 = vadd.f32 %v7763, %v7523
  %v7765 = vadd.f32 %v7764, %v7526
  %v7766 = vadd.f32 %v7765, %v7531
  %v7767 = vadd.f32 %v7766, %v7534
  %v7768 = vadd.f32 %v7767, %v7539
  %v7769 = vadd.f32 %v7768, %v7542
  %v7770 = vadd.f32 %v7769, %v7547
  %v7771 = vadd.f32 %v7770, %v7550
  %v7772 = vadd.f32 %v7771, %v7555
  %v7773 = vadd.f32 %v7772, %v7558
  %v7774 = vadd.f32 %v7773, %v7563
  %v7775 = vadd.f32 %v7774, %v7566
  %v7776 = vadd.f32 %v7775, %v7571
  %v7777 = vadd.f32 %v7776, %v7574
  %v7778 = vadd.f32 %v7777, %v7579
  %v7779 = vadd.f32 %v7778, %v7582
  %v7780 = vadd.f32 %v7779, %v7587
  %v7781 = vadd.f32 %v7780, %v7590
  %v7782 = vadd.f32 %v7781, %v7595
  %v7783 = vadd.f32 %v7782, %v7598
  %v7784 = vadd.f32 %v7783, %v7603
  %v7785 = vadd.f32 %v7784, %v7606
  %v7786 = vadd.f32 %v7785, %v7611
  %v7787 = vadd.f32 %v7786, %v7614
  %v7788 = vadd.f32 %v7787, %v7619
  %v7789 = vadd.f32 %v7788, %v7622
  %v7790 = vadd.f32 %v7789, %v7627
  %v7791 = vadd.f32 %v7790, %v7630
  %v7792 = vadd.f32 %v7791, %v7635
  %v7793 = vadd.f32 %v7792, %v7638
  %v7794 = vadd.f32 %v7793, %v7643
  %v7795 = vadd.f32 %v7794, %v7646
  %v7796 = vadd.f32 %v7795, %v7651
  %v7797 = vadd.f32 %v7796, %v7654
  %v7798 = vadd.f32 %v7797, %v7659
  %v7799 = vadd.f32 %v7798, %v7662
  %v7800 = vadd.f32 %v7799, %v7667
  %v7801 = vadd.f32 %v7800, %v7670
  %v7802 = vadd.f32 %v7801, %v7675
  %v7803 = vadd.f32 %v7802, %v7678
  %v7804 = vadd.f32 %v7803, %v7683
  %v7805 = vadd.f32 %v7804, %v7686
  %v7806 = vadd.f32 %v7805, %v7691
  %v7807 = vadd.f32 %v7806, %v7694
  %v7808 = vadd.f32 %v7807, %v7699
  %v7809 = vadd.f32 %v7808, %v7702
  %v7810 = vadd.f32 %v7809, %v7707
  %v7811 = vadd.f32 %v7810, %v7710
  %v7812 = vadd.f32 %v7811, %v7715
  %v7813 = vadd.f32 %v7812, %v7718
  %v7814 = vadd.f32 %v7813, %v7723
  %v7815 = vadd.f32 %v7814, %v7726
  %v7816 = vadd.f32 %v7815, %v7731
  %v7817 = vadd.f32 %v7816, %v7734
  %v7818 = vadd.f32 %v7817, %v7739
  %v7819 = vadd.f32 %v7818, %v7742
  %v7820 = vadd.f32 %v7819, %v7747
  %v7821 = vadd.f32 %v7820, %v7750
  %v7822 = vadd.f32 %v7821, %v7755
  %v7823 = vadd.f32 %v7822, %v7758
  %v7824 = vrot.slane %v7823, 4
  %v7825 = vadd.f32 %v7823, %v7824
  %v7826 = vrot.slane %v7825, 2
  %v7827 = vadd.f32 %v7825, %v7826
  %v7828 = vrot.slane %v7827, 1
  %v7829 = vadd.f32 %v7827, %v7828
  %v7830 = vmul.f32 %v7829, %v3764
  %v7831 = vsub.f32 %v7507, %v7830
  %v7832 = vsub.f32 %v7510, %v7830
  %v7833 = vsub.f32 %v7515, %v7830
  %v7834 = vsub.f32 %v7518, %v7830
  %v7835 = vsub.f32 %v7523, %v7830
  %v7836 = vsub.f32 %v7526, %v7830
  %v7837 = vsub.f32 %v7531, %v7830
  %v7838 = vsub.f32 %v7534, %v7830
  %v7839 = vsub.f32 %v7539, %v7830
  %v7840 = vsub.f32 %v7542, %v7830
  %v7841 = vsub.f32 %v7547, %v7830
  %v7842 = vsub.f32 %v7550, %v7830
  %v7843 = vsub.f32 %v7555, %v7830
  %v7844 = vsub.f32 %v7558, %v7830
  %v7845 = vsub.f32 %v7563, %v7830
  %v7846 = vsub.f32 %v7566, %v7830
  %v7847 = vsub.f32 %v7571, %v7830
  %v7848 = vsub.f32 %v7574, %v7830
  %v7849 = vsub.f32 %v7579, %v7830
  %v7850 = vsub.f32 %v7582, %v7830
  %v7851 = vsub.f32 %v7587, %v7830
  %v7852 = vsub.f32 %v7590, %v7830
  %v7853 = vsub.f32 %v7595, %v7830
  %v7854 = vsub.f32 %v7598, %v7830
  %v7855 = vsub.f32 %v7603, %v7830
  %v7856 = vsub.f32 %v7606, %v7830
  %v7857 = vsub.f32 %v7611, %v7830
  %v7858 = vsub.f32 %v7614, %v7830
  %v7859 = vsub.f32 %v7619, %v7830
  %v7860 = vsub.f32 %v7622, %v7830
  %v7861 = vsub.f32 %v7627, %v7830
  %v7862 = vsub.f32 %v7630, %v7830
  %v7863 = vsub.f32 %v7635, %v7830
  %v7864 = vsub.f32 %v7638, %v7830
  %v7865 = vsub.f32 %v7643, %v7830
  %v7866 = vsub.f32 %v7646, %v7830
  %v7867 = vsub.f32 %v7651, %v7830
  %v7868 = vsub.f32 %v7654, %v7830
  %v7869 = vsub.f32 %v7659, %v7830
  %v7870 = vsub.f32 %v7662, %v7830
  %v7871 = vsub.f32 %v7667, %v7830
  %v7872 = vsub.f32 %v7670, %v7830
  %v7873 = vsub.f32 %v7675, %v7830
  %v7874 = vsub.f32 %v7678, %v7830
  %v7875 = vsub.f32 %v7683, %v7830
  %v7876 = vsub.f32 %v7686, %v7830
  %v7877 = vsub.f32 %v7691, %v7830
  %v7878 = vsub.f32 %v7694, %v7830
  %v7879 = vsub.f32 %v7699, %v7830
  %v7880 = vsub.f32 %v7702, %v7830
  %v7881 = vsub.f32 %v7707, %v7830
  %v7882 = vsub.f32 %v7710, %v7830
  %v7883 = vsub.f32 %v7715, %v7830
  %v7884 = vsub.f32 %v7718, %v7830
  %v7885 = vsub.f32 %v7723, %v7830
  %v7886 = vsub.f32 %v7726, %v7830
  %v7887 = vsub.f32 %v7731, %v7830
  %v7888 = vsub.f32 %v7734, %v7830
  %v7889 = vsub.f32 %v7739, %v7830
  %v7890 = vsub.f32 %v7742, %v7830
  %v7891 = vsub.f32 %v7747, %v7830
  %v7892 = vsub.f32 %v7750, %v7830
  %v7893 = vsub.f32 %v7755, %v7830
  %v7894 = vsub.f32 %v7758, %v7830
  %v7895 = vmul.f32 %v7831, %v7831
  %v7896 = vmul.f32 %v7832, %v7832
  %v7897 = vmul.f32 %v7833, %v7833
  %v7898 = vmul.f32 %v7834, %v7834
  %v7899 = vmul.f32 %v7835, %v7835
  %v7900 = vmul.f32 %v7836, %v7836
  %v7901 = vmul.f32 %v7837, %v7837
  %v7902 = vmul.f32 %v7838, %v7838
  %v7903 = vmul.f32 %v7839, %v7839
  %v7904 = vmul.f32 %v7840, %v7840
  %v7905 = vmul.f32 %v7841, %v7841
  %v7906 = vmul.f32 %v7842, %v7842
  %v7907 = vmul.f32 %v7843, %v7843
  %v7908 = vmul.f32 %v7844, %v7844
  %v7909 = vmul.f32 %v7845, %v7845
  %v7910 = vmul.f32 %v7846, %v7846
  %v7911 = vmul.f32 %v7847, %v7847
  %v7912 = vmul.f32 %v7848, %v7848
  %v7913 = vmul.f32 %v7849, %v7849
  %v7914 = vmul.f32 %v7850, %v7850
  %v7915 = vmul.f32 %v7851, %v7851
  %v7916 = vmul.f32 %v7852, %v7852
  %v7917 = vmul.f32 %v7853, %v7853
  %v7918 = vmul.f32 %v7854, %v7854
  %v7919 = vmul.f32 %v7855, %v7855
  %v7920 = vmul.f32 %v7856, %v7856
  %v7921 = vmul.f32 %v7857, %v7857
  %v7922 = vmul.f32 %v7858, %v7858
  %v7923 = vmul.f32 %v7859, %v7859
  %v7924 = vmul.f32 %v7860, %v7860
  %v7925 = vmul.f32 %v7861, %v7861
  %v7926 = vmul.f32 %v7862, %v7862
  %v7927 = vmul.f32 %v7863, %v7863
  %v7928 = vmul.f32 %v7864, %v7864
  %v7929 = vmul.f32 %v7865, %v7865
  %v7930 = vmul.f32 %v7866, %v7866
  %v7931 = vmul.f32 %v7867, %v7867
  %v7932 = vmul.f32 %v7868, %v7868
  %v7933 = vmul.f32 %v7869, %v7869
  %v7934 = vmul.f32 %v7870, %v7870
  %v7935 = vmul.f32 %v7871, %v7871
  %v7936 = vmul.f32 %v7872, %v7872
  %v7937 = vmul.f32 %v7873, %v7873
  %v7938 = vmul.f32 %v7874, %v7874
  %v7939 = vmul.f32 %v7875, %v7875
  %v7940 = vmul.f32 %v7876, %v7876
  %v7941 = vmul.f32 %v7877, %v7877
  %v7942 = vmul.f32 %v7878, %v7878
  %v7943 = vmul.f32 %v7879, %v7879
  %v7944 = vmul.f32 %v7880, %v7880
  %v7945 = vmul.f32 %v7881, %v7881
  %v7946 = vmul.f32 %v7882, %v7882
  %v7947 = vmul.f32 %v7883, %v7883
  %v7948 = vmul.f32 %v7884, %v7884
  %v7949 = vmul.f32 %v7885, %v7885
  %v7950 = vmul.f32 %v7886, %v7886
  %v7951 = vmul.f32 %v7887, %v7887
  %v7952 = vmul.f32 %v7888, %v7888
  %v7953 = vmul.f32 %v7889, %v7889
  %v7954 = vmul.f32 %v7890, %v7890
  %v7955 = vmul.f32 %v7891, %v7891
  %v7956 = vmul.f32 %v7892, %v7892
  %v7957 = vmul.f32 %v7893, %v7893
  %v7958 = vmul.f32 %v7894, %v7894
  %v7959 = vadd.f32 %v7895, %v7896
  %v7960 = vadd.f32 %v7959, %v7897
  %v7961 = vadd.f32 %v7960, %v7898
  %v7962 = vadd.f32 %v7961, %v7899
  %v7963 = vadd.f32 %v7962, %v7900
  %v7964 = vadd.f32 %v7963, %v7901
  %v7965 = vadd.f32 %v7964, %v7902
  %v7966 = vadd.f32 %v7965, %v7903
  %v7967 = vadd.f32 %v7966, %v7904
  %v7968 = vadd.f32 %v7967, %v7905
  %v7969 = vadd.f32 %v7968, %v7906
  %v7970 = vadd.f32 %v7969, %v7907
  %v7971 = vadd.f32 %v7970, %v7908
  %v7972 = vadd.f32 %v7971, %v7909
  %v7973 = vadd.f32 %v7972, %v7910
  %v7974 = vadd.f32 %v7973, %v7911
  %v7975 = vadd.f32 %v7974, %v7912
  %v7976 = vadd.f32 %v7975, %v7913
  %v7977 = vadd.f32 %v7976, %v7914
  %v7978 = vadd.f32 %v7977, %v7915
  %v7979 = vadd.f32 %v7978, %v7916
  %v7980 = vadd.f32 %v7979, %v7917
  %v7981 = vadd.f32 %v7980, %v7918
  %v7982 = vadd.f32 %v7981, %v7919
  %v7983 = vadd.f32 %v7982, %v7920
  %v7984 = vadd.f32 %v7983, %v7921
  %v7985 = vadd.f32 %v7984, %v7922
  %v7986 = vadd.f32 %v7985, %v7923
  %v7987 = vadd.f32 %v7986, %v7924
  %v7988 = vadd.f32 %v7987, %v7925
  %v7989 = vadd.f32 %v7988, %v7926
  %v7990 = vadd.f32 %v7989, %v7927
  %v7991 = vadd.f32 %v7990, %v7928
  %v7992 = vadd.f32 %v7991, %v7929
  %v7993 = vadd.f32 %v7992, %v7930
  %v7994 = vadd.f32 %v7993, %v7931
  %v7995 = vadd.f32 %v7994, %v7932
  %v7996 = vadd.f32 %v7995, %v7933
  %v7997 = vadd.f32 %v7996, %v7934
  %v7998 = vadd.f32 %v7997, %v7935
  %v7999 = vadd.f32 %v7998, %v7936
  %v8000 = vadd.f32 %v7999, %v7937
  %v8001 = vadd.f32 %v8000, %v7938
  %v8002 = vadd.f32 %v8001, %v7939
  %v8003 = vadd.f32 %v8002, %v7940
  %v8004 = vadd.f32 %v8003, %v7941
  %v8005 = vadd.f32 %v8004, %v7942
  %v8006 = vadd.f32 %v8005, %v7943
  %v8007 = vadd.f32 %v8006, %v7944
  %v8008 = vadd.f32 %v8007, %v7945
  %v8009 = vadd.f32 %v8008, %v7946
  %v8010 = vadd.f32 %v8009, %v7947
  %v8011 = vadd.f32 %v8010, %v7948
  %v8012 = vadd.f32 %v8011, %v7949
  %v8013 = vadd.f32 %v8012, %v7950
  %v8014 = vadd.f32 %v8013, %v7951
  %v8015 = vadd.f32 %v8014, %v7952
  %v8016 = vadd.f32 %v8015, %v7953
  %v8017 = vadd.f32 %v8016, %v7954
  %v8018 = vadd.f32 %v8017, %v7955
  %v8019 = vadd.f32 %v8018, %v7956
  %v8020 = vadd.f32 %v8019, %v7957
  %v8021 = vadd.f32 %v8020, %v7958
  %v8022 = vrot.slane %v8021, 4
  %v8023 = vadd.f32 %v8021, %v8022
  %v8024 = vrot.slane %v8023, 2
  %v8025 = vadd.f32 %v8023, %v8024
  %v8026 = vrot.slane %v8025, 1
  %v8027 = vadd.f32 %v8025, %v8026
  %v8028 = vmul.f32 %v8027, %v3764
  %v8029 = vadd.f32 %v8028, 1e-05
  %v8030 = vrsqrt.pop %v8029
  %v8031 = vmul.f32 %v7831, %v8030
  %v8032 = vmul.f32 %v7832, %v8030
  %v8033 = vmul.f32 %v7833, %v8030
  %v8034 = vmul.f32 %v7834, %v8030
  %v8035 = vmul.f32 %v7835, %v8030
  %v8036 = vmul.f32 %v7836, %v8030
  %v8037 = vmul.f32 %v7837, %v8030
  %v8038 = vmul.f32 %v7838, %v8030
  %v8039 = vmul.f32 %v7839, %v8030
  %v8040 = vmul.f32 %v7840, %v8030
  %v8041 = vmul.f32 %v7841, %v8030
  %v8042 = vmul.f32 %v7842, %v8030
  %v8043 = vmul.f32 %v7843, %v8030
  %v8044 = vmul.f32 %v7844, %v8030
  %v8045 = vmul.f32 %v7845, %v8030
  %v8046 = vmul.f32 %v7846, %v8030
  %v8047 = vmul.f32 %v7847, %v8030
  %v8048 = vmul.f32 %v7848, %v8030
  %v8049 = vmul.f32 %v7849, %v8030
  %v8050 = vmul.f32 %v7850, %v8030
  %v8051 = vmul.f32 %v7851, %v8030
  %v8052 = vmul.f32 %v7852, %v8030
  %v8053 = vmul.f32 %v7853, %v8030
  %v8054 = vmul.f32 %v7854, %v8030
  %v8055 = vmul.f32 %v7855, %v8030
  %v8056 = vmul.f32 %v7856, %v8030
  %v8057 = vmul.f32 %v7857, %v8030
  %v8058 = vmul.f32 %v7858, %v8030
  %v8059 = vmul.f32 %v7859, %v8030
  %v8060 = vmul.f32 %v7860, %v8030
  %v8061 = vmul.f32 %v7861, %v8030
  %v8062 = vmul.f32 %v7862, %v8030
  %v8063 = vmul.f32 %v7863, %v8030
  %v8064 = vmul.f32 %v7864, %v8030
  %v8065 = vmul.f32 %v7865, %v8030
  %v8066 = vmul.f32 %v7866, %v8030
  %v8067 = vmul.f32 %v7867, %v8030
  %v8068 = vmul.f32 %v7868, %v8030
  %v8069 = vmul.f32 %v7869, %v8030
  %v8070 = vmul.f32 %v7870, %v8030
  %v8071 = vmul.f32 %v7871, %v8030
  %v8072 = vmul.f32 %v7872, %v8030
  %v8073 = vmul.f32 %v7873, %v8030
  %v8074 = vmul.f32 %v7874, %v8030
  %v8075 = vmul.f32 %v7875, %v8030
  %v8076 = vmul.f32 %v7876, %v8030
  %v8077 = vmul.f32 %v7877, %v8030
  %v8078 = vmul.f32 %v7878, %v8030
  %v8079 = vmul.f32 %v7879, %v8030
  %v8080 = vmul.f32 %v7880, %v8030
  %v8081 = vmul.f32 %v7881, %v8030
  %v8082 = vmul.f32 %v7882, %v8030
  %v8083 = vmul.f32 %v7883, %v8030
  %v8084 = vmul.f32 %v7884, %v8030
  %v8085 = vmul.f32 %v7885, %v8030
  %v8086 = vmul.f32 %v7886, %v8030
  %v8087 = vmul.f32 %v7887, %v8030
  %v8088 = vmul.f32 %v7888, %v8030
  %v8089 = vmul.f32 %v7889, %v8030
  %v8090 = vmul.f32 %v7890, %v8030
  %v8091 = vmul.f32 %v7891, %v8030
  %v8092 = vmul.f32 %v7892, %v8030
  %v8093 = vmul.f32 %v7893, %v8030
  %v8094 = vmul.f32 %v7894, %v8030
  %v8095 = vld [vmem:[%s5] sm:$0x1]
  %v8097 = vlaneseq
  %v8098 = vshrl.u32 %v8097, 7
  %v8099 = vsub.s32 0, %v8098
  %v8100 = vrot.slane %v8095, %v8099
  %v8102 = vmul.f32 %v8031, %v8100
  %v8103 = vmul.f32 %v8032, %v8100
  %v8104 = vmul.f32 %v8033, %v8100
  %v8105 = vmul.f32 %v8034, %v8100
  %v8106 = vmul.f32 %v8035, %v8100
  %v8107 = vmul.f32 %v8036, %v8100
  %v8108 = vmul.f32 %v8037, %v8100
  %v8109 = vmul.f32 %v8038, %v8100
  %v8110 = vmul.f32 %v8039, %v8100
  %v8111 = vmul.f32 %v8040, %v8100
  %v8112 = vmul.f32 %v8041, %v8100
  %v8113 = vmul.f32 %v8042, %v8100
  %v8114 = vmul.f32 %v8043, %v8100
  %v8115 = vmul.f32 %v8044, %v8100
  %v8116 = vmul.f32 %v8045, %v8100
  %v8117 = vmul.f32 %v8046, %v8100
  %v8118 = vmul.f32 %v8047, %v8100
  %v8119 = vmul.f32 %v8048, %v8100
  %v8120 = vmul.f32 %v8049, %v8100
  %v8121 = vmul.f32 %v8050, %v8100
  %v8122 = vmul.f32 %v8051, %v8100
  %v8123 = vmul.f32 %v8052, %v8100
  %v8124 = vmul.f32 %v8053, %v8100
  %v8125 = vmul.f32 %v8054, %v8100
  %v8126 = vmul.f32 %v8055, %v8100
  %v8127 = vmul.f32 %v8056, %v8100
  %v8128 = vmul.f32 %v8057, %v8100
  %v8129 = vmul.f32 %v8058, %v8100
  %v8130 = vmul.f32 %v8059, %v8100
  %v8131 = vmul.f32 %v8060, %v8100
  %v8132 = vmul.f32 %v8061, %v8100
  %v8133 = vmul.f32 %v8062, %v8100
  %v8134 = vmul.f32 %v8063, %v8100
  %v8135 = vmul.f32 %v8064, %v8100
  %v8136 = vmul.f32 %v8065, %v8100
  %v8137 = vmul.f32 %v8066, %v8100
  %v8138 = vmul.f32 %v8067, %v8100
  %v8139 = vmul.f32 %v8068, %v8100
  %v8140 = vmul.f32 %v8069, %v8100
  %v8141 = vmul.f32 %v8070, %v8100
  %v8142 = vmul.f32 %v8071, %v8100
  %v8143 = vmul.f32 %v8072, %v8100
  %v8144 = vmul.f32 %v8073, %v8100
  %v8145 = vmul.f32 %v8074, %v8100
  %v8146 = vmul.f32 %v8075, %v8100
  %v8147 = vmul.f32 %v8076, %v8100
  %v8148 = vmul.f32 %v8077, %v8100
  %v8149 = vmul.f32 %v8078, %v8100
  %v8150 = vmul.f32 %v8079, %v8100
  %v8151 = vmul.f32 %v8080, %v8100
  %v8152 = vmul.f32 %v8081, %v8100
  %v8153 = vmul.f32 %v8082, %v8100
  %v8154 = vmul.f32 %v8083, %v8100
  %v8155 = vmul.f32 %v8084, %v8100
  %v8156 = vmul.f32 %v8085, %v8100
  %v8157 = vmul.f32 %v8086, %v8100
  %v8158 = vmul.f32 %v8087, %v8100
  %v8159 = vmul.f32 %v8088, %v8100
  %v8160 = vmul.f32 %v8089, %v8100
  %v8161 = vmul.f32 %v8090, %v8100
  %v8162 = vmul.f32 %v8091, %v8100
  %v8163 = vmul.f32 %v8092, %v8100
  %v8164 = vmul.f32 %v8093, %v8100
  %v8165 = vmul.f32 %v8094, %v8100
  %v8166 = vld [vmem:[%s6] sm:$0x1]
  %v8168 = vlaneseq
  %v8169 = vshrl.u32 %v8168, 7
  %v8170 = vsub.s32 0, %v8169
  %v8171 = vrot.slane %v8166, %v8170
  %v8173 = vadd.f32 %v8102, %v8171
  %v8174 = vadd.f32 %v8103, %v8171
  %v8175 = vadd.f32 %v8104, %v8171
  %v8176 = vadd.f32 %v8105, %v8171
  %v8177 = vadd.f32 %v8106, %v8171
  %v8178 = vadd.f32 %v8107, %v8171
  %v8179 = vadd.f32 %v8108, %v8171
  %v8180 = vadd.f32 %v8109, %v8171
  %v8181 = vadd.f32 %v8110, %v8171
  %v8182 = vadd.f32 %v8111, %v8171
  %v8183 = vadd.f32 %v8112, %v8171
  %v8184 = vadd.f32 %v8113, %v8171
  %v8185 = vadd.f32 %v8114, %v8171
  %v8186 = vadd.f32 %v8115, %v8171
  %v8187 = vadd.f32 %v8116, %v8171
  %v8188 = vadd.f32 %v8117, %v8171
  %v8189 = vadd.f32 %v8118, %v8171
  %v8190 = vadd.f32 %v8119, %v8171
  %v8191 = vadd.f32 %v8120, %v8171
  %v8192 = vadd.f32 %v8121, %v8171
  %v8193 = vadd.f32 %v8122, %v8171
  %v8194 = vadd.f32 %v8123, %v8171
  %v8195 = vadd.f32 %v8124, %v8171
  %v8196 = vadd.f32 %v8125, %v8171
  %v8197 = vadd.f32 %v8126, %v8171
  %v8198 = vadd.f32 %v8127, %v8171
  %v8199 = vadd.f32 %v8128, %v8171
  %v8200 = vadd.f32 %v8129, %v8171
  %v8201 = vadd.f32 %v8130, %v8171
  %v8202 = vadd.f32 %v8131, %v8171
  %v8203 = vadd.f32 %v8132, %v8171
  %v8204 = vadd.f32 %v8133, %v8171
  %v8205 = vadd.f32 %v8134, %v8171
  %v8206 = vadd.f32 %v8135, %v8171
  %v8207 = vadd.f32 %v8136, %v8171
  %v8208 = vadd.f32 %v8137, %v8171
  %v8209 = vadd.f32 %v8138, %v8171
  %v8210 = vadd.f32 %v8139, %v8171
  %v8211 = vadd.f32 %v8140, %v8171
  %v8212 = vadd.f32 %v8141, %v8171
  %v8213 = vadd.f32 %v8142, %v8171
  %v8214 = vadd.f32 %v8143, %v8171
  %v8215 = vadd.f32 %v8144, %v8171
  %v8216 = vadd.f32 %v8145, %v8171
  %v8217 = vadd.f32 %v8146, %v8171
  %v8218 = vadd.f32 %v8147, %v8171
  %v8219 = vadd.f32 %v8148, %v8171
  %v8220 = vadd.f32 %v8149, %v8171
  %v8221 = vadd.f32 %v8150, %v8171
  %v8222 = vadd.f32 %v8151, %v8171
  %v8223 = vadd.f32 %v8152, %v8171
  %v8224 = vadd.f32 %v8153, %v8171
  %v8225 = vadd.f32 %v8154, %v8171
  %v8226 = vadd.f32 %v8155, %v8171
  %v8227 = vadd.f32 %v8156, %v8171
  %v8228 = vadd.f32 %v8157, %v8171
  %v8229 = vadd.f32 %v8158, %v8171
  %v8230 = vadd.f32 %v8159, %v8171
  %v8231 = vadd.f32 %v8160, %v8171
  %v8232 = vadd.f32 %v8161, %v8171
  %v8233 = vadd.f32 %v8162, %v8171
  %v8234 = vadd.f32 %v8163, %v8171
  %v8235 = vadd.f32 %v8164, %v8171
  %v8236 = vadd.f32 %v8165, %v8171
  %v8237 = vld [vmem:[%s0] sm:$0xff]
  %v8238 = vld [vmem:[%s0 + $0x8] sm:$0xff]
  %v8239 = vld [vmem:[%s0 + $0x10] sm:$0xff]
  %v8240 = vld [vmem:[%s0 + $0x18] sm:$0xff]
  %v8241 = vld [vmem:[%s0 + $0x20] sm:$0xff]
  %v8242 = vld [vmem:[%s0 + $0x28] sm:$0xff]
  %v8243 = vld [vmem:[%s0 + $0x30] sm:$0xff]
  %v8244 = vld [vmem:[%s0 + $0x38] sm:$0xff]
  %v8245 = vld [vmem:[%s0 + $0x40] sm:$0xff]
  %v8246 = vld [vmem:[%s0 + $0x48] sm:$0xff]
  %v8247 = vld [vmem:[%s0 + $0x50] sm:$0xff]
  %v8248 = vld [vmem:[%s0 + $0x58] sm:$0xff]
  %v8249 = vld [vmem:[%s0 + $0x60] sm:$0xff]
  %v8250 = vld [vmem:[%s0 + $0x68] sm:$0xff]
  %v8251 = vld [vmem:[%s0 + $0x70] sm:$0xff]
  %v8252 = vld [vmem:[%s0 + $0x78] sm:$0xff]
  %v8253 = vld [vmem:[%s0 + $0x80] sm:$0xff]
  %v8254 = vld [vmem:[%s0 + $0x88] sm:$0xff]
  %v8255 = vld [vmem:[%s0 + $0x90] sm:$0xff]
  %v8256 = vld [vmem:[%s0 + $0x98] sm:$0xff]
  %v8257 = vld [vmem:[%s0 + $0xa0] sm:$0xff]
  %v8258 = vld [vmem:[%s0 + $0xa8] sm:$0xff]
  %v8259 = vld [vmem:[%s0 + $0xb0] sm:$0xff]
  %v8260 = vld [vmem:[%s0 + $0xb8] sm:$0xff]
  %v8261 = vld [vmem:[%s0 + $0xc0] sm:$0xff]
  %v8262 = vld [vmem:[%s0 + $0xc8] sm:$0xff]
  %v8263 = vld [vmem:[%s0 + $0xd0] sm:$0xff]
  %v8264 = vld [vmem:[%s0 + $0xd8] sm:$0xff]
  %v8265 = vld [vmem:[%s0 + $0xe0] sm:$0xff]
  %v8266 = vld [vmem:[%s0 + $0xe8] sm:$0xff]
  %v8267 = vld [vmem:[%s0 + $0xf0] sm:$0xff]
  %v8268 = vld [vmem:[%s0 + $0xf8] sm:$0xff]
  %v8269 = vld [vmem:[%s0 + $0x100] sm:$0xff]
  %v8270 = vld [vmem:[%s0 + $0x108] sm:$0xff]
  %v8271 = vld [vmem:[%s0 + $0x110] sm:$0xff]
  %v8272 = vld [vmem:[%s0 + $0x118] sm:$0xff]
  %v8273 = vld [vmem:[%s0 + $0x120] sm:$0xff]
  %v8274 = vld [vmem:[%s0 + $0x128] sm:$0xff]
  %v8275 = vld [vmem:[%s0 + $0x130] sm:$0xff]
  %v8276 = vld [vmem:[%s0 + $0x138] sm:$0xff]
  %v8277 = vld [vmem:[%s0 + $0x140] sm:$0xff]
  %v8278 = vld [vmem:[%s0 + $0x148] sm:$0xff]
  %v8279 = vld [vmem:[%s0 + $0x150] sm:$0xff]
  %v8280 = vld [vmem:[%s0 + $0x158] sm:$0xff]
  %v8281 = vld [vmem:[%s0 + $0x160] sm:$0xff]
  %v8282 = vld [vmem:[%s0 + $0x168] sm:$0xff]
  %v8283 = vld [vmem:[%s0 + $0x170] sm:$0xff]
  %v8284 = vld [vmem:[%s0 + $0x178] sm:$0xff]
  %v8285 = vld [vmem:[%s0 + $0x180] sm:$0xff]
  %v8286 = vld [vmem:[%s0 + $0x188] sm:$0xff]
  %v8287 = vld [vmem:[%s0 + $0x190] sm:$0xff]
  %v8288 = vld [vmem:[%s0 + $0x198] sm:$0xff]
  %v8289 = vld [vmem:[%s0 + $0x1a0] sm:$0xff]
  %v8290 = vld [vmem:[%s0 + $0x1a8] sm:$0xff]
  %v8291 = vld [vmem:[%s0 + $0x1b0] sm:$0xff]
  %v8292 = vld [vmem:[%s0 + $0x1b8] sm:$0xff]
  %v8293 = vld [vmem:[%s0 + $0x1c0] sm:$0xff]
  %v8294 = vld [vmem:[%s0 + $0x1c8] sm:$0xff]
  %v8295 = vld [vmem:[%s0 + $0x1d0] sm:$0xff]
  %v8296 = vld [vmem:[%s0 + $0x1d8] sm:$0xff]
  %v8297 = vld [vmem:[%s0 + $0x1e0] sm:$0xff]
  %v8298 = vld [vmem:[%s0 + $0x1e8] sm:$0xff]
  %v8299 = vld [vmem:[%s0 + $0x1f0] sm:$0xff]
  %v8300 = vld [vmem:[%s0 + $0x1f8] sm:$0xff]
  %v8301 = vadd.f32 %v8173, %v8237
  %v8302 = vadd.f32 %v8174, %v8238
  %v8303 = vadd.f32 %v8175, %v8239
  %v8304 = vadd.f32 %v8176, %v8240
  %v8305 = vadd.f32 %v8177, %v8241
  %v8306 = vadd.f32 %v8178, %v8242
  %v8307 = vadd.f32 %v8179, %v8243
  %v8308 = vadd.f32 %v8180, %v8244
  %v8309 = vadd.f32 %v8181, %v8245
  %v8310 = vadd.f32 %v8182, %v8246
  %v8311 = vadd.f32 %v8183, %v8247
  %v8312 = vadd.f32 %v8184, %v8248
  %v8313 = vadd.f32 %v8185, %v8249
  %v8314 = vadd.f32 %v8186, %v8250
  %v8315 = vadd.f32 %v8187, %v8251
  %v8316 = vadd.f32 %v8188, %v8252
  %v8317 = vadd.f32 %v8189, %v8253
  %v8318 = vadd.f32 %v8190, %v8254
  %v8319 = vadd.f32 %v8191, %v8255
  %v8320 = vadd.f32 %v8192, %v8256
  %v8321 = vadd.f32 %v8193, %v8257
  %v8322 = vadd.f32 %v8194, %v8258
  %v8323 = vadd.f32 %v8195, %v8259
  %v8324 = vadd.f32 %v8196, %v8260
  %v8325 = vadd.f32 %v8197, %v8261
  %v8326 = vadd.f32 %v8198, %v8262
  %v8327 = vadd.f32 %v8199, %v8263
  %v8328 = vadd.f32 %v8200, %v8264
  %v8329 = vadd.f32 %v8201, %v8265
  %v8330 = vadd.f32 %v8202, %v8266
  %v8331 = vadd.f32 %v8203, %v8267
  %v8332 = vadd.f32 %v8204, %v8268
  %v8333 = vadd.f32 %v8205, %v8269
  %v8334 = vadd.f32 %v8206, %v8270
  %v8335 = vadd.f32 %v8207, %v8271
  %v8336 = vadd.f32 %v8208, %v8272
  %v8337 = vadd.f32 %v8209, %v8273
  %v8338 = vadd.f32 %v8210, %v8274
  %v8339 = vadd.f32 %v8211, %v8275
  %v8340 = vadd.f32 %v8212, %v8276
  %v8341 = vadd.f32 %v8213, %v8277
  %v8342 = vadd.f32 %v8214, %v8278
  %v8343 = vadd.f32 %v8215, %v8279
  %v8344 = vadd.f32 %v8216, %v8280
  %v8345 = vadd.f32 %v8217, %v8281
  %v8346 = vadd.f32 %v8218, %v8282
  %v8347 = vadd.f32 %v8219, %v8283
  %v8348 = vadd.f32 %v8220, %v8284
  %v8349 = vadd.f32 %v8221, %v8285
  %v8350 = vadd.f32 %v8222, %v8286
  %v8351 = vadd.f32 %v8223, %v8287
  %v8352 = vadd.f32 %v8224, %v8288
  %v8353 = vadd.f32 %v8225, %v8289
  %v8354 = vadd.f32 %v8226, %v8290
  %v8355 = vadd.f32 %v8227, %v8291
  %v8356 = vadd.f32 %v8228, %v8292
  %v8357 = vadd.f32 %v8229, %v8293
  %v8358 = vadd.f32 %v8230, %v8294
  %v8359 = vadd.f32 %v8231, %v8295
  %v8360 = vadd.f32 %v8232, %v8296
  %v8361 = vadd.f32 %v8233, %v8297
  %v8362 = vadd.f32 %v8234, %v8298
  %v8363 = vadd.f32 %v8235, %v8299
  %v8364 = vadd.f32 %v8236, %v8300
  %v8365 = vmax.f32 %v8301, 0.0
  %v8366 = vmax.f32 %v8302, 0.0
  %v8367 = vmax.f32 %v8303, 0.0
  %v8368 = vmax.f32 %v8304, 0.0
  %v8369 = vmax.f32 %v8305, 0.0
  %v8370 = vmax.f32 %v8306, 0.0
  %v8371 = vmax.f32 %v8307, 0.0
  %v8372 = vmax.f32 %v8308, 0.0
  %v8373 = vmax.f32 %v8309, 0.0
  %v8374 = vmax.f32 %v8310, 0.0
  %v8375 = vmax.f32 %v8311, 0.0
  %v8376 = vmax.f32 %v8312, 0.0
  %v8377 = vmax.f32 %v8313, 0.0
  %v8378 = vmax.f32 %v8314, 0.0
  %v8379 = vmax.f32 %v8315, 0.0
  %v8380 = vmax.f32 %v8316, 0.0
  %v8381 = vmax.f32 %v8317, 0.0
  %v8382 = vmax.f32 %v8318, 0.0
  %v8383 = vmax.f32 %v8319, 0.0
  %v8384 = vmax.f32 %v8320, 0.0
  %v8385 = vmax.f32 %v8321, 0.0
  %v8386 = vmax.f32 %v8322, 0.0
  %v8387 = vmax.f32 %v8323, 0.0
  %v8388 = vmax.f32 %v8324, 0.0
  %v8389 = vmax.f32 %v8325, 0.0
  %v8390 = vmax.f32 %v8326, 0.0
  %v8391 = vmax.f32 %v8327, 0.0
  %v8392 = vmax.f32 %v8328, 0.0
  %v8393 = vmax.f32 %v8329, 0.0
  %v8394 = vmax.f32 %v8330, 0.0
  %v8395 = vmax.f32 %v8331, 0.0
  %v8396 = vmax.f32 %v8332, 0.0
  %v8397 = vmax.f32 %v8333, 0.0
  %v8398 = vmax.f32 %v8334, 0.0
  %v8399 = vmax.f32 %v8335, 0.0
  %v8400 = vmax.f32 %v8336, 0.0
  %v8401 = vmax.f32 %v8337, 0.0
  %v8402 = vmax.f32 %v8338, 0.0
  %v8403 = vmax.f32 %v8339, 0.0
  %v8404 = vmax.f32 %v8340, 0.0
  %v8405 = vmax.f32 %v8341, 0.0
  %v8406 = vmax.f32 %v8342, 0.0
  %v8407 = vmax.f32 %v8343, 0.0
  %v8408 = vmax.f32 %v8344, 0.0
  %v8409 = vmax.f32 %v8345, 0.0
  %v8410 = vmax.f32 %v8346, 0.0
  %v8411 = vmax.f32 %v8347, 0.0
  %v8412 = vmax.f32 %v8348, 0.0
  %v8413 = vmax.f32 %v8349, 0.0
  %v8414 = vmax.f32 %v8350, 0.0
  %v8415 = vmax.f32 %v8351, 0.0
  %v8416 = vmax.f32 %v8352, 0.0
  %v8417 = vmax.f32 %v8353, 0.0
  %v8418 = vmax.f32 %v8354, 0.0
  %v8419 = vmax.f32 %v8355, 0.0
  %v8420 = vmax.f32 %v8356, 0.0
  %v8421 = vmax.f32 %v8357, 0.0
  %v8422 = vmax.f32 %v8358, 0.0
  %v8423 = vmax.f32 %v8359, 0.0
  %v8424 = vmax.f32 %v8360, 0.0
  %v8425 = vmax.f32 %v8361, 0.0
  %v8426 = vmax.f32 %v8362, 0.0
  %v8427 = vmax.f32 %v8363, 0.0
  %v8428 = vmax.f32 %v8364, 0.0
  %8429 = vst [vmem:[%s7] sm:$0xff] %v8365
  %8430 = vst [vmem:[%s7 + $0x8] sm:$0xff] %v8366
  %8431 = vst [vmem:[%s7 + $0x10] sm:$0xff] %v8367
  %8432 = vst [vmem:[%s7 + $0x18] sm:$0xff] %v8368
  %8433 = vst [vmem:[%s7 + $0x20] sm:$0xff] %v8369
  %8434 = vst [vmem:[%s7 + $0x28] sm:$0xff] %v8370
  %8435 = vst [vmem:[%s7 + $0x30] sm:$0xff] %v8371
  %8436 = vst [vmem:[%s7 + $0x38] sm:$0xff] %v8372
  %8437 = vst [vmem:[%s7 + $0x40] sm:$0xff] %v8373
  %8438 = vst [vmem:[%s7 + $0x48] sm:$0xff] %v8374
  %8439 = vst [vmem:[%s7 + $0x50] sm:$0xff] %v8375
  %8440 = vst [vmem:[%s7 + $0x58] sm:$0xff] %v8376
  %8441 = vst [vmem:[%s7 + $0x60] sm:$0xff] %v8377
  %8442 = vst [vmem:[%s7 + $0x68] sm:$0xff] %v8378
  %8443 = vst [vmem:[%s7 + $0x70] sm:$0xff] %v8379
  %8444 = vst [vmem:[%s7 + $0x78] sm:$0xff] %v8380
  %8445 = vst [vmem:[%s7 + $0x80] sm:$0xff] %v8381
  %8446 = vst [vmem:[%s7 + $0x88] sm:$0xff] %v8382
  %8447 = vst [vmem:[%s7 + $0x90] sm:$0xff] %v8383
  %8448 = vst [vmem:[%s7 + $0x98] sm:$0xff] %v8384
  %8449 = vst [vmem:[%s7 + $0xa0] sm:$0xff] %v8385
  %8450 = vst [vmem:[%s7 + $0xa8] sm:$0xff] %v8386
  %8451 = vst [vmem:[%s7 + $0xb0] sm:$0xff] %v8387
  %8452 = vst [vmem:[%s7 + $0xb8] sm:$0xff] %v8388
  %8453 = vst [vmem:[%s7 + $0xc0] sm:$0xff] %v8389
  %8454 = vst [vmem:[%s7 + $0xc8] sm:$0xff] %v8390
  %8455 = vst [vmem:[%s7 + $0xd0] sm:$0xff] %v8391
  %8456 = vst [vmem:[%s7 + $0xd8] sm:$0xff] %v8392
  %8457 = vst [vmem:[%s7 + $0xe0] sm:$0xff] %v8393
  %8458 = vst [vmem:[%s7 + $0xe8] sm:$0xff] %v8394
  %8459 = vst [vmem:[%s7 + $0xf0] sm:$0xff] %v8395
  %8460 = vst [vmem:[%s7 + $0xf8] sm:$0xff] %v8396
  %8461 = vst [vmem:[%s7 + $0x100] sm:$0xff] %v8397
  %8462 = vst [vmem:[%s7 + $0x108] sm:$0xff] %v8398
  %8463 = vst [vmem:[%s7 + $0x110] sm:$0xff] %v8399
  %8464 = vst [vmem:[%s7 + $0x118] sm:$0xff] %v8400
  %8465 = vst [vmem:[%s7 + $0x120] sm:$0xff] %v8401
  %8466 = vst [vmem:[%s7 + $0x128] sm:$0xff] %v8402
  %8467 = vst [vmem:[%s7 + $0x130] sm:$0xff] %v8403
  %8468 = vst [vmem:[%s7 + $0x138] sm:$0xff] %v8404
  %8469 = vst [vmem:[%s7 + $0x140] sm:$0xff] %v8405
  %8470 = vst [vmem:[%s7 + $0x148] sm:$0xff] %v8406
  %8471 = vst [vmem:[%s7 + $0x150] sm:$0xff] %v8407
  %8472 = vst [vmem:[%s7 + $0x158] sm:$0xff] %v8408
  %8473 = vst [vmem:[%s7 + $0x160] sm:$0xff] %v8409
  %8474 = vst [vmem:[%s7 + $0x168] sm:$0xff] %v8410
  %8475 = vst [vmem:[%s7 + $0x170] sm:$0xff] %v8411
  %8476 = vst [vmem:[%s7 + $0x178] sm:$0xff] %v8412
  %8477 = vst [vmem:[%s7 + $0x180] sm:$0xff] %v8413
  %8478 = vst [vmem:[%s7 + $0x188] sm:$0xff] %v8414
  %8479 = vst [vmem:[%s7 + $0x190] sm:$0xff] %v8415
  %8480 = vst [vmem:[%s7 + $0x198] sm:$0xff] %v8416
  %8481 = vst [vmem:[%s7 + $0x1a0] sm:$0xff] %v8417
  %8482 = vst [vmem:[%s7 + $0x1a8] sm:$0xff] %v8418
  %8483 = vst [vmem:[%s7 + $0x1b0] sm:$0xff] %v8419
  %8484 = vst [vmem:[%s7 + $0x1b8] sm:$0xff] %v8420
  %8485 = vst [vmem:[%s7 + $0x1c0] sm:$0xff] %v8421
  %8486 = vst [vmem:[%s7 + $0x1c8] sm:$0xff] %v8422
  %8487 = vst [vmem:[%s7 + $0x1d0] sm:$0xff] %v8423
  %8488 = vst [vmem:[%s7 + $0x1d8] sm:$0xff] %v8424
  %8489 = vst [vmem:[%s7 + $0x1e0] sm:$0xff] %v8425
  %8490 = vst [vmem:[%s7 + $0x1e8] sm:$0xff] %v8426
  %8491 = vst [vmem:[%s7 + $0x1f0] sm:$0xff] %v8427
  %8492 = vst [vmem:[%s7 + $0x1f8] sm:$0xff] %v8428
  // Predicated region
  $region30: #{residual_block_forward.1} parent=0 // pred_check
    _
  $region31: #{residual_block_forward.1} parent=0 // pred_check_branch
    %8494 = sbr.rel (0) target = $region33
  $region32: #{residual_block_forward.1} parent=0 // pred_region
    _
  $region33: #{residual_block_forward.1} parent=0 // pred_fallthru
    _
  // Predicated region
  $region34: #{residual_block_forward.1} parent=0 // pred_check
    _
  $region35: #{residual_block_forward.1} parent=0 // pred_check_branch
    %8496 = sbr.rel (0) target = $region37
  $region36: #{residual_block_forward.1} parent=0 // pred_region
    _
  $region37: #{residual_block_forward.1} parent=0 // pred_fallthru
    _

</llo_original>
